<compile_context>
chip_gen: v5e
topology: v5e:2x2
jax: 0.10.0
libtpu: 0.0.40
codegen_flags: <defaults>
</compile_context>

<pallas_src>
import functools

import jax
import jax.numpy as jnp
import numpy as np
from jax.experimental import pallas as pl
from jax.experimental.pallas import tpu as pltpu

EPS = 1e-5          # nn.BatchNorm3d default eps
NEG_SLOPE = 0.01    # nn.LeakyReLU default negative_slope


def _round_up(x, m):
    return (x + m - 1) // m * m


def _cdiv(a, b):
    return -(-a // b)


def _metric_kernel(x0_ref, x1_ref, w_ref, mask_ref, gamma_ref, beta_ref,
                   out_ref, win_ref, stk_ref, sum_ref, ssq_ref,
                   *, offsets, tl, cin, n_tiles, inv_count):
    """One fused tile step.

    x0_ref:   (Cin, TL)     bf16  main block of the guarded flat padded volume.
    x1_ref:   (Cin, HALO)   bf16  halo block immediately following x0.
    w_ref:    (Cout, 27*Cin) bf16 stencil-stacked conv weights.
    mask_ref: (1, TL)       bf16  1 on valid (non-halo, non-tail) voxels.
    gamma_ref/beta_ref: (Cout, 1) f32 BN affine parameters.
    out_ref:  (Cout, Lpad)  f32   full output, VMEM-resident across the grid.
    win_ref:  (Cin, TL+HALO) bf16 scratch: sliding window for this tile.
    stk_ref:  (27*Cin, TL)  bf16 scratch: stencil-stacked RHS of the fused dot.
    sum_ref/ssq_ref: (Cout, 1) f32 scratch: running masked sum / sum-of-squares.
    """
    t = pl.program_id(0)

    @pl.when(t == 0)
    def _init():
        sum_ref[...] = jnp.zeros_like(sum_ref)
        ssq_ref[...] = jnp.zeros_like(ssq_ref)

    # Assemble the sliding window (main tile + small halo) in VMEM.
    win_ref[:, :tl] = x0_ref[...]
    win_ref[:, tl:] = x1_ref[...]

    # Stencil-stack the 27 statically shifted views so the whole 3x3x3 conv
    # becomes a single K = 27*Cin matmul on the MXU (instead of 27 K=Cin dots).
    for k, s in enumerate(offsets):
        stk_ref[k * cin:(k + 1) * cin, :] = win_ref[:, s:s + tl]

    conv = jnp.dot(w_ref[...], stk_ref[...],
                   preferred_element_type=jnp.float32)        # (Cout, TL) f32

    # Masked partial BN statistics (halo / padding-tail voxels excluded).
    masked = conv * mask_ref[...].astype(jnp.float32)
    sum_ref[...] += jnp.sum(masked, axis=1, keepdims=True)
    ssq_ref[...] += jnp.sum(masked * conv, axis=1, keepdims=True)

    # Park the conv tile in the resident output buffer (lane-dense store).
    start = pl.multiple_of(t * tl, 128)
    out_ref[:, pl.ds(start, tl)] = conv

    # Last tile: fold batch statistics into a per-channel scale/shift and run
    # the BN + LeakyReLU sweep over the resident conv buffer (no HBM round
    # trip of the intermediate, no second kernel launch).
    @pl.when(t == n_tiles - 1)
    def _finalize():
        mean = sum_ref[...] * inv_count
        var = jnp.maximum(ssq_ref[...] * inv_count - mean * mean, 0.0)
        a = gamma_ref[...] * jax.lax.rsqrt(var + EPS)         # rsqrt -> EUP
        c = beta_ref[...] - mean * a
        for j in range(n_tiles):                              # static unroll
            y = out_ref[:, j * tl:(j + 1) * tl] * a + c
            out_ref[:, j * tl:(j + 1) * tl] = jnp.where(y >= 0, y, NEG_SLOPE * y)


@jax.jit
def metric_block(x, weight, bias, gamma, beta):
    """x: (N, Cin, D, H, W) f32, weight: (Cout, Cin, 3, 3, 3). Returns NCDHW f32."""
    del bias  # exactly cancelled by the training-mode BN mean subtraction
    # TODO(synk): BatchNorm3d running_mean/running_var buffer updates (a
    # training-time side effect, not part of the returned tensor) are not
    # reproduced; the conv bias would only matter for those buffers.

    N, Cin, D, H, W = x.shape
    Cout = weight.shape[0]
    Dp, Hp, Wp = D + 2, H + 2, W + 2
    Lp = N * Dp * Hp * Wp                    # flattened padded spatial length
    G = Hp * Wp + Wp + 1                     # max |flat tap offset|
    HALO = _round_up(2 * G, 128)             # lane-aligned halo width
    # Lane tile: a multiple of HALO (so the halo block index is integral).
    # 4096 keeps >1 grid tile at this test size; big volumes want 8-16k.
    TL = HALO * max(1, min(_cdiv(4096, HALO), _cdiv(Lp, HALO)))
    T = _cdiv(Lp, TL)                        # number of lane tiles (grid size)
    Lpad = T * TL                            # padded flat output length
    Ltot = T * TL + HALO                     # guarded flat input length

    # The fused single-pass kernel keeps the full (Cout, Lpad) f32 conv result
    # resident in VMEM — fine for MetricBlock-sized volumes.
    resident_bytes = Cout * Lpad * 4 + 27 * Cin * TL * 2 + Cin * (TL + HALO) * 2
    assert resident_bytes < 24 * 1024 * 1024, "volume too large for fused kernel"

    # ------------- wrapper-side layout plumbing (bf16, no compute) -----------
    x_cf = jnp.transpose(x.astype(jnp.bfloat16), (1, 0, 2, 3, 4))    # (Cin,N,D,H,W)
    xp = jnp.pad(x_cf, ((0, 0), (0, 0), (1, 1), (1, 1), (1, 1)))     # pad D/H/W
    xg = jnp.pad(xp.reshape(Cin, Lp), ((0, 0), (G, Ltot - G - Lp)))  # guard bands

    # tap k = (kd, kh, kw) row-major; in-window offset s_k = kd*Hp*Wp + kh*Wp + kw
    w_stk = jnp.transpose(weight, (0, 2, 3, 4, 1)).reshape(Cout, 27 * Cin)
    w_stk = w_stk.astype(jnp.bfloat16)
    offsets = tuple(kd * Hp * Wp + kh * Wp + kw
                    for kd in range(3) for kh in range(3) for kw in range(3))

    mask = jnp.pad(jnp.ones((N, D, H, W), jnp.bfloat16),
                   ((0, 0), (1, 1), (1, 1), (1, 1))).reshape(1, Lp)
    mask = jnp.pad(mask, ((0, 0), (0, Lpad - Lp)))

    gamma2 = gamma.reshape(Cout, 1).astype(jnp.float32)
    beta2 = beta.reshape(Cout, 1).astype(jnp.float32)

    R = TL // HALO                           # halo blocks per main tile

    y = pl.pallas_call(
        functools.partial(_metric_kernel, offsets=offsets, tl=TL, cin=Cin,
                          n_tiles=T, inv_count=1.0 / float(N * D * H * W)),
        out_shape=jax.ShapeDtypeStruct((Cout, Lpad), jnp.float32),
        grid=(T,),
        in_specs=[
            pl.BlockSpec((Cin, TL), lambda t: (0, t)),               # main block
            pl.BlockSpec((Cin, HALO), lambda t: (0, (t + 1) * R)),   # halo block
            pl.BlockSpec((Cout, 27 * Cin), lambda t: (0, 0)),        # fused weights
            pl.BlockSpec((1, TL), lambda t: (0, t)),                 # validity mask
            pl.BlockSpec((Cout, 1), lambda t: (0, 0)),               # gamma
            pl.BlockSpec((Cout, 1), lambda t: (0, 0)),               # beta
        ],
        out_specs=pl.BlockSpec((Cout, Lpad), lambda t: (0, 0)),      # VMEM-resident
        scratch_shapes=[
            pltpu.VMEM((Cin, TL + HALO), jnp.bfloat16),   # sliding window
            pltpu.VMEM((27 * Cin, TL), jnp.bfloat16),     # stencil-stacked RHS
            pltpu.VMEM((Cout, 1), jnp.float32),           # masked sum
            pltpu.VMEM((Cout, 1), jnp.float32),           # masked sum of squares
        ],
        compiler_params=pltpu.CompilerParams(
            dimension_semantics=("arbitrary",)),
        cost_estimate=pl.CostEstimate(
            flops=int(2 * Cout * 27 * Cin * Lpad + 10 * Cout * Lpad),
            transcendentals=int(Cout),
            bytes_accessed=int(Cin * Ltot * 2 + Cin * T * HALO * 2 + Lpad * 2
                               + Cout * 27 * Cin * 2 + Cout * Lpad * 4)),
    )(xg, xg, w_stk, mask, gamma2, beta2)

    # ------------------------- layout back to NCDHW --------------------------
    out = y[:, :Lp].reshape(Cout, N, Dp, Hp, Wp)[:, :, 1:1 + D, 1:1 + H, 1:1 + W]
    return jnp.transpose(out, (1, 0, 2, 3, 4))


def metric_block_reference(x, weight, bias, gamma, beta):
    """Pure-JAX reference matching the PyTorch forward (training-mode BN)."""
    conv = jax.lax.conv_general_dilated(
        x, weight, window_strides=(1, 1, 1),
        padding=((1, 1), (1, 1), (1, 1)),
        dimension_numbers=("NCDHW", "OIDHW", "NCDHW"),
        precision=jax.lax.Precision.HIGHEST)
    conv = conv + bias[None, :, None, None, None]
    mean = conv.mean(axis=(0, 2, 3, 4), keepdims=True)
    var = conv.var(axis=(0, 2, 3, 4), keepdims=True)  # biased, as in BN training
    yy = (conv - mean) * jax.lax.rsqrt(var + EPS)
    yy = yy * gamma[None, :, None, None, None] + beta[None, :, None, None, None]
    return jnp.where(yy >= 0, yy, NEG_SLOPE * yy)


if __name__ == "__main__":
    # Small shapes consistent with the module: (N, Cin, D, H, W)
    N, Cin, Cout, D, H, W = 2, 4, 8, 8, 16, 16

    key = jax.random.PRNGKey(0)
    k_w, k_b, k_g, k_be, k_x = jax.random.split(key, 5)

    # Conv3d-style init; non-trivial BN affine params to exercise the fold.
    fan_in = Cin * 3 * 3 * 3
    bound = 1.0 / np.sqrt(fan_in)
    weight = jax.random.uniform(k_w, (Cout, Cin, 3, 3, 3),
                                minval=-bound, maxval=bound, dtype=jnp.float32)
    bias = jax.random.uniform(k_b, (Cout,),
                              minval=-bound, maxval=bound, dtype=jnp.float32)
    gamma = 1.0 + 0.1 * jax.random.normal(k_g, (Cout,), dtype=jnp.float32)
    beta = 0.1 * jax.random.normal(k_be, (Cout,), dtype=jnp.float32)

    x = jax.random.normal(k_x, (N, Cin, D, H, W), dtype=jnp.float32)

    out = jax.block_until_ready(metric_block(x, weight, bias, gamma, beta))
    ref = jax.block_until_ready(metric_block_reference(x, weight, bias, gamma, beta))

    assert out.shape == (N, Cout, D, H, W), out.shape
    # Tolerance accounts for bf16 MXU operands (f32 accumulation) versus the
    # reference's HIGHEST-precision f32 conv.
    np.testing.assert_allclose(np.asarray(out), np.asarray(ref),
                               rtol=2e-2, atol=2e-2)
    print("KERNEL_OK")
</pallas_src>

<mosaic_0001>
module attributes {stable_mosaic.version = 11 : i64} {
  func.func @_metric_kernel(%arg0: i32, %arg1: memref<4x4608xbf16, #tpu.memory_space<vmem>>, %arg2: memref<4x768xbf16, #tpu.memory_space<vmem>>, %arg3: memref<8x108xbf16, #tpu.memory_space<vmem>>, %arg4: memref<1x4608xbf16, #tpu.memory_space<vmem>>, %arg5: memref<8x1xf32, #tpu.memory_space<vmem>>, %arg6: memref<8x1xf32, #tpu.memory_space<vmem>>, %arg7: memref<8x9216xf32, #tpu.memory_space<vmem>>, %arg8: memref<4x5376xbf16, #tpu.memory_space<vmem>>, %arg9: memref<108x4608xbf16, #tpu.memory_space<vmem>>, %arg10: memref<8x1xf32, #tpu.memory_space<vmem>>, %arg11: memref<8x1xf32, #tpu.memory_space<vmem>>) attributes {dimension_semantics = [#tpu.dimension_semantics<arbitrary>], iteration_bounds = array<i64: 2>, scalar_prefetch = 0 : i64, scratch_operands = 4 : i64, tpu.core_type = #tpu.core_type<tc>, window_params = [{transform_indices = @transform_0, window_bounds = array<i64: 4, 4608>}, {transform_indices = @transform_1, window_bounds = array<i64: 4, 768>}, {pipeline_mode = #tpu.pipeline_mode<synchronous>, transform_indices = @transform_2, window_bounds = array<i64: 8, 108>}, {transform_indices = @transform_3, window_bounds = array<i64: 1, 4608>}, {pipeline_mode = #tpu.pipeline_mode<synchronous>, transform_indices = @transform_4, window_bounds = array<i64: 8, 1>}, {pipeline_mode = #tpu.pipeline_mode<synchronous>, transform_indices = @transform_5, window_bounds = array<i64: 8, 1>}, {pipeline_mode = #tpu.pipeline_mode<synchronous>, transform_indices = @transform_6, window_bounds = array<i64: 8, 9216>}]} {
    %c0_i32 = arith.constant 0 : i32
    %0 = arith.cmpi eq, %arg0, %c0_i32 : i32
    %1 = arith.extui %0 : i1 to i32
    %c0_i32_0 = arith.constant 0 : i32
    %2 = arith.cmpi ne, %1, %c0_i32_0 : i32
    scf.if %2 {
      %cst_83 = arith.constant 0.000000e+00 : f32
      %86 = vector.broadcast %cst_83 : f32 to vector<8x1xf32>
      %c0_84 = arith.constant 0 : index
      %c0_85 = arith.constant 0 : index
      %87 = vector.load %arg10[%c0_84, %c0_85] : memref<8x1xf32, #tpu.memory_space<vmem>>, vector<8x1xf32>
      tpu.vector_store %arg10[%c0_84, %c0_85], %86 {strides = array<i32>} : memref<8x1xf32, #tpu.memory_space<vmem>>, vector<8x1xf32>,
      %cst_86 = arith.constant 0.000000e+00 : f32
      %88 = vector.broadcast %cst_86 : f32 to vector<8x1xf32>
      %c0_87 = arith.constant 0 : index
      %c0_88 = arith.constant 0 : index
      %89 = vector.load %arg11[%c0_87, %c0_88] : memref<8x1xf32, #tpu.memory_space<vmem>>, vector<8x1xf32>
      tpu.vector_store %arg11[%c0_87, %c0_88], %88 {strides = array<i32>} : memref<8x1xf32, #tpu.memory_space<vmem>>, vector<8x1xf32>,
    } else {
    }
    %c0 = arith.constant 0 : index
    %c0_1 = arith.constant 0 : index
    %3 = vector.load %arg1[%c0, %c0_1] : memref<4x4608xbf16, #tpu.memory_space<vmem>>, vector<4x4608xbf16>
    %c0_2 = arith.constant 0 : index
    %c0_3 = arith.constant 0 : index
    %4 = vector.load %arg8[%c0_2, %c0_3] : memref<4x5376xbf16, #tpu.memory_space<vmem>>, vector<4x4608xbf16>
    tpu.vector_store %arg8[%c0_2, %c0_3], %3 {strides = array<i32>} : memref<4x5376xbf16, #tpu.memory_space<vmem>>, vector<4x4608xbf16>,
    %c0_4 = arith.constant 0 : index
    %c0_5 = arith.constant 0 : index
    %5 = vector.load %arg2[%c0_4, %c0_5] : memref<4x768xbf16, #tpu.memory_space<vmem>>, vector<4x768xbf16>
    %c0_6 = arith.constant 0 : index
    %c4608 = arith.constant 4608 : index
    %6 = vector.load %arg8[%c0_6, %c4608] : memref<4x5376xbf16, #tpu.memory_space<vmem>>, vector<4x768xbf16>
    tpu.vector_store %arg8[%c0_6, %c4608], %5 {strides = array<i32>} : memref<4x5376xbf16, #tpu.memory_space<vmem>>, vector<4x768xbf16>,
    %c0_7 = arith.constant 0 : index
    %c0_8 = arith.constant 0 : index
    %7 = vector.load %arg8[%c0_7, %c0_8] : memref<4x5376xbf16, #tpu.memory_space<vmem>>, vector<4x4608xbf16>
    %c0_9 = arith.constant 0 : index
    %c0_10 = arith.constant 0 : index
    %8 = vector.load %arg9[%c0_9, %c0_10] : memref<108x4608xbf16, #tpu.memory_space<vmem>>, vector<4x4608xbf16>
    tpu.vector_store %arg9[%c0_9, %c0_10], %7 {strides = array<i32>} : memref<108x4608xbf16, #tpu.memory_space<vmem>>, vector<4x4608xbf16>,
    %c0_11 = arith.constant 0 : index
    %c1 = arith.constant 1 : index
    %9 = vector.load %arg8[%c0_11, %c1] : memref<4x5376xbf16, #tpu.memory_space<vmem>>, vector<4x4608xbf16>
    %c4 = arith.constant 4 : index
    %c0_12 = arith.constant 0 : index
    %10 = vector.load %arg9[%c4, %c0_12] : memref<108x4608xbf16, #tpu.memory_space<vmem>>, vector<4x4608xbf16>
    tpu.vector_store %arg9[%c4, %c0_12], %9 {strides = array<i32>} : memref<108x4608xbf16, #tpu.memory_space<vmem>>, vector<4x4608xbf16>,
    %c0_13 = arith.constant 0 : index
    %c2 = arith.constant 2 : index
    %11 = vector.load %arg8[%c0_13, %c2] : memref<4x5376xbf16, #tpu.memory_space<vmem>>, vector<4x4608xbf16>
    %c8 = arith.constant 8 : index
    %c0_14 = arith.constant 0 : index
    %12 = vector.load %arg9[%c8, %c0_14] : memref<108x4608xbf16, #tpu.memory_space<vmem>>, vector<4x4608xbf16>
    tpu.vector_store %arg9[%c8, %c0_14], %11 {strides = array<i32>} : memref<108x4608xbf16, #tpu.memory_space<vmem>>, vector<4x4608xbf16>,
    %c0_15 = arith.constant 0 : index
    %c18 = arith.constant 18 : index
    %13 = vector.load %arg8[%c0_15, %c18] : memref<4x5376xbf16, #tpu.memory_space<vmem>>, vector<4x4608xbf16>
    %c12 = arith.constant 12 : index
    %c0_16 = arith.constant 0 : index
    %14 = vector.load %arg9[%c12, %c0_16] : memref<108x4608xbf16, #tpu.memory_space<vmem>>, vector<4x4608xbf16>
    tpu.vector_store %arg9[%c12, %c0_16], %13 {strides = array<i32>} : memref<108x4608xbf16, #tpu.memory_space<vmem>>, vector<4x4608xbf16>,
    %c0_17 = arith.constant 0 : index
    %c19 = arith.constant 19 : index
    %15 = vector.load %arg8[%c0_17, %c19] : memref<4x5376xbf16, #tpu.memory_space<vmem>>, vector<4x4608xbf16>
    %c16 = arith.constant 16 : index
    %c0_18 = arith.constant 0 : index
    %16 = vector.load %arg9[%c16, %c0_18] : memref<108x4608xbf16, #tpu.memory_space<vmem>>, vector<4x4608xbf16>
    tpu.vector_store %arg9[%c16, %c0_18], %15 {strides = array<i32>} : memref<108x4608xbf16, #tpu.memory_space<vmem>>, vector<4x4608xbf16>,
    %c0_19 = arith.constant 0 : index
    %c20 = arith.constant 20 : index
    %17 = vector.load %arg8[%c0_19, %c20] : memref<4x5376xbf16, #tpu.memory_space<vmem>>, vector<4x4608xbf16>
    %c20_20 = arith.constant 20 : index
    %c0_21 = arith.constant 0 : index
    %18 = vector.load %arg9[%c20_20, %c0_21] : memref<108x4608xbf16, #tpu.memory_space<vmem>>, vector<4x4608xbf16>
    tpu.vector_store %arg9[%c20_20, %c0_21], %17 {strides = array<i32>} : memref<108x4608xbf16, #tpu.memory_space<vmem>>, vector<4x4608xbf16>,
    %c0_22 = arith.constant 0 : index
    %c36 = arith.constant 36 : index
    %19 = vector.load %arg8[%c0_22, %c36] : memref<4x5376xbf16, #tpu.memory_space<vmem>>, vector<4x4608xbf16>
    %c24 = arith.constant 24 : index
    %c0_23 = arith.constant 0 : index
    %20 = vector.load %arg9[%c24, %c0_23] : memref<108x4608xbf16, #tpu.memory_space<vmem>>, vector<4x4608xbf16>
    tpu.vector_store %arg9[%c24, %c0_23], %19 {strides = array<i32>} : memref<108x4608xbf16, #tpu.memory_space<vmem>>, vector<4x4608xbf16>,
    %c0_24 = arith.constant 0 : index
    %c37 = arith.constant 37 : index
    %21 = vector.load %arg8[%c0_24, %c37] : memref<4x5376xbf16, #tpu.memory_space<vmem>>, vector<4x4608xbf16>
    %c28 = arith.constant 28 : index
    %c0_25 = arith.constant 0 : index
    %22 = vector.load %arg9[%c28, %c0_25] : memref<108x4608xbf16, #tpu.memory_space<vmem>>, vector<4x4608xbf16>
    tpu.vector_store %arg9[%c28, %c0_25], %21 {strides = array<i32>} : memref<108x4608xbf16, #tpu.memory_space<vmem>>, vector<4x4608xbf16>,
    %c0_26 = arith.constant 0 : index
    %c38 = arith.constant 38 : index
    %23 = vector.load %arg8[%c0_26, %c38] : memref<4x5376xbf16, #tpu.memory_space<vmem>>, vector<4x4608xbf16>
    %c32 = arith.constant 32 : index
    %c0_27 = arith.constant 0 : index
    %24 = vector.load %arg9[%c32, %c0_27] : memref<108x4608xbf16, #tpu.memory_space<vmem>>, vector<4x4608xbf16>
    tpu.vector_store %arg9[%c32, %c0_27], %23 {strides = array<i32>} : memref<108x4608xbf16, #tpu.memory_space<vmem>>, vector<4x4608xbf16>,
    %c0_28 = arith.constant 0 : index
    %c324 = arith.constant 324 : index
    %25 = vector.load %arg8[%c0_28, %c324] : memref<4x5376xbf16, #tpu.memory_space<vmem>>, vector<4x4608xbf16>
    %c36_29 = arith.constant 36 : index
    %c0_30 = arith.constant 0 : index
    %26 = vector.load %arg9[%c36_29, %c0_30] : memref<108x4608xbf16, #tpu.memory_space<vmem>>, vector<4x4608xbf16>
    tpu.vector_store %arg9[%c36_29, %c0_30], %25 {strides = array<i32>} : memref<108x4608xbf16, #tpu.memory_space<vmem>>, vector<4x4608xbf16>,
    %c0_31 = arith.constant 0 : index
    %c325 = arith.constant 325 : index
    %27 = vector.load %arg8[%c0_31, %c325] : memref<4x5376xbf16, #tpu.memory_space<vmem>>, vector<4x4608xbf16>
    %c40 = arith.constant 40 : index
    %c0_32 = arith.constant 0 : index
    %28 = vector.load %arg9[%c40, %c0_32] : memref<108x4608xbf16, #tpu.memory_space<vmem>>, vector<4x4608xbf16>
    tpu.vector_store %arg9[%c40, %c0_32], %27 {strides = array<i32>} : memref<108x4608xbf16, #tpu.memory_space<vmem>>, vector<4x4608xbf16>,
    %c0_33 = arith.constant 0 : index
    %c326 = arith.constant 326 : index
    %29 = vector.load %arg8[%c0_33, %c326] : memref<4x5376xbf16, #tpu.memory_space<vmem>>, vector<4x4608xbf16>
    %c44 = arith.constant 44 : index
    %c0_34 = arith.constant 0 : index
    %30 = vector.load %arg9[%c44, %c0_34] : memref<108x4608xbf16, #tpu.memory_space<vmem>>, vector<4x4608xbf16>
    tpu.vector_store %arg9[%c44, %c0_34], %29 {strides = array<i32>} : memref<108x4608xbf16, #tpu.memory_space<vmem>>, vector<4x4608xbf16>,
    %c0_35 = arith.constant 0 : index
    %c342 = arith.constant 342 : index
    %31 = vector.load %arg8[%c0_35, %c342] : memref<4x5376xbf16, #tpu.memory_space<vmem>>, vector<4x4608xbf16>
    %c48 = arith.constant 48 : index
    %c0_36 = arith.constant 0 : index
    %32 = vector.load %arg9[%c48, %c0_36] : memref<108x4608xbf16, #tpu.memory_space<vmem>>, vector<4x4608xbf16>
    tpu.vector_store %arg9[%c48, %c0_36], %31 {strides = array<i32>} : memref<108x4608xbf16, #tpu.memory_space<vmem>>, vector<4x4608xbf16>,
    %c0_37 = arith.constant 0 : index
    %c343 = arith.constant 343 : index
    %33 = vector.load %arg8[%c0_37, %c343] : memref<4x5376xbf16, #tpu.memory_space<vmem>>, vector<4x4608xbf16>
    %c52 = arith.constant 52 : index
    %c0_38 = arith.constant 0 : index
    %34 = vector.load %arg9[%c52, %c0_38] : memref<108x4608xbf16, #tpu.memory_space<vmem>>, vector<4x4608xbf16>
    tpu.vector_store %arg9[%c52, %c0_38], %33 {strides = array<i32>} : memref<108x4608xbf16, #tpu.memory_space<vmem>>, vector<4x4608xbf16>,
    %c0_39 = arith.constant 0 : index
    %c344 = arith.constant 344 : index
    %35 = vector.load %arg8[%c0_39, %c344] : memref<4x5376xbf16, #tpu.memory_space<vmem>>, vector<4x4608xbf16>
    %c56 = arith.constant 56 : index
    %c0_40 = arith.constant 0 : index
    %36 = vector.load %arg9[%c56, %c0_40] : memref<108x4608xbf16, #tpu.memory_space<vmem>>, vector<4x4608xbf16>
    tpu.vector_store %arg9[%c56, %c0_40], %35 {strides = array<i32>} : memref<108x4608xbf16, #tpu.memory_space<vmem>>, vector<4x4608xbf16>,
    %c0_41 = arith.constant 0 : index
    %c360 = arith.constant 360 : index
    %37 = vector.load %arg8[%c0_41, %c360] : memref<4x5376xbf16, #tpu.memory_space<vmem>>, vector<4x4608xbf16>
    %c60 = arith.constant 60 : index
    %c0_42 = arith.constant 0 : index
    %38 = vector.load %arg9[%c60, %c0_42] : memref<108x4608xbf16, #tpu.memory_space<vmem>>, vector<4x4608xbf16>
    tpu.vector_store %arg9[%c60, %c0_42], %37 {strides = array<i32>} : memref<108x4608xbf16, #tpu.memory_space<vmem>>, vector<4x4608xbf16>,
    %c0_43 = arith.constant 0 : index
    %c361 = arith.constant 361 : index
    %39 = vector.load %arg8[%c0_43, %c361] : memref<4x5376xbf16, #tpu.memory_space<vmem>>, vector<4x4608xbf16>
    %c64 = arith.constant 64 : index
    %c0_44 = arith.constant 0 : index
    %40 = vector.load %arg9[%c64, %c0_44] : memref<108x4608xbf16, #tpu.memory_space<vmem>>, vector<4x4608xbf16>
    tpu.vector_store %arg9[%c64, %c0_44], %39 {strides = array<i32>} : memref<108x4608xbf16, #tpu.memory_space<vmem>>, vector<4x4608xbf16>,
    %c0_45 = arith.constant 0 : index
    %c362 = arith.constant 362 : index
    %41 = vector.load %arg8[%c0_45, %c362] : memref<4x5376xbf16, #tpu.memory_space<vmem>>, vector<4x4608xbf16>
    %c68 = arith.constant 68 : index
    %c0_46 = arith.constant 0 : index
    %42 = vector.load %arg9[%c68, %c0_46] : memref<108x4608xbf16, #tpu.memory_space<vmem>>, vector<4x4608xbf16>
    tpu.vector_store %arg9[%c68, %c0_46], %41 {strides = array<i32>} : memref<108x4608xbf16, #tpu.memory_space<vmem>>, vector<4x4608xbf16>,
    %c0_47 = arith.constant 0 : index
    %c648 = arith.constant 648 : index
    %43 = vector.load %arg8[%c0_47, %c648] : memref<4x5376xbf16, #tpu.memory_space<vmem>>, vector<4x4608xbf16>
    %c72 = arith.constant 72 : index
    %c0_48 = arith.constant 0 : index
    %44 = vector.load %arg9[%c72, %c0_48] : memref<108x4608xbf16, #tpu.memory_space<vmem>>, vector<4x4608xbf16>
    tpu.vector_store %arg9[%c72, %c0_48], %43 {strides = array<i32>} : memref<108x4608xbf16, #tpu.memory_space<vmem>>, vector<4x4608xbf16>,
    %c0_49 = arith.constant 0 : index
    %c649 = arith.constant 649 : index
    %45 = vector.load %arg8[%c0_49, %c649] : memref<4x5376xbf16, #tpu.memory_space<vmem>>, vector<4x4608xbf16>
    %c76 = arith.constant 76 : index
    %c0_50 = arith.constant 0 : index
    %46 = vector.load %arg9[%c76, %c0_50] : memref<108x4608xbf16, #tpu.memory_space<vmem>>, vector<4x4608xbf16>
    tpu.vector_store %arg9[%c76, %c0_50], %45 {strides = array<i32>} : memref<108x4608xbf16, #tpu.memory_space<vmem>>, vector<4x4608xbf16>,
    %c0_51 = arith.constant 0 : index
    %c650 = arith.constant 650 : index
    %47 = vector.load %arg8[%c0_51, %c650] : memref<4x5376xbf16, #tpu.memory_space<vmem>>, vector<4x4608xbf16>
    %c80 = arith.constant 80 : index
    %c0_52 = arith.constant 0 : index
    %48 = vector.load %arg9[%c80, %c0_52] : memref<108x4608xbf16, #tpu.memory_space<vmem>>, vector<4x4608xbf16>
    tpu.vector_store %arg9[%c80, %c0_52], %47 {strides = array<i32>} : memref<108x4608xbf16, #tpu.memory_space<vmem>>, vector<4x4608xbf16>,
    %c0_53 = arith.constant 0 : index
    %c666 = arith.constant 666 : index
    %49 = vector.load %arg8[%c0_53, %c666] : memref<4x5376xbf16, #tpu.memory_space<vmem>>, vector<4x4608xbf16>
    %c84 = arith.constant 84 : index
    %c0_54 = arith.constant 0 : index
    %50 = vector.load %arg9[%c84, %c0_54] : memref<108x4608xbf16, #tpu.memory_space<vmem>>, vector<4x4608xbf16>
    tpu.vector_store %arg9[%c84, %c0_54], %49 {strides = array<i32>} : memref<108x4608xbf16, #tpu.memory_space<vmem>>, vector<4x4608xbf16>,
    %c0_55 = arith.constant 0 : index
    %c667 = arith.constant 667 : index
    %51 = vector.load %arg8[%c0_55, %c667] : memref<4x5376xbf16, #tpu.memory_space<vmem>>, vector<4x4608xbf16>
    %c88 = arith.constant 88 : index
    %c0_56 = arith.constant 0 : index
    %52 = vector.load %arg9[%c88, %c0_56] : memref<108x4608xbf16, #tpu.memory_space<vmem>>, vector<4x4608xbf16>
    tpu.vector_store %arg9[%c88, %c0_56], %51 {strides = array<i32>} : memref<108x4608xbf16, #tpu.memory_space<vmem>>, vector<4x4608xbf16>,
    %c0_57 = arith.constant 0 : index
    %c668 = arith.constant 668 : index
    %53 = vector.load %arg8[%c0_57, %c668] : memref<4x5376xbf16, #tpu.memory_space<vmem>>, vector<4x4608xbf16>
    %c92 = arith.constant 92 : index
    %c0_58 = arith.constant 0 : index
    %54 = vector.load %arg9[%c92, %c0_58] : memref<108x4608xbf16, #tpu.memory_space<vmem>>, vector<4x4608xbf16>
    tpu.vector_store %arg9[%c92, %c0_58], %53 {strides = array<i32>} : memref<108x4608xbf16, #tpu.memory_space<vmem>>, vector<4x4608xbf16>,
    %c0_59 = arith.constant 0 : index
    %c684 = arith.constant 684 : index
    %55 = vector.load %arg8[%c0_59, %c684] : memref<4x5376xbf16, #tpu.memory_space<vmem>>, vector<4x4608xbf16>
    %c96 = arith.constant 96 : index
    %c0_60 = arith.constant 0 : index
    %56 = vector.load %arg9[%c96, %c0_60] : memref<108x4608xbf16, #tpu.memory_space<vmem>>, vector<4x4608xbf16>
    tpu.vector_store %arg9[%c96, %c0_60], %55 {strides = array<i32>} : memref<108x4608xbf16, #tpu.memory_space<vmem>>, vector<4x4608xbf16>,
    %c0_61 = arith.constant 0 : index
    %c685 = arith.constant 685 : index
    %57 = vector.load %arg8[%c0_61, %c685] : memref<4x5376xbf16, #tpu.memory_space<vmem>>, vector<4x4608xbf16>
    %c100 = arith.constant 100 : index
    %c0_62 = arith.constant 0 : index
    %58 = vector.load %arg9[%c100, %c0_62] : memref<108x4608xbf16, #tpu.memory_space<vmem>>, vector<4x4608xbf16>
    tpu.vector_store %arg9[%c100, %c0_62], %57 {strides = array<i32>} : memref<108x4608xbf16, #tpu.memory_space<vmem>>, vector<4x4608xbf16>,
    %c0_63 = arith.constant 0 : index
    %c686 = arith.constant 686 : index
    %59 = vector.load %arg8[%c0_63, %c686] : memref<4x5376xbf16, #tpu.memory_space<vmem>>, vector<4x4608xbf16>
    %c104 = arith.constant 104 : index
    %c0_64 = arith.constant 0 : index
    %60 = vector.load %arg9[%c104, %c0_64] : memref<108x4608xbf16, #tpu.memory_space<vmem>>, vector<4x4608xbf16>
    tpu.vector_store %arg9[%c104, %c0_64], %59 {strides = array<i32>} : memref<108x4608xbf16, #tpu.memory_space<vmem>>, vector<4x4608xbf16>,
    %c0_65 = arith.constant 0 : index
    %c0_66 = arith.constant 0 : index
    %61 = vector.load %arg3[%c0_65, %c0_66] : memref<8x108xbf16, #tpu.memory_space<vmem>>, vector<8x108xbf16>
    %c0_67 = arith.constant 0 : index
    %c0_68 = arith.constant 0 : index
    %62 = vector.load %arg9[%c0_67, %c0_68] : memref<108x4608xbf16, #tpu.memory_space<vmem>>, vector<108x4608xbf16>
    %cst = arith.constant dense<0.000000e+00> : vector<8x4608xf32>
    %63 = tpu.matmul %61, %62, %cst {dimension_numbers = #tpu.dot_dimension_numbers<[1], [0], [0], [1], [0, 0, 1, 1], [], []>} : vector<8x108xbf16>, vector<108x4608xbf16>, vector<8x4608xf32> -> vector<8x4608xf32>
    %c0_69 = arith.constant 0 : index
    %c0_70 = arith.constant 0 : index
    %64 = vector.load %arg4[%c0_69, %c0_70] : memref<1x4608xbf16, #tpu.memory_space<vmem>>, vector<1x4608xbf16>
    %65 = arith.extf %64 : vector<1x4608xbf16> to vector<1x4608xf32>
    %66 = vector.broadcast %65 : vector<1x4608xf32> to vector<8x4608xf32>
    %67 = arith.mulf %63, %66 : vector<8x4608xf32>
    %c0_71 = arith.constant 0 : index
    %c0_72 = arith.constant 0 : index
    %68 = vector.load %arg10[%c0_71, %c0_72] : memref<8x1xf32, #tpu.memory_space<vmem>>, vector<8x1xf32>
    %cst_73 = arith.constant dense<0.000000e+00> : vector<8xf32>
    %69 = vector.multi_reduction <add>, %67, %cst_73 [1] : vector<8x4608xf32> to vector<8xf32>
    %70 = vector.shape_cast %69 : vector<8xf32> to vector<8x1xf32>
    %71 = arith.addf %68, %70 : vector<8x1xf32>
    %c0_74 = arith.constant 0 : index
    %c0_75 = arith.constant 0 : index
    %72 = vector.load %arg10[%c0_74, %c0_75] : memref<8x1xf32, #tpu.memory_space<vmem>>, vector<8x1xf32>
    tpu.vector_store %arg10[%c0_74, %c0_75], %71 {strides = array<i32>} : memref<8x1xf32, #tpu.memory_space<vmem>>, vector<8x1xf32>,
    %c0_76 = arith.constant 0 : index
    %c0_77 = arith.constant 0 : index
    %73 = vector.load %arg11[%c0_76, %c0_77] : memref<8x1xf32, #tpu.memory_space<vmem>>, vector<8x1xf32>
    %74 = arith.mulf %67, %63 : vector<8x4608xf32>
    %cst_78 = arith.constant dense<0.000000e+00> : vector<8xf32>
    %75 = vector.multi_reduction <add>, %74, %cst_78 [1] : vector<8x4608xf32> to vector<8xf32>
    %76 = vector.shape_cast %75 : vector<8xf32> to vector<8x1xf32>
    %77 = arith.addf %73, %76 : vector<8x1xf32>
    %c0_79 = arith.constant 0 : index
    %c0_80 = arith.constant 0 : index
    %78 = vector.load %arg11[%c0_79, %c0_80] : memref<8x1xf32, #tpu.memory_space<vmem>>, vector<8x1xf32>
    tpu.vector_store %arg11[%c0_79, %c0_80], %77 {strides = array<i32>} : memref<8x1xf32, #tpu.memory_space<vmem>>, vector<8x1xf32>,
    %c4608_i32 = arith.constant 4608 : i32
    %79 = arith.muli %arg0, %c4608_i32 : i32
    %80 = tpu.assume_multiple %79, 128 : i32
    %c0_81 = arith.constant 0 : index
    %81 = arith.index_cast %80 : i32 to index
    %82 = vector.load %arg7[%c0_81, %81] : memref<8x9216xf32, #tpu.memory_space<vmem>>, vector<8x4608xf32>
    tpu.vector_store %arg7[%c0_81, %81], %63 {strides = array<i32>} : memref<8x9216xf32, #tpu.memory_space<vmem>>, vector<8x4608xf32>,
    %c1_i32 = arith.constant 1 : i32
    %83 = arith.cmpi eq, %arg0, %c1_i32 : i32
    %84 = arith.extui %83 : i1 to i32
    %c0_i32_82 = arith.constant 0 : i32
    %85 = arith.cmpi ne, %84, %c0_i32_82 : i32
    scf.if %85 {
      %c0_83 = arith.constant 0 : index
      %c0_84 = arith.constant 0 : index
      %86 = vector.load %arg10[%c0_83, %c0_84] : memref<8x1xf32, #tpu.memory_space<vmem>>, vector<8x1xf32>
      %cst_85 = arith.constant 2.44140625E-4 : f32
      %87 = vector.broadcast %cst_85 : f32 to vector<8x1xf32>
      %88 = arith.mulf %86, %87 : vector<8x1xf32>
      %c0_86 = arith.constant 0 : index
      %c0_87 = arith.constant 0 : index
      %89 = vector.load %arg11[%c0_86, %c0_87] : memref<8x1xf32, #tpu.memory_space<vmem>>, vector<8x1xf32>
      %cst_88 = arith.constant 2.44140625E-4 : f32
      %90 = vector.broadcast %cst_88 : f32 to vector<8x1xf32>
      %91 = arith.mulf %89, %90 : vector<8x1xf32>
      %92 = arith.mulf %88, %88 : vector<8x1xf32>
      %93 = arith.subf %91, %92 : vector<8x1xf32>
      %cst_89 = arith.constant 0.000000e+00 : f32
      %94 = vector.broadcast %cst_89 : f32 to vector<8x1xf32>
      %95 = arith.maximumf %93, %94 : vector<8x1xf32>
      %c0_90 = arith.constant 0 : index
      %c0_91 = arith.constant 0 : index
      %96 = vector.load %arg5[%c0_90, %c0_91] : memref<8x1xf32, #tpu.memory_space<vmem>>, vector<8x1xf32>
      %cst_92 = arith.constant 9.99999974E-6 : f32
      %97 = vector.broadcast %cst_92 : f32 to vector<8x1xf32>
      %98 = arith.addf %95, %97 : vector<8x1xf32>
      %99 = math.rsqrt %98 : vector<8x1xf32>
      %100 = arith.mulf %96, %99 : vector<8x1xf32>
      %c0_93 = arith.constant 0 : index
      %c0_94 = arith.constant 0 : index
      %101 = vector.load %arg6[%c0_93, %c0_94] : memref<8x1xf32, #tpu.memory_space<vmem>>, vector<8x1xf32>
      %102 = arith.mulf %88, %100 : vector<8x1xf32>
      %103 = arith.subf %101, %102 : vector<8x1xf32>
      %c0_95 = arith.constant 0 : index
      %c0_96 = arith.constant 0 : index
      %104 = vector.load %arg7[%c0_95, %c0_96] : memref<8x9216xf32, #tpu.memory_space<vmem>>, vector<8x4608xf32>
      %105 = vector.broadcast %100 : vector<8x1xf32> to vector<8x4608xf32>
      %106 = arith.mulf %104, %105 : vector<8x4608xf32>
      %107 = vector.broadcast %103 : vector<8x1xf32> to vector<8x4608xf32>
      %108 = arith.addf %106, %107 : vector<8x4608xf32>
      %cst_97 = arith.constant 0.000000e+00 : f32
      %109 = vector.broadcast %cst_97 : f32 to vector<8x4608xf32>
      %110 = arith.cmpf oge, %108, %109 : vector<8x4608xf32>
      %cst_98 = arith.constant 0.00999999977 : f32
      %111 = vector.broadcast %cst_98 : f32 to vector<8x4608xf32>
      %112 = arith.mulf %111, %108 : vector<8x4608xf32>
      %113 = arith.select %110, %108, %112 : vector<8x4608xi1>, vector<8x4608xf32>
      %c0_99 = arith.constant 0 : index
      %c0_100 = arith.constant 0 : index
      %114 = vector.load %arg7[%c0_99, %c0_100] : memref<8x9216xf32, #tpu.memory_space<vmem>>, vector<8x4608xf32>
      tpu.vector_store %arg7[%c0_99, %c0_100], %113 {strides = array<i32>} : memref<8x9216xf32, #tpu.memory_space<vmem>>, vector<8x4608xf32>,
      %c0_101 = arith.constant 0 : index
      %c4608_102 = arith.constant 4608 : index
      %115 = vector.load %arg7[%c0_101, %c4608_102] : memref<8x9216xf32, #tpu.memory_space<vmem>>, vector<8x4608xf32>
      %116 = vector.broadcast %100 : vector<8x1xf32> to vector<8x4608xf32>
      %117 = arith.mulf %115, %116 : vector<8x4608xf32>
      %118 = vector.broadcast %103 : vector<8x1xf32> to vector<8x4608xf32>
      %119 = arith.addf %117, %118 : vector<8x4608xf32>
      %cst_103 = arith.constant 0.000000e+00 : f32
      %120 = vector.broadcast %cst_103 : f32 to vector<8x4608xf32>
      %121 = arith.cmpf oge, %119, %120 : vector<8x4608xf32>
      %cst_104 = arith.constant 0.00999999977 : f32
      %122 = vector.broadcast %cst_104 : f32 to vector<8x4608xf32>
      %123 = arith.mulf %122, %119 : vector<8x4608xf32>
      %124 = arith.select %121, %119, %123 : vector<8x4608xi1>, vector<8x4608xf32>
      %c0_105 = arith.constant 0 : index
      %c4608_106 = arith.constant 4608 : index
      %125 = vector.load %arg7[%c0_105, %c4608_106] : memref<8x9216xf32, #tpu.memory_space<vmem>>, vector<8x4608xf32>
      tpu.vector_store %arg7[%c0_105, %c4608_106], %124 {strides = array<i32>} : memref<8x9216xf32, #tpu.memory_space<vmem>>, vector<8x4608xf32>,
    } else {
    }
    return
  }
  func.func @transform_0(%arg0: i32) -> (i32, i32) {
    %c0_i32 = arith.constant 0 : i32
    %c0_i32_0 = arith.constant 0 : i32
    return %c0_i32, %arg0 : i32, i32
  }
  func.func @transform_1(%arg0: i32) -> (i32, i32) {
    %c1_i32 = arith.constant 1 : i32
    %0 = arith.addi %arg0, %c1_i32 : i32
    %c6_i32 = arith.constant 6 : i32
    %1 = arith.muli %0, %c6_i32 : i32
    %c0_i32 = arith.constant 0 : i32
    %c0_i32_0 = arith.constant 0 : i32
    return %c0_i32, %1 : i32, i32
  }
  func.func @transform_2(%arg0: i32) -> (i32, i32) {
    %c0_i32 = arith.constant 0 : i32
    %c0_i32_0 = arith.constant 0 : i32
    %c0_i32_1 = arith.constant 0 : i32
    return %c0_i32, %c0_i32_0 : i32, i32
  }
  func.func @transform_3(%arg0: i32) -> (i32, i32) {
    %c0_i32 = arith.constant 0 : i32
    %c0_i32_0 = arith.constant 0 : i32
    return %c0_i32, %arg0 : i32, i32
  }
  func.func @transform_4(%arg0: i32) -> (i32, i32) {
    %c0_i32 = arith.constant 0 : i32
    %c0_i32_0 = arith.constant 0 : i32
    %c0_i32_1 = arith.constant 0 : i32
    return %c0_i32, %c0_i32_0 : i32, i32
  }
  func.func @transform_5(%arg0: i32) -> (i32, i32) {
    %c0_i32 = arith.constant 0 : i32
    %c0_i32_0 = arith.constant 0 : i32
    %c0_i32_1 = arith.constant 0 : i32
    return %c0_i32, %c0_i32_0 : i32, i32
  }
  func.func @transform_6(%arg0: i32) -> (i32, i32) {
    %c0_i32 = arith.constant 0 : i32
    %c0_i32_0 = arith.constant 0 : i32
    %c0_i32_1 = arith.constant 0 : i32
    return %c0_i32, %c0_i32_0 : i32, i32
  }
}

</mosaic_0001>

<llo_original>
// kernel: metric_block.1
$region0: #{metric_block.1}
  #allocation0 [shape = 'u32[]', space=smem, size = 0x4, offset = 0x4, fixed_abs, tag = 'smem constant byte address 0x4 - core index']
  #allocation1 [shape = 'u32[72,128]{1,0:T(1,128)}', space=vmem, size = 0x9000, scoped, tag = 'internal scratch']
  #allocation2 [shape = 'bf16[4,5376]{1,0:T(4,128)(2,1)}', space=vmem, size = 0xa800, scoped, tag = 'scratch operand']
  #allocation3 [shape = 'bf16[108,4608]{1,0:T(8,128)(2,1)}', space=vmem, size = 0xfc000, scoped, tag = 'scratch operand']
  #allocation4 [shape = 'f32[8,1]{1,0:T(8,128)}', space=vmem, size = 0x1000, scoped, tag = 'scratch operand']
  #allocation5 [shape = 'f32[8,1]{1,0:T(8,128)}', space=vmem, size = 0x1000, scoped, tag = 'scratch operand']
  %s0 = inlined_call_operand.vmem [shape: bf16[4,9984], index: 0, kind: input, shape index: {}, may-alias: {0,1}]
  %s1 = inlined_call_operand.vmem [shape: bf16[4,9984], index: 1, kind: input, shape index: {}, may-alias: {0,1}]
  %s2 = inlined_call_operand.vmem [shape: bf16[8,108], index: 2, kind: input, shape index: {}]
  %s3 = inlined_call_operand.vmem [shape: bf16[1,9216], index: 3, kind: input, shape index: {}]
  %s4 = inlined_call_operand.vmem [shape: f32[8,1], index: 4, kind: input, shape index: {}]
  %s5 = inlined_call_operand.vmem [shape: f32[8,1], index: 5, kind: input, shape index: {}]
  %s6 = inlined_call_operand.vmem [shape: f32[8,9216], index: 6, kind: output, shape index: {}]
  %s7 = sld [smem:[#allocation0]]
  $region65: #{metric_block.1} parent=0
    _
  %s9 = ssub.s32 1, %s7
  %s10 = scalar_select 0, %s9, %s7
  loop: start=0, step=1, limit=4
  $region2: #{metric_block.1} parent=0 // loop_pre_header
    _
  $region3: #{metric_block.1} parent=0 // loop_header
    %s12 = sphi 0, %s16
    %p13 = scmp.ge.s32.totalorder %s12, 4
    %s22 = sphi 0, %s24
    %s25 = sphi 0, %s22
    %s26 = sphi 0, %s25
    %s42 = sphi 0, %s26
    %s52 = sphi 0, %s54
    %s55 = sphi 0, %s52
    %s56 = sphi 0, %s55
    %s72 = sphi 0, %s56
    %s76 = sphi 0, %s76
    %s78 = sphi 0, %s76
    %s79 = sphi 0, %s78
    %s93 = sphi 0, %s79
    %s99 = sphi 0, %s101
    %s102 = sphi 0, %s99
    %s103 = sphi 0, %s102
    %s119 = sphi 0, %s103
    %s123 = sphi 0, %s123
    %s125 = sphi 0, %s123
    %s126 = sphi 0, %s125
    %s140 = sphi 0, %s126
    %s144 = sphi 0, %s144
    %s146 = sphi 0, %s144
    %s147 = sphi 0, %s146
    %s161 = sphi 0, %s147
    %s165 = sphi 0, %s165
    %s167 = sphi 0, %s165
    %s168 = sphi 0, %s167
    %s182 = sphi 0, %s168
  $region4: #{metric_block.1} parent=0 // loop_header_branch
    %15 = sbr.rel (%p13) target = $region8
  $region5: #{metric_block.1} parent=0 // loop_body
    %s17 = ssub.s32 %s12, 1
    %s18 = ssub.s32 %s12, 2
    %s19 = sadd.s32 %s12, 1
    %s20 = ssub.s32 %s12, %s19
    %p21 = scmp.eq.s32.totalorder %s20, 0
    %s23 = sadd.s32 %s22, 1
    %s24 = scalar_select %p21, %s22, %s23
    %p27 = pneg %p21
    %p28 = scmp.eq.s32.totalorder %s12, 1
    %p29 = por %p27, %p28
    %p30 = scmp.ne.s32.totalorder %s22, %s25
    %p31 = scmp.eq.s32.totalorder %s12, 0
    %p32 = por %p30, %p31
    %p33 = scmp.ne.s32.totalorder %s22, %s25
    %p34 = scmp.eq.s32.totalorder %s17, 1
    %p35 = por %p33, %p34
    %p36 = scmp.ne.s32.totalorder %s25, %s26
    %p37 = scmp.eq.s32.totalorder %s17, 0
    %p38 = por %p36, %p37
    %p39 = scmp.ne.s32.totalorder %s25, %s26
    %p40 = scmp.eq.s32.totalorder %s18, 1
    %p41 = por %p39, %p40
    %p43 = scmp.ne.s32.totalorder %s26, %s42
    %p44 = scmp.eq.s32.totalorder %s18, 0
    %p45 = por %p43, %p44
    %s46 = sadd.s32 %s12, 1
    %s47 = smul.u32 %s46, 6
    %s48 = sadd.s32 %s19, 1
    %s49 = smul.u32 %s48, 6
    %s50 = ssub.s32 %s47, %s49
    %p51 = scmp.eq.s32.totalorder %s50, 0
    %s53 = sadd.s32 %s52, 1
    %s54 = scalar_select %p51, %s52, %s53
    %p57 = pneg %p51
    %p58 = scmp.eq.s32.totalorder %s12, 1
    %p59 = por %p57, %p58
    %p60 = scmp.ne.s32.totalorder %s52, %s55
    %p61 = scmp.eq.s32.totalorder %s12, 0
    %p62 = por %p60, %p61
    %p63 = scmp.ne.s32.totalorder %s52, %s55
    %p64 = scmp.eq.s32.totalorder %s17, 1
    %p65 = por %p63, %p64
    %p66 = scmp.ne.s32.totalorder %s55, %s56
    %p67 = scmp.eq.s32.totalorder %s17, 0
    %p68 = por %p66, %p67
    %p69 = scmp.ne.s32.totalorder %s55, %s56
    %p70 = scmp.eq.s32.totalorder %s18, 1
    %p71 = por %p69, %p70
    %p73 = scmp.ne.s32.totalorder %s56, %s72
    %p74 = scmp.eq.s32.totalorder %s18, 0
    %p75 = por %p73, %p74
    %s77 = sadd.s32 %s76, 1
    %p80 = scmp.eq.s32.totalorder %s12, 1
    %p81 = scmp.ne.s32.totalorder %s76, %s78
    %p82 = scmp.eq.s32.totalorder %s12, 0
    %p83 = por %p81, %p82
    %p84 = scmp.ne.s32.totalorder %s76, %s78
    %p85 = scmp.eq.s32.totalorder %s17, 1
    %p86 = por %p84, %p85
    %p87 = scmp.ne.s32.totalorder %s78, %s79
    %p88 = scmp.eq.s32.totalorder %s17, 0
    %p89 = por %p87, %p88
    %p90 = scmp.ne.s32.totalorder %s78, %s79
    %p91 = scmp.eq.s32.totalorder %s18, 1
    %p92 = por %p90, %p91
    %p94 = scmp.ne.s32.totalorder %s79, %s93
    %p95 = scmp.eq.s32.totalorder %s18, 0
    %p96 = por %p94, %p95
    %s97 = ssub.s32 %s12, %s19
    %p98 = scmp.eq.s32.totalorder %s97, 0
    %s100 = sadd.s32 %s99, 1
    %s101 = scalar_select %p98, %s99, %s100
    %p104 = pneg %p98
    %p105 = scmp.eq.s32.totalorder %s12, 1
    %p106 = por %p104, %p105
    %p107 = scmp.ne.s32.totalorder %s99, %s102
    %p108 = scmp.eq.s32.totalorder %s12, 0
    %p109 = por %p107, %p108
    %p110 = scmp.ne.s32.totalorder %s99, %s102
    %p111 = scmp.eq.s32.totalorder %s17, 1
    %p112 = por %p110, %p111
    %p113 = scmp.ne.s32.totalorder %s102, %s103
    %p114 = scmp.eq.s32.totalorder %s17, 0
    %p115 = por %p113, %p114
    %p116 = scmp.ne.s32.totalorder %s102, %s103
    %p117 = scmp.eq.s32.totalorder %s18, 1
    %p118 = por %p116, %p117
    %p120 = scmp.ne.s32.totalorder %s103, %s119
    %p121 = scmp.eq.s32.totalorder %s18, 0
    %p122 = por %p120, %p121
    %s124 = sadd.s32 %s123, 1
    %p127 = scmp.eq.s32.totalorder %s12, 1
    %p128 = scmp.ne.s32.totalorder %s123, %s125
    %p129 = scmp.eq.s32.totalorder %s12, 0
    %p130 = por %p128, %p129
    %p131 = scmp.ne.s32.totalorder %s123, %s125
    %p132 = scmp.eq.s32.totalorder %s17, 1
    %p133 = por %p131, %p132
    %p134 = scmp.ne.s32.totalorder %s125, %s126
    %p135 = scmp.eq.s32.totalorder %s17, 0
    %p136 = por %p134, %p135
    %p137 = scmp.ne.s32.totalorder %s125, %s126
    %p138 = scmp.eq.s32.totalorder %s18, 1
    %p139 = por %p137, %p138
    %p141 = scmp.ne.s32.totalorder %s126, %s140
    %p142 = scmp.eq.s32.totalorder %s18, 0
    %p143 = por %p141, %p142
    %s145 = sadd.s32 %s144, 1
    %p148 = scmp.eq.s32.totalorder %s12, 1
    %p149 = scmp.ne.s32.totalorder %s144, %s146
    %p150 = scmp.eq.s32.totalorder %s12, 0
    %p151 = por %p149, %p150
    %p152 = scmp.ne.s32.totalorder %s144, %s146
    %p153 = scmp.eq.s32.totalorder %s17, 1
    %p154 = por %p152, %p153
    %p155 = scmp.ne.s32.totalorder %s146, %s147
    %p156 = scmp.eq.s32.totalorder %s17, 0
    %p157 = por %p155, %p156
    %p158 = scmp.ne.s32.totalorder %s146, %s147
    %p159 = scmp.eq.s32.totalorder %s18, 1
    %p160 = por %p158, %p159
    %p162 = scmp.ne.s32.totalorder %s147, %s161
    %p163 = scmp.eq.s32.totalorder %s18, 0
    %p164 = por %p162, %p163
    %s166 = sadd.s32 %s165, 1
    %p169 = scmp.eq.s32.totalorder %s12, 1
    %p170 = scmp.ne.s32.totalorder %s165, %s167
    %p171 = scmp.eq.s32.totalorder %s12, 0
    %p172 = por %p170, %p171
    %p173 = scmp.ne.s32.totalorder %s165, %s167
    %p174 = scmp.eq.s32.totalorder %s17, 1
    %p175 = por %p173, %p174
    %p176 = scmp.ne.s32.totalorder %s167, %s168
    %p177 = scmp.eq.s32.totalorder %s17, 0
    %p178 = por %p176, %p177
    %p179 = scmp.ne.s32.totalorder %s167, %s168
    %p180 = scmp.eq.s32.totalorder %s18, 1
    %p181 = por %p179, %p180
    %p183 = scmp.ne.s32.totalorder %s168, %s182
    %p184 = scmp.eq.s32.totalorder %s18, 0
    %p185 = por %p183, %p184
    %p186 = scmp.le.s32.totalorder 1, %s12
    %p187 = scmp.lt.s32.totalorder %s12, 3
    %p188 = pnand %p186, %p187
    %p189 = pneg %p188
    // Predicated region
    $region9: #{metric_block.1} parent=5 // pred_check
      _
    $region10: #{metric_block.1} parent=5 // pred_check_branch
      %191 = sbr.rel (%p188) target = $region12
    $region11: #{metric_block.1} parent=5 // pred_region
      %s192 = ssub.s32 %s12, 1
      // Predicated region
      $region13: #{metric_block.1} parent=11 // pred_check
        %p193 = pneg %p89
      $region14: #{metric_block.1} parent=11 // pred_check_branch
        %195 = sbr.rel (%p193) target = $region16
      $region15: #{metric_block.1} parent=11 // pred_region
        _
      $region16: #{metric_block.1} parent=11 // pred_fallthru
        _
      // Predicated region
      $region17: #{metric_block.1} parent=11 // pred_check
        %p196 = pneg %p136
      $region18: #{metric_block.1} parent=11 // pred_check_branch
        %198 = sbr.rel (%p196) target = $region20
      $region19: #{metric_block.1} parent=11 // pred_region
        _
      $region20: #{metric_block.1} parent=11 // pred_fallthru
        _
      // Predicated region
      $region21: #{metric_block.1} parent=11 // pred_check
        %p199 = pneg %p157
      $region22: #{metric_block.1} parent=11 // pred_check_branch
        %201 = sbr.rel (%p199) target = $region24
      $region23: #{metric_block.1} parent=11 // pred_region
        _
      $region24: #{metric_block.1} parent=11 // pred_fallthru
        _
    $region12: #{metric_block.1} parent=5 // pred_fallthru
      _
    %p202 = scmp.lt.s32.totalorder %s12, 2
    // Predicated region
    $region25: #{metric_block.1} parent=5 // pred_check
      %p203 = pneg %p202
    $region26: #{metric_block.1} parent=5 // pred_check_branch
      %205 = sbr.rel (%p203) target = $region28
    $region27: #{metric_block.1} parent=5 // pred_region
      // Predicated region
      $region29: #{metric_block.1} parent=27 // pred_check
        %p206 = pneg %p32
      $region30: #{metric_block.1} parent=27 // pred_check_branch
        %208 = sbr.rel (%p206) target = $region32
      $region31: #{metric_block.1} parent=27 // pred_region
        %s209 = smul.u32 36, %s12
        %s210 = ssub.s32 78, %s209
        %p211 = scmp.lt.s32.totalorder %s210, 36
        %s212 = scalar_select %p211, %s210, 36
        %s213 = smul.u32 2, %s212
        %p214 = scmp.lt.s32.totalorder %s209, 77
        %s215 = scalar_select %p214, %s209, 77
        %s216 = smul.addr %s215, 2
        %s217 = scalar_lea.vmem %s0, %s216
        %s218 = smul.u32 36, %s12
        %s219 = ssub.s32 78, %s218
        %p220 = scmp.lt.s32.totalorder %s219, 36
        %s221 = scalar_select %p220, %s219, 36
        %s222 = smul.u32 2, %s221
      $region32: #{metric_block.1} parent=27 // pred_fallthru
        _
      // Predicated region
      $region33: #{metric_block.1} parent=27 // pred_check
        %p223 = pneg %p62
      $region34: #{metric_block.1} parent=27 // pred_check_branch
        %225 = sbr.rel (%p223) target = $region36
      $region35: #{metric_block.1} parent=27 // pred_region
        %s226 = sadd.s32 %s12, 1
        %s227 = smul.u32 %s226, 6
        %s228 = smul.u32 6, %s227
        %p229 = scmp.lt.s32.totalorder %s228, 77
        %s230 = scalar_select %p229, %s228, 77
        %s231 = smul.addr %s230, 2
        %s232 = scalar_lea.vmem %s1, %s231
        %s233 = sadd.s32 %s12, 1
        %s234 = smul.u32 %s233, 6
        %s235 = smul.u32 6, %s234
      $region36: #{metric_block.1} parent=27 // pred_fallthru
        _
      // Predicated region
      $region37: #{metric_block.1} parent=27 // pred_check
        %p236 = pneg %p109
      $region38: #{metric_block.1} parent=27 // pred_check_branch
        %238 = sbr.rel (%p236) target = $region40
      $region39: #{metric_block.1} parent=27 // pred_region
        %s239 = smul.u32 36, %s12
        %p240 = scmp.lt.s32.totalorder %s239, 71
        %s241 = scalar_select %p240, %s239, 71
        %s242 = scalar_lea.vmem %s3, %s241
        %s243 = smul.u32 36, %s12
      $region40: #{metric_block.1} parent=27 // pred_fallthru
        _
    $region28: #{metric_block.1} parent=5 // pred_fallthru
      _
    %p244 = scmp.le.s32.totalorder 1, %s12
    %p245 = scmp.lt.s32.totalorder %s12, 3
    %p246 = pnand %p244, %p245
    %p247 = pneg %p246
    // Predicated region
    $region41: #{metric_block.1} parent=5 // pred_check
      _
    $region42: #{metric_block.1} parent=5 // pred_check_branch
      %249 = sbr.rel (%p246) target = $region44
    $region43: #{metric_block.1} parent=5 // pred_region
      %s250 = ssub.s32 %s12, 1
      %s251 = smul.u32 36, %s17
      %s252 = ssub.s32 78, %s251
      %p253 = scmp.lt.s32.totalorder %s252, 36
      %s254 = scalar_select %p253, %s252, 36
      %s255 = smul.u32 2, %s254
      %p256 = scmp.lt.s32.totalorder %s251, 77
      %s257 = scalar_select %p256, %s251, 77
      %s258 = smul.addr %s257, 2
      %s259 = scalar_lea.vmem %s0, %s258
      %p260 = pneg %p38
      %p261 = pneg %p35
      %s262 = sadd.s32 %s17, 1
      %s263 = smul.u32 %s262, 6
      %s264 = smul.u32 6, %s263
      %p265 = scmp.lt.s32.totalorder %s264, 77
      %s266 = scalar_select %p265, %s264, 77
      %s267 = smul.addr %s266, 2
      %s268 = scalar_lea.vmem %s1, %s267
      %p269 = pneg %p68
      %p270 = pneg %p65
      %p271 = pneg %p89
      %p272 = pneg %p86
      %s273 = smul.u32 36, %s17
      %p274 = scmp.lt.s32.totalorder %s273, 71
      %s275 = scalar_select %p274, %s273, 71
      %s276 = scalar_lea.vmem %s3, %s275
      %p277 = pneg %p115
      %p278 = pneg %p112
      %p279 = pneg %p136
      %p280 = pneg %p133
      %p281 = pneg %p157
      %p282 = pneg %p154
      %p283 = pneg %p178
      %p284 = pneg %p175
      %s285 = smul.u32 36, %s17
      %s286 = ssub.s32 78, %s285
      %p287 = scmp.lt.s32.totalorder %s286, 36
      %s288 = scalar_select %p287, %s286, 36
      %s289 = smul.u32 2, %s288
      %p290 = scmp.lt.s32.totalorder %s285, 77
      %s291 = scalar_select %p290, %s285, 77
      %s292 = smul.addr %s291, 2
      %s293 = scalar_lea.vmem %s0, %s292
      %s294 = smul.u32 36, %s17
      %s295 = ssub.s32 78, %s294
      %p296 = scmp.lt.s32.totalorder %s295, 36
      %s297 = scalar_select %p296, %s295, 36
      %s298 = smul.u32 2, %s297
      %s299 = sadd.s32 %s17, 1
      %s300 = smul.u32 %s299, 6
      %s301 = smul.u32 6, %s300
      %p302 = scmp.lt.s32.totalorder %s301, 77
      %s303 = scalar_select %p302, %s301, 77
      %s304 = smul.addr %s303, 2
      %s305 = scalar_lea.vmem %s1, %s304
      %s306 = sadd.s32 %s17, 1
      %s307 = smul.u32 %s306, 6
      %s308 = smul.u32 6, %s307
      %s309 = smul.u32 36, %s17
      %p310 = scmp.lt.s32.totalorder %s309, 71
      %s311 = scalar_select %p310, %s309, 71
      %s312 = scalar_lea.vmem %s3, %s311
      %s313 = smul.u32 36, %s17
      %p315 = scmp.eq.s32.totalorder %s17, 0
      // Predicated region
      $region45: #{metric_block.1} parent=43 // pred_check
        %p316 = pneg %p315
      $region46: #{metric_block.1} parent=43 // pred_check_branch
        %318 = sbr.rel (%p316) target = $region48
      $region47: #{metric_block.1} parent=43 // pred_region
        %vm319 = vcmask 7168
        %320 = vst.msk [vmem:[#allocation4] sm:$0xff] %vm319, 0.0
        %321 = vst.msk [vmem:[#allocation5] sm:$0xff] %vm319, 0.0
      $region48: #{metric_block.1} parent=43 // pred_fallthru
        _
      %v322 = vld [vmem:[%s293] sm:$0xff]
      %v323 = vld [vmem:[%s293 + $0x8] sm:$0xff]
      %v324 = vld [vmem:[%s293 + $0x10] sm:$0xff]
      %v325 = vld [vmem:[%s293 + $0x18] sm:$0xff]
      %v326 = vld [vmem:[%s293 + $0x20] sm:$0xff]
      %v327 = vld [vmem:[%s293 + $0x28] sm:$0xff]
      %v328 = vld [vmem:[%s293 + $0x30] sm:$0xff]
      %v329 = vld [vmem:[%s293 + $0x38] sm:$0xff]
      %v330 = vld [vmem:[%s293 + $0x40] sm:$0xff]
      %331 = vst [vmem:[#allocation2] sm:$0xff] %v322
      %332 = vst [vmem:[#allocation2 + $0x8] sm:$0xff] %v323
      %333 = vst [vmem:[#allocation2 + $0x10] sm:$0xff] %v324
      %334 = vst [vmem:[#allocation2 + $0x18] sm:$0xff] %v325
      %335 = vst [vmem:[#allocation2 + $0x20] sm:$0xff] %v326
      %336 = vst [vmem:[#allocation2 + $0x28] sm:$0xff] %v327
      %337 = vst [vmem:[#allocation2 + $0x30] sm:$0xff] %v328
      %338 = vst [vmem:[#allocation2 + $0x38] sm:$0xff] %v329
      %339 = vst [vmem:[#allocation2 + $0x40] sm:$0xff] %v330
      %v340 = vld [vmem:[%s305] sm:$0xff]
      %v341 = vld [vmem:[%s305 + $0x8] sm:$0xf]
      %342 = vst [vmem:[#allocation2 + $0x48] sm:$0xff] %v340
      %343 = vst [vmem:[#allocation2 + $0x50] sm:$0xf] %v341
      %v344 = vld [vmem:[#allocation2] sm:$0xff]
      %v345 = vld [vmem:[#allocation2 + $0x8] sm:$0xff]
      %v346 = vld [vmem:[#allocation2 + $0x10] sm:$0xff]
      %v347 = vld [vmem:[#allocation2 + $0x18] sm:$0xff]
      %v348 = vld [vmem:[#allocation2 + $0x20] sm:$0xff]
      %v349 = vld [vmem:[#allocation2 + $0x28] sm:$0xff]
      %v350 = vld [vmem:[#allocation2 + $0x30] sm:$0xff]
      %v351 = vld [vmem:[#allocation2 + $0x38] sm:$0xff]
      %v352 = vld [vmem:[#allocation2 + $0x40] sm:$0xff]
      %354 = vst [vmem:[#allocation1] ss:$2 sm:$0xff] %v344
      %s356 = scalar_lea.vmem [#allocation1], 16
      %357 = vst [vmem:[%s356] ss:$2 sm:$0xff] %v345
      %s359 = scalar_lea.vmem [#allocation1], 32
      %360 = vst [vmem:[%s359] ss:$2 sm:$0xff] %v346
      %s362 = scalar_lea.vmem [#allocation1], 48
      %363 = vst [vmem:[%s362] ss:$2 sm:$0xff] %v347
      %v364 = vld.sshfl [vmem:[#allocation1] sm:$0xff pattern:$0x75643120]
      %v365 = vld.sshfl [vmem:[#allocation1 + $0x8] sm:$0xff pattern:$0x75643120]
      %v366 = vld.sshfl [vmem:[#allocation1 + $0x10] sm:$0xff pattern:$0x75643120]
      %v367 = vld.sshfl [vmem:[#allocation1 + $0x18] sm:$0xff pattern:$0x75643120]
      %v368 = vld.sshfl [vmem:[#allocation1 + $0x20] sm:$0xff pattern:$0x75643120]
      %v369 = vld.sshfl [vmem:[#allocation1 + $0x28] sm:$0xff pattern:$0x75643120]
      %v370 = vld.sshfl [vmem:[#allocation1 + $0x30] sm:$0xff pattern:$0x75643120]
      %v371 = vld.sshfl [vmem:[#allocation1 + $0x38] sm:$0xff pattern:$0x75643120]
      %373 = vst [vmem:[#allocation1] ss:$2 sm:$0xff] %v348
      %375 = vst [vmem:[%s356] ss:$2 sm:$0xff] %v349
      %377 = vst [vmem:[%s359] ss:$2 sm:$0xff] %v350
      %379 = vst [vmem:[%s362] ss:$2 sm:$0xff] %v351
      %v380 = vld.sshfl [vmem:[#allocation1] sm:$0xff pattern:$0x75643120]
      %v381 = vld.sshfl [vmem:[#allocation1 + $0x8] sm:$0xff pattern:$0x75643120]
      %v382 = vld.sshfl [vmem:[#allocation1 + $0x10] sm:$0xff pattern:$0x75643120]
      %v383 = vld.sshfl [vmem:[#allocation1 + $0x18] sm:$0xff pattern:$0x75643120]
      %v384 = vld.sshfl [vmem:[#allocation1 + $0x20] sm:$0xff pattern:$0x75643120]
      %v385 = vld.sshfl [vmem:[#allocation1 + $0x28] sm:$0xff pattern:$0x75643120]
      %v386 = vld.sshfl [vmem:[#allocation1 + $0x30] sm:$0xff pattern:$0x75643120]
      %v387 = vld.sshfl [vmem:[#allocation1 + $0x38] sm:$0xff pattern:$0x75643120]
      %389 = vst [vmem:[#allocation1] ss:$2 sm:$0xff] %v352
      %v390 = vld.sshfl [vmem:[#allocation1] sm:$0xff pattern:$0x75643120]
      %v391 = vld.sshfl [vmem:[#allocation1 + $0x8] sm:$0xff pattern:$0x75643120]
      %410 = vst [vmem:[#allocation3] sm:$0x33] %v364
      %411 = vst [vmem:[#allocation3 + $0x8] sm:$0x33] %v365
      %412 = vst [vmem:[#allocation3 + $0x10] sm:$0x33] %v366
      %413 = vst [vmem:[#allocation3 + $0x18] sm:$0x33] %v367
      %414 = vst [vmem:[#allocation3 + $0x20] sm:$0x33] %v368
      %415 = vst [vmem:[#allocation3 + $0x28] sm:$0x33] %v369
      %416 = vst [vmem:[#allocation3 + $0x30] sm:$0x33] %v370
      %417 = vst [vmem:[#allocation3 + $0x38] sm:$0x33] %v371
      %418 = vst [vmem:[#allocation3 + $0x40] sm:$0x33] %v380
      %419 = vst [vmem:[#allocation3 + $0x48] sm:$0x33] %v381
      %420 = vst [vmem:[#allocation3 + $0x50] sm:$0x33] %v382
      %421 = vst [vmem:[#allocation3 + $0x58] sm:$0x33] %v383
      %422 = vst [vmem:[#allocation3 + $0x60] sm:$0x33] %v384
      %423 = vst [vmem:[#allocation3 + $0x68] sm:$0x33] %v385
      %424 = vst [vmem:[#allocation3 + $0x70] sm:$0x33] %v386
      %425 = vst [vmem:[#allocation3 + $0x78] sm:$0x33] %v387
      %426 = vst [vmem:[#allocation3 + $0x80] sm:$0x33] %v390
      %427 = vst [vmem:[#allocation3 + $0x88] sm:$0x33] %v391
      %v428 = vld [vmem:[#allocation2] sm:$0xff]
      %v429 = vld [vmem:[#allocation2 + $0x8] sm:$0xff]
      %v430 = vld [vmem:[#allocation2 + $0x10] sm:$0xff]
      %v431 = vld [vmem:[#allocation2 + $0x18] sm:$0xff]
      %v432 = vld [vmem:[#allocation2 + $0x20] sm:$0xff]
      %v433 = vld [vmem:[#allocation2 + $0x28] sm:$0xff]
      %v434 = vld [vmem:[#allocation2 + $0x30] sm:$0xff]
      %v435 = vld [vmem:[#allocation2 + $0x38] sm:$0xff]
      %v436 = vld [vmem:[#allocation2 + $0x40] sm:$0xff]
      %v437 = vld [vmem:[#allocation2 + $0x48] sm:$0x3]
      %s439 = scalar_lea.vmem [#allocation1], 1
      %440 = vst [vmem:[%s439] ss:$2 sm:$0xff] %v428
      %s442 = scalar_lea.vmem [#allocation1], 17
      %443 = vst [vmem:[%s442] ss:$2 sm:$0xff] %v429
      %s445 = scalar_lea.vmem [#allocation1], 33
      %446 = vst [vmem:[%s445] ss:$2 sm:$0xff] %v430
      %s448 = scalar_lea.vmem [#allocation1], 49
      %449 = vst [vmem:[%s448] ss:$2 sm:$0xff] %v431
      %v450 = vld.sshfl [vmem:[#allocation1] sm:$0xff pattern:$0x75643120]
      %v452 = vld.sshfl [vmem:[#allocation1 + $0x8] sm:$0xff pattern:$0x75643120]
      %v454 = vld.sshfl [vmem:[#allocation1 + $0x10] sm:$0xff pattern:$0x75643120]
      %v456 = vld.sshfl [vmem:[#allocation1 + $0x18] sm:$0xff pattern:$0x75643120]
      %v458 = vld.sshfl [vmem:[#allocation1 + $0x20] sm:$0xff pattern:$0x75643120]
      %v460 = vld.sshfl [vmem:[#allocation1 + $0x28] sm:$0xff pattern:$0x75643120]
      %v462 = vld.sshfl [vmem:[#allocation1 + $0x30] sm:$0xff pattern:$0x75643120]
      %v464 = vld.sshfl [vmem:[#allocation1 + $0x38] sm:$0xff pattern:$0x75643120]
      %467 = vst [vmem:[%s439] ss:$2 sm:$0xff] %v432
      %469 = vst [vmem:[%s442] ss:$2 sm:$0xff] %v433
      %471 = vst [vmem:[%s445] ss:$2 sm:$0xff] %v434
      %473 = vst [vmem:[%s448] ss:$2 sm:$0xff] %v435
      %v474 = vld.sshfl [vmem:[#allocation1] sm:$0xff pattern:$0x75643120]
      %v476 = vld.sshfl [vmem:[#allocation1 + $0x8] sm:$0xff pattern:$0x75643120]
      %v478 = vld.sshfl [vmem:[#allocation1 + $0x10] sm:$0xff pattern:$0x75643120]
      %v480 = vld.sshfl [vmem:[#allocation1 + $0x18] sm:$0xff pattern:$0x75643120]
      %v482 = vld.sshfl [vmem:[#allocation1 + $0x20] sm:$0xff pattern:$0x75643120]
      %v484 = vld.sshfl [vmem:[#allocation1 + $0x28] sm:$0xff pattern:$0x75643120]
      %v486 = vld.sshfl [vmem:[#allocation1 + $0x30] sm:$0xff pattern:$0x75643120]
      %v488 = vld.sshfl [vmem:[#allocation1 + $0x38] sm:$0xff pattern:$0x75643120]
      %491 = vst [vmem:[%s439] ss:$2 sm:$0xff] %v436
      %493 = vst [vmem:[%s442] ss:$2 sm:$0xff] %v437
      %v494 = vld.sshfl [vmem:[#allocation1] sm:$0xff pattern:$0x75643120]
      %v496 = vld.sshfl [vmem:[#allocation1 + $0x8] sm:$0xff pattern:$0x75643120]
      %v498 = vld.sshfl [vmem:[#allocation1 + $0x10] sm:$0xff pattern:$0x75643120]
      %500 = vrot.lane.b32.xlu0 %v450, 127
      %v501 = vpop.permute.xlu0 %500
      %502 = vrot.lane.b32.xlu0 %v452, 127
      %v503 = vpop.permute.xlu0 %502
      %504 = vrot.lane.b32.xlu0 %v454, 127
      %v505 = vpop.permute.xlu0 %504
      %506 = vrot.lane.b32.xlu0 %v456, 127
      %v507 = vpop.permute.xlu0 %506
      %508 = vrot.lane.b32.xlu0 %v458, 127
      %v509 = vpop.permute.xlu0 %508
      %510 = vrot.lane.b32.xlu0 %v460, 127
      %v511 = vpop.permute.xlu0 %510
      %512 = vrot.lane.b32.xlu0 %v462, 127
      %v513 = vpop.permute.xlu0 %512
      %514 = vrot.lane.b32.xlu0 %v464, 127
      %v515 = vpop.permute.xlu0 %514
      %516 = vrot.lane.b32.xlu0 %v474, 127
      %v517 = vpop.permute.xlu0 %516
      %518 = vrot.lane.b32.xlu0 %v476, 127
      %v519 = vpop.permute.xlu0 %518
      %520 = vrot.lane.b32.xlu0 %v478, 127
      %v521 = vpop.permute.xlu0 %520
      %522 = vrot.lane.b32.xlu0 %v480, 127
      %v523 = vpop.permute.xlu0 %522
      %524 = vrot.lane.b32.xlu0 %v482, 127
      %v525 = vpop.permute.xlu0 %524
      %526 = vrot.lane.b32.xlu0 %v484, 127
      %v527 = vpop.permute.xlu0 %526
      %528 = vrot.lane.b32.xlu0 %v486, 127
      %v529 = vpop.permute.xlu0 %528
      %530 = vrot.lane.b32.xlu0 %v488, 127
      %v531 = vpop.permute.xlu0 %530
      %532 = vrot.lane.b32.xlu0 %v494, 127
      %v533 = vpop.permute.xlu0 %532
      %534 = vrot.lane.b32.xlu0 %v496, 127
      %v535 = vpop.permute.xlu0 %534
      %536 = vrot.lane.b32.xlu0 %v498, 127
      %v537 = vpop.permute.xlu0 %536
      %v538 = vrot.slane %v501, 4
      %v539 = vrot.slane %v503, 4
      %v540 = vrot.slane %v505, 4
      %v541 = vrot.slane %v507, 4
      %v542 = vrot.slane %v509, 4
      %v543 = vrot.slane %v511, 4
      %v544 = vrot.slane %v513, 4
      %v545 = vrot.slane %v515, 4
      %v546 = vrot.slane %v517, 4
      %v547 = vrot.slane %v519, 4
      %v548 = vrot.slane %v521, 4
      %v549 = vrot.slane %v523, 4
      %v550 = vrot.slane %v525, 4
      %v551 = vrot.slane %v527, 4
      %v552 = vrot.slane %v529, 4
      %v553 = vrot.slane %v531, 4
      %v554 = vrot.slane %v533, 4
      %v555 = vrot.slane %v535, 4
      %v556 = vrot.slane %v537, 4
      %vm557 = vcmask 1043456
      %v558 = vsel %vm557, %v538, %v539
      %vm559 = vcmask 1039360
      %v560 = vsel %vm559, %v501, %v558
      %v561 = vsel %vm557, %v539, %v540
      %v562 = vsel %vm559, %v503, %v561
      %v563 = vsel %vm557, %v540, %v541
      %v564 = vsel %vm559, %v505, %v563
      %v565 = vsel %vm557, %v541, %v542
      %v566 = vsel %vm559, %v507, %v565
      %v567 = vsel %vm557, %v542, %v543
      %v568 = vsel %vm559, %v509, %v567
      %v569 = vsel %vm557, %v543, %v544
      %v570 = vsel %vm559, %v511, %v569
      %v571 = vsel %vm557, %v544, %v545
      %v572 = vsel %vm559, %v513, %v571
      %v573 = vsel %vm557, %v545, %v546
      %v574 = vsel %vm559, %v515, %v573
      %v575 = vsel %vm557, %v546, %v547
      %v576 = vsel %vm559, %v517, %v575
      %v577 = vsel %vm557, %v547, %v548
      %v578 = vsel %vm559, %v519, %v577
      %v579 = vsel %vm557, %v548, %v549
      %v580 = vsel %vm559, %v521, %v579
      %v581 = vsel %vm557, %v549, %v550
      %v582 = vsel %vm559, %v523, %v581
      %v583 = vsel %vm557, %v550, %v551
      %v584 = vsel %vm559, %v525, %v583
      %v585 = vsel %vm557, %v551, %v552
      %v586 = vsel %vm559, %v527, %v585
      %v587 = vsel %vm557, %v552, %v553
      %v588 = vsel %vm559, %v529, %v587
      %v589 = vsel %vm557, %v553, %v554
      %v590 = vsel %vm559, %v531, %v589
      %v591 = vsel %vm557, %v554, %v555
      %v592 = vsel %vm559, %v533, %v591
      %v593 = vsel %vm557, %v555, %v556
      %v594 = vsel %vm559, %v535, %v593
      %613 = vst [vmem:[#allocation3] sm:$0xcc] %v560
      %614 = vst [vmem:[#allocation3 + $0x8] sm:$0xcc] %v562
      %615 = vst [vmem:[#allocation3 + $0x10] sm:$0xcc] %v564
      %616 = vst [vmem:[#allocation3 + $0x18] sm:$0xcc] %v566
      %617 = vst [vmem:[#allocation3 + $0x20] sm:$0xcc] %v568
      %618 = vst [vmem:[#allocation3 + $0x28] sm:$0xcc] %v570
      %619 = vst [vmem:[#allocation3 + $0x30] sm:$0xcc] %v572
      %620 = vst [vmem:[#allocation3 + $0x38] sm:$0xcc] %v574
      %621 = vst [vmem:[#allocation3 + $0x40] sm:$0xcc] %v576
      %622 = vst [vmem:[#allocation3 + $0x48] sm:$0xcc] %v578
      %623 = vst [vmem:[#allocation3 + $0x50] sm:$0xcc] %v580
      %624 = vst [vmem:[#allocation3 + $0x58] sm:$0xcc] %v582
      %625 = vst [vmem:[#allocation3 + $0x60] sm:$0xcc] %v584
      %626 = vst [vmem:[#allocation3 + $0x68] sm:$0xcc] %v586
      %627 = vst [vmem:[#allocation3 + $0x70] sm:$0xcc] %v588
      %628 = vst [vmem:[#allocation3 + $0x78] sm:$0xcc] %v590
      %629 = vst [vmem:[#allocation3 + $0x80] sm:$0xcc] %v592
      %630 = vst [vmem:[#allocation3 + $0x88] sm:$0xcc] %v594
      %v631 = vld [vmem:[#allocation2] sm:$0xff]
      %v632 = vld [vmem:[#allocation2 + $0x8] sm:$0xff]
      %v633 = vld [vmem:[#allocation2 + $0x10] sm:$0xff]
      %v634 = vld [vmem:[#allocation2 + $0x18] sm:$0xff]
      %v635 = vld [vmem:[#allocation2 + $0x20] sm:$0xff]
      %v636 = vld [vmem:[#allocation2 + $0x28] sm:$0xff]
      %v637 = vld [vmem:[#allocation2 + $0x30] sm:$0xff]
      %v638 = vld [vmem:[#allocation2 + $0x38] sm:$0xff]
      %v639 = vld [vmem:[#allocation2 + $0x40] sm:$0xff]
      %v640 = vld [vmem:[#allocation2 + $0x48] sm:$0x3]
      %642 = vst [vmem:[#allocation1] ss:$2 sm:$0xff] %v631
      %s644 = scalar_lea.vmem [#allocation1], 16
      %645 = vst [vmem:[%s644] ss:$2 sm:$0xff] %v632
      %s647 = scalar_lea.vmem [#allocation1], 32
      %648 = vst [vmem:[%s647] ss:$2 sm:$0xff] %v633
      %s650 = scalar_lea.vmem [#allocation1], 48
      %651 = vst [vmem:[%s650] ss:$2 sm:$0xff] %v634
      %v652 = vld.sshfl [vmem:[#allocation1] sm:$0xff pattern:$0x75643120]
      %v654 = vld.sshfl [vmem:[#allocation1 + $0x8] sm:$0xff pattern:$0x75643120]
      %v656 = vld.sshfl [vmem:[#allocation1 + $0x10] sm:$0xff pattern:$0x75643120]
      %v658 = vld.sshfl [vmem:[#allocation1 + $0x18] sm:$0xff pattern:$0x75643120]
      %v660 = vld.sshfl [vmem:[#allocation1 + $0x20] sm:$0xff pattern:$0x75643120]
      %v662 = vld.sshfl [vmem:[#allocation1 + $0x28] sm:$0xff pattern:$0x75643120]
      %v664 = vld.sshfl [vmem:[#allocation1 + $0x30] sm:$0xff pattern:$0x75643120]
      %v666 = vld.sshfl [vmem:[#allocation1 + $0x38] sm:$0xff pattern:$0x75643120]
      %669 = vst [vmem:[#allocation1] ss:$2 sm:$0xff] %v635
      %671 = vst [vmem:[%s644] ss:$2 sm:$0xff] %v636
      %673 = vst [vmem:[%s647] ss:$2 sm:$0xff] %v637
      %675 = vst [vmem:[%s650] ss:$2 sm:$0xff] %v638
      %v676 = vld.sshfl [vmem:[#allocation1] sm:$0xff pattern:$0x75643120]
      %v678 = vld.sshfl [vmem:[#allocation1 + $0x8] sm:$0xff pattern:$0x75643120]
      %v680 = vld.sshfl [vmem:[#allocation1 + $0x10] sm:$0xff pattern:$0x75643120]
      %v682 = vld.sshfl [vmem:[#allocation1 + $0x18] sm:$0xff pattern:$0x75643120]
      %v684 = vld.sshfl [vmem:[#allocation1 + $0x20] sm:$0xff pattern:$0x75643120]
      %v686 = vld.sshfl [vmem:[#allocation1 + $0x28] sm:$0xff pattern:$0x75643120]
      %v688 = vld.sshfl [vmem:[#allocation1 + $0x30] sm:$0xff pattern:$0x75643120]
      %v690 = vld.sshfl [vmem:[#allocation1 + $0x38] sm:$0xff pattern:$0x75643120]
      %693 = vst [vmem:[#allocation1] ss:$2 sm:$0xff] %v639
      %695 = vst [vmem:[%s644] ss:$2 sm:$0xff] %v640
      %v696 = vld.sshfl [vmem:[#allocation1] sm:$0xff pattern:$0x75643120]
      %v698 = vld.sshfl [vmem:[#allocation1 + $0x8] sm:$0xff pattern:$0x75643120]
      %v700 = vld.sshfl [vmem:[#allocation1 + $0x10] sm:$0xff pattern:$0x75643120]
      %702 = vrot.lane.b32.xlu0 %v652, 126
      %v703 = vpop.permute.xlu0 %702
      %704 = vrot.lane.b32.xlu0 %v654, 126
      %v705 = vpop.permute.xlu0 %704
      %706 = vrot.lane.b32.xlu0 %v656, 126
      %v707 = vpop.permute.xlu0 %706
      %708 = vrot.lane.b32.xlu0 %v658, 126
      %v709 = vpop.permute.xlu0 %708
      %710 = vrot.lane.b32.xlu0 %v660, 126
      %v711 = vpop.permute.xlu0 %710
      %712 = vrot.lane.b32.xlu0 %v662, 126
      %v713 = vpop.permute.xlu0 %712
      %714 = vrot.lane.b32.xlu0 %v664, 126
      %v715 = vpop.permute.xlu0 %714
      %716 = vrot.lane.b32.xlu0 %v666, 126
      %v717 = vpop.permute.xlu0 %716
      %718 = vrot.lane.b32.xlu0 %v676, 126
      %v719 = vpop.permute.xlu0 %718
      %720 = vrot.lane.b32.xlu0 %v678, 126
      %v721 = vpop.permute.xlu0 %720
      %722 = vrot.lane.b32.xlu0 %v680, 126
      %v723 = vpop.permute.xlu0 %722
      %724 = vrot.lane.b32.xlu0 %v682, 126
      %v725 = vpop.permute.xlu0 %724
      %726 = vrot.lane.b32.xlu0 %v684, 126
      %v727 = vpop.permute.xlu0 %726
      %728 = vrot.lane.b32.xlu0 %v686, 126
      %v729 = vpop.permute.xlu0 %728
      %730 = vrot.lane.b32.xlu0 %v688, 126
      %v731 = vpop.permute.xlu0 %730
      %732 = vrot.lane.b32.xlu0 %v690, 126
      %v733 = vpop.permute.xlu0 %732
      %734 = vrot.lane.b32.xlu0 %v696, 126
      %v735 = vpop.permute.xlu0 %734
      %736 = vrot.lane.b32.xlu0 %v698, 126
      %v737 = vpop.permute.xlu0 %736
      %738 = vrot.lane.b32.xlu0 %v700, 126
      %v739 = vpop.permute.xlu0 %738
      %v740 = vrot.slane %v703, 4
      %v741 = vrot.slane %v705, 4
      %v742 = vrot.slane %v707, 4
      %v743 = vrot.slane %v709, 4
      %v744 = vrot.slane %v711, 4
      %v745 = vrot.slane %v713, 4
      %v746 = vrot.slane %v715, 4
      %v747 = vrot.slane %v717, 4
      %v748 = vrot.slane %v719, 4
      %v749 = vrot.slane %v721, 4
      %v750 = vrot.slane %v723, 4
      %v751 = vrot.slane %v725, 4
      %v752 = vrot.slane %v727, 4
      %v753 = vrot.slane %v729, 4
      %v754 = vrot.slane %v731, 4
      %v755 = vrot.slane %v733, 4
      %v756 = vrot.slane %v735, 4
      %v757 = vrot.slane %v737, 4
      %v758 = vrot.slane %v739, 4
      %v759 = vsel %vm557, %v740, %v741
      %vm760 = vcmask 1031168
      %v761 = vsel %vm760, %v703, %v759
      %v762 = vsel %vm557, %v741, %v742
      %v763 = vsel %vm760, %v705, %v762
      %v764 = vsel %vm557, %v742, %v743
      %v765 = vsel %vm760, %v707, %v764
      %v766 = vsel %vm557, %v743, %v744
      %v767 = vsel %vm760, %v709, %v766
      %v768 = vsel %vm557, %v744, %v745
      %v769 = vsel %vm760, %v711, %v768
      %v770 = vsel %vm557, %v745, %v746
      %v771 = vsel %vm760, %v713, %v770
      %v772 = vsel %vm557, %v746, %v747
      %v773 = vsel %vm760, %v715, %v772
      %v774 = vsel %vm557, %v747, %v748
      %v775 = vsel %vm760, %v717, %v774
      %v776 = vsel %vm557, %v748, %v749
      %v777 = vsel %vm760, %v719, %v776
      %v778 = vsel %vm557, %v749, %v750
      %v779 = vsel %vm760, %v721, %v778
      %v780 = vsel %vm557, %v750, %v751
      %v781 = vsel %vm760, %v723, %v780
      %v782 = vsel %vm557, %v751, %v752
      %v783 = vsel %vm760, %v725, %v782
      %v784 = vsel %vm557, %v752, %v753
      %v785 = vsel %vm760, %v727, %v784
      %v786 = vsel %vm557, %v753, %v754
      %v787 = vsel %vm760, %v729, %v786
      %v788 = vsel %vm557, %v754, %v755
      %v789 = vsel %vm760, %v731, %v788
      %v790 = vsel %vm557, %v755, %v756
      %v791 = vsel %vm760, %v733, %v790
      %v792 = vsel %vm557, %v756, %v757
      %v793 = vsel %vm760, %v735, %v792
      %v794 = vsel %vm557, %v757, %v758
      %v795 = vsel %vm760, %v737, %v794
      %814 = vst [vmem:[#allocation3 + $0x90] sm:$0x33] %v761
      %815 = vst [vmem:[#allocation3 + $0x98] sm:$0x33] %v763
      %816 = vst [vmem:[#allocation3 + $0xa0] sm:$0x33] %v765
      %817 = vst [vmem:[#allocation3 + $0xa8] sm:$0x33] %v767
      %818 = vst [vmem:[#allocation3 + $0xb0] sm:$0x33] %v769
      %819 = vst [vmem:[#allocation3 + $0xb8] sm:$0x33] %v771
      %820 = vst [vmem:[#allocation3 + $0xc0] sm:$0x33] %v773
      %821 = vst [vmem:[#allocation3 + $0xc8] sm:$0x33] %v775
      %822 = vst [vmem:[#allocation3 + $0xd0] sm:$0x33] %v777
      %823 = vst [vmem:[#allocation3 + $0xd8] sm:$0x33] %v779
      %824 = vst [vmem:[#allocation3 + $0xe0] sm:$0x33] %v781
      %825 = vst [vmem:[#allocation3 + $0xe8] sm:$0x33] %v783
      %826 = vst [vmem:[#allocation3 + $0xf0] sm:$0x33] %v785
      %827 = vst [vmem:[#allocation3 + $0xf8] sm:$0x33] %v787
      %828 = vst [vmem:[#allocation3 + $0x100] sm:$0x33] %v789
      %829 = vst [vmem:[#allocation3 + $0x108] sm:$0x33] %v791
      %830 = vst [vmem:[#allocation3 + $0x110] sm:$0x33] %v793
      %831 = vst [vmem:[#allocation3 + $0x118] sm:$0x33] %v795
      %v832 = vld [vmem:[#allocation2] sm:$0xff]
      %v833 = vld [vmem:[#allocation2 + $0x8] sm:$0xff]
      %v834 = vld [vmem:[#allocation2 + $0x10] sm:$0xff]
      %v835 = vld [vmem:[#allocation2 + $0x18] sm:$0xff]
      %v836 = vld [vmem:[#allocation2 + $0x20] sm:$0xff]
      %v837 = vld [vmem:[#allocation2 + $0x28] sm:$0xff]
      %v838 = vld [vmem:[#allocation2 + $0x30] sm:$0xff]
      %v839 = vld [vmem:[#allocation2 + $0x38] sm:$0xff]
      %v840 = vld [vmem:[#allocation2 + $0x40] sm:$0xff]
      %v841 = vld [vmem:[#allocation2 + $0x48] sm:$0x3]
      %s843 = scalar_lea.vmem [#allocation1], 1
      %844 = vst [vmem:[%s843] ss:$2 sm:$0xff] %v832
      %s846 = scalar_lea.vmem [#allocation1], 17
      %847 = vst [vmem:[%s846] ss:$2 sm:$0xff] %v833
      %s849 = scalar_lea.vmem [#allocation1], 33
      %850 = vst [vmem:[%s849] ss:$2 sm:$0xff] %v834
      %s852 = scalar_lea.vmem [#allocation1], 49
      %853 = vst [vmem:[%s852] ss:$2 sm:$0xff] %v835
      %v854 = vld.sshfl [vmem:[#allocation1] sm:$0xff pattern:$0x75643120]
      %v856 = vld.sshfl [vmem:[#allocation1 + $0x8] sm:$0xff pattern:$0x75643120]
      %v858 = vld.sshfl [vmem:[#allocation1 + $0x10] sm:$0xff pattern:$0x75643120]
      %v860 = vld.sshfl [vmem:[#allocation1 + $0x18] sm:$0xff pattern:$0x75643120]
      %v862 = vld.sshfl [vmem:[#allocation1 + $0x20] sm:$0xff pattern:$0x75643120]
      %v864 = vld.sshfl [vmem:[#allocation1 + $0x28] sm:$0xff pattern:$0x75643120]
      %v866 = vld.sshfl [vmem:[#allocation1 + $0x30] sm:$0xff pattern:$0x75643120]
      %v868 = vld.sshfl [vmem:[#allocation1 + $0x38] sm:$0xff pattern:$0x75643120]
      %871 = vst [vmem:[%s843] ss:$2 sm:$0xff] %v836
      %873 = vst [vmem:[%s846] ss:$2 sm:$0xff] %v837
      %875 = vst [vmem:[%s849] ss:$2 sm:$0xff] %v838
      %877 = vst [vmem:[%s852] ss:$2 sm:$0xff] %v839
      %v878 = vld.sshfl [vmem:[#allocation1] sm:$0xff pattern:$0x75643120]
      %v880 = vld.sshfl [vmem:[#allocation1 + $0x8] sm:$0xff pattern:$0x75643120]
      %v882 = vld.sshfl [vmem:[#allocation1 + $0x10] sm:$0xff pattern:$0x75643120]
      %v884 = vld.sshfl [vmem:[#allocation1 + $0x18] sm:$0xff pattern:$0x75643120]
      %v886 = vld.sshfl [vmem:[#allocation1 + $0x20] sm:$0xff pattern:$0x75643120]
      %v888 = vld.sshfl [vmem:[#allocation1 + $0x28] sm:$0xff pattern:$0x75643120]
      %v890 = vld.sshfl [vmem:[#allocation1 + $0x30] sm:$0xff pattern:$0x75643120]
      %v892 = vld.sshfl [vmem:[#allocation1 + $0x38] sm:$0xff pattern:$0x75643120]
      %895 = vst [vmem:[%s843] ss:$2 sm:$0xff] %v840
      %897 = vst [vmem:[%s846] ss:$2 sm:$0xff] %v841
      %v898 = vld.sshfl [vmem:[#allocation1] sm:$0xff pattern:$0x75643120]
      %v900 = vld.sshfl [vmem:[#allocation1 + $0x8] sm:$0xff pattern:$0x75643120]
      %v902 = vld.sshfl [vmem:[#allocation1 + $0x10] sm:$0xff pattern:$0x75643120]
      %904 = vrot.lane.b32.xlu0 %v854, 110
      %v905 = vpop.permute.xlu0 %904
      %906 = vrot.lane.b32.xlu0 %v856, 110
      %v907 = vpop.permute.xlu0 %906
      %908 = vrot.lane.b32.xlu0 %v858, 110
      %v909 = vpop.permute.xlu0 %908
      %910 = vrot.lane.b32.xlu0 %v860, 110
      %v911 = vpop.permute.xlu0 %910
      %912 = vrot.lane.b32.xlu0 %v862, 110
      %v913 = vpop.permute.xlu0 %912
      %914 = vrot.lane.b32.xlu0 %v864, 110
      %v915 = vpop.permute.xlu0 %914
      %916 = vrot.lane.b32.xlu0 %v866, 110
      %v917 = vpop.permute.xlu0 %916
      %918 = vrot.lane.b32.xlu0 %v868, 110
      %v919 = vpop.permute.xlu0 %918
      %920 = vrot.lane.b32.xlu0 %v878, 110
      %v921 = vpop.permute.xlu0 %920
      %922 = vrot.lane.b32.xlu0 %v880, 110
      %v923 = vpop.permute.xlu0 %922
      %924 = vrot.lane.b32.xlu0 %v882, 110
      %v925 = vpop.permute.xlu0 %924
      %926 = vrot.lane.b32.xlu0 %v884, 110
      %v927 = vpop.permute.xlu0 %926
      %928 = vrot.lane.b32.xlu0 %v886, 110
      %v929 = vpop.permute.xlu0 %928
      %930 = vrot.lane.b32.xlu0 %v888, 110
      %v931 = vpop.permute.xlu0 %930
      %932 = vrot.lane.b32.xlu0 %v890, 110
      %v933 = vpop.permute.xlu0 %932
      %934 = vrot.lane.b32.xlu0 %v892, 110
      %v935 = vpop.permute.xlu0 %934
      %936 = vrot.lane.b32.xlu0 %v898, 110
      %v937 = vpop.permute.xlu0 %936
      %938 = vrot.lane.b32.xlu0 %v900, 110
      %v939 = vpop.permute.xlu0 %938
      %940 = vrot.lane.b32.xlu0 %v902, 110
      %v941 = vpop.permute.xlu0 %940
      %v942 = vrot.slane %v905, 4
      %v943 = vrot.slane %v907, 4
      %v944 = vrot.slane %v909, 4
      %v945 = vrot.slane %v911, 4
      %v946 = vrot.slane %v913, 4
      %v947 = vrot.slane %v915, 4
      %v948 = vrot.slane %v917, 4
      %v949 = vrot.slane %v919, 4
      %v950 = vrot.slane %v921, 4
      %v951 = vrot.slane %v923, 4
      %v952 = vrot.slane %v925, 4
      %v953 = vrot.slane %v927, 4
      %v954 = vrot.slane %v929, 4
      %v955 = vrot.slane %v931, 4
      %v956 = vrot.slane %v933, 4
      %v957 = vrot.slane %v935, 4
      %v958 = vrot.slane %v937, 4
      %v959 = vrot.slane %v939, 4
      %v960 = vrot.slane %v941, 4
      %v961 = vsel %vm557, %v942, %v943
      %vm962 = vcmask 900096
      %v963 = vsel %vm962, %v905, %v961
      %v964 = vsel %vm557, %v943, %v944
      %v965 = vsel %vm962, %v907, %v964
      %v966 = vsel %vm557, %v944, %v945
      %v967 = vsel %vm962, %v909, %v966
      %v968 = vsel %vm557, %v945, %v946
      %v969 = vsel %vm962, %v911, %v968
      %v970 = vsel %vm557, %v946, %v947
      %v971 = vsel %vm962, %v913, %v970
      %v972 = vsel %vm557, %v947, %v948
      %v973 = vsel %vm962, %v915, %v972
      %v974 = vsel %vm557, %v948, %v949
      %v975 = vsel %vm962, %v917, %v974
      %v976 = vsel %vm557, %v949, %v950
      %v977 = vsel %vm962, %v919, %v976
      %v978 = vsel %vm557, %v950, %v951
      %v979 = vsel %vm962, %v921, %v978
      %v980 = vsel %vm557, %v951, %v952
      %v981 = vsel %vm962, %v923, %v980
      %v982 = vsel %vm557, %v952, %v953
      %v983 = vsel %vm962, %v925, %v982
      %v984 = vsel %vm557, %v953, %v954
      %v985 = vsel %vm962, %v927, %v984
      %v986 = vsel %vm557, %v954, %v955
      %v987 = vsel %vm962, %v929, %v986
      %v988 = vsel %vm557, %v955, %v956
      %v989 = vsel %vm962, %v931, %v988
      %v990 = vsel %vm557, %v956, %v957
      %v991 = vsel %vm962, %v933, %v990
      %v992 = vsel %vm557, %v957, %v958
      %v993 = vsel %vm962, %v935, %v992
      %v994 = vsel %vm557, %v958, %v959
      %v995 = vsel %vm962, %v937, %v994
      %v996 = vsel %vm557, %v959, %v960
      %v997 = vsel %vm962, %v939, %v996
      %1016 = vst [vmem:[#allocation3 + $0x90] sm:$0xcc] %v963
      %1017 = vst [vmem:[#allocation3 + $0x98] sm:$0xcc] %v965
      %1018 = vst [vmem:[#allocation3 + $0xa0] sm:$0xcc] %v967
      %1019 = vst [vmem:[#allocation3 + $0xa8] sm:$0xcc] %v969
      %1020 = vst [vmem:[#allocation3 + $0xb0] sm:$0xcc] %v971
      %1021 = vst [vmem:[#allocation3 + $0xb8] sm:$0xcc] %v973
      %1022 = vst [vmem:[#allocation3 + $0xc0] sm:$0xcc] %v975
      %1023 = vst [vmem:[#allocation3 + $0xc8] sm:$0xcc] %v977
      %1024 = vst [vmem:[#allocation3 + $0xd0] sm:$0xcc] %v979
      %1025 = vst [vmem:[#allocation3 + $0xd8] sm:$0xcc] %v981
      %1026 = vst [vmem:[#allocation3 + $0xe0] sm:$0xcc] %v983
      %1027 = vst [vmem:[#allocation3 + $0xe8] sm:$0xcc] %v985
      %1028 = vst [vmem:[#allocation3 + $0xf0] sm:$0xcc] %v987
      %1029 = vst [vmem:[#allocation3 + $0xf8] sm:$0xcc] %v989
      %1030 = vst [vmem:[#allocation3 + $0x100] sm:$0xcc] %v991
      %1031 = vst [vmem:[#allocation3 + $0x108] sm:$0xcc] %v993
      %1032 = vst [vmem:[#allocation3 + $0x110] sm:$0xcc] %v995
      %1033 = vst [vmem:[#allocation3 + $0x118] sm:$0xcc] %v997
      %v1034 = vld [vmem:[#allocation2] sm:$0xff]
      %v1035 = vld [vmem:[#allocation2 + $0x8] sm:$0xff]
      %v1036 = vld [vmem:[#allocation2 + $0x10] sm:$0xff]
      %v1037 = vld [vmem:[#allocation2 + $0x18] sm:$0xff]
      %v1038 = vld [vmem:[#allocation2 + $0x20] sm:$0xff]
      %v1039 = vld [vmem:[#allocation2 + $0x28] sm:$0xff]
      %v1040 = vld [vmem:[#allocation2 + $0x30] sm:$0xff]
      %v1041 = vld [vmem:[#allocation2 + $0x38] sm:$0xff]
      %v1042 = vld [vmem:[#allocation2 + $0x40] sm:$0xff]
      %v1043 = vld [vmem:[#allocation2 + $0x48] sm:$0x3]
      %1045 = vst [vmem:[#allocation1] ss:$2 sm:$0xff] %v1034
      %s1047 = scalar_lea.vmem [#allocation1], 16
      %1048 = vst [vmem:[%s1047] ss:$2 sm:$0xff] %v1035
      %s1050 = scalar_lea.vmem [#allocation1], 32
      %1051 = vst [vmem:[%s1050] ss:$2 sm:$0xff] %v1036
      %s1053 = scalar_lea.vmem [#allocation1], 48
      %1054 = vst [vmem:[%s1053] ss:$2 sm:$0xff] %v1037
      %v1055 = vld.sshfl [vmem:[#allocation1] sm:$0xff pattern:$0x75643120]
      %v1057 = vld.sshfl [vmem:[#allocation1 + $0x8] sm:$0xff pattern:$0x75643120]
      %v1059 = vld.sshfl [vmem:[#allocation1 + $0x10] sm:$0xff pattern:$0x75643120]
      %v1061 = vld.sshfl [vmem:[#allocation1 + $0x18] sm:$0xff pattern:$0x75643120]
      %v1063 = vld.sshfl [vmem:[#allocation1 + $0x20] sm:$0xff pattern:$0x75643120]
      %v1065 = vld.sshfl [vmem:[#allocation1 + $0x28] sm:$0xff pattern:$0x75643120]
      %v1067 = vld.sshfl [vmem:[#allocation1 + $0x30] sm:$0xff pattern:$0x75643120]
      %v1069 = vld.sshfl [vmem:[#allocation1 + $0x38] sm:$0xff pattern:$0x75643120]
      %1072 = vst [vmem:[#allocation1] ss:$2 sm:$0xff] %v1038
      %1074 = vst [vmem:[%s1047] ss:$2 sm:$0xff] %v1039
      %1076 = vst [vmem:[%s1050] ss:$2 sm:$0xff] %v1040
      %1078 = vst [vmem:[%s1053] ss:$2 sm:$0xff] %v1041
      %v1079 = vld.sshfl [vmem:[#allocation1] sm:$0xff pattern:$0x75643120]
      %v1081 = vld.sshfl [vmem:[#allocation1 + $0x8] sm:$0xff pattern:$0x75643120]
      %v1083 = vld.sshfl [vmem:[#allocation1 + $0x10] sm:$0xff pattern:$0x75643120]
      %v1085 = vld.sshfl [vmem:[#allocation1 + $0x18] sm:$0xff pattern:$0x75643120]
      %v1087 = vld.sshfl [vmem:[#allocation1 + $0x20] sm:$0xff pattern:$0x75643120]
      %v1089 = vld.sshfl [vmem:[#allocation1 + $0x28] sm:$0xff pattern:$0x75643120]
      %v1091 = vld.sshfl [vmem:[#allocation1 + $0x30] sm:$0xff pattern:$0x75643120]
      %v1093 = vld.sshfl [vmem:[#allocation1 + $0x38] sm:$0xff pattern:$0x75643120]
      %1096 = vst [vmem:[#allocation1] ss:$2 sm:$0xff] %v1042
      %1098 = vst [vmem:[%s1047] ss:$2 sm:$0xff] %v1043
      %v1099 = vld.sshfl [vmem:[#allocation1] sm:$0xff pattern:$0x75643120]
      %v1101 = vld.sshfl [vmem:[#allocation1 + $0x8] sm:$0xff pattern:$0x75643120]
      %v1103 = vld.sshfl [vmem:[#allocation1 + $0x10] sm:$0xff pattern:$0x75643120]
      %1105 = vrot.lane.b32.xlu0 %v1055, 109
      %v1106 = vpop.permute.xlu0 %1105
      %1107 = vrot.lane.b32.xlu0 %v1057, 109
      %v1108 = vpop.permute.xlu0 %1107
      %1109 = vrot.lane.b32.xlu0 %v1059, 109
      %v1110 = vpop.permute.xlu0 %1109
      %1111 = vrot.lane.b32.xlu0 %v1061, 109
      %v1112 = vpop.permute.xlu0 %1111
      %1113 = vrot.lane.b32.xlu0 %v1063, 109
      %v1114 = vpop.permute.xlu0 %1113
      %1115 = vrot.lane.b32.xlu0 %v1065, 109
      %v1116 = vpop.permute.xlu0 %1115
      %1117 = vrot.lane.b32.xlu0 %v1067, 109
      %v1118 = vpop.permute.xlu0 %1117
      %1119 = vrot.lane.b32.xlu0 %v1069, 109
      %v1120 = vpop.permute.xlu0 %1119
      %1121 = vrot.lane.b32.xlu0 %v1079, 109
      %v1122 = vpop.permute.xlu0 %1121
      %1123 = vrot.lane.b32.xlu0 %v1081, 109
      %v1124 = vpop.permute.xlu0 %1123
      %1125 = vrot.lane.b32.xlu0 %v1083, 109
      %v1126 = vpop.permute.xlu0 %1125
      %1127 = vrot.lane.b32.xlu0 %v1085, 109
      %v1128 = vpop.permute.xlu0 %1127
      %1129 = vrot.lane.b32.xlu0 %v1087, 109
      %v1130 = vpop.permute.xlu0 %1129
      %1131 = vrot.lane.b32.xlu0 %v1089, 109
      %v1132 = vpop.permute.xlu0 %1131
      %1133 = vrot.lane.b32.xlu0 %v1091, 109
      %v1134 = vpop.permute.xlu0 %1133
      %1135 = vrot.lane.b32.xlu0 %v1093, 109
      %v1136 = vpop.permute.xlu0 %1135
      %1137 = vrot.lane.b32.xlu0 %v1099, 109
      %v1138 = vpop.permute.xlu0 %1137
      %1139 = vrot.lane.b32.xlu0 %v1101, 109
      %v1140 = vpop.permute.xlu0 %1139
      %1141 = vrot.lane.b32.xlu0 %v1103, 109
      %v1142 = vpop.permute.xlu0 %1141
      %v1143 = vrot.slane %v1106, 4
      %v1144 = vrot.slane %v1108, 4
      %v1145 = vrot.slane %v1110, 4
      %v1146 = vrot.slane %v1112, 4
      %v1147 = vrot.slane %v1114, 4
      %v1148 = vrot.slane %v1116, 4
      %v1149 = vrot.slane %v1118, 4
      %v1150 = vrot.slane %v1120, 4
      %v1151 = vrot.slane %v1122, 4
      %v1152 = vrot.slane %v1124, 4
      %v1153 = vrot.slane %v1126, 4
      %v1154 = vrot.slane %v1128, 4
      %v1155 = vrot.slane %v1130, 4
      %v1156 = vrot.slane %v1132, 4
      %v1157 = vrot.slane %v1134, 4
      %v1158 = vrot.slane %v1136, 4
      %v1159 = vrot.slane %v1138, 4
      %v1160 = vrot.slane %v1140, 4
      %v1161 = vrot.slane %v1142, 4
      %v1162 = vsel %vm557, %v1143, %v1144
      %vm1163 = vcmask 891904
      %v1164 = vsel %vm1163, %v1106, %v1162
      %v1165 = vsel %vm557, %v1144, %v1145
      %v1166 = vsel %vm1163, %v1108, %v1165
      %v1167 = vsel %vm557, %v1145, %v1146
      %v1168 = vsel %vm1163, %v1110, %v1167
      %v1169 = vsel %vm557, %v1146, %v1147
      %v1170 = vsel %vm1163, %v1112, %v1169
      %v1171 = vsel %vm557, %v1147, %v1148
      %v1172 = vsel %vm1163, %v1114, %v1171
      %v1173 = vsel %vm557, %v1148, %v1149
      %v1174 = vsel %vm1163, %v1116, %v1173
      %v1175 = vsel %vm557, %v1149, %v1150
      %v1176 = vsel %vm1163, %v1118, %v1175
      %v1177 = vsel %vm557, %v1150, %v1151
      %v1178 = vsel %vm1163, %v1120, %v1177
      %v1179 = vsel %vm557, %v1151, %v1152
      %v1180 = vsel %vm1163, %v1122, %v1179
      %v1181 = vsel %vm557, %v1152, %v1153
      %v1182 = vsel %vm1163, %v1124, %v1181
      %v1183 = vsel %vm557, %v1153, %v1154
      %v1184 = vsel %vm1163, %v1126, %v1183
      %v1185 = vsel %vm557, %v1154, %v1155
      %v1186 = vsel %vm1163, %v1128, %v1185
      %v1187 = vsel %vm557, %v1155, %v1156
      %v1188 = vsel %vm1163, %v1130, %v1187
      %v1189 = vsel %vm557, %v1156, %v1157
      %v1190 = vsel %vm1163, %v1132, %v1189
      %v1191 = vsel %vm557, %v1157, %v1158
      %v1192 = vsel %vm1163, %v1134, %v1191
      %v1193 = vsel %vm557, %v1158, %v1159
      %v1194 = vsel %vm1163, %v1136, %v1193
      %v1195 = vsel %vm557, %v1159, %v1160
      %v1196 = vsel %vm1163, %v1138, %v1195
      %v1197 = vsel %vm557, %v1160, %v1161
      %v1198 = vsel %vm1163, %v1140, %v1197
      %1217 = vst [vmem:[#allocation3 + $0x120] sm:$0x33] %v1164
      %1218 = vst [vmem:[#allocation3 + $0x128] sm:$0x33] %v1166
      %1219 = vst [vmem:[#allocation3 + $0x130] sm:$0x33] %v1168
      %1220 = vst [vmem:[#allocation3 + $0x138] sm:$0x33] %v1170
      %1221 = vst [vmem:[#allocation3 + $0x140] sm:$0x33] %v1172
      %1222 = vst [vmem:[#allocation3 + $0x148] sm:$0x33] %v1174
      %1223 = vst [vmem:[#allocation3 + $0x150] sm:$0x33] %v1176
      %1224 = vst [vmem:[#allocation3 + $0x158] sm:$0x33] %v1178
      %1225 = vst [vmem:[#allocation3 + $0x160] sm:$0x33] %v1180
      %1226 = vst [vmem:[#allocation3 + $0x168] sm:$0x33] %v1182
      %1227 = vst [vmem:[#allocation3 + $0x170] sm:$0x33] %v1184
      %1228 = vst [vmem:[#allocation3 + $0x178] sm:$0x33] %v1186
      %1229 = vst [vmem:[#allocation3 + $0x180] sm:$0x33] %v1188
      %1230 = vst [vmem:[#allocation3 + $0x188] sm:$0x33] %v1190
      %1231 = vst [vmem:[#allocation3 + $0x190] sm:$0x33] %v1192
      %1232 = vst [vmem:[#allocation3 + $0x198] sm:$0x33] %v1194
      %1233 = vst [vmem:[#allocation3 + $0x1a0] sm:$0x33] %v1196
      %1234 = vst [vmem:[#allocation3 + $0x1a8] sm:$0x33] %v1198
      %v1235 = vld [vmem:[#allocation2] sm:$0xff]
      %v1236 = vld [vmem:[#allocation2 + $0x8] sm:$0xff]
      %v1237 = vld [vmem:[#allocation2 + $0x10] sm:$0xff]
      %v1238 = vld [vmem:[#allocation2 + $0x18] sm:$0xff]
      %v1239 = vld [vmem:[#allocation2 + $0x20] sm:$0xff]
      %v1240 = vld [vmem:[#allocation2 + $0x28] sm:$0xff]
      %v1241 = vld [vmem:[#allocation2 + $0x30] sm:$0xff]
      %v1242 = vld [vmem:[#allocation2 + $0x38] sm:$0xff]
      %v1243 = vld [vmem:[#allocation2 + $0x40] sm:$0xff]
      %v1244 = vld [vmem:[#allocation2 + $0x48] sm:$0x3]
      %s1246 = scalar_lea.vmem [#allocation1], 1
      %1247 = vst [vmem:[%s1246] ss:$2 sm:$0xff] %v1235
      %s1249 = scalar_lea.vmem [#allocation1], 17
      %1250 = vst [vmem:[%s1249] ss:$2 sm:$0xff] %v1236
      %s1252 = scalar_lea.vmem [#allocation1], 33
      %1253 = vst [vmem:[%s1252] ss:$2 sm:$0xff] %v1237
      %s1255 = scalar_lea.vmem [#allocation1], 49
      %1256 = vst [vmem:[%s1255] ss:$2 sm:$0xff] %v1238
      %v1257 = vld.sshfl [vmem:[#allocation1] sm:$0xff pattern:$0x75643120]
      %v1259 = vld.sshfl [vmem:[#allocation1 + $0x8] sm:$0xff pattern:$0x75643120]
      %v1261 = vld.sshfl [vmem:[#allocation1 + $0x10] sm:$0xff pattern:$0x75643120]
      %v1263 = vld.sshfl [vmem:[#allocation1 + $0x18] sm:$0xff pattern:$0x75643120]
      %v1265 = vld.sshfl [vmem:[#allocation1 + $0x20] sm:$0xff pattern:$0x75643120]
      %v1267 = vld.sshfl [vmem:[#allocation1 + $0x28] sm:$0xff pattern:$0x75643120]
      %v1269 = vld.sshfl [vmem:[#allocation1 + $0x30] sm:$0xff pattern:$0x75643120]
      %v1271 = vld.sshfl [vmem:[#allocation1 + $0x38] sm:$0xff pattern:$0x75643120]
      %1274 = vst [vmem:[%s1246] ss:$2 sm:$0xff] %v1239
      %1276 = vst [vmem:[%s1249] ss:$2 sm:$0xff] %v1240
      %1278 = vst [vmem:[%s1252] ss:$2 sm:$0xff] %v1241
      %1280 = vst [vmem:[%s1255] ss:$2 sm:$0xff] %v1242
      %v1281 = vld.sshfl [vmem:[#allocation1] sm:$0xff pattern:$0x75643120]
      %v1283 = vld.sshfl [vmem:[#allocation1 + $0x8] sm:$0xff pattern:$0x75643120]
      %v1285 = vld.sshfl [vmem:[#allocation1 + $0x10] sm:$0xff pattern:$0x75643120]
      %v1287 = vld.sshfl [vmem:[#allocation1 + $0x18] sm:$0xff pattern:$0x75643120]
      %v1289 = vld.sshfl [vmem:[#allocation1 + $0x20] sm:$0xff pattern:$0x75643120]
      %v1291 = vld.sshfl [vmem:[#allocation1 + $0x28] sm:$0xff pattern:$0x75643120]
      %v1293 = vld.sshfl [vmem:[#allocation1 + $0x30] sm:$0xff pattern:$0x75643120]
      %v1295 = vld.sshfl [vmem:[#allocation1 + $0x38] sm:$0xff pattern:$0x75643120]
      %1298 = vst [vmem:[%s1246] ss:$2 sm:$0xff] %v1243
      %1300 = vst [vmem:[%s1249] ss:$2 sm:$0xff] %v1244
      %v1301 = vld.sshfl [vmem:[#allocation1] sm:$0xff pattern:$0x75643120]
      %v1303 = vld.sshfl [vmem:[#allocation1 + $0x8] sm:$0xff pattern:$0x75643120]
      %v1305 = vld.sshfl [vmem:[#allocation1 + $0x10] sm:$0xff pattern:$0x75643120]
      %1307 = vrot.lane.b32.xlu0 %v1257, 108
      %v1308 = vpop.permute.xlu0 %1307
      %1309 = vrot.lane.b32.xlu0 %v1259, 108
      %v1310 = vpop.permute.xlu0 %1309
      %1311 = vrot.lane.b32.xlu0 %v1261, 108
      %v1312 = vpop.permute.xlu0 %1311
      %1313 = vrot.lane.b32.xlu0 %v1263, 108
      %v1314 = vpop.permute.xlu0 %1313
      %1315 = vrot.lane.b32.xlu0 %v1265, 108
      %v1316 = vpop.permute.xlu0 %1315
      %1317 = vrot.lane.b32.xlu0 %v1267, 108
      %v1318 = vpop.permute.xlu0 %1317
      %1319 = vrot.lane.b32.xlu0 %v1269, 108
      %v1320 = vpop.permute.xlu0 %1319
      %1321 = vrot.lane.b32.xlu0 %v1271, 108
      %v1322 = vpop.permute.xlu0 %1321
      %1323 = vrot.lane.b32.xlu0 %v1281, 108
      %v1324 = vpop.permute.xlu0 %1323
      %1325 = vrot.lane.b32.xlu0 %v1283, 108
      %v1326 = vpop.permute.xlu0 %1325
      %1327 = vrot.lane.b32.xlu0 %v1285, 108
      %v1328 = vpop.permute.xlu0 %1327
      %1329 = vrot.lane.b32.xlu0 %v1287, 108
      %v1330 = vpop.permute.xlu0 %1329
      %1331 = vrot.lane.b32.xlu0 %v1289, 108
      %v1332 = vpop.permute.xlu0 %1331
      %1333 = vrot.lane.b32.xlu0 %v1291, 108
      %v1334 = vpop.permute.xlu0 %1333
      %1335 = vrot.lane.b32.xlu0 %v1293, 108
      %v1336 = vpop.permute.xlu0 %1335
      %1337 = vrot.lane.b32.xlu0 %v1295, 108
      %v1338 = vpop.permute.xlu0 %1337
      %1339 = vrot.lane.b32.xlu0 %v1301, 108
      %v1340 = vpop.permute.xlu0 %1339
      %1341 = vrot.lane.b32.xlu0 %v1303, 108
      %v1342 = vpop.permute.xlu0 %1341
      %1343 = vrot.lane.b32.xlu0 %v1305, 108
      %v1344 = vpop.permute.xlu0 %1343
      %v1345 = vrot.slane %v1308, 4
      %v1346 = vrot.slane %v1310, 4
      %v1347 = vrot.slane %v1312, 4
      %v1348 = vrot.slane %v1314, 4
      %v1349 = vrot.slane %v1316, 4
      %v1350 = vrot.slane %v1318, 4
      %v1351 = vrot.slane %v1320, 4
      %v1352 = vrot.slane %v1322, 4
      %v1353 = vrot.slane %v1324, 4
      %v1354 = vrot.slane %v1326, 4
      %v1355 = vrot.slane %v1328, 4
      %v1356 = vrot.slane %v1330, 4
      %v1357 = vrot.slane %v1332, 4
      %v1358 = vrot.slane %v1334, 4
      %v1359 = vrot.slane %v1336, 4
      %v1360 = vrot.slane %v1338, 4
      %v1361 = vrot.slane %v1340, 4
      %v1362 = vrot.slane %v1342, 4
      %v1363 = vrot.slane %v1344, 4
      %v1364 = vsel %vm557, %v1345, %v1346
      %vm1365 = vcmask 883712
      %v1366 = vsel %vm1365, %v1308, %v1364
      %v1367 = vsel %vm557, %v1346, %v1347
      %v1368 = vsel %vm1365, %v1310, %v1367
      %v1369 = vsel %vm557, %v1347, %v1348
      %v1370 = vsel %vm1365, %v1312, %v1369
      %v1371 = vsel %vm557, %v1348, %v1349
      %v1372 = vsel %vm1365, %v1314, %v1371
      %v1373 = vsel %vm557, %v1349, %v1350
      %v1374 = vsel %vm1365, %v1316, %v1373
      %v1375 = vsel %vm557, %v1350, %v1351
      %v1376 = vsel %vm1365, %v1318, %v1375
      %v1377 = vsel %vm557, %v1351, %v1352
      %v1378 = vsel %vm1365, %v1320, %v1377
      %v1379 = vsel %vm557, %v1352, %v1353
      %v1380 = vsel %vm1365, %v1322, %v1379
      %v1381 = vsel %vm557, %v1353, %v1354
      %v1382 = vsel %vm1365, %v1324, %v1381
      %v1383 = vsel %vm557, %v1354, %v1355
      %v1384 = vsel %vm1365, %v1326, %v1383
      %v1385 = vsel %vm557, %v1355, %v1356
      %v1386 = vsel %vm1365, %v1328, %v1385
      %v1387 = vsel %vm557, %v1356, %v1357
      %v1388 = vsel %vm1365, %v1330, %v1387
      %v1389 = vsel %vm557, %v1357, %v1358
      %v1390 = vsel %vm1365, %v1332, %v1389
      %v1391 = vsel %vm557, %v1358, %v1359
      %v1392 = vsel %vm1365, %v1334, %v1391
      %v1393 = vsel %vm557, %v1359, %v1360
      %v1394 = vsel %vm1365, %v1336, %v1393
      %v1395 = vsel %vm557, %v1360, %v1361
      %v1396 = vsel %vm1365, %v1338, %v1395
      %v1397 = vsel %vm557, %v1361, %v1362
      %v1398 = vsel %vm1365, %v1340, %v1397
      %v1399 = vsel %vm557, %v1362, %v1363
      %v1400 = vsel %vm1365, %v1342, %v1399
      %1419 = vst [vmem:[#allocation3 + $0x120] sm:$0xcc] %v1366
      %1420 = vst [vmem:[#allocation3 + $0x128] sm:$0xcc] %v1368
      %1421 = vst [vmem:[#allocation3 + $0x130] sm:$0xcc] %v1370
      %1422 = vst [vmem:[#allocation3 + $0x138] sm:$0xcc] %v1372
      %1423 = vst [vmem:[#allocation3 + $0x140] sm:$0xcc] %v1374
      %1424 = vst [vmem:[#allocation3 + $0x148] sm:$0xcc] %v1376
      %1425 = vst [vmem:[#allocation3 + $0x150] sm:$0xcc] %v1378
      %1426 = vst [vmem:[#allocation3 + $0x158] sm:$0xcc] %v1380
      %1427 = vst [vmem:[#allocation3 + $0x160] sm:$0xcc] %v1382
      %1428 = vst [vmem:[#allocation3 + $0x168] sm:$0xcc] %v1384
      %1429 = vst [vmem:[#allocation3 + $0x170] sm:$0xcc] %v1386
      %1430 = vst [vmem:[#allocation3 + $0x178] sm:$0xcc] %v1388
      %1431 = vst [vmem:[#allocation3 + $0x180] sm:$0xcc] %v1390
      %1432 = vst [vmem:[#allocation3 + $0x188] sm:$0xcc] %v1392
      %1433 = vst [vmem:[#allocation3 + $0x190] sm:$0xcc] %v1394
      %1434 = vst [vmem:[#allocation3 + $0x198] sm:$0xcc] %v1396
      %1435 = vst [vmem:[#allocation3 + $0x1a0] sm:$0xcc] %v1398
      %1436 = vst [vmem:[#allocation3 + $0x1a8] sm:$0xcc] %v1400
      %v1437 = vld [vmem:[#allocation2] sm:$0xff]
      %v1438 = vld [vmem:[#allocation2 + $0x8] sm:$0xff]
      %v1439 = vld [vmem:[#allocation2 + $0x10] sm:$0xff]
      %v1440 = vld [vmem:[#allocation2 + $0x18] sm:$0xff]
      %v1441 = vld [vmem:[#allocation2 + $0x20] sm:$0xff]
      %v1442 = vld [vmem:[#allocation2 + $0x28] sm:$0xff]
      %v1443 = vld [vmem:[#allocation2 + $0x30] sm:$0xff]
      %v1444 = vld [vmem:[#allocation2 + $0x38] sm:$0xff]
      %v1445 = vld [vmem:[#allocation2 + $0x40] sm:$0xff]
      %v1446 = vld [vmem:[#allocation2 + $0x48] sm:$0x3]
      %1448 = vst [vmem:[#allocation1] ss:$2 sm:$0xff] %v1437
      %s1450 = scalar_lea.vmem [#allocation1], 16
      %1451 = vst [vmem:[%s1450] ss:$2 sm:$0xff] %v1438
      %s1453 = scalar_lea.vmem [#allocation1], 32
      %1454 = vst [vmem:[%s1453] ss:$2 sm:$0xff] %v1439
      %s1456 = scalar_lea.vmem [#allocation1], 48
      %1457 = vst [vmem:[%s1456] ss:$2 sm:$0xff] %v1440
      %v1458 = vld.sshfl [vmem:[#allocation1] sm:$0xff pattern:$0x75643120]
      %v1460 = vld.sshfl [vmem:[#allocation1 + $0x8] sm:$0xff pattern:$0x75643120]
      %v1462 = vld.sshfl [vmem:[#allocation1 + $0x10] sm:$0xff pattern:$0x75643120]
      %v1464 = vld.sshfl [vmem:[#allocation1 + $0x18] sm:$0xff pattern:$0x75643120]
      %v1466 = vld.sshfl [vmem:[#allocation1 + $0x20] sm:$0xff pattern:$0x75643120]
      %v1468 = vld.sshfl [vmem:[#allocation1 + $0x28] sm:$0xff pattern:$0x75643120]
      %v1470 = vld.sshfl [vmem:[#allocation1 + $0x30] sm:$0xff pattern:$0x75643120]
      %v1472 = vld.sshfl [vmem:[#allocation1 + $0x38] sm:$0xff pattern:$0x75643120]
      %1475 = vst [vmem:[#allocation1] ss:$2 sm:$0xff] %v1441
      %1477 = vst [vmem:[%s1450] ss:$2 sm:$0xff] %v1442
      %1479 = vst [vmem:[%s1453] ss:$2 sm:$0xff] %v1443
      %1481 = vst [vmem:[%s1456] ss:$2 sm:$0xff] %v1444
      %v1482 = vld.sshfl [vmem:[#allocation1] sm:$0xff pattern:$0x75643120]
      %v1484 = vld.sshfl [vmem:[#allocation1 + $0x8] sm:$0xff pattern:$0x75643120]
      %v1486 = vld.sshfl [vmem:[#allocation1 + $0x10] sm:$0xff pattern:$0x75643120]
      %v1488 = vld.sshfl [vmem:[#allocation1 + $0x18] sm:$0xff pattern:$0x75643120]
      %v1490 = vld.sshfl [vmem:[#allocation1 + $0x20] sm:$0xff pattern:$0x75643120]
      %v1492 = vld.sshfl [vmem:[#allocation1 + $0x28] sm:$0xff pattern:$0x75643120]
      %v1494 = vld.sshfl [vmem:[#allocation1 + $0x30] sm:$0xff pattern:$0x75643120]
      %v1496 = vld.sshfl [vmem:[#allocation1 + $0x38] sm:$0xff pattern:$0x75643120]
      %1499 = vst [vmem:[#allocation1] ss:$2 sm:$0xff] %v1445
      %1501 = vst [vmem:[%s1450] ss:$2 sm:$0xff] %v1446
      %v1502 = vld.sshfl [vmem:[#allocation1] sm:$0xff pattern:$0x75643120]
      %v1504 = vld.sshfl [vmem:[#allocation1 + $0x8] sm:$0xff pattern:$0x75643120]
      %v1506 = vld.sshfl [vmem:[#allocation1 + $0x10] sm:$0xff pattern:$0x75643120]
      %1508 = vrot.lane.b32.xlu0 %v1458, 92
      %v1509 = vpop.permute.xlu0 %1508
      %1510 = vrot.lane.b32.xlu0 %v1460, 92
      %v1511 = vpop.permute.xlu0 %1510
      %1512 = vrot.lane.b32.xlu0 %v1462, 92
      %v1513 = vpop.permute.xlu0 %1512
      %1514 = vrot.lane.b32.xlu0 %v1464, 92
      %v1515 = vpop.permute.xlu0 %1514
      %1516 = vrot.lane.b32.xlu0 %v1466, 92
      %v1517 = vpop.permute.xlu0 %1516
      %1518 = vrot.lane.b32.xlu0 %v1468, 92
      %v1519 = vpop.permute.xlu0 %1518
      %1520 = vrot.lane.b32.xlu0 %v1470, 92
      %v1521 = vpop.permute.xlu0 %1520
      %1522 = vrot.lane.b32.xlu0 %v1472, 92
      %v1523 = vpop.permute.xlu0 %1522
      %1524 = vrot.lane.b32.xlu0 %v1482, 92
      %v1525 = vpop.permute.xlu0 %1524
      %1526 = vrot.lane.b32.xlu0 %v1484, 92
      %v1527 = vpop.permute.xlu0 %1526
      %1528 = vrot.lane.b32.xlu0 %v1486, 92
      %v1529 = vpop.permute.xlu0 %1528
      %1530 = vrot.lane.b32.xlu0 %v1488, 92
      %v1531 = vpop.permute.xlu0 %1530
      %1532 = vrot.lane.b32.xlu0 %v1490, 92
      %v1533 = vpop.permute.xlu0 %1532
      %1534 = vrot.lane.b32.xlu0 %v1492, 92
      %v1535 = vpop.permute.xlu0 %1534
      %1536 = vrot.lane.b32.xlu0 %v1494, 92
      %v1537 = vpop.permute.xlu0 %1536
      %1538 = vrot.lane.b32.xlu0 %v1496, 92
      %v1539 = vpop.permute.xlu0 %1538
      %1540 = vrot.lane.b32.xlu0 %v1502, 92
      %v1541 = vpop.permute.xlu0 %1540
      %1542 = vrot.lane.b32.xlu0 %v1504, 92
      %v1543 = vpop.permute.xlu0 %1542
      %1544 = vrot.lane.b32.xlu0 %v1506, 92
      %v1545 = vpop.permute.xlu0 %1544
      %v1546 = vrot.slane %v1509, 4
      %v1547 = vrot.slane %v1511, 4
      %v1548 = vrot.slane %v1513, 4
      %v1549 = vrot.slane %v1515, 4
      %v1550 = vrot.slane %v1517, 4
      %v1551 = vrot.slane %v1519, 4
      %v1552 = vrot.slane %v1521, 4
      %v1553 = vrot.slane %v1523, 4
      %v1554 = vrot.slane %v1525, 4
      %v1555 = vrot.slane %v1527, 4
      %v1556 = vrot.slane %v1529, 4
      %v1557 = vrot.slane %v1531, 4
      %v1558 = vrot.slane %v1533, 4
      %v1559 = vrot.slane %v1535, 4
      %v1560 = vrot.slane %v1537, 4
      %v1561 = vrot.slane %v1539, 4
      %v1562 = vrot.slane %v1541, 4
      %v1563 = vrot.slane %v1543, 4
      %v1564 = vrot.slane %v1545, 4
      %v1565 = vsel %vm557, %v1546, %v1547
      %vm1566 = vcmask 752640
      %v1567 = vsel %vm1566, %v1509, %v1565
      %v1568 = vsel %vm557, %v1547, %v1548
      %v1569 = vsel %vm1566, %v1511, %v1568
      %v1570 = vsel %vm557, %v1548, %v1549
      %v1571 = vsel %vm1566, %v1513, %v1570
      %v1572 = vsel %vm557, %v1549, %v1550
      %v1573 = vsel %vm1566, %v1515, %v1572
      %v1574 = vsel %vm557, %v1550, %v1551
      %v1575 = vsel %vm1566, %v1517, %v1574
      %v1576 = vsel %vm557, %v1551, %v1552
      %v1577 = vsel %vm1566, %v1519, %v1576
      %v1578 = vsel %vm557, %v1552, %v1553
      %v1579 = vsel %vm1566, %v1521, %v1578
      %v1580 = vsel %vm557, %v1553, %v1554
      %v1581 = vsel %vm1566, %v1523, %v1580
      %v1582 = vsel %vm557, %v1554, %v1555
      %v1583 = vsel %vm1566, %v1525, %v1582
      %v1584 = vsel %vm557, %v1555, %v1556
      %v1585 = vsel %vm1566, %v1527, %v1584
      %v1586 = vsel %vm557, %v1556, %v1557
      %v1587 = vsel %vm1566, %v1529, %v1586
      %v1588 = vsel %vm557, %v1557, %v1558
      %v1589 = vsel %vm1566, %v1531, %v1588
      %v1590 = vsel %vm557, %v1558, %v1559
      %v1591 = vsel %vm1566, %v1533, %v1590
      %v1592 = vsel %vm557, %v1559, %v1560
      %v1593 = vsel %vm1566, %v1535, %v1592
      %v1594 = vsel %vm557, %v1560, %v1561
      %v1595 = vsel %vm1566, %v1537, %v1594
      %v1596 = vsel %vm557, %v1561, %v1562
      %v1597 = vsel %vm1566, %v1539, %v1596
      %v1598 = vsel %vm557, %v1562, %v1563
      %v1599 = vsel %vm1566, %v1541, %v1598
      %v1600 = vsel %vm557, %v1563, %v1564
      %v1601 = vsel %vm1566, %v1543, %v1600
      %1620 = vst [vmem:[#allocation3 + $0x1b0] sm:$0x33] %v1567
      %1621 = vst [vmem:[#allocation3 + $0x1b8] sm:$0x33] %v1569
      %1622 = vst [vmem:[#allocation3 + $0x1c0] sm:$0x33] %v1571
      %1623 = vst [vmem:[#allocation3 + $0x1c8] sm:$0x33] %v1573
      %1624 = vst [vmem:[#allocation3 + $0x1d0] sm:$0x33] %v1575
      %1625 = vst [vmem:[#allocation3 + $0x1d8] sm:$0x33] %v1577
      %1626 = vst [vmem:[#allocation3 + $0x1e0] sm:$0x33] %v1579
      %1627 = vst [vmem:[#allocation3 + $0x1e8] sm:$0x33] %v1581
      %1628 = vst [vmem:[#allocation3 + $0x1f0] sm:$0x33] %v1583
      %1629 = vst [vmem:[#allocation3 + $0x1f8] sm:$0x33] %v1585
      %1630 = vst [vmem:[#allocation3 + $0x200] sm:$0x33] %v1587
      %1631 = vst [vmem:[#allocation3 + $0x208] sm:$0x33] %v1589
      %1632 = vst [vmem:[#allocation3 + $0x210] sm:$0x33] %v1591
      %1633 = vst [vmem:[#allocation3 + $0x218] sm:$0x33] %v1593
      %1634 = vst [vmem:[#allocation3 + $0x220] sm:$0x33] %v1595
      %1635 = vst [vmem:[#allocation3 + $0x228] sm:$0x33] %v1597
      %1636 = vst [vmem:[#allocation3 + $0x230] sm:$0x33] %v1599
      %1637 = vst [vmem:[#allocation3 + $0x238] sm:$0x33] %v1601
      %v1638 = vld [vmem:[#allocation2] sm:$0xff]
      %v1639 = vld [vmem:[#allocation2 + $0x8] sm:$0xff]
      %v1640 = vld [vmem:[#allocation2 + $0x10] sm:$0xff]
      %v1641 = vld [vmem:[#allocation2 + $0x18] sm:$0xff]
      %v1642 = vld [vmem:[#allocation2 + $0x20] sm:$0xff]
      %v1643 = vld [vmem:[#allocation2 + $0x28] sm:$0xff]
      %v1644 = vld [vmem:[#allocation2 + $0x30] sm:$0xff]
      %v1645 = vld [vmem:[#allocation2 + $0x38] sm:$0xff]
      %v1646 = vld [vmem:[#allocation2 + $0x40] sm:$0xff]
      %v1647 = vld [vmem:[#allocation2 + $0x48] sm:$0x3]
      %s1649 = scalar_lea.vmem [#allocation1], 1
      %1650 = vst [vmem:[%s1649] ss:$2 sm:$0xff] %v1638
      %s1652 = scalar_lea.vmem [#allocation1], 17
      %1653 = vst [vmem:[%s1652] ss:$2 sm:$0xff] %v1639
      %s1655 = scalar_lea.vmem [#allocation1], 33
      %1656 = vst [vmem:[%s1655] ss:$2 sm:$0xff] %v1640
      %s1658 = scalar_lea.vmem [#allocation1], 49
      %1659 = vst [vmem:[%s1658] ss:$2 sm:$0xff] %v1641
      %v1660 = vld.sshfl [vmem:[#allocation1] sm:$0xff pattern:$0x75643120]
      %v1662 = vld.sshfl [vmem:[#allocation1 + $0x8] sm:$0xff pattern:$0x75643120]
      %v1664 = vld.sshfl [vmem:[#allocation1 + $0x10] sm:$0xff pattern:$0x75643120]
      %v1666 = vld.sshfl [vmem:[#allocation1 + $0x18] sm:$0xff pattern:$0x75643120]
      %v1668 = vld.sshfl [vmem:[#allocation1 + $0x20] sm:$0xff pattern:$0x75643120]
      %v1670 = vld.sshfl [vmem:[#allocation1 + $0x28] sm:$0xff pattern:$0x75643120]
      %v1672 = vld.sshfl [vmem:[#allocation1 + $0x30] sm:$0xff pattern:$0x75643120]
      %v1674 = vld.sshfl [vmem:[#allocation1 + $0x38] sm:$0xff pattern:$0x75643120]
      %1677 = vst [vmem:[%s1649] ss:$2 sm:$0xff] %v1642
      %1679 = vst [vmem:[%s1652] ss:$2 sm:$0xff] %v1643
      %1681 = vst [vmem:[%s1655] ss:$2 sm:$0xff] %v1644
      %1683 = vst [vmem:[%s1658] ss:$2 sm:$0xff] %v1645
      %v1684 = vld.sshfl [vmem:[#allocation1] sm:$0xff pattern:$0x75643120]
      %v1686 = vld.sshfl [vmem:[#allocation1 + $0x8] sm:$0xff pattern:$0x75643120]
      %v1688 = vld.sshfl [vmem:[#allocation1 + $0x10] sm:$0xff pattern:$0x75643120]
      %v1690 = vld.sshfl [vmem:[#allocation1 + $0x18] sm:$0xff pattern:$0x75643120]
      %v1692 = vld.sshfl [vmem:[#allocation1 + $0x20] sm:$0xff pattern:$0x75643120]
      %v1694 = vld.sshfl [vmem:[#allocation1 + $0x28] sm:$0xff pattern:$0x75643120]
      %v1696 = vld.sshfl [vmem:[#allocation1 + $0x30] sm:$0xff pattern:$0x75643120]
      %v1698 = vld.sshfl [vmem:[#allocation1 + $0x38] sm:$0xff pattern:$0x75643120]
      %1701 = vst [vmem:[%s1649] ss:$2 sm:$0xff] %v1646
      %1703 = vst [vmem:[%s1652] ss:$2 sm:$0xff] %v1647
      %v1704 = vld.sshfl [vmem:[#allocation1] sm:$0xff pattern:$0x75643120]
      %v1706 = vld.sshfl [vmem:[#allocation1 + $0x8] sm:$0xff pattern:$0x75643120]
      %v1708 = vld.sshfl [vmem:[#allocation1 + $0x10] sm:$0xff pattern:$0x75643120]
      %1710 = vrot.lane.b32.xlu0 %v1660, 91
      %v1711 = vpop.permute.xlu0 %1710
      %1712 = vrot.lane.b32.xlu0 %v1662, 91
      %v1713 = vpop.permute.xlu0 %1712
      %1714 = vrot.lane.b32.xlu0 %v1664, 91
      %v1715 = vpop.permute.xlu0 %1714
      %1716 = vrot.lane.b32.xlu0 %v1666, 91
      %v1717 = vpop.permute.xlu0 %1716
      %1718 = vrot.lane.b32.xlu0 %v1668, 91
      %v1719 = vpop.permute.xlu0 %1718
      %1720 = vrot.lane.b32.xlu0 %v1670, 91
      %v1721 = vpop.permute.xlu0 %1720
      %1722 = vrot.lane.b32.xlu0 %v1672, 91
      %v1723 = vpop.permute.xlu0 %1722
      %1724 = vrot.lane.b32.xlu0 %v1674, 91
      %v1725 = vpop.permute.xlu0 %1724
      %1726 = vrot.lane.b32.xlu0 %v1684, 91
      %v1727 = vpop.permute.xlu0 %1726
      %1728 = vrot.lane.b32.xlu0 %v1686, 91
      %v1729 = vpop.permute.xlu0 %1728
      %1730 = vrot.lane.b32.xlu0 %v1688, 91
      %v1731 = vpop.permute.xlu0 %1730
      %1732 = vrot.lane.b32.xlu0 %v1690, 91
      %v1733 = vpop.permute.xlu0 %1732
      %1734 = vrot.lane.b32.xlu0 %v1692, 91
      %v1735 = vpop.permute.xlu0 %1734
      %1736 = vrot.lane.b32.xlu0 %v1694, 91
      %v1737 = vpop.permute.xlu0 %1736
      %1738 = vrot.lane.b32.xlu0 %v1696, 91
      %v1739 = vpop.permute.xlu0 %1738
      %1740 = vrot.lane.b32.xlu0 %v1698, 91
      %v1741 = vpop.permute.xlu0 %1740
      %1742 = vrot.lane.b32.xlu0 %v1704, 91
      %v1743 = vpop.permute.xlu0 %1742
      %1744 = vrot.lane.b32.xlu0 %v1706, 91
      %v1745 = vpop.permute.xlu0 %1744
      %1746 = vrot.lane.b32.xlu0 %v1708, 91
      %v1747 = vpop.permute.xlu0 %1746
      %v1748 = vrot.slane %v1711, 4
      %v1749 = vrot.slane %v1713, 4
      %v1750 = vrot.slane %v1715, 4
      %v1751 = vrot.slane %v1717, 4
      %v1752 = vrot.slane %v1719, 4
      %v1753 = vrot.slane %v1721, 4
      %v1754 = vrot.slane %v1723, 4
      %v1755 = vrot.slane %v1725, 4
      %v1756 = vrot.slane %v1727, 4
      %v1757 = vrot.slane %v1729, 4
      %v1758 = vrot.slane %v1731, 4
      %v1759 = vrot.slane %v1733, 4
      %v1760 = vrot.slane %v1735, 4
      %v1761 = vrot.slane %v1737, 4
      %v1762 = vrot.slane %v1739, 4
      %v1763 = vrot.slane %v1741, 4
      %v1764 = vrot.slane %v1743, 4
      %v1765 = vrot.slane %v1745, 4
      %v1766 = vrot.slane %v1747, 4
      %v1767 = vsel %vm557, %v1748, %v1749
      %vm1768 = vcmask 744448
      %v1769 = vsel %vm1768, %v1711, %v1767
      %v1770 = vsel %vm557, %v1749, %v1750
      %v1771 = vsel %vm1768, %v1713, %v1770
      %v1772 = vsel %vm557, %v1750, %v1751
      %v1773 = vsel %vm1768, %v1715, %v1772
      %v1774 = vsel %vm557, %v1751, %v1752
      %v1775 = vsel %vm1768, %v1717, %v1774
      %v1776 = vsel %vm557, %v1752, %v1753
      %v1777 = vsel %vm1768, %v1719, %v1776
      %v1778 = vsel %vm557, %v1753, %v1754
      %v1779 = vsel %vm1768, %v1721, %v1778
      %v1780 = vsel %vm557, %v1754, %v1755
      %v1781 = vsel %vm1768, %v1723, %v1780
      %v1782 = vsel %vm557, %v1755, %v1756
      %v1783 = vsel %vm1768, %v1725, %v1782
      %v1784 = vsel %vm557, %v1756, %v1757
      %v1785 = vsel %vm1768, %v1727, %v1784
      %v1786 = vsel %vm557, %v1757, %v1758
      %v1787 = vsel %vm1768, %v1729, %v1786
      %v1788 = vsel %vm557, %v1758, %v1759
      %v1789 = vsel %vm1768, %v1731, %v1788
      %v1790 = vsel %vm557, %v1759, %v1760
      %v1791 = vsel %vm1768, %v1733, %v1790
      %v1792 = vsel %vm557, %v1760, %v1761
      %v1793 = vsel %vm1768, %v1735, %v1792
      %v1794 = vsel %vm557, %v1761, %v1762
      %v1795 = vsel %vm1768, %v1737, %v1794
      %v1796 = vsel %vm557, %v1762, %v1763
      %v1797 = vsel %vm1768, %v1739, %v1796
      %v1798 = vsel %vm557, %v1763, %v1764
      %v1799 = vsel %vm1768, %v1741, %v1798
      %v1800 = vsel %vm557, %v1764, %v1765
      %v1801 = vsel %vm1768, %v1743, %v1800
      %v1802 = vsel %vm557, %v1765, %v1766
      %v1803 = vsel %vm1768, %v1745, %v1802
      %1822 = vst [vmem:[#allocation3 + $0x1b0] sm:$0xcc] %v1769
      %1823 = vst [vmem:[#allocation3 + $0x1b8] sm:$0xcc] %v1771
      %1824 = vst [vmem:[#allocation3 + $0x1c0] sm:$0xcc] %v1773
      %1825 = vst [vmem:[#allocation3 + $0x1c8] sm:$0xcc] %v1775
      %1826 = vst [vmem:[#allocation3 + $0x1d0] sm:$0xcc] %v1777
      %1827 = vst [vmem:[#allocation3 + $0x1d8] sm:$0xcc] %v1779
      %1828 = vst [vmem:[#allocation3 + $0x1e0] sm:$0xcc] %v1781
      %1829 = vst [vmem:[#allocation3 + $0x1e8] sm:$0xcc] %v1783
      %1830 = vst [vmem:[#allocation3 + $0x1f0] sm:$0xcc] %v1785
      %1831 = vst [vmem:[#allocation3 + $0x1f8] sm:$0xcc] %v1787
      %1832 = vst [vmem:[#allocation3 + $0x200] sm:$0xcc] %v1789
      %1833 = vst [vmem:[#allocation3 + $0x208] sm:$0xcc] %v1791
      %1834 = vst [vmem:[#allocation3 + $0x210] sm:$0xcc] %v1793
      %1835 = vst [vmem:[#allocation3 + $0x218] sm:$0xcc] %v1795
      %1836 = vst [vmem:[#allocation3 + $0x220] sm:$0xcc] %v1797
      %1837 = vst [vmem:[#allocation3 + $0x228] sm:$0xcc] %v1799
      %1838 = vst [vmem:[#allocation3 + $0x230] sm:$0xcc] %v1801
      %1839 = vst [vmem:[#allocation3 + $0x238] sm:$0xcc] %v1803
      %v1840 = vld [vmem:[#allocation2] sm:$0xff]
      %v1841 = vld [vmem:[#allocation2 + $0x8] sm:$0xff]
      %v1842 = vld [vmem:[#allocation2 + $0x10] sm:$0xff]
      %v1843 = vld [vmem:[#allocation2 + $0x18] sm:$0xff]
      %v1844 = vld [vmem:[#allocation2 + $0x20] sm:$0xff]
      %v1845 = vld [vmem:[#allocation2 + $0x28] sm:$0xff]
      %v1846 = vld [vmem:[#allocation2 + $0x30] sm:$0xff]
      %v1847 = vld [vmem:[#allocation2 + $0x38] sm:$0xff]
      %v1848 = vld [vmem:[#allocation2 + $0x40] sm:$0xff]
      %v1849 = vld [vmem:[#allocation2 + $0x48] sm:$0x3]
      %1851 = vst [vmem:[#allocation1] ss:$2 sm:$0xff] %v1840
      %s1853 = scalar_lea.vmem [#allocation1], 16
      %1854 = vst [vmem:[%s1853] ss:$2 sm:$0xff] %v1841
      %s1856 = scalar_lea.vmem [#allocation1], 32
      %1857 = vst [vmem:[%s1856] ss:$2 sm:$0xff] %v1842
      %s1859 = scalar_lea.vmem [#allocation1], 48
      %1860 = vst [vmem:[%s1859] ss:$2 sm:$0xff] %v1843
      %v1861 = vld.sshfl [vmem:[#allocation1] sm:$0xff pattern:$0x75643120]
      %v1863 = vld.sshfl [vmem:[#allocation1 + $0x8] sm:$0xff pattern:$0x75643120]
      %v1865 = vld.sshfl [vmem:[#allocation1 + $0x10] sm:$0xff pattern:$0x75643120]
      %v1867 = vld.sshfl [vmem:[#allocation1 + $0x18] sm:$0xff pattern:$0x75643120]
      %v1869 = vld.sshfl [vmem:[#allocation1 + $0x20] sm:$0xff pattern:$0x75643120]
      %v1871 = vld.sshfl [vmem:[#allocation1 + $0x28] sm:$0xff pattern:$0x75643120]
      %v1873 = vld.sshfl [vmem:[#allocation1 + $0x30] sm:$0xff pattern:$0x75643120]
      %v1875 = vld.sshfl [vmem:[#allocation1 + $0x38] sm:$0xff pattern:$0x75643120]
      %1878 = vst [vmem:[#allocation1] ss:$2 sm:$0xff] %v1844
      %1880 = vst [vmem:[%s1853] ss:$2 sm:$0xff] %v1845
      %1882 = vst [vmem:[%s1856] ss:$2 sm:$0xff] %v1846
      %1884 = vst [vmem:[%s1859] ss:$2 sm:$0xff] %v1847
      %v1885 = vld.sshfl [vmem:[#allocation1] sm:$0xff pattern:$0x75643120]
      %v1887 = vld.sshfl [vmem:[#allocation1 + $0x8] sm:$0xff pattern:$0x75643120]
      %v1889 = vld.sshfl [vmem:[#allocation1 + $0x10] sm:$0xff pattern:$0x75643120]
      %v1891 = vld.sshfl [vmem:[#allocation1 + $0x18] sm:$0xff pattern:$0x75643120]
      %v1893 = vld.sshfl [vmem:[#allocation1 + $0x20] sm:$0xff pattern:$0x75643120]
      %v1895 = vld.sshfl [vmem:[#allocation1 + $0x28] sm:$0xff pattern:$0x75643120]
      %v1897 = vld.sshfl [vmem:[#allocation1 + $0x30] sm:$0xff pattern:$0x75643120]
      %v1899 = vld.sshfl [vmem:[#allocation1 + $0x38] sm:$0xff pattern:$0x75643120]
      %1902 = vst [vmem:[#allocation1] ss:$2 sm:$0xff] %v1848
      %1904 = vst [vmem:[%s1853] ss:$2 sm:$0xff] %v1849
      %v1905 = vld.sshfl [vmem:[#allocation1] sm:$0xff pattern:$0x75643120]
      %v1907 = vld.sshfl [vmem:[#allocation1 + $0x8] sm:$0xff pattern:$0x75643120]
      %v1909 = vld.sshfl [vmem:[#allocation1 + $0x10] sm:$0xff pattern:$0x75643120]
      %1911 = vrot.lane.b32.xlu0 %v1861, 90
      %v1912 = vpop.permute.xlu0 %1911
      %1913 = vrot.lane.b32.xlu0 %v1863, 90
      %v1914 = vpop.permute.xlu0 %1913
      %1915 = vrot.lane.b32.xlu0 %v1865, 90
      %v1916 = vpop.permute.xlu0 %1915
      %1917 = vrot.lane.b32.xlu0 %v1867, 90
      %v1918 = vpop.permute.xlu0 %1917
      %1919 = vrot.lane.b32.xlu0 %v1869, 90
      %v1920 = vpop.permute.xlu0 %1919
      %1921 = vrot.lane.b32.xlu0 %v1871, 90
      %v1922 = vpop.permute.xlu0 %1921
      %1923 = vrot.lane.b32.xlu0 %v1873, 90
      %v1924 = vpop.permute.xlu0 %1923
      %1925 = vrot.lane.b32.xlu0 %v1875, 90
      %v1926 = vpop.permute.xlu0 %1925
      %1927 = vrot.lane.b32.xlu0 %v1885, 90
      %v1928 = vpop.permute.xlu0 %1927
      %1929 = vrot.lane.b32.xlu0 %v1887, 90
      %v1930 = vpop.permute.xlu0 %1929
      %1931 = vrot.lane.b32.xlu0 %v1889, 90
      %v1932 = vpop.permute.xlu0 %1931
      %1933 = vrot.lane.b32.xlu0 %v1891, 90
      %v1934 = vpop.permute.xlu0 %1933
      %1935 = vrot.lane.b32.xlu0 %v1893, 90
      %v1936 = vpop.permute.xlu0 %1935
      %1937 = vrot.lane.b32.xlu0 %v1895, 90
      %v1938 = vpop.permute.xlu0 %1937
      %1939 = vrot.lane.b32.xlu0 %v1897, 90
      %v1940 = vpop.permute.xlu0 %1939
      %1941 = vrot.lane.b32.xlu0 %v1899, 90
      %v1942 = vpop.permute.xlu0 %1941
      %1943 = vrot.lane.b32.xlu0 %v1905, 90
      %v1944 = vpop.permute.xlu0 %1943
      %1945 = vrot.lane.b32.xlu0 %v1907, 90
      %v1946 = vpop.permute.xlu0 %1945
      %1947 = vrot.lane.b32.xlu0 %v1909, 90
      %v1948 = vpop.permute.xlu0 %1947
      %v1949 = vrot.slane %v1912, 4
      %v1950 = vrot.slane %v1914, 4
      %v1951 = vrot.slane %v1916, 4
      %v1952 = vrot.slane %v1918, 4
      %v1953 = vrot.slane %v1920, 4
      %v1954 = vrot.slane %v1922, 4
      %v1955 = vrot.slane %v1924, 4
      %v1956 = vrot.slane %v1926, 4
      %v1957 = vrot.slane %v1928, 4
      %v1958 = vrot.slane %v1930, 4
      %v1959 = vrot.slane %v1932, 4
      %v1960 = vrot.slane %v1934, 4
      %v1961 = vrot.slane %v1936, 4
      %v1962 = vrot.slane %v1938, 4
      %v1963 = vrot.slane %v1940, 4
      %v1964 = vrot.slane %v1942, 4
      %v1965 = vrot.slane %v1944, 4
      %v1966 = vrot.slane %v1946, 4
      %v1967 = vrot.slane %v1948, 4
      %v1968 = vsel %vm557, %v1949, %v1950
      %vm1969 = vcmask 736256
      %v1970 = vsel %vm1969, %v1912, %v1968
      %v1971 = vsel %vm557, %v1950, %v1951
      %v1972 = vsel %vm1969, %v1914, %v1971
      %v1973 = vsel %vm557, %v1951, %v1952
      %v1974 = vsel %vm1969, %v1916, %v1973
      %v1975 = vsel %vm557, %v1952, %v1953
      %v1976 = vsel %vm1969, %v1918, %v1975
      %v1977 = vsel %vm557, %v1953, %v1954
      %v1978 = vsel %vm1969, %v1920, %v1977
      %v1979 = vsel %vm557, %v1954, %v1955
      %v1980 = vsel %vm1969, %v1922, %v1979
      %v1981 = vsel %vm557, %v1955, %v1956
      %v1982 = vsel %vm1969, %v1924, %v1981
      %v1983 = vsel %vm557, %v1956, %v1957
      %v1984 = vsel %vm1969, %v1926, %v1983
      %v1985 = vsel %vm557, %v1957, %v1958
      %v1986 = vsel %vm1969, %v1928, %v1985
      %v1987 = vsel %vm557, %v1958, %v1959
      %v1988 = vsel %vm1969, %v1930, %v1987
      %v1989 = vsel %vm557, %v1959, %v1960
      %v1990 = vsel %vm1969, %v1932, %v1989
      %v1991 = vsel %vm557, %v1960, %v1961
      %v1992 = vsel %vm1969, %v1934, %v1991
      %v1993 = vsel %vm557, %v1961, %v1962
      %v1994 = vsel %vm1969, %v1936, %v1993
      %v1995 = vsel %vm557, %v1962, %v1963
      %v1996 = vsel %vm1969, %v1938, %v1995
      %v1997 = vsel %vm557, %v1963, %v1964
      %v1998 = vsel %vm1969, %v1940, %v1997
      %v1999 = vsel %vm557, %v1964, %v1965
      %v2000 = vsel %vm1969, %v1942, %v1999
      %v2001 = vsel %vm557, %v1965, %v1966
      %v2002 = vsel %vm1969, %v1944, %v2001
      %v2003 = vsel %vm557, %v1966, %v1967
      %v2004 = vsel %vm1969, %v1946, %v2003
      %2023 = vst [vmem:[#allocation3 + $0x240] sm:$0x33] %v1970
      %2024 = vst [vmem:[#allocation3 + $0x248] sm:$0x33] %v1972
      %2025 = vst [vmem:[#allocation3 + $0x250] sm:$0x33] %v1974
      %2026 = vst [vmem:[#allocation3 + $0x258] sm:$0x33] %v1976
      %2027 = vst [vmem:[#allocation3 + $0x260] sm:$0x33] %v1978
      %2028 = vst [vmem:[#allocation3 + $0x268] sm:$0x33] %v1980
      %2029 = vst [vmem:[#allocation3 + $0x270] sm:$0x33] %v1982
      %2030 = vst [vmem:[#allocation3 + $0x278] sm:$0x33] %v1984
      %2031 = vst [vmem:[#allocation3 + $0x280] sm:$0x33] %v1986
      %2032 = vst [vmem:[#allocation3 + $0x288] sm:$0x33] %v1988
      %2033 = vst [vmem:[#allocation3 + $0x290] sm:$0x33] %v1990
      %2034 = vst [vmem:[#allocation3 + $0x298] sm:$0x33] %v1992
      %2035 = vst [vmem:[#allocation3 + $0x2a0] sm:$0x33] %v1994
      %2036 = vst [vmem:[#allocation3 + $0x2a8] sm:$0x33] %v1996
      %2037 = vst [vmem:[#allocation3 + $0x2b0] sm:$0x33] %v1998
      %2038 = vst [vmem:[#allocation3 + $0x2b8] sm:$0x33] %v2000
      %2039 = vst [vmem:[#allocation3 + $0x2c0] sm:$0x33] %v2002
      %2040 = vst [vmem:[#allocation3 + $0x2c8] sm:$0x33] %v2004
      %v2041 = vld [vmem:[#allocation2 + $0x4] sm:$0xff]
      %v2042 = vld [vmem:[#allocation2 + $0xc] sm:$0xff]
      %v2043 = vld [vmem:[#allocation2 + $0x14] sm:$0xff]
      %v2044 = vld [vmem:[#allocation2 + $0x1c] sm:$0xff]
      %v2045 = vld [vmem:[#allocation2 + $0x24] sm:$0xff]
      %v2046 = vld [vmem:[#allocation2 + $0x2c] sm:$0xff]
      %v2047 = vld [vmem:[#allocation2 + $0x34] sm:$0xff]
      %v2048 = vld [vmem:[#allocation2 + $0x3c] sm:$0xff]
      %v2049 = vld [vmem:[#allocation2 + $0x44] sm:$0xff]
      %v2050 = vld [vmem:[#allocation2 + $0x4c] sm:$0x3]
      %s2052 = scalar_lea.vmem [#allocation1], 1
      %2053 = vst [vmem:[%s2052] ss:$2 sm:$0xff] %v2041
      %s2055 = scalar_lea.vmem [#allocation1], 17
      %2056 = vst [vmem:[%s2055] ss:$2 sm:$0xff] %v2042
      %s2058 = scalar_lea.vmem [#allocation1], 33
      %2059 = vst [vmem:[%s2058] ss:$2 sm:$0xff] %v2043
      %s2061 = scalar_lea.vmem [#allocation1], 49
      %2062 = vst [vmem:[%s2061] ss:$2 sm:$0xff] %v2044
      %v2063 = vld.sshfl [vmem:[#allocation1] sm:$0xff pattern:$0x75643120]
      %v2065 = vld.sshfl [vmem:[#allocation1 + $0x8] sm:$0xff pattern:$0x75643120]
      %v2067 = vld.sshfl [vmem:[#allocation1 + $0x10] sm:$0xff pattern:$0x75643120]
      %v2069 = vld.sshfl [vmem:[#allocation1 + $0x18] sm:$0xff pattern:$0x75643120]
      %v2071 = vld.sshfl [vmem:[#allocation1 + $0x20] sm:$0xff pattern:$0x75643120]
      %v2073 = vld.sshfl [vmem:[#allocation1 + $0x28] sm:$0xff pattern:$0x75643120]
      %v2075 = vld.sshfl [vmem:[#allocation1 + $0x30] sm:$0xff pattern:$0x75643120]
      %v2077 = vld.sshfl [vmem:[#allocation1 + $0x38] sm:$0xff pattern:$0x75643120]
      %2080 = vst [vmem:[%s2052] ss:$2 sm:$0xff] %v2045
      %2082 = vst [vmem:[%s2055] ss:$2 sm:$0xff] %v2046
      %2084 = vst [vmem:[%s2058] ss:$2 sm:$0xff] %v2047
      %2086 = vst [vmem:[%s2061] ss:$2 sm:$0xff] %v2048
      %v2087 = vld.sshfl [vmem:[#allocation1] sm:$0xff pattern:$0x75643120]
      %v2089 = vld.sshfl [vmem:[#allocation1 + $0x8] sm:$0xff pattern:$0x75643120]
      %v2091 = vld.sshfl [vmem:[#allocation1 + $0x10] sm:$0xff pattern:$0x75643120]
      %v2093 = vld.sshfl [vmem:[#allocation1 + $0x18] sm:$0xff pattern:$0x75643120]
      %v2095 = vld.sshfl [vmem:[#allocation1 + $0x20] sm:$0xff pattern:$0x75643120]
      %v2097 = vld.sshfl [vmem:[#allocation1 + $0x28] sm:$0xff pattern:$0x75643120]
      %v2099 = vld.sshfl [vmem:[#allocation1 + $0x30] sm:$0xff pattern:$0x75643120]
      %v2101 = vld.sshfl [vmem:[#allocation1 + $0x38] sm:$0xff pattern:$0x75643120]
      %2104 = vst [vmem:[%s2052] ss:$2 sm:$0xff] %v2049
      %2106 = vst [vmem:[%s2055] ss:$2 sm:$0xff] %v2050
      %v2107 = vld.sshfl [vmem:[#allocation1] sm:$0xff pattern:$0x75643120]
      %v2109 = vld.sshfl [vmem:[#allocation1 + $0x8] sm:$0xff pattern:$0x75643120]
      %v2111 = vld.sshfl [vmem:[#allocation1 + $0x10] sm:$0xff pattern:$0x75643120]
      %2113 = vrot.lane.b32.xlu0 %v2063, 60
      %v2114 = vpop.permute.xlu0 %2113
      %2115 = vrot.lane.b32.xlu0 %v2065, 60
      %v2116 = vpop.permute.xlu0 %2115
      %2117 = vrot.lane.b32.xlu0 %v2067, 60
      %v2118 = vpop.permute.xlu0 %2117
      %2119 = vrot.lane.b32.xlu0 %v2069, 60
      %v2120 = vpop.permute.xlu0 %2119
      %2121 = vrot.lane.b32.xlu0 %v2071, 60
      %v2122 = vpop.permute.xlu0 %2121
      %2123 = vrot.lane.b32.xlu0 %v2073, 60
      %v2124 = vpop.permute.xlu0 %2123
      %2125 = vrot.lane.b32.xlu0 %v2075, 60
      %v2126 = vpop.permute.xlu0 %2125
      %2127 = vrot.lane.b32.xlu0 %v2077, 60
      %v2128 = vpop.permute.xlu0 %2127
      %2129 = vrot.lane.b32.xlu0 %v2087, 60
      %v2130 = vpop.permute.xlu0 %2129
      %2131 = vrot.lane.b32.xlu0 %v2089, 60
      %v2132 = vpop.permute.xlu0 %2131
      %2133 = vrot.lane.b32.xlu0 %v2091, 60
      %v2134 = vpop.permute.xlu0 %2133
      %2135 = vrot.lane.b32.xlu0 %v2093, 60
      %v2136 = vpop.permute.xlu0 %2135
      %2137 = vrot.lane.b32.xlu0 %v2095, 60
      %v2138 = vpop.permute.xlu0 %2137
      %2139 = vrot.lane.b32.xlu0 %v2097, 60
      %v2140 = vpop.permute.xlu0 %2139
      %2141 = vrot.lane.b32.xlu0 %v2099, 60
      %v2142 = vpop.permute.xlu0 %2141
      %2143 = vrot.lane.b32.xlu0 %v2101, 60
      %v2144 = vpop.permute.xlu0 %2143
      %2145 = vrot.lane.b32.xlu0 %v2107, 60
      %v2146 = vpop.permute.xlu0 %2145
      %2147 = vrot.lane.b32.xlu0 %v2109, 60
      %v2148 = vpop.permute.xlu0 %2147
      %2149 = vrot.lane.b32.xlu0 %v2111, 60
      %v2150 = vpop.permute.xlu0 %2149
      %v2151 = vrot.slane %v2114, 4
      %v2152 = vrot.slane %v2116, 4
      %v2153 = vrot.slane %v2118, 4
      %v2154 = vrot.slane %v2120, 4
      %v2155 = vrot.slane %v2122, 4
      %v2156 = vrot.slane %v2124, 4
      %v2157 = vrot.slane %v2126, 4
      %v2158 = vrot.slane %v2128, 4
      %v2159 = vrot.slane %v2130, 4
      %v2160 = vrot.slane %v2132, 4
      %v2161 = vrot.slane %v2134, 4
      %v2162 = vrot.slane %v2136, 4
      %v2163 = vrot.slane %v2138, 4
      %v2164 = vrot.slane %v2140, 4
      %v2165 = vrot.slane %v2142, 4
      %v2166 = vrot.slane %v2144, 4
      %v2167 = vrot.slane %v2146, 4
      %v2168 = vrot.slane %v2148, 4
      %v2169 = vrot.slane %v2150, 4
      %v2170 = vsel %vm557, %v2151, %v2152
      %vm2171 = vcmask 490496
      %v2172 = vsel %vm2171, %v2114, %v2170
      %v2173 = vsel %vm557, %v2152, %v2153
      %v2174 = vsel %vm2171, %v2116, %v2173
      %v2175 = vsel %vm557, %v2153, %v2154
      %v2176 = vsel %vm2171, %v2118, %v2175
      %v2177 = vsel %vm557, %v2154, %v2155
      %v2178 = vsel %vm2171, %v2120, %v2177
      %v2179 = vsel %vm557, %v2155, %v2156
      %v2180 = vsel %vm2171, %v2122, %v2179
      %v2181 = vsel %vm557, %v2156, %v2157
      %v2182 = vsel %vm2171, %v2124, %v2181
      %v2183 = vsel %vm557, %v2157, %v2158
      %v2184 = vsel %vm2171, %v2126, %v2183
      %v2185 = vsel %vm557, %v2158, %v2159
      %v2186 = vsel %vm2171, %v2128, %v2185
      %v2187 = vsel %vm557, %v2159, %v2160
      %v2188 = vsel %vm2171, %v2130, %v2187
      %v2189 = vsel %vm557, %v2160, %v2161
      %v2190 = vsel %vm2171, %v2132, %v2189
      %v2191 = vsel %vm557, %v2161, %v2162
      %v2192 = vsel %vm2171, %v2134, %v2191
      %v2193 = vsel %vm557, %v2162, %v2163
      %v2194 = vsel %vm2171, %v2136, %v2193
      %v2195 = vsel %vm557, %v2163, %v2164
      %v2196 = vsel %vm2171, %v2138, %v2195
      %v2197 = vsel %vm557, %v2164, %v2165
      %v2198 = vsel %vm2171, %v2140, %v2197
      %v2199 = vsel %vm557, %v2165, %v2166
      %v2200 = vsel %vm2171, %v2142, %v2199
      %v2201 = vsel %vm557, %v2166, %v2167
      %v2202 = vsel %vm2171, %v2144, %v2201
      %v2203 = vsel %vm557, %v2167, %v2168
      %v2204 = vsel %vm2171, %v2146, %v2203
      %v2205 = vsel %vm557, %v2168, %v2169
      %v2206 = vsel %vm2171, %v2148, %v2205
      %2225 = vst [vmem:[#allocation3 + $0x240] sm:$0xcc] %v2172
      %2226 = vst [vmem:[#allocation3 + $0x248] sm:$0xcc] %v2174
      %2227 = vst [vmem:[#allocation3 + $0x250] sm:$0xcc] %v2176
      %2228 = vst [vmem:[#allocation3 + $0x258] sm:$0xcc] %v2178
      %2229 = vst [vmem:[#allocation3 + $0x260] sm:$0xcc] %v2180
      %2230 = vst [vmem:[#allocation3 + $0x268] sm:$0xcc] %v2182
      %2231 = vst [vmem:[#allocation3 + $0x270] sm:$0xcc] %v2184
      %2232 = vst [vmem:[#allocation3 + $0x278] sm:$0xcc] %v2186
      %2233 = vst [vmem:[#allocation3 + $0x280] sm:$0xcc] %v2188
      %2234 = vst [vmem:[#allocation3 + $0x288] sm:$0xcc] %v2190
      %2235 = vst [vmem:[#allocation3 + $0x290] sm:$0xcc] %v2192
      %2236 = vst [vmem:[#allocation3 + $0x298] sm:$0xcc] %v2194
      %2237 = vst [vmem:[#allocation3 + $0x2a0] sm:$0xcc] %v2196
      %2238 = vst [vmem:[#allocation3 + $0x2a8] sm:$0xcc] %v2198
      %2239 = vst [vmem:[#allocation3 + $0x2b0] sm:$0xcc] %v2200
      %2240 = vst [vmem:[#allocation3 + $0x2b8] sm:$0xcc] %v2202
      %2241 = vst [vmem:[#allocation3 + $0x2c0] sm:$0xcc] %v2204
      %2242 = vst [vmem:[#allocation3 + $0x2c8] sm:$0xcc] %v2206
      %v2243 = vld [vmem:[#allocation2 + $0x4] sm:$0xff]
      %v2244 = vld [vmem:[#allocation2 + $0xc] sm:$0xff]
      %v2245 = vld [vmem:[#allocation2 + $0x14] sm:$0xff]
      %v2246 = vld [vmem:[#allocation2 + $0x1c] sm:$0xff]
      %v2247 = vld [vmem:[#allocation2 + $0x24] sm:$0xff]
      %v2248 = vld [vmem:[#allocation2 + $0x2c] sm:$0xff]
      %v2249 = vld [vmem:[#allocation2 + $0x34] sm:$0xff]
      %v2250 = vld [vmem:[#allocation2 + $0x3c] sm:$0xff]
      %v2251 = vld [vmem:[#allocation2 + $0x44] sm:$0xff]
      %v2252 = vld [vmem:[#allocation2 + $0x4c] sm:$0x3]
      %2254 = vst [vmem:[#allocation1] ss:$2 sm:$0xff] %v2243
      %s2256 = scalar_lea.vmem [#allocation1], 16
      %2257 = vst [vmem:[%s2256] ss:$2 sm:$0xff] %v2244
      %s2259 = scalar_lea.vmem [#allocation1], 32
      %2260 = vst [vmem:[%s2259] ss:$2 sm:$0xff] %v2245
      %s2262 = scalar_lea.vmem [#allocation1], 48
      %2263 = vst [vmem:[%s2262] ss:$2 sm:$0xff] %v2246
      %v2264 = vld.sshfl [vmem:[#allocation1] sm:$0xff pattern:$0x75643120]
      %v2266 = vld.sshfl [vmem:[#allocation1 + $0x8] sm:$0xff pattern:$0x75643120]
      %v2268 = vld.sshfl [vmem:[#allocation1 + $0x10] sm:$0xff pattern:$0x75643120]
      %v2270 = vld.sshfl [vmem:[#allocation1 + $0x18] sm:$0xff pattern:$0x75643120]
      %v2272 = vld.sshfl [vmem:[#allocation1 + $0x20] sm:$0xff pattern:$0x75643120]
      %v2274 = vld.sshfl [vmem:[#allocation1 + $0x28] sm:$0xff pattern:$0x75643120]
      %v2276 = vld.sshfl [vmem:[#allocation1 + $0x30] sm:$0xff pattern:$0x75643120]
      %v2278 = vld.sshfl [vmem:[#allocation1 + $0x38] sm:$0xff pattern:$0x75643120]
      %2281 = vst [vmem:[#allocation1] ss:$2 sm:$0xff] %v2247
      %2283 = vst [vmem:[%s2256] ss:$2 sm:$0xff] %v2248
      %2285 = vst [vmem:[%s2259] ss:$2 sm:$0xff] %v2249
      %2287 = vst [vmem:[%s2262] ss:$2 sm:$0xff] %v2250
      %v2288 = vld.sshfl [vmem:[#allocation1] sm:$0xff pattern:$0x75643120]
      %v2290 = vld.sshfl [vmem:[#allocation1 + $0x8] sm:$0xff pattern:$0x75643120]
      %v2292 = vld.sshfl [vmem:[#allocation1 + $0x10] sm:$0xff pattern:$0x75643120]
      %v2294 = vld.sshfl [vmem:[#allocation1 + $0x18] sm:$0xff pattern:$0x75643120]
      %v2296 = vld.sshfl [vmem:[#allocation1 + $0x20] sm:$0xff pattern:$0x75643120]
      %v2298 = vld.sshfl [vmem:[#allocation1 + $0x28] sm:$0xff pattern:$0x75643120]
      %v2300 = vld.sshfl [vmem:[#allocation1 + $0x30] sm:$0xff pattern:$0x75643120]
      %v2302 = vld.sshfl [vmem:[#allocation1 + $0x38] sm:$0xff pattern:$0x75643120]
      %2305 = vst [vmem:[#allocation1] ss:$2 sm:$0xff] %v2251
      %2307 = vst [vmem:[%s2256] ss:$2 sm:$0xff] %v2252
      %v2308 = vld.sshfl [vmem:[#allocation1] sm:$0xff pattern:$0x75643120]
      %v2310 = vld.sshfl [vmem:[#allocation1 + $0x8] sm:$0xff pattern:$0x75643120]
      %v2312 = vld.sshfl [vmem:[#allocation1 + $0x10] sm:$0xff pattern:$0x75643120]
      %2314 = vrot.lane.b32.xlu0 %v2264, 59
      %v2315 = vpop.permute.xlu0 %2314
      %2316 = vrot.lane.b32.xlu0 %v2266, 59
      %v2317 = vpop.permute.xlu0 %2316
      %2318 = vrot.lane.b32.xlu0 %v2268, 59
      %v2319 = vpop.permute.xlu0 %2318
      %2320 = vrot.lane.b32.xlu0 %v2270, 59
      %v2321 = vpop.permute.xlu0 %2320
      %2322 = vrot.lane.b32.xlu0 %v2272, 59
      %v2323 = vpop.permute.xlu0 %2322
      %2324 = vrot.lane.b32.xlu0 %v2274, 59
      %v2325 = vpop.permute.xlu0 %2324
      %2326 = vrot.lane.b32.xlu0 %v2276, 59
      %v2327 = vpop.permute.xlu0 %2326
      %2328 = vrot.lane.b32.xlu0 %v2278, 59
      %v2329 = vpop.permute.xlu0 %2328
      %2330 = vrot.lane.b32.xlu0 %v2288, 59
      %v2331 = vpop.permute.xlu0 %2330
      %2332 = vrot.lane.b32.xlu0 %v2290, 59
      %v2333 = vpop.permute.xlu0 %2332
      %2334 = vrot.lane.b32.xlu0 %v2292, 59
      %v2335 = vpop.permute.xlu0 %2334
      %2336 = vrot.lane.b32.xlu0 %v2294, 59
      %v2337 = vpop.permute.xlu0 %2336
      %2338 = vrot.lane.b32.xlu0 %v2296, 59
      %v2339 = vpop.permute.xlu0 %2338
      %2340 = vrot.lane.b32.xlu0 %v2298, 59
      %v2341 = vpop.permute.xlu0 %2340
      %2342 = vrot.lane.b32.xlu0 %v2300, 59
      %v2343 = vpop.permute.xlu0 %2342
      %2344 = vrot.lane.b32.xlu0 %v2302, 59
      %v2345 = vpop.permute.xlu0 %2344
      %2346 = vrot.lane.b32.xlu0 %v2308, 59
      %v2347 = vpop.permute.xlu0 %2346
      %2348 = vrot.lane.b32.xlu0 %v2310, 59
      %v2349 = vpop.permute.xlu0 %2348
      %2350 = vrot.lane.b32.xlu0 %v2312, 59
      %v2351 = vpop.permute.xlu0 %2350
      %v2352 = vrot.slane %v2315, 4
      %v2353 = vrot.slane %v2317, 4
      %v2354 = vrot.slane %v2319, 4
      %v2355 = vrot.slane %v2321, 4
      %v2356 = vrot.slane %v2323, 4
      %v2357 = vrot.slane %v2325, 4
      %v2358 = vrot.slane %v2327, 4
      %v2359 = vrot.slane %v2329, 4
      %v2360 = vrot.slane %v2331, 4
      %v2361 = vrot.slane %v2333, 4
      %v2362 = vrot.slane %v2335, 4
      %v2363 = vrot.slane %v2337, 4
      %v2364 = vrot.slane %v2339, 4
      %v2365 = vrot.slane %v2341, 4
      %v2366 = vrot.slane %v2343, 4
      %v2367 = vrot.slane %v2345, 4
      %v2368 = vrot.slane %v2347, 4
      %v2369 = vrot.slane %v2349, 4
      %v2370 = vrot.slane %v2351, 4
      %v2371 = vsel %vm557, %v2352, %v2353
      %vm2372 = vcmask 482304
      %v2373 = vsel %vm2372, %v2315, %v2371
      %v2374 = vsel %vm557, %v2353, %v2354
      %v2375 = vsel %vm2372, %v2317, %v2374
      %v2376 = vsel %vm557, %v2354, %v2355
      %v2377 = vsel %vm2372, %v2319, %v2376
      %v2378 = vsel %vm557, %v2355, %v2356
      %v2379 = vsel %vm2372, %v2321, %v2378
      %v2380 = vsel %vm557, %v2356, %v2357
      %v2381 = vsel %vm2372, %v2323, %v2380
      %v2382 = vsel %vm557, %v2357, %v2358
      %v2383 = vsel %vm2372, %v2325, %v2382
      %v2384 = vsel %vm557, %v2358, %v2359
      %v2385 = vsel %vm2372, %v2327, %v2384
      %v2386 = vsel %vm557, %v2359, %v2360
      %v2387 = vsel %vm2372, %v2329, %v2386
      %v2388 = vsel %vm557, %v2360, %v2361
      %v2389 = vsel %vm2372, %v2331, %v2388
      %v2390 = vsel %vm557, %v2361, %v2362
      %v2391 = vsel %vm2372, %v2333, %v2390
      %v2392 = vsel %vm557, %v2362, %v2363
      %v2393 = vsel %vm2372, %v2335, %v2392
      %v2394 = vsel %vm557, %v2363, %v2364
      %v2395 = vsel %vm2372, %v2337, %v2394
      %v2396 = vsel %vm557, %v2364, %v2365
      %v2397 = vsel %vm2372, %v2339, %v2396
      %v2398 = vsel %vm557, %v2365, %v2366
      %v2399 = vsel %vm2372, %v2341, %v2398
      %v2400 = vsel %vm557, %v2366, %v2367
      %v2401 = vsel %vm2372, %v2343, %v2400
      %v2402 = vsel %vm557, %v2367, %v2368
      %v2403 = vsel %vm2372, %v2345, %v2402
      %v2404 = vsel %vm557, %v2368, %v2369
      %v2405 = vsel %vm2372, %v2347, %v2404
      %v2406 = vsel %vm557, %v2369, %v2370
      %v2407 = vsel %vm2372, %v2349, %v2406
      %2426 = vst [vmem:[#allocation3 + $0x2d0] sm:$0x33] %v2373
      %2427 = vst [vmem:[#allocation3 + $0x2d8] sm:$0x33] %v2375
      %2428 = vst [vmem:[#allocation3 + $0x2e0] sm:$0x33] %v2377
      %2429 = vst [vmem:[#allocation3 + $0x2e8] sm:$0x33] %v2379
      %2430 = vst [vmem:[#allocation3 + $0x2f0] sm:$0x33] %v2381
      %2431 = vst [vmem:[#allocation3 + $0x2f8] sm:$0x33] %v2383
      %2432 = vst [vmem:[#allocation3 + $0x300] sm:$0x33] %v2385
      %2433 = vst [vmem:[#allocation3 + $0x308] sm:$0x33] %v2387
      %2434 = vst [vmem:[#allocation3 + $0x310] sm:$0x33] %v2389
      %2435 = vst [vmem:[#allocation3 + $0x318] sm:$0x33] %v2391
      %2436 = vst [vmem:[#allocation3 + $0x320] sm:$0x33] %v2393
      %2437 = vst [vmem:[#allocation3 + $0x328] sm:$0x33] %v2395
      %2438 = vst [vmem:[#allocation3 + $0x330] sm:$0x33] %v2397
      %2439 = vst [vmem:[#allocation3 + $0x338] sm:$0x33] %v2399
      %2440 = vst [vmem:[#allocation3 + $0x340] sm:$0x33] %v2401
      %2441 = vst [vmem:[#allocation3 + $0x348] sm:$0x33] %v2403
      %2442 = vst [vmem:[#allocation3 + $0x350] sm:$0x33] %v2405
      %2443 = vst [vmem:[#allocation3 + $0x358] sm:$0x33] %v2407
      %v2444 = vld [vmem:[#allocation2 + $0x4] sm:$0xff]
      %v2445 = vld [vmem:[#allocation2 + $0xc] sm:$0xff]
      %v2446 = vld [vmem:[#allocation2 + $0x14] sm:$0xff]
      %v2447 = vld [vmem:[#allocation2 + $0x1c] sm:$0xff]
      %v2448 = vld [vmem:[#allocation2 + $0x24] sm:$0xff]
      %v2449 = vld [vmem:[#allocation2 + $0x2c] sm:$0xff]
      %v2450 = vld [vmem:[#allocation2 + $0x34] sm:$0xff]
      %v2451 = vld [vmem:[#allocation2 + $0x3c] sm:$0xff]
      %v2452 = vld [vmem:[#allocation2 + $0x44] sm:$0xff]
      %v2453 = vld [vmem:[#allocation2 + $0x4c] sm:$0x3]
      %s2455 = scalar_lea.vmem [#allocation1], 1
      %2456 = vst [vmem:[%s2455] ss:$2 sm:$0xff] %v2444
      %s2458 = scalar_lea.vmem [#allocation1], 17
      %2459 = vst [vmem:[%s2458] ss:$2 sm:$0xff] %v2445
      %s2461 = scalar_lea.vmem [#allocation1], 33
      %2462 = vst [vmem:[%s2461] ss:$2 sm:$0xff] %v2446
      %s2464 = scalar_lea.vmem [#allocation1], 49
      %2465 = vst [vmem:[%s2464] ss:$2 sm:$0xff] %v2447
      %v2466 = vld.sshfl [vmem:[#allocation1] sm:$0xff pattern:$0x75643120]
      %v2468 = vld.sshfl [vmem:[#allocation1 + $0x8] sm:$0xff pattern:$0x75643120]
      %v2470 = vld.sshfl [vmem:[#allocation1 + $0x10] sm:$0xff pattern:$0x75643120]
      %v2472 = vld.sshfl [vmem:[#allocation1 + $0x18] sm:$0xff pattern:$0x75643120]
      %v2474 = vld.sshfl [vmem:[#allocation1 + $0x20] sm:$0xff pattern:$0x75643120]
      %v2476 = vld.sshfl [vmem:[#allocation1 + $0x28] sm:$0xff pattern:$0x75643120]
      %v2478 = vld.sshfl [vmem:[#allocation1 + $0x30] sm:$0xff pattern:$0x75643120]
      %v2480 = vld.sshfl [vmem:[#allocation1 + $0x38] sm:$0xff pattern:$0x75643120]
      %2483 = vst [vmem:[%s2455] ss:$2 sm:$0xff] %v2448
      %2485 = vst [vmem:[%s2458] ss:$2 sm:$0xff] %v2449
      %2487 = vst [vmem:[%s2461] ss:$2 sm:$0xff] %v2450
      %2489 = vst [vmem:[%s2464] ss:$2 sm:$0xff] %v2451
      %v2490 = vld.sshfl [vmem:[#allocation1] sm:$0xff pattern:$0x75643120]
      %v2492 = vld.sshfl [vmem:[#allocation1 + $0x8] sm:$0xff pattern:$0x75643120]
      %v2494 = vld.sshfl [vmem:[#allocation1 + $0x10] sm:$0xff pattern:$0x75643120]
      %v2496 = vld.sshfl [vmem:[#allocation1 + $0x18] sm:$0xff pattern:$0x75643120]
      %v2498 = vld.sshfl [vmem:[#allocation1 + $0x20] sm:$0xff pattern:$0x75643120]
      %v2500 = vld.sshfl [vmem:[#allocation1 + $0x28] sm:$0xff pattern:$0x75643120]
      %v2502 = vld.sshfl [vmem:[#allocation1 + $0x30] sm:$0xff pattern:$0x75643120]
      %v2504 = vld.sshfl [vmem:[#allocation1 + $0x38] sm:$0xff pattern:$0x75643120]
      %2507 = vst [vmem:[%s2455] ss:$2 sm:$0xff] %v2452
      %2509 = vst [vmem:[%s2458] ss:$2 sm:$0xff] %v2453
      %v2510 = vld.sshfl [vmem:[#allocation1] sm:$0xff pattern:$0x75643120]
      %v2512 = vld.sshfl [vmem:[#allocation1 + $0x8] sm:$0xff pattern:$0x75643120]
      %v2514 = vld.sshfl [vmem:[#allocation1 + $0x10] sm:$0xff pattern:$0x75643120]
      %2516 = vrot.lane.b32.xlu0 %v2466, 58
      %v2517 = vpop.permute.xlu0 %2516
      %2518 = vrot.lane.b32.xlu0 %v2468, 58
      %v2519 = vpop.permute.xlu0 %2518
      %2520 = vrot.lane.b32.xlu0 %v2470, 58
      %v2521 = vpop.permute.xlu0 %2520
      %2522 = vrot.lane.b32.xlu0 %v2472, 58
      %v2523 = vpop.permute.xlu0 %2522
      %2524 = vrot.lane.b32.xlu0 %v2474, 58
      %v2525 = vpop.permute.xlu0 %2524
      %2526 = vrot.lane.b32.xlu0 %v2476, 58
      %v2527 = vpop.permute.xlu0 %2526
      %2528 = vrot.lane.b32.xlu0 %v2478, 58
      %v2529 = vpop.permute.xlu0 %2528
      %2530 = vrot.lane.b32.xlu0 %v2480, 58
      %v2531 = vpop.permute.xlu0 %2530
      %2532 = vrot.lane.b32.xlu0 %v2490, 58
      %v2533 = vpop.permute.xlu0 %2532
      %2534 = vrot.lane.b32.xlu0 %v2492, 58
      %v2535 = vpop.permute.xlu0 %2534
      %2536 = vrot.lane.b32.xlu0 %v2494, 58
      %v2537 = vpop.permute.xlu0 %2536
      %2538 = vrot.lane.b32.xlu0 %v2496, 58
      %v2539 = vpop.permute.xlu0 %2538
      %2540 = vrot.lane.b32.xlu0 %v2498, 58
      %v2541 = vpop.permute.xlu0 %2540
      %2542 = vrot.lane.b32.xlu0 %v2500, 58
      %v2543 = vpop.permute.xlu0 %2542
      %2544 = vrot.lane.b32.xlu0 %v2502, 58
      %v2545 = vpop.permute.xlu0 %2544
      %2546 = vrot.lane.b32.xlu0 %v2504, 58
      %v2547 = vpop.permute.xlu0 %2546
      %2548 = vrot.lane.b32.xlu0 %v2510, 58
      %v2549 = vpop.permute.xlu0 %2548
      %2550 = vrot.lane.b32.xlu0 %v2512, 58
      %v2551 = vpop.permute.xlu0 %2550
      %2552 = vrot.lane.b32.xlu0 %v2514, 58
      %v2553 = vpop.permute.xlu0 %2552
      %v2554 = vrot.slane %v2517, 4
      %v2555 = vrot.slane %v2519, 4
      %v2556 = vrot.slane %v2521, 4
      %v2557 = vrot.slane %v2523, 4
      %v2558 = vrot.slane %v2525, 4
      %v2559 = vrot.slane %v2527, 4
      %v2560 = vrot.slane %v2529, 4
      %v2561 = vrot.slane %v2531, 4
      %v2562 = vrot.slane %v2533, 4
      %v2563 = vrot.slane %v2535, 4
      %v2564 = vrot.slane %v2537, 4
      %v2565 = vrot.slane %v2539, 4
      %v2566 = vrot.slane %v2541, 4
      %v2567 = vrot.slane %v2543, 4
      %v2568 = vrot.slane %v2545, 4
      %v2569 = vrot.slane %v2547, 4
      %v2570 = vrot.slane %v2549, 4
      %v2571 = vrot.slane %v2551, 4
      %v2572 = vrot.slane %v2553, 4
      %v2573 = vsel %vm557, %v2554, %v2555
      %vm2574 = vcmask 474112
      %v2575 = vsel %vm2574, %v2517, %v2573
      %v2576 = vsel %vm557, %v2555, %v2556
      %v2577 = vsel %vm2574, %v2519, %v2576
      %v2578 = vsel %vm557, %v2556, %v2557
      %v2579 = vsel %vm2574, %v2521, %v2578
      %v2580 = vsel %vm557, %v2557, %v2558
      %v2581 = vsel %vm2574, %v2523, %v2580
      %v2582 = vsel %vm557, %v2558, %v2559
      %v2583 = vsel %vm2574, %v2525, %v2582
      %v2584 = vsel %vm557, %v2559, %v2560
      %v2585 = vsel %vm2574, %v2527, %v2584
      %v2586 = vsel %vm557, %v2560, %v2561
      %v2587 = vsel %vm2574, %v2529, %v2586
      %v2588 = vsel %vm557, %v2561, %v2562
      %v2589 = vsel %vm2574, %v2531, %v2588
      %v2590 = vsel %vm557, %v2562, %v2563
      %v2591 = vsel %vm2574, %v2533, %v2590
      %v2592 = vsel %vm557, %v2563, %v2564
      %v2593 = vsel %vm2574, %v2535, %v2592
      %v2594 = vsel %vm557, %v2564, %v2565
      %v2595 = vsel %vm2574, %v2537, %v2594
      %v2596 = vsel %vm557, %v2565, %v2566
      %v2597 = vsel %vm2574, %v2539, %v2596
      %v2598 = vsel %vm557, %v2566, %v2567
      %v2599 = vsel %vm2574, %v2541, %v2598
      %v2600 = vsel %vm557, %v2567, %v2568
      %v2601 = vsel %vm2574, %v2543, %v2600
      %v2602 = vsel %vm557, %v2568, %v2569
      %v2603 = vsel %vm2574, %v2545, %v2602
      %v2604 = vsel %vm557, %v2569, %v2570
      %v2605 = vsel %vm2574, %v2547, %v2604
      %v2606 = vsel %vm557, %v2570, %v2571
      %v2607 = vsel %vm2574, %v2549, %v2606
      %v2608 = vsel %vm557, %v2571, %v2572
      %v2609 = vsel %vm2574, %v2551, %v2608
      %2628 = vst [vmem:[#allocation3 + $0x2d0] sm:$0xcc] %v2575
      %2629 = vst [vmem:[#allocation3 + $0x2d8] sm:$0xcc] %v2577
      %2630 = vst [vmem:[#allocation3 + $0x2e0] sm:$0xcc] %v2579
      %2631 = vst [vmem:[#allocation3 + $0x2e8] sm:$0xcc] %v2581
      %2632 = vst [vmem:[#allocation3 + $0x2f0] sm:$0xcc] %v2583
      %2633 = vst [vmem:[#allocation3 + $0x2f8] sm:$0xcc] %v2585
      %2634 = vst [vmem:[#allocation3 + $0x300] sm:$0xcc] %v2587
      %2635 = vst [vmem:[#allocation3 + $0x308] sm:$0xcc] %v2589
      %2636 = vst [vmem:[#allocation3 + $0x310] sm:$0xcc] %v2591
      %2637 = vst [vmem:[#allocation3 + $0x318] sm:$0xcc] %v2593
      %2638 = vst [vmem:[#allocation3 + $0x320] sm:$0xcc] %v2595
      %2639 = vst [vmem:[#allocation3 + $0x328] sm:$0xcc] %v2597
      %2640 = vst [vmem:[#allocation3 + $0x330] sm:$0xcc] %v2599
      %2641 = vst [vmem:[#allocation3 + $0x338] sm:$0xcc] %v2601
      %2642 = vst [vmem:[#allocation3 + $0x340] sm:$0xcc] %v2603
      %2643 = vst [vmem:[#allocation3 + $0x348] sm:$0xcc] %v2605
      %2644 = vst [vmem:[#allocation3 + $0x350] sm:$0xcc] %v2607
      %2645 = vst [vmem:[#allocation3 + $0x358] sm:$0xcc] %v2609
      %v2646 = vld [vmem:[#allocation2 + $0x4] sm:$0xff]
      %v2647 = vld [vmem:[#allocation2 + $0xc] sm:$0xff]
      %v2648 = vld [vmem:[#allocation2 + $0x14] sm:$0xff]
      %v2649 = vld [vmem:[#allocation2 + $0x1c] sm:$0xff]
      %v2650 = vld [vmem:[#allocation2 + $0x24] sm:$0xff]
      %v2651 = vld [vmem:[#allocation2 + $0x2c] sm:$0xff]
      %v2652 = vld [vmem:[#allocation2 + $0x34] sm:$0xff]
      %v2653 = vld [vmem:[#allocation2 + $0x3c] sm:$0xff]
      %v2654 = vld [vmem:[#allocation2 + $0x44] sm:$0xff]
      %v2655 = vld [vmem:[#allocation2 + $0x4c] sm:$0x3]
      %2657 = vst [vmem:[#allocation1] ss:$2 sm:$0xff] %v2646
      %s2659 = scalar_lea.vmem [#allocation1], 16
      %2660 = vst [vmem:[%s2659] ss:$2 sm:$0xff] %v2647
      %s2662 = scalar_lea.vmem [#allocation1], 32
      %2663 = vst [vmem:[%s2662] ss:$2 sm:$0xff] %v2648
      %s2665 = scalar_lea.vmem [#allocation1], 48
      %2666 = vst [vmem:[%s2665] ss:$2 sm:$0xff] %v2649
      %v2667 = vld.sshfl [vmem:[#allocation1] sm:$0xff pattern:$0x75643120]
      %v2669 = vld.sshfl [vmem:[#allocation1 + $0x8] sm:$0xff pattern:$0x75643120]
      %v2671 = vld.sshfl [vmem:[#allocation1 + $0x10] sm:$0xff pattern:$0x75643120]
      %v2673 = vld.sshfl [vmem:[#allocation1 + $0x18] sm:$0xff pattern:$0x75643120]
      %v2675 = vld.sshfl [vmem:[#allocation1 + $0x20] sm:$0xff pattern:$0x75643120]
      %v2677 = vld.sshfl [vmem:[#allocation1 + $0x28] sm:$0xff pattern:$0x75643120]
      %v2679 = vld.sshfl [vmem:[#allocation1 + $0x30] sm:$0xff pattern:$0x75643120]
      %v2681 = vld.sshfl [vmem:[#allocation1 + $0x38] sm:$0xff pattern:$0x75643120]
      %2684 = vst [vmem:[#allocation1] ss:$2 sm:$0xff] %v2650
      %2686 = vst [vmem:[%s2659] ss:$2 sm:$0xff] %v2651
      %2688 = vst [vmem:[%s2662] ss:$2 sm:$0xff] %v2652
      %2690 = vst [vmem:[%s2665] ss:$2 sm:$0xff] %v2653
      %v2691 = vld.sshfl [vmem:[#allocation1] sm:$0xff pattern:$0x75643120]
      %v2693 = vld.sshfl [vmem:[#allocation1 + $0x8] sm:$0xff pattern:$0x75643120]
      %v2695 = vld.sshfl [vmem:[#allocation1 + $0x10] sm:$0xff pattern:$0x75643120]
      %v2697 = vld.sshfl [vmem:[#allocation1 + $0x18] sm:$0xff pattern:$0x75643120]
      %v2699 = vld.sshfl [vmem:[#allocation1 + $0x20] sm:$0xff pattern:$0x75643120]
      %v2701 = vld.sshfl [vmem:[#allocation1 + $0x28] sm:$0xff pattern:$0x75643120]
      %v2703 = vld.sshfl [vmem:[#allocation1 + $0x30] sm:$0xff pattern:$0x75643120]
      %v2705 = vld.sshfl [vmem:[#allocation1 + $0x38] sm:$0xff pattern:$0x75643120]
      %2708 = vst [vmem:[#allocation1] ss:$2 sm:$0xff] %v2654
      %2710 = vst [vmem:[%s2659] ss:$2 sm:$0xff] %v2655
      %v2711 = vld.sshfl [vmem:[#allocation1] sm:$0xff pattern:$0x75643120]
      %v2713 = vld.sshfl [vmem:[#allocation1 + $0x8] sm:$0xff pattern:$0x75643120]
      %v2715 = vld.sshfl [vmem:[#allocation1 + $0x10] sm:$0xff pattern:$0x75643120]
      %2717 = vrot.lane.b32.xlu0 %v2667, 42
      %v2718 = vpop.permute.xlu0 %2717
      %2719 = vrot.lane.b32.xlu0 %v2669, 42
      %v2720 = vpop.permute.xlu0 %2719
      %2721 = vrot.lane.b32.xlu0 %v2671, 42
      %v2722 = vpop.permute.xlu0 %2721
      %2723 = vrot.lane.b32.xlu0 %v2673, 42
      %v2724 = vpop.permute.xlu0 %2723
      %2725 = vrot.lane.b32.xlu0 %v2675, 42
      %v2726 = vpop.permute.xlu0 %2725
      %2727 = vrot.lane.b32.xlu0 %v2677, 42
      %v2728 = vpop.permute.xlu0 %2727
      %2729 = vrot.lane.b32.xlu0 %v2679, 42
      %v2730 = vpop.permute.xlu0 %2729
      %2731 = vrot.lane.b32.xlu0 %v2681, 42
      %v2732 = vpop.permute.xlu0 %2731
      %2733 = vrot.lane.b32.xlu0 %v2691, 42
      %v2734 = vpop.permute.xlu0 %2733
      %2735 = vrot.lane.b32.xlu0 %v2693, 42
      %v2736 = vpop.permute.xlu0 %2735
      %2737 = vrot.lane.b32.xlu0 %v2695, 42
      %v2738 = vpop.permute.xlu0 %2737
      %2739 = vrot.lane.b32.xlu0 %v2697, 42
      %v2740 = vpop.permute.xlu0 %2739
      %2741 = vrot.lane.b32.xlu0 %v2699, 42
      %v2742 = vpop.permute.xlu0 %2741
      %2743 = vrot.lane.b32.xlu0 %v2701, 42
      %v2744 = vpop.permute.xlu0 %2743
      %2745 = vrot.lane.b32.xlu0 %v2703, 42
      %v2746 = vpop.permute.xlu0 %2745
      %2747 = vrot.lane.b32.xlu0 %v2705, 42
      %v2748 = vpop.permute.xlu0 %2747
      %2749 = vrot.lane.b32.xlu0 %v2711, 42
      %v2750 = vpop.permute.xlu0 %2749
      %2751 = vrot.lane.b32.xlu0 %v2713, 42
      %v2752 = vpop.permute.xlu0 %2751
      %2753 = vrot.lane.b32.xlu0 %v2715, 42
      %v2754 = vpop.permute.xlu0 %2753
      %v2755 = vrot.slane %v2718, 4
      %v2756 = vrot.slane %v2720, 4
      %v2757 = vrot.slane %v2722, 4
      %v2758 = vrot.slane %v2724, 4
      %v2759 = vrot.slane %v2726, 4
      %v2760 = vrot.slane %v2728, 4
      %v2761 = vrot.slane %v2730, 4
      %v2762 = vrot.slane %v2732, 4
      %v2763 = vrot.slane %v2734, 4
      %v2764 = vrot.slane %v2736, 4
      %v2765 = vrot.slane %v2738, 4
      %v2766 = vrot.slane %v2740, 4
      %v2767 = vrot.slane %v2742, 4
      %v2768 = vrot.slane %v2744, 4
      %v2769 = vrot.slane %v2746, 4
      %v2770 = vrot.slane %v2748, 4
      %v2771 = vrot.slane %v2750, 4
      %v2772 = vrot.slane %v2752, 4
      %v2773 = vrot.slane %v2754, 4
      %v2774 = vsel %vm557, %v2755, %v2756
      %vm2775 = vcmask 343040
      %v2776 = vsel %vm2775, %v2718, %v2774
      %v2777 = vsel %vm557, %v2756, %v2757
      %v2778 = vsel %vm2775, %v2720, %v2777
      %v2779 = vsel %vm557, %v2757, %v2758
      %v2780 = vsel %vm2775, %v2722, %v2779
      %v2781 = vsel %vm557, %v2758, %v2759
      %v2782 = vsel %vm2775, %v2724, %v2781
      %v2783 = vsel %vm557, %v2759, %v2760
      %v2784 = vsel %vm2775, %v2726, %v2783
      %v2785 = vsel %vm557, %v2760, %v2761
      %v2786 = vsel %vm2775, %v2728, %v2785
      %v2787 = vsel %vm557, %v2761, %v2762
      %v2788 = vsel %vm2775, %v2730, %v2787
      %v2789 = vsel %vm557, %v2762, %v2763
      %v2790 = vsel %vm2775, %v2732, %v2789
      %v2791 = vsel %vm557, %v2763, %v2764
      %v2792 = vsel %vm2775, %v2734, %v2791
      %v2793 = vsel %vm557, %v2764, %v2765
      %v2794 = vsel %vm2775, %v2736, %v2793
      %v2795 = vsel %vm557, %v2765, %v2766
      %v2796 = vsel %vm2775, %v2738, %v2795
      %v2797 = vsel %vm557, %v2766, %v2767
      %v2798 = vsel %vm2775, %v2740, %v2797
      %v2799 = vsel %vm557, %v2767, %v2768
      %v2800 = vsel %vm2775, %v2742, %v2799
      %v2801 = vsel %vm557, %v2768, %v2769
      %v2802 = vsel %vm2775, %v2744, %v2801
      %v2803 = vsel %vm557, %v2769, %v2770
      %v2804 = vsel %vm2775, %v2746, %v2803
      %v2805 = vsel %vm557, %v2770, %v2771
      %v2806 = vsel %vm2775, %v2748, %v2805
      %v2807 = vsel %vm557, %v2771, %v2772
      %v2808 = vsel %vm2775, %v2750, %v2807
      %v2809 = vsel %vm557, %v2772, %v2773
      %v2810 = vsel %vm2775, %v2752, %v2809
      %2829 = vst [vmem:[#allocation3 + $0x360] sm:$0x33] %v2776
      %2830 = vst [vmem:[#allocation3 + $0x368] sm:$0x33] %v2778
      %2831 = vst [vmem:[#allocation3 + $0x370] sm:$0x33] %v2780
      %2832 = vst [vmem:[#allocation3 + $0x378] sm:$0x33] %v2782
      %2833 = vst [vmem:[#allocation3 + $0x380] sm:$0x33] %v2784
      %2834 = vst [vmem:[#allocation3 + $0x388] sm:$0x33] %v2786
      %2835 = vst [vmem:[#allocation3 + $0x390] sm:$0x33] %v2788
      %2836 = vst [vmem:[#allocation3 + $0x398] sm:$0x33] %v2790
      %2837 = vst [vmem:[#allocation3 + $0x3a0] sm:$0x33] %v2792
      %2838 = vst [vmem:[#allocation3 + $0x3a8] sm:$0x33] %v2794
      %2839 = vst [vmem:[#allocation3 + $0x3b0] sm:$0x33] %v2796
      %2840 = vst [vmem:[#allocation3 + $0x3b8] sm:$0x33] %v2798
      %2841 = vst [vmem:[#allocation3 + $0x3c0] sm:$0x33] %v2800
      %2842 = vst [vmem:[#allocation3 + $0x3c8] sm:$0x33] %v2802
      %2843 = vst [vmem:[#allocation3 + $0x3d0] sm:$0x33] %v2804
      %2844 = vst [vmem:[#allocation3 + $0x3d8] sm:$0x33] %v2806
      %2845 = vst [vmem:[#allocation3 + $0x3e0] sm:$0x33] %v2808
      %2846 = vst [vmem:[#allocation3 + $0x3e8] sm:$0x33] %v2810
      %v2847 = vld [vmem:[#allocation2 + $0x4] sm:$0xff]
      %v2848 = vld [vmem:[#allocation2 + $0xc] sm:$0xff]
      %v2849 = vld [vmem:[#allocation2 + $0x14] sm:$0xff]
      %v2850 = vld [vmem:[#allocation2 + $0x1c] sm:$0xff]
      %v2851 = vld [vmem:[#allocation2 + $0x24] sm:$0xff]
      %v2852 = vld [vmem:[#allocation2 + $0x2c] sm:$0xff]
      %v2853 = vld [vmem:[#allocation2 + $0x34] sm:$0xff]
      %v2854 = vld [vmem:[#allocation2 + $0x3c] sm:$0xff]
      %v2855 = vld [vmem:[#allocation2 + $0x44] sm:$0xff]
      %v2856 = vld [vmem:[#allocation2 + $0x4c] sm:$0x3]
      %s2858 = scalar_lea.vmem [#allocation1], 1
      %2859 = vst [vmem:[%s2858] ss:$2 sm:$0xff] %v2847
      %s2861 = scalar_lea.vmem [#allocation1], 17
      %2862 = vst [vmem:[%s2861] ss:$2 sm:$0xff] %v2848
      %s2864 = scalar_lea.vmem [#allocation1], 33
      %2865 = vst [vmem:[%s2864] ss:$2 sm:$0xff] %v2849
      %s2867 = scalar_lea.vmem [#allocation1], 49
      %2868 = vst [vmem:[%s2867] ss:$2 sm:$0xff] %v2850
      %v2869 = vld.sshfl [vmem:[#allocation1] sm:$0xff pattern:$0x75643120]
      %v2871 = vld.sshfl [vmem:[#allocation1 + $0x8] sm:$0xff pattern:$0x75643120]
      %v2873 = vld.sshfl [vmem:[#allocation1 + $0x10] sm:$0xff pattern:$0x75643120]
      %v2875 = vld.sshfl [vmem:[#allocation1 + $0x18] sm:$0xff pattern:$0x75643120]
      %v2877 = vld.sshfl [vmem:[#allocation1 + $0x20] sm:$0xff pattern:$0x75643120]
      %v2879 = vld.sshfl [vmem:[#allocation1 + $0x28] sm:$0xff pattern:$0x75643120]
      %v2881 = vld.sshfl [vmem:[#allocation1 + $0x30] sm:$0xff pattern:$0x75643120]
      %v2883 = vld.sshfl [vmem:[#allocation1 + $0x38] sm:$0xff pattern:$0x75643120]
      %2886 = vst [vmem:[%s2858] ss:$2 sm:$0xff] %v2851
      %2888 = vst [vmem:[%s2861] ss:$2 sm:$0xff] %v2852
      %2890 = vst [vmem:[%s2864] ss:$2 sm:$0xff] %v2853
      %2892 = vst [vmem:[%s2867] ss:$2 sm:$0xff] %v2854
      %v2893 = vld.sshfl [vmem:[#allocation1] sm:$0xff pattern:$0x75643120]
      %v2895 = vld.sshfl [vmem:[#allocation1 + $0x8] sm:$0xff pattern:$0x75643120]
      %v2897 = vld.sshfl [vmem:[#allocation1 + $0x10] sm:$0xff pattern:$0x75643120]
      %v2899 = vld.sshfl [vmem:[#allocation1 + $0x18] sm:$0xff pattern:$0x75643120]
      %v2901 = vld.sshfl [vmem:[#allocation1 + $0x20] sm:$0xff pattern:$0x75643120]
      %v2903 = vld.sshfl [vmem:[#allocation1 + $0x28] sm:$0xff pattern:$0x75643120]
      %v2905 = vld.sshfl [vmem:[#allocation1 + $0x30] sm:$0xff pattern:$0x75643120]
      %v2907 = vld.sshfl [vmem:[#allocation1 + $0x38] sm:$0xff pattern:$0x75643120]
      %2910 = vst [vmem:[%s2858] ss:$2 sm:$0xff] %v2855
      %2912 = vst [vmem:[%s2861] ss:$2 sm:$0xff] %v2856
      %v2913 = vld.sshfl [vmem:[#allocation1] sm:$0xff pattern:$0x75643120]
      %v2915 = vld.sshfl [vmem:[#allocation1 + $0x8] sm:$0xff pattern:$0x75643120]
      %v2917 = vld.sshfl [vmem:[#allocation1 + $0x10] sm:$0xff pattern:$0x75643120]
      %2919 = vrot.lane.b32.xlu0 %v2869, 41
      %v2920 = vpop.permute.xlu0 %2919
      %2921 = vrot.lane.b32.xlu0 %v2871, 41
      %v2922 = vpop.permute.xlu0 %2921
      %2923 = vrot.lane.b32.xlu0 %v2873, 41
      %v2924 = vpop.permute.xlu0 %2923
      %2925 = vrot.lane.b32.xlu0 %v2875, 41
      %v2926 = vpop.permute.xlu0 %2925
      %2927 = vrot.lane.b32.xlu0 %v2877, 41
      %v2928 = vpop.permute.xlu0 %2927
      %2929 = vrot.lane.b32.xlu0 %v2879, 41
      %v2930 = vpop.permute.xlu0 %2929
      %2931 = vrot.lane.b32.xlu0 %v2881, 41
      %v2932 = vpop.permute.xlu0 %2931
      %2933 = vrot.lane.b32.xlu0 %v2883, 41
      %v2934 = vpop.permute.xlu0 %2933
      %2935 = vrot.lane.b32.xlu0 %v2893, 41
      %v2936 = vpop.permute.xlu0 %2935
      %2937 = vrot.lane.b32.xlu0 %v2895, 41
      %v2938 = vpop.permute.xlu0 %2937
      %2939 = vrot.lane.b32.xlu0 %v2897, 41
      %v2940 = vpop.permute.xlu0 %2939
      %2941 = vrot.lane.b32.xlu0 %v2899, 41
      %v2942 = vpop.permute.xlu0 %2941
      %2943 = vrot.lane.b32.xlu0 %v2901, 41
      %v2944 = vpop.permute.xlu0 %2943
      %2945 = vrot.lane.b32.xlu0 %v2903, 41
      %v2946 = vpop.permute.xlu0 %2945
      %2947 = vrot.lane.b32.xlu0 %v2905, 41
      %v2948 = vpop.permute.xlu0 %2947
      %2949 = vrot.lane.b32.xlu0 %v2907, 41
      %v2950 = vpop.permute.xlu0 %2949
      %2951 = vrot.lane.b32.xlu0 %v2913, 41
      %v2952 = vpop.permute.xlu0 %2951
      %2953 = vrot.lane.b32.xlu0 %v2915, 41
      %v2954 = vpop.permute.xlu0 %2953
      %2955 = vrot.lane.b32.xlu0 %v2917, 41
      %v2956 = vpop.permute.xlu0 %2955
      %v2957 = vrot.slane %v2920, 4
      %v2958 = vrot.slane %v2922, 4
      %v2959 = vrot.slane %v2924, 4
      %v2960 = vrot.slane %v2926, 4
      %v2961 = vrot.slane %v2928, 4
      %v2962 = vrot.slane %v2930, 4
      %v2963 = vrot.slane %v2932, 4
      %v2964 = vrot.slane %v2934, 4
      %v2965 = vrot.slane %v2936, 4
      %v2966 = vrot.slane %v2938, 4
      %v2967 = vrot.slane %v2940, 4
      %v2968 = vrot.slane %v2942, 4
      %v2969 = vrot.slane %v2944, 4
      %v2970 = vrot.slane %v2946, 4
      %v2971 = vrot.slane %v2948, 4
      %v2972 = vrot.slane %v2950, 4
      %v2973 = vrot.slane %v2952, 4
      %v2974 = vrot.slane %v2954, 4
      %v2975 = vrot.slane %v2956, 4
      %v2976 = vsel %vm557, %v2957, %v2958
      %vm2977 = vcmask 334848
      %v2978 = vsel %vm2977, %v2920, %v2976
      %v2979 = vsel %vm557, %v2958, %v2959
      %v2980 = vsel %vm2977, %v2922, %v2979
      %v2981 = vsel %vm557, %v2959, %v2960
      %v2982 = vsel %vm2977, %v2924, %v2981
      %v2983 = vsel %vm557, %v2960, %v2961
      %v2984 = vsel %vm2977, %v2926, %v2983
      %v2985 = vsel %vm557, %v2961, %v2962
      %v2986 = vsel %vm2977, %v2928, %v2985
      %v2987 = vsel %vm557, %v2962, %v2963
      %v2988 = vsel %vm2977, %v2930, %v2987
      %v2989 = vsel %vm557, %v2963, %v2964
      %v2990 = vsel %vm2977, %v2932, %v2989
      %v2991 = vsel %vm557, %v2964, %v2965
      %v2992 = vsel %vm2977, %v2934, %v2991
      %v2993 = vsel %vm557, %v2965, %v2966
      %v2994 = vsel %vm2977, %v2936, %v2993
      %v2995 = vsel %vm557, %v2966, %v2967
      %v2996 = vsel %vm2977, %v2938, %v2995
      %v2997 = vsel %vm557, %v2967, %v2968
      %v2998 = vsel %vm2977, %v2940, %v2997
      %v2999 = vsel %vm557, %v2968, %v2969
      %v3000 = vsel %vm2977, %v2942, %v2999
      %v3001 = vsel %vm557, %v2969, %v2970
      %v3002 = vsel %vm2977, %v2944, %v3001
      %v3003 = vsel %vm557, %v2970, %v2971
      %v3004 = vsel %vm2977, %v2946, %v3003
      %v3005 = vsel %vm557, %v2971, %v2972
      %v3006 = vsel %vm2977, %v2948, %v3005
      %v3007 = vsel %vm557, %v2972, %v2973
      %v3008 = vsel %vm2977, %v2950, %v3007
      %v3009 = vsel %vm557, %v2973, %v2974
      %v3010 = vsel %vm2977, %v2952, %v3009
      %v3011 = vsel %vm557, %v2974, %v2975
      %v3012 = vsel %vm2977, %v2954, %v3011
      %3031 = vst [vmem:[#allocation3 + $0x360] sm:$0xcc] %v2978
      %3032 = vst [vmem:[#allocation3 + $0x368] sm:$0xcc] %v2980
      %3033 = vst [vmem:[#allocation3 + $0x370] sm:$0xcc] %v2982
      %3034 = vst [vmem:[#allocation3 + $0x378] sm:$0xcc] %v2984
      %3035 = vst [vmem:[#allocation3 + $0x380] sm:$0xcc] %v2986
      %3036 = vst [vmem:[#allocation3 + $0x388] sm:$0xcc] %v2988
      %3037 = vst [vmem:[#allocation3 + $0x390] sm:$0xcc] %v2990
      %3038 = vst [vmem:[#allocation3 + $0x398] sm:$0xcc] %v2992
      %3039 = vst [vmem:[#allocation3 + $0x3a0] sm:$0xcc] %v2994
      %3040 = vst [vmem:[#allocation3 + $0x3a8] sm:$0xcc] %v2996
      %3041 = vst [vmem:[#allocation3 + $0x3b0] sm:$0xcc] %v2998
      %3042 = vst [vmem:[#allocation3 + $0x3b8] sm:$0xcc] %v3000
      %3043 = vst [vmem:[#allocation3 + $0x3c0] sm:$0xcc] %v3002
      %3044 = vst [vmem:[#allocation3 + $0x3c8] sm:$0xcc] %v3004
      %3045 = vst [vmem:[#allocation3 + $0x3d0] sm:$0xcc] %v3006
      %3046 = vst [vmem:[#allocation3 + $0x3d8] sm:$0xcc] %v3008
      %3047 = vst [vmem:[#allocation3 + $0x3e0] sm:$0xcc] %v3010
      %3048 = vst [vmem:[#allocation3 + $0x3e8] sm:$0xcc] %v3012
      %v3049 = vld [vmem:[#allocation2 + $0x4] sm:$0xff]
      %v3050 = vld [vmem:[#allocation2 + $0xc] sm:$0xff]
      %v3051 = vld [vmem:[#allocation2 + $0x14] sm:$0xff]
      %v3052 = vld [vmem:[#allocation2 + $0x1c] sm:$0xff]
      %v3053 = vld [vmem:[#allocation2 + $0x24] sm:$0xff]
      %v3054 = vld [vmem:[#allocation2 + $0x2c] sm:$0xff]
      %v3055 = vld [vmem:[#allocation2 + $0x34] sm:$0xff]
      %v3056 = vld [vmem:[#allocation2 + $0x3c] sm:$0xff]
      %v3057 = vld [vmem:[#allocation2 + $0x44] sm:$0xff]
      %v3058 = vld [vmem:[#allocation2 + $0x4c] sm:$0x3]
      %3060 = vst [vmem:[#allocation1] ss:$2 sm:$0xff] %v3049
      %s3062 = scalar_lea.vmem [#allocation1], 16
      %3063 = vst [vmem:[%s3062] ss:$2 sm:$0xff] %v3050
      %s3065 = scalar_lea.vmem [#allocation1], 32
      %3066 = vst [vmem:[%s3065] ss:$2 sm:$0xff] %v3051
      %s3068 = scalar_lea.vmem [#allocation1], 48
      %3069 = vst [vmem:[%s3068] ss:$2 sm:$0xff] %v3052
      %v3070 = vld.sshfl [vmem:[#allocation1] sm:$0xff pattern:$0x75643120]
      %v3072 = vld.sshfl [vmem:[#allocation1 + $0x8] sm:$0xff pattern:$0x75643120]
      %v3074 = vld.sshfl [vmem:[#allocation1 + $0x10] sm:$0xff pattern:$0x75643120]
      %v3076 = vld.sshfl [vmem:[#allocation1 + $0x18] sm:$0xff pattern:$0x75643120]
      %v3078 = vld.sshfl [vmem:[#allocation1 + $0x20] sm:$0xff pattern:$0x75643120]
      %v3080 = vld.sshfl [vmem:[#allocation1 + $0x28] sm:$0xff pattern:$0x75643120]
      %v3082 = vld.sshfl [vmem:[#allocation1 + $0x30] sm:$0xff pattern:$0x75643120]
      %v3084 = vld.sshfl [vmem:[#allocation1 + $0x38] sm:$0xff pattern:$0x75643120]
      %3087 = vst [vmem:[#allocation1] ss:$2 sm:$0xff] %v3053
      %3089 = vst [vmem:[%s3062] ss:$2 sm:$0xff] %v3054
      %3091 = vst [vmem:[%s3065] ss:$2 sm:$0xff] %v3055
      %3093 = vst [vmem:[%s3068] ss:$2 sm:$0xff] %v3056
      %v3094 = vld.sshfl [vmem:[#allocation1] sm:$0xff pattern:$0x75643120]
      %v3096 = vld.sshfl [vmem:[#allocation1 + $0x8] sm:$0xff pattern:$0x75643120]
      %v3098 = vld.sshfl [vmem:[#allocation1 + $0x10] sm:$0xff pattern:$0x75643120]
      %v3100 = vld.sshfl [vmem:[#allocation1 + $0x18] sm:$0xff pattern:$0x75643120]
      %v3102 = vld.sshfl [vmem:[#allocation1 + $0x20] sm:$0xff pattern:$0x75643120]
      %v3104 = vld.sshfl [vmem:[#allocation1 + $0x28] sm:$0xff pattern:$0x75643120]
      %v3106 = vld.sshfl [vmem:[#allocation1 + $0x30] sm:$0xff pattern:$0x75643120]
      %v3108 = vld.sshfl [vmem:[#allocation1 + $0x38] sm:$0xff pattern:$0x75643120]
      %3111 = vst [vmem:[#allocation1] ss:$2 sm:$0xff] %v3057
      %3113 = vst [vmem:[%s3062] ss:$2 sm:$0xff] %v3058
      %v3114 = vld.sshfl [vmem:[#allocation1] sm:$0xff pattern:$0x75643120]
      %v3116 = vld.sshfl [vmem:[#allocation1 + $0x8] sm:$0xff pattern:$0x75643120]
      %v3118 = vld.sshfl [vmem:[#allocation1 + $0x10] sm:$0xff pattern:$0x75643120]
      %3120 = vrot.lane.b32.xlu0 %v3070, 40
      %v3121 = vpop.permute.xlu0 %3120
      %3122 = vrot.lane.b32.xlu0 %v3072, 40
      %v3123 = vpop.permute.xlu0 %3122
      %3124 = vrot.lane.b32.xlu0 %v3074, 40
      %v3125 = vpop.permute.xlu0 %3124
      %3126 = vrot.lane.b32.xlu0 %v3076, 40
      %v3127 = vpop.permute.xlu0 %3126
      %3128 = vrot.lane.b32.xlu0 %v3078, 40
      %v3129 = vpop.permute.xlu0 %3128
      %3130 = vrot.lane.b32.xlu0 %v3080, 40
      %v3131 = vpop.permute.xlu0 %3130
      %3132 = vrot.lane.b32.xlu0 %v3082, 40
      %v3133 = vpop.permute.xlu0 %3132
      %3134 = vrot.lane.b32.xlu0 %v3084, 40
      %v3135 = vpop.permute.xlu0 %3134
      %3136 = vrot.lane.b32.xlu0 %v3094, 40
      %v3137 = vpop.permute.xlu0 %3136
      %3138 = vrot.lane.b32.xlu0 %v3096, 40
      %v3139 = vpop.permute.xlu0 %3138
      %3140 = vrot.lane.b32.xlu0 %v3098, 40
      %v3141 = vpop.permute.xlu0 %3140
      %3142 = vrot.lane.b32.xlu0 %v3100, 40
      %v3143 = vpop.permute.xlu0 %3142
      %3144 = vrot.lane.b32.xlu0 %v3102, 40
      %v3145 = vpop.permute.xlu0 %3144
      %3146 = vrot.lane.b32.xlu0 %v3104, 40
      %v3147 = vpop.permute.xlu0 %3146
      %3148 = vrot.lane.b32.xlu0 %v3106, 40
      %v3149 = vpop.permute.xlu0 %3148
      %3150 = vrot.lane.b32.xlu0 %v3108, 40
      %v3151 = vpop.permute.xlu0 %3150
      %3152 = vrot.lane.b32.xlu0 %v3114, 40
      %v3153 = vpop.permute.xlu0 %3152
      %3154 = vrot.lane.b32.xlu0 %v3116, 40
      %v3155 = vpop.permute.xlu0 %3154
      %3156 = vrot.lane.b32.xlu0 %v3118, 40
      %v3157 = vpop.permute.xlu0 %3156
      %v3158 = vrot.slane %v3121, 4
      %v3159 = vrot.slane %v3123, 4
      %v3160 = vrot.slane %v3125, 4
      %v3161 = vrot.slane %v3127, 4
      %v3162 = vrot.slane %v3129, 4
      %v3163 = vrot.slane %v3131, 4
      %v3164 = vrot.slane %v3133, 4
      %v3165 = vrot.slane %v3135, 4
      %v3166 = vrot.slane %v3137, 4
      %v3167 = vrot.slane %v3139, 4
      %v3168 = vrot.slane %v3141, 4
      %v3169 = vrot.slane %v3143, 4
      %v3170 = vrot.slane %v3145, 4
      %v3171 = vrot.slane %v3147, 4
      %v3172 = vrot.slane %v3149, 4
      %v3173 = vrot.slane %v3151, 4
      %v3174 = vrot.slane %v3153, 4
      %v3175 = vrot.slane %v3155, 4
      %v3176 = vrot.slane %v3157, 4
      %v3177 = vsel %vm557, %v3158, %v3159
      %vm3178 = vcmask 326656
      %v3179 = vsel %vm3178, %v3121, %v3177
      %v3180 = vsel %vm557, %v3159, %v3160
      %v3181 = vsel %vm3178, %v3123, %v3180
      %v3182 = vsel %vm557, %v3160, %v3161
      %v3183 = vsel %vm3178, %v3125, %v3182
      %v3184 = vsel %vm557, %v3161, %v3162
      %v3185 = vsel %vm3178, %v3127, %v3184
      %v3186 = vsel %vm557, %v3162, %v3163
      %v3187 = vsel %vm3178, %v3129, %v3186
      %v3188 = vsel %vm557, %v3163, %v3164
      %v3189 = vsel %vm3178, %v3131, %v3188
      %v3190 = vsel %vm557, %v3164, %v3165
      %v3191 = vsel %vm3178, %v3133, %v3190
      %v3192 = vsel %vm557, %v3165, %v3166
      %v3193 = vsel %vm3178, %v3135, %v3192
      %v3194 = vsel %vm557, %v3166, %v3167
      %v3195 = vsel %vm3178, %v3137, %v3194
      %v3196 = vsel %vm557, %v3167, %v3168
      %v3197 = vsel %vm3178, %v3139, %v3196
      %v3198 = vsel %vm557, %v3168, %v3169
      %v3199 = vsel %vm3178, %v3141, %v3198
      %v3200 = vsel %vm557, %v3169, %v3170
      %v3201 = vsel %vm3178, %v3143, %v3200
      %v3202 = vsel %vm557, %v3170, %v3171
      %v3203 = vsel %vm3178, %v3145, %v3202
      %v3204 = vsel %vm557, %v3171, %v3172
      %v3205 = vsel %vm3178, %v3147, %v3204
      %v3206 = vsel %vm557, %v3172, %v3173
      %v3207 = vsel %vm3178, %v3149, %v3206
      %v3208 = vsel %vm557, %v3173, %v3174
      %v3209 = vsel %vm3178, %v3151, %v3208
      %v3210 = vsel %vm557, %v3174, %v3175
      %v3211 = vsel %vm3178, %v3153, %v3210
      %v3212 = vsel %vm557, %v3175, %v3176
      %v3213 = vsel %vm3178, %v3155, %v3212
      %3232 = vst [vmem:[#allocation3 + $0x3f0] sm:$0x33] %v3179
      %3233 = vst [vmem:[#allocation3 + $0x3f8] sm:$0x33] %v3181
      %3234 = vst [vmem:[#allocation3 + $0x400] sm:$0x33] %v3183
      %3235 = vst [vmem:[#allocation3 + $0x408] sm:$0x33] %v3185
      %3236 = vst [vmem:[#allocation3 + $0x410] sm:$0x33] %v3187
      %3237 = vst [vmem:[#allocation3 + $0x418] sm:$0x33] %v3189
      %3238 = vst [vmem:[#allocation3 + $0x420] sm:$0x33] %v3191
      %3239 = vst [vmem:[#allocation3 + $0x428] sm:$0x33] %v3193
      %3240 = vst [vmem:[#allocation3 + $0x430] sm:$0x33] %v3195
      %3241 = vst [vmem:[#allocation3 + $0x438] sm:$0x33] %v3197
      %3242 = vst [vmem:[#allocation3 + $0x440] sm:$0x33] %v3199
      %3243 = vst [vmem:[#allocation3 + $0x448] sm:$0x33] %v3201
      %3244 = vst [vmem:[#allocation3 + $0x450] sm:$0x33] %v3203
      %3245 = vst [vmem:[#allocation3 + $0x458] sm:$0x33] %v3205
      %3246 = vst [vmem:[#allocation3 + $0x460] sm:$0x33] %v3207
      %3247 = vst [vmem:[#allocation3 + $0x468] sm:$0x33] %v3209
      %3248 = vst [vmem:[#allocation3 + $0x470] sm:$0x33] %v3211
      %3249 = vst [vmem:[#allocation3 + $0x478] sm:$0x33] %v3213
      %v3250 = vld [vmem:[#allocation2 + $0x4] sm:$0xff]
      %v3251 = vld [vmem:[#allocation2 + $0xc] sm:$0xff]
      %v3252 = vld [vmem:[#allocation2 + $0x14] sm:$0xff]
      %v3253 = vld [vmem:[#allocation2 + $0x1c] sm:$0xff]
      %v3254 = vld [vmem:[#allocation2 + $0x24] sm:$0xff]
      %v3255 = vld [vmem:[#allocation2 + $0x2c] sm:$0xff]
      %v3256 = vld [vmem:[#allocation2 + $0x34] sm:$0xff]
      %v3257 = vld [vmem:[#allocation2 + $0x3c] sm:$0xff]
      %v3258 = vld [vmem:[#allocation2 + $0x44] sm:$0xff]
      %v3259 = vld [vmem:[#allocation2 + $0x4c] sm:$0x3]
      %s3261 = scalar_lea.vmem [#allocation1], 1
      %3262 = vst [vmem:[%s3261] ss:$2 sm:$0xff] %v3250
      %s3264 = scalar_lea.vmem [#allocation1], 17
      %3265 = vst [vmem:[%s3264] ss:$2 sm:$0xff] %v3251
      %s3267 = scalar_lea.vmem [#allocation1], 33
      %3268 = vst [vmem:[%s3267] ss:$2 sm:$0xff] %v3252
      %s3270 = scalar_lea.vmem [#allocation1], 49
      %3271 = vst [vmem:[%s3270] ss:$2 sm:$0xff] %v3253
      %v3272 = vld.sshfl [vmem:[#allocation1] sm:$0xff pattern:$0x75643120]
      %v3274 = vld.sshfl [vmem:[#allocation1 + $0x8] sm:$0xff pattern:$0x75643120]
      %v3276 = vld.sshfl [vmem:[#allocation1 + $0x10] sm:$0xff pattern:$0x75643120]
      %v3278 = vld.sshfl [vmem:[#allocation1 + $0x18] sm:$0xff pattern:$0x75643120]
      %v3280 = vld.sshfl [vmem:[#allocation1 + $0x20] sm:$0xff pattern:$0x75643120]
      %v3282 = vld.sshfl [vmem:[#allocation1 + $0x28] sm:$0xff pattern:$0x75643120]
      %v3284 = vld.sshfl [vmem:[#allocation1 + $0x30] sm:$0xff pattern:$0x75643120]
      %v3286 = vld.sshfl [vmem:[#allocation1 + $0x38] sm:$0xff pattern:$0x75643120]
      %3289 = vst [vmem:[%s3261] ss:$2 sm:$0xff] %v3254
      %3291 = vst [vmem:[%s3264] ss:$2 sm:$0xff] %v3255
      %3293 = vst [vmem:[%s3267] ss:$2 sm:$0xff] %v3256
      %3295 = vst [vmem:[%s3270] ss:$2 sm:$0xff] %v3257
      %v3296 = vld.sshfl [vmem:[#allocation1] sm:$0xff pattern:$0x75643120]
      %v3298 = vld.sshfl [vmem:[#allocation1 + $0x8] sm:$0xff pattern:$0x75643120]
      %v3300 = vld.sshfl [vmem:[#allocation1 + $0x10] sm:$0xff pattern:$0x75643120]
      %v3302 = vld.sshfl [vmem:[#allocation1 + $0x18] sm:$0xff pattern:$0x75643120]
      %v3304 = vld.sshfl [vmem:[#allocation1 + $0x20] sm:$0xff pattern:$0x75643120]
      %v3306 = vld.sshfl [vmem:[#allocation1 + $0x28] sm:$0xff pattern:$0x75643120]
      %v3308 = vld.sshfl [vmem:[#allocation1 + $0x30] sm:$0xff pattern:$0x75643120]
      %v3310 = vld.sshfl [vmem:[#allocation1 + $0x38] sm:$0xff pattern:$0x75643120]
      %3313 = vst [vmem:[%s3261] ss:$2 sm:$0xff] %v3258
      %3315 = vst [vmem:[%s3264] ss:$2 sm:$0xff] %v3259
      %v3316 = vld.sshfl [vmem:[#allocation1] sm:$0xff pattern:$0x75643120]
      %v3318 = vld.sshfl [vmem:[#allocation1 + $0x8] sm:$0xff pattern:$0x75643120]
      %v3320 = vld.sshfl [vmem:[#allocation1 + $0x10] sm:$0xff pattern:$0x75643120]
      %3322 = vrot.lane.b32.xlu0 %v3272, 24
      %v3323 = vpop.permute.xlu0 %3322
      %3324 = vrot.lane.b32.xlu0 %v3274, 24
      %v3325 = vpop.permute.xlu0 %3324
      %3326 = vrot.lane.b32.xlu0 %v3276, 24
      %v3327 = vpop.permute.xlu0 %3326
      %3328 = vrot.lane.b32.xlu0 %v3278, 24
      %v3329 = vpop.permute.xlu0 %3328
      %3330 = vrot.lane.b32.xlu0 %v3280, 24
      %v3331 = vpop.permute.xlu0 %3330
      %3332 = vrot.lane.b32.xlu0 %v3282, 24
      %v3333 = vpop.permute.xlu0 %3332
      %3334 = vrot.lane.b32.xlu0 %v3284, 24
      %v3335 = vpop.permute.xlu0 %3334
      %3336 = vrot.lane.b32.xlu0 %v3286, 24
      %v3337 = vpop.permute.xlu0 %3336
      %3338 = vrot.lane.b32.xlu0 %v3296, 24
      %v3339 = vpop.permute.xlu0 %3338
      %3340 = vrot.lane.b32.xlu0 %v3298, 24
      %v3341 = vpop.permute.xlu0 %3340
      %3342 = vrot.lane.b32.xlu0 %v3300, 24
      %v3343 = vpop.permute.xlu0 %3342
      %3344 = vrot.lane.b32.xlu0 %v3302, 24
      %v3345 = vpop.permute.xlu0 %3344
      %3346 = vrot.lane.b32.xlu0 %v3304, 24
      %v3347 = vpop.permute.xlu0 %3346
      %3348 = vrot.lane.b32.xlu0 %v3306, 24
      %v3349 = vpop.permute.xlu0 %3348
      %3350 = vrot.lane.b32.xlu0 %v3308, 24
      %v3351 = vpop.permute.xlu0 %3350
      %3352 = vrot.lane.b32.xlu0 %v3310, 24
      %v3353 = vpop.permute.xlu0 %3352
      %3354 = vrot.lane.b32.xlu0 %v3316, 24
      %v3355 = vpop.permute.xlu0 %3354
      %3356 = vrot.lane.b32.xlu0 %v3318, 24
      %v3357 = vpop.permute.xlu0 %3356
      %3358 = vrot.lane.b32.xlu0 %v3320, 24
      %v3359 = vpop.permute.xlu0 %3358
      %v3360 = vrot.slane %v3323, 4
      %v3361 = vrot.slane %v3325, 4
      %v3362 = vrot.slane %v3327, 4
      %v3363 = vrot.slane %v3329, 4
      %v3364 = vrot.slane %v3331, 4
      %v3365 = vrot.slane %v3333, 4
      %v3366 = vrot.slane %v3335, 4
      %v3367 = vrot.slane %v3337, 4
      %v3368 = vrot.slane %v3339, 4
      %v3369 = vrot.slane %v3341, 4
      %v3370 = vrot.slane %v3343, 4
      %v3371 = vrot.slane %v3345, 4
      %v3372 = vrot.slane %v3347, 4
      %v3373 = vrot.slane %v3349, 4
      %v3374 = vrot.slane %v3351, 4
      %v3375 = vrot.slane %v3353, 4
      %v3376 = vrot.slane %v3355, 4
      %v3377 = vrot.slane %v3357, 4
      %v3378 = vrot.slane %v3359, 4
      %v3379 = vsel %vm557, %v3360, %v3361
      %vm3380 = vcmask 195584
      %v3381 = vsel %vm3380, %v3323, %v3379
      %v3382 = vsel %vm557, %v3361, %v3362
      %v3383 = vsel %vm3380, %v3325, %v3382
      %v3384 = vsel %vm557, %v3362, %v3363
      %v3385 = vsel %vm3380, %v3327, %v3384
      %v3386 = vsel %vm557, %v3363, %v3364
      %v3387 = vsel %vm3380, %v3329, %v3386
      %v3388 = vsel %vm557, %v3364, %v3365
      %v3389 = vsel %vm3380, %v3331, %v3388
      %v3390 = vsel %vm557, %v3365, %v3366
      %v3391 = vsel %vm3380, %v3333, %v3390
      %v3392 = vsel %vm557, %v3366, %v3367
      %v3393 = vsel %vm3380, %v3335, %v3392
      %v3394 = vsel %vm557, %v3367, %v3368
      %v3395 = vsel %vm3380, %v3337, %v3394
      %v3396 = vsel %vm557, %v3368, %v3369
      %v3397 = vsel %vm3380, %v3339, %v3396
      %v3398 = vsel %vm557, %v3369, %v3370
      %v3399 = vsel %vm3380, %v3341, %v3398
      %v3400 = vsel %vm557, %v3370, %v3371
      %v3401 = vsel %vm3380, %v3343, %v3400
      %v3402 = vsel %vm557, %v3371, %v3372
      %v3403 = vsel %vm3380, %v3345, %v3402
      %v3404 = vsel %vm557, %v3372, %v3373
      %v3405 = vsel %vm3380, %v3347, %v3404
      %v3406 = vsel %vm557, %v3373, %v3374
      %v3407 = vsel %vm3380, %v3349, %v3406
      %v3408 = vsel %vm557, %v3374, %v3375
      %v3409 = vsel %vm3380, %v3351, %v3408
      %v3410 = vsel %vm557, %v3375, %v3376
      %v3411 = vsel %vm3380, %v3353, %v3410
      %v3412 = vsel %vm557, %v3376, %v3377
      %v3413 = vsel %vm3380, %v3355, %v3412
      %v3414 = vsel %vm557, %v3377, %v3378
      %v3415 = vsel %vm3380, %v3357, %v3414
      %3434 = vst [vmem:[#allocation3 + $0x3f0] sm:$0xcc] %v3381
      %3435 = vst [vmem:[#allocation3 + $0x3f8] sm:$0xcc] %v3383
      %3436 = vst [vmem:[#allocation3 + $0x400] sm:$0xcc] %v3385
      %3437 = vst [vmem:[#allocation3 + $0x408] sm:$0xcc] %v3387
      %3438 = vst [vmem:[#allocation3 + $0x410] sm:$0xcc] %v3389
      %3439 = vst [vmem:[#allocation3 + $0x418] sm:$0xcc] %v3391
      %3440 = vst [vmem:[#allocation3 + $0x420] sm:$0xcc] %v3393
      %3441 = vst [vmem:[#allocation3 + $0x428] sm:$0xcc] %v3395
      %3442 = vst [vmem:[#allocation3 + $0x430] sm:$0xcc] %v3397
      %3443 = vst [vmem:[#allocation3 + $0x438] sm:$0xcc] %v3399
      %3444 = vst [vmem:[#allocation3 + $0x440] sm:$0xcc] %v3401
      %3445 = vst [vmem:[#allocation3 + $0x448] sm:$0xcc] %v3403
      %3446 = vst [vmem:[#allocation3 + $0x450] sm:$0xcc] %v3405
      %3447 = vst [vmem:[#allocation3 + $0x458] sm:$0xcc] %v3407
      %3448 = vst [vmem:[#allocation3 + $0x460] sm:$0xcc] %v3409
      %3449 = vst [vmem:[#allocation3 + $0x468] sm:$0xcc] %v3411
      %3450 = vst [vmem:[#allocation3 + $0x470] sm:$0xcc] %v3413
      %3451 = vst [vmem:[#allocation3 + $0x478] sm:$0xcc] %v3415
      %v3452 = vld [vmem:[#allocation2 + $0x4] sm:$0xff]
      %v3453 = vld [vmem:[#allocation2 + $0xc] sm:$0xff]
      %v3454 = vld [vmem:[#allocation2 + $0x14] sm:$0xff]
      %v3455 = vld [vmem:[#allocation2 + $0x1c] sm:$0xff]
      %v3456 = vld [vmem:[#allocation2 + $0x24] sm:$0xff]
      %v3457 = vld [vmem:[#allocation2 + $0x2c] sm:$0xff]
      %v3458 = vld [vmem:[#allocation2 + $0x34] sm:$0xff]
      %v3459 = vld [vmem:[#allocation2 + $0x3c] sm:$0xff]
      %v3460 = vld [vmem:[#allocation2 + $0x44] sm:$0xff]
      %v3461 = vld [vmem:[#allocation2 + $0x4c] sm:$0x3]
      %3463 = vst [vmem:[#allocation1] ss:$2 sm:$0xff] %v3452
      %s3465 = scalar_lea.vmem [#allocation1], 16
      %3466 = vst [vmem:[%s3465] ss:$2 sm:$0xff] %v3453
      %s3468 = scalar_lea.vmem [#allocation1], 32
      %3469 = vst [vmem:[%s3468] ss:$2 sm:$0xff] %v3454
      %s3471 = scalar_lea.vmem [#allocation1], 48
      %3472 = vst [vmem:[%s3471] ss:$2 sm:$0xff] %v3455
      %v3473 = vld.sshfl [vmem:[#allocation1] sm:$0xff pattern:$0x75643120]
      %v3475 = vld.sshfl [vmem:[#allocation1 + $0x8] sm:$0xff pattern:$0x75643120]
      %v3477 = vld.sshfl [vmem:[#allocation1 + $0x10] sm:$0xff pattern:$0x75643120]
      %v3479 = vld.sshfl [vmem:[#allocation1 + $0x18] sm:$0xff pattern:$0x75643120]
      %v3481 = vld.sshfl [vmem:[#allocation1 + $0x20] sm:$0xff pattern:$0x75643120]
      %v3483 = vld.sshfl [vmem:[#allocation1 + $0x28] sm:$0xff pattern:$0x75643120]
      %v3485 = vld.sshfl [vmem:[#allocation1 + $0x30] sm:$0xff pattern:$0x75643120]
      %v3487 = vld.sshfl [vmem:[#allocation1 + $0x38] sm:$0xff pattern:$0x75643120]
      %3490 = vst [vmem:[#allocation1] ss:$2 sm:$0xff] %v3456
      %3492 = vst [vmem:[%s3465] ss:$2 sm:$0xff] %v3457
      %3494 = vst [vmem:[%s3468] ss:$2 sm:$0xff] %v3458
      %3496 = vst [vmem:[%s3471] ss:$2 sm:$0xff] %v3459
      %v3497 = vld.sshfl [vmem:[#allocation1] sm:$0xff pattern:$0x75643120]
      %v3499 = vld.sshfl [vmem:[#allocation1 + $0x8] sm:$0xff pattern:$0x75643120]
      %v3501 = vld.sshfl [vmem:[#allocation1 + $0x10] sm:$0xff pattern:$0x75643120]
      %v3503 = vld.sshfl [vmem:[#allocation1 + $0x18] sm:$0xff pattern:$0x75643120]
      %v3505 = vld.sshfl [vmem:[#allocation1 + $0x20] sm:$0xff pattern:$0x75643120]
      %v3507 = vld.sshfl [vmem:[#allocation1 + $0x28] sm:$0xff pattern:$0x75643120]
      %v3509 = vld.sshfl [vmem:[#allocation1 + $0x30] sm:$0xff pattern:$0x75643120]
      %v3511 = vld.sshfl [vmem:[#allocation1 + $0x38] sm:$0xff pattern:$0x75643120]
      %3514 = vst [vmem:[#allocation1] ss:$2 sm:$0xff] %v3460
      %3516 = vst [vmem:[%s3465] ss:$2 sm:$0xff] %v3461
      %v3517 = vld.sshfl [vmem:[#allocation1] sm:$0xff pattern:$0x75643120]
      %v3519 = vld.sshfl [vmem:[#allocation1 + $0x8] sm:$0xff pattern:$0x75643120]
      %v3521 = vld.sshfl [vmem:[#allocation1 + $0x10] sm:$0xff pattern:$0x75643120]
      %3523 = vrot.lane.b32.xlu0 %v3473, 23
      %v3524 = vpop.permute.xlu0 %3523
      %3525 = vrot.lane.b32.xlu0 %v3475, 23
      %v3526 = vpop.permute.xlu0 %3525
      %3527 = vrot.lane.b32.xlu0 %v3477, 23
      %v3528 = vpop.permute.xlu0 %3527
      %3529 = vrot.lane.b32.xlu0 %v3479, 23
      %v3530 = vpop.permute.xlu0 %3529
      %3531 = vrot.lane.b32.xlu0 %v3481, 23
      %v3532 = vpop.permute.xlu0 %3531
      %3533 = vrot.lane.b32.xlu0 %v3483, 23
      %v3534 = vpop.permute.xlu0 %3533
      %3535 = vrot.lane.b32.xlu0 %v3485, 23
      %v3536 = vpop.permute.xlu0 %3535
      %3537 = vrot.lane.b32.xlu0 %v3487, 23
      %v3538 = vpop.permute.xlu0 %3537
      %3539 = vrot.lane.b32.xlu0 %v3497, 23
      %v3540 = vpop.permute.xlu0 %3539
      %3541 = vrot.lane.b32.xlu0 %v3499, 23
      %v3542 = vpop.permute.xlu0 %3541
      %3543 = vrot.lane.b32.xlu0 %v3501, 23
      %v3544 = vpop.permute.xlu0 %3543
      %3545 = vrot.lane.b32.xlu0 %v3503, 23
      %v3546 = vpop.permute.xlu0 %3545
      %3547 = vrot.lane.b32.xlu0 %v3505, 23
      %v3548 = vpop.permute.xlu0 %3547
      %3549 = vrot.lane.b32.xlu0 %v3507, 23
      %v3550 = vpop.permute.xlu0 %3549
      %3551 = vrot.lane.b32.xlu0 %v3509, 23
      %v3552 = vpop.permute.xlu0 %3551
      %3553 = vrot.lane.b32.xlu0 %v3511, 23
      %v3554 = vpop.permute.xlu0 %3553
      %3555 = vrot.lane.b32.xlu0 %v3517, 23
      %v3556 = vpop.permute.xlu0 %3555
      %3557 = vrot.lane.b32.xlu0 %v3519, 23
      %v3558 = vpop.permute.xlu0 %3557
      %3559 = vrot.lane.b32.xlu0 %v3521, 23
      %v3560 = vpop.permute.xlu0 %3559
      %v3561 = vrot.slane %v3524, 4
      %v3562 = vrot.slane %v3526, 4
      %v3563 = vrot.slane %v3528, 4
      %v3564 = vrot.slane %v3530, 4
      %v3565 = vrot.slane %v3532, 4
      %v3566 = vrot.slane %v3534, 4
      %v3567 = vrot.slane %v3536, 4
      %v3568 = vrot.slane %v3538, 4
      %v3569 = vrot.slane %v3540, 4
      %v3570 = vrot.slane %v3542, 4
      %v3571 = vrot.slane %v3544, 4
      %v3572 = vrot.slane %v3546, 4
      %v3573 = vrot.slane %v3548, 4
      %v3574 = vrot.slane %v3550, 4
      %v3575 = vrot.slane %v3552, 4
      %v3576 = vrot.slane %v3554, 4
      %v3577 = vrot.slane %v3556, 4
      %v3578 = vrot.slane %v3558, 4
      %v3579 = vrot.slane %v3560, 4
      %v3580 = vsel %vm557, %v3561, %v3562
      %vm3581 = vcmask 187392
      %v3582 = vsel %vm3581, %v3524, %v3580
      %v3583 = vsel %vm557, %v3562, %v3563
      %v3584 = vsel %vm3581, %v3526, %v3583
      %v3585 = vsel %vm557, %v3563, %v3564
      %v3586 = vsel %vm3581, %v3528, %v3585
      %v3587 = vsel %vm557, %v3564, %v3565
      %v3588 = vsel %vm3581, %v3530, %v3587
      %v3589 = vsel %vm557, %v3565, %v3566
      %v3590 = vsel %vm3581, %v3532, %v3589
      %v3591 = vsel %vm557, %v3566, %v3567
      %v3592 = vsel %vm3581, %v3534, %v3591
      %v3593 = vsel %vm557, %v3567, %v3568
      %v3594 = vsel %vm3581, %v3536, %v3593
      %v3595 = vsel %vm557, %v3568, %v3569
      %v3596 = vsel %vm3581, %v3538, %v3595
      %v3597 = vsel %vm557, %v3569, %v3570
      %v3598 = vsel %vm3581, %v3540, %v3597
      %v3599 = vsel %vm557, %v3570, %v3571
      %v3600 = vsel %vm3581, %v3542, %v3599
      %v3601 = vsel %vm557, %v3571, %v3572
      %v3602 = vsel %vm3581, %v3544, %v3601
      %v3603 = vsel %vm557, %v3572, %v3573
      %v3604 = vsel %vm3581, %v3546, %v3603
      %v3605 = vsel %vm557, %v3573, %v3574
      %v3606 = vsel %vm3581, %v3548, %v3605
      %v3607 = vsel %vm557, %v3574, %v3575
      %v3608 = vsel %vm3581, %v3550, %v3607
      %v3609 = vsel %vm557, %v3575, %v3576
      %v3610 = vsel %vm3581, %v3552, %v3609
      %v3611 = vsel %vm557, %v3576, %v3577
      %v3612 = vsel %vm3581, %v3554, %v3611
      %v3613 = vsel %vm557, %v3577, %v3578
      %v3614 = vsel %vm3581, %v3556, %v3613
      %v3615 = vsel %vm557, %v3578, %v3579
      %v3616 = vsel %vm3581, %v3558, %v3615
      %3635 = vst [vmem:[#allocation3 + $0x480] sm:$0x33] %v3582
      %3636 = vst [vmem:[#allocation3 + $0x488] sm:$0x33] %v3584
      %3637 = vst [vmem:[#allocation3 + $0x490] sm:$0x33] %v3586
      %3638 = vst [vmem:[#allocation3 + $0x498] sm:$0x33] %v3588
      %3639 = vst [vmem:[#allocation3 + $0x4a0] sm:$0x33] %v3590
      %3640 = vst [vmem:[#allocation3 + $0x4a8] sm:$0x33] %v3592
      %3641 = vst [vmem:[#allocation3 + $0x4b0] sm:$0x33] %v3594
      %3642 = vst [vmem:[#allocation3 + $0x4b8] sm:$0x33] %v3596
      %3643 = vst [vmem:[#allocation3 + $0x4c0] sm:$0x33] %v3598
      %3644 = vst [vmem:[#allocation3 + $0x4c8] sm:$0x33] %v3600
      %3645 = vst [vmem:[#allocation3 + $0x4d0] sm:$0x33] %v3602
      %3646 = vst [vmem:[#allocation3 + $0x4d8] sm:$0x33] %v3604
      %3647 = vst [vmem:[#allocation3 + $0x4e0] sm:$0x33] %v3606
      %3648 = vst [vmem:[#allocation3 + $0x4e8] sm:$0x33] %v3608
      %3649 = vst [vmem:[#allocation3 + $0x4f0] sm:$0x33] %v3610
      %3650 = vst [vmem:[#allocation3 + $0x4f8] sm:$0x33] %v3612
      %3651 = vst [vmem:[#allocation3 + $0x500] sm:$0x33] %v3614
      %3652 = vst [vmem:[#allocation3 + $0x508] sm:$0x33] %v3616
      %v3653 = vld [vmem:[#allocation2 + $0x4] sm:$0xff]
      %v3654 = vld [vmem:[#allocation2 + $0xc] sm:$0xff]
      %v3655 = vld [vmem:[#allocation2 + $0x14] sm:$0xff]
      %v3656 = vld [vmem:[#allocation2 + $0x1c] sm:$0xff]
      %v3657 = vld [vmem:[#allocation2 + $0x24] sm:$0xff]
      %v3658 = vld [vmem:[#allocation2 + $0x2c] sm:$0xff]
      %v3659 = vld [vmem:[#allocation2 + $0x34] sm:$0xff]
      %v3660 = vld [vmem:[#allocation2 + $0x3c] sm:$0xff]
      %v3661 = vld [vmem:[#allocation2 + $0x44] sm:$0xff]
      %v3662 = vld [vmem:[#allocation2 + $0x4c] sm:$0x3]
      %s3664 = scalar_lea.vmem [#allocation1], 1
      %3665 = vst [vmem:[%s3664] ss:$2 sm:$0xff] %v3653
      %s3667 = scalar_lea.vmem [#allocation1], 17
      %3668 = vst [vmem:[%s3667] ss:$2 sm:$0xff] %v3654
      %s3670 = scalar_lea.vmem [#allocation1], 33
      %3671 = vst [vmem:[%s3670] ss:$2 sm:$0xff] %v3655
      %s3673 = scalar_lea.vmem [#allocation1], 49
      %3674 = vst [vmem:[%s3673] ss:$2 sm:$0xff] %v3656
      %v3675 = vld.sshfl [vmem:[#allocation1] sm:$0xff pattern:$0x75643120]
      %v3677 = vld.sshfl [vmem:[#allocation1 + $0x8] sm:$0xff pattern:$0x75643120]
      %v3679 = vld.sshfl [vmem:[#allocation1 + $0x10] sm:$0xff pattern:$0x75643120]
      %v3681 = vld.sshfl [vmem:[#allocation1 + $0x18] sm:$0xff pattern:$0x75643120]
      %v3683 = vld.sshfl [vmem:[#allocation1 + $0x20] sm:$0xff pattern:$0x75643120]
      %v3685 = vld.sshfl [vmem:[#allocation1 + $0x28] sm:$0xff pattern:$0x75643120]
      %v3687 = vld.sshfl [vmem:[#allocation1 + $0x30] sm:$0xff pattern:$0x75643120]
      %v3689 = vld.sshfl [vmem:[#allocation1 + $0x38] sm:$0xff pattern:$0x75643120]
      %3692 = vst [vmem:[%s3664] ss:$2 sm:$0xff] %v3657
      %3694 = vst [vmem:[%s3667] ss:$2 sm:$0xff] %v3658
      %3696 = vst [vmem:[%s3670] ss:$2 sm:$0xff] %v3659
      %3698 = vst [vmem:[%s3673] ss:$2 sm:$0xff] %v3660
      %v3699 = vld.sshfl [vmem:[#allocation1] sm:$0xff pattern:$0x75643120]
      %v3701 = vld.sshfl [vmem:[#allocation1 + $0x8] sm:$0xff pattern:$0x75643120]
      %v3703 = vld.sshfl [vmem:[#allocation1 + $0x10] sm:$0xff pattern:$0x75643120]
      %v3705 = vld.sshfl [vmem:[#allocation1 + $0x18] sm:$0xff pattern:$0x75643120]
      %v3707 = vld.sshfl [vmem:[#allocation1 + $0x20] sm:$0xff pattern:$0x75643120]
      %v3709 = vld.sshfl [vmem:[#allocation1 + $0x28] sm:$0xff pattern:$0x75643120]
      %v3711 = vld.sshfl [vmem:[#allocation1 + $0x30] sm:$0xff pattern:$0x75643120]
      %v3713 = vld.sshfl [vmem:[#allocation1 + $0x38] sm:$0xff pattern:$0x75643120]
      %3716 = vst [vmem:[%s3664] ss:$2 sm:$0xff] %v3661
      %3718 = vst [vmem:[%s3667] ss:$2 sm:$0xff] %v3662
      %v3719 = vld.sshfl [vmem:[#allocation1] sm:$0xff pattern:$0x75643120]
      %v3721 = vld.sshfl [vmem:[#allocation1 + $0x8] sm:$0xff pattern:$0x75643120]
      %v3723 = vld.sshfl [vmem:[#allocation1 + $0x10] sm:$0xff pattern:$0x75643120]
      %3725 = vrot.lane.b32.xlu0 %v3675, 22
      %v3726 = vpop.permute.xlu0 %3725
      %3727 = vrot.lane.b32.xlu0 %v3677, 22
      %v3728 = vpop.permute.xlu0 %3727
      %3729 = vrot.lane.b32.xlu0 %v3679, 22
      %v3730 = vpop.permute.xlu0 %3729
      %3731 = vrot.lane.b32.xlu0 %v3681, 22
      %v3732 = vpop.permute.xlu0 %3731
      %3733 = vrot.lane.b32.xlu0 %v3683, 22
      %v3734 = vpop.permute.xlu0 %3733
      %3735 = vrot.lane.b32.xlu0 %v3685, 22
      %v3736 = vpop.permute.xlu0 %3735
      %3737 = vrot.lane.b32.xlu0 %v3687, 22
      %v3738 = vpop.permute.xlu0 %3737
      %3739 = vrot.lane.b32.xlu0 %v3689, 22
      %v3740 = vpop.permute.xlu0 %3739
      %3741 = vrot.lane.b32.xlu0 %v3699, 22
      %v3742 = vpop.permute.xlu0 %3741
      %3743 = vrot.lane.b32.xlu0 %v3701, 22
      %v3744 = vpop.permute.xlu0 %3743
      %3745 = vrot.lane.b32.xlu0 %v3703, 22
      %v3746 = vpop.permute.xlu0 %3745
      %3747 = vrot.lane.b32.xlu0 %v3705, 22
      %v3748 = vpop.permute.xlu0 %3747
      %3749 = vrot.lane.b32.xlu0 %v3707, 22
      %v3750 = vpop.permute.xlu0 %3749
      %3751 = vrot.lane.b32.xlu0 %v3709, 22
      %v3752 = vpop.permute.xlu0 %3751
      %3753 = vrot.lane.b32.xlu0 %v3711, 22
      %v3754 = vpop.permute.xlu0 %3753
      %3755 = vrot.lane.b32.xlu0 %v3713, 22
      %v3756 = vpop.permute.xlu0 %3755
      %3757 = vrot.lane.b32.xlu0 %v3719, 22
      %v3758 = vpop.permute.xlu0 %3757
      %3759 = vrot.lane.b32.xlu0 %v3721, 22
      %v3760 = vpop.permute.xlu0 %3759
      %3761 = vrot.lane.b32.xlu0 %v3723, 22
      %v3762 = vpop.permute.xlu0 %3761
      %v3763 = vrot.slane %v3726, 4
      %v3764 = vrot.slane %v3728, 4
      %v3765 = vrot.slane %v3730, 4
      %v3766 = vrot.slane %v3732, 4
      %v3767 = vrot.slane %v3734, 4
      %v3768 = vrot.slane %v3736, 4
      %v3769 = vrot.slane %v3738, 4
      %v3770 = vrot.slane %v3740, 4
      %v3771 = vrot.slane %v3742, 4
      %v3772 = vrot.slane %v3744, 4
      %v3773 = vrot.slane %v3746, 4
      %v3774 = vrot.slane %v3748, 4
      %v3775 = vrot.slane %v3750, 4
      %v3776 = vrot.slane %v3752, 4
      %v3777 = vrot.slane %v3754, 4
      %v3778 = vrot.slane %v3756, 4
      %v3779 = vrot.slane %v3758, 4
      %v3780 = vrot.slane %v3760, 4
      %v3781 = vrot.slane %v3762, 4
      %v3782 = vsel %vm557, %v3763, %v3764
      %vm3783 = vcmask 179200
      %v3784 = vsel %vm3783, %v3726, %v3782
      %v3785 = vsel %vm557, %v3764, %v3765
      %v3786 = vsel %vm3783, %v3728, %v3785
      %v3787 = vsel %vm557, %v3765, %v3766
      %v3788 = vsel %vm3783, %v3730, %v3787
      %v3789 = vsel %vm557, %v3766, %v3767
      %v3790 = vsel %vm3783, %v3732, %v3789
      %v3791 = vsel %vm557, %v3767, %v3768
      %v3792 = vsel %vm3783, %v3734, %v3791
      %v3793 = vsel %vm557, %v3768, %v3769
      %v3794 = vsel %vm3783, %v3736, %v3793
      %v3795 = vsel %vm557, %v3769, %v3770
      %v3796 = vsel %vm3783, %v3738, %v3795
      %v3797 = vsel %vm557, %v3770, %v3771
      %v3798 = vsel %vm3783, %v3740, %v3797
      %v3799 = vsel %vm557, %v3771, %v3772
      %v3800 = vsel %vm3783, %v3742, %v3799
      %v3801 = vsel %vm557, %v3772, %v3773
      %v3802 = vsel %vm3783, %v3744, %v3801
      %v3803 = vsel %vm557, %v3773, %v3774
      %v3804 = vsel %vm3783, %v3746, %v3803
      %v3805 = vsel %vm557, %v3774, %v3775
      %v3806 = vsel %vm3783, %v3748, %v3805
      %v3807 = vsel %vm557, %v3775, %v3776
      %v3808 = vsel %vm3783, %v3750, %v3807
      %v3809 = vsel %vm557, %v3776, %v3777
      %v3810 = vsel %vm3783, %v3752, %v3809
      %v3811 = vsel %vm557, %v3777, %v3778
      %v3812 = vsel %vm3783, %v3754, %v3811
      %v3813 = vsel %vm557, %v3778, %v3779
      %v3814 = vsel %vm3783, %v3756, %v3813
      %v3815 = vsel %vm557, %v3779, %v3780
      %v3816 = vsel %vm3783, %v3758, %v3815
      %v3817 = vsel %vm557, %v3780, %v3781
      %v3818 = vsel %vm3783, %v3760, %v3817
      %3837 = vst [vmem:[#allocation3 + $0x480] sm:$0xcc] %v3784
      %3838 = vst [vmem:[#allocation3 + $0x488] sm:$0xcc] %v3786
      %3839 = vst [vmem:[#allocation3 + $0x490] sm:$0xcc] %v3788
      %3840 = vst [vmem:[#allocation3 + $0x498] sm:$0xcc] %v3790
      %3841 = vst [vmem:[#allocation3 + $0x4a0] sm:$0xcc] %v3792
      %3842 = vst [vmem:[#allocation3 + $0x4a8] sm:$0xcc] %v3794
      %3843 = vst [vmem:[#allocation3 + $0x4b0] sm:$0xcc] %v3796
      %3844 = vst [vmem:[#allocation3 + $0x4b8] sm:$0xcc] %v3798
      %3845 = vst [vmem:[#allocation3 + $0x4c0] sm:$0xcc] %v3800
      %3846 = vst [vmem:[#allocation3 + $0x4c8] sm:$0xcc] %v3802
      %3847 = vst [vmem:[#allocation3 + $0x4d0] sm:$0xcc] %v3804
      %3848 = vst [vmem:[#allocation3 + $0x4d8] sm:$0xcc] %v3806
      %3849 = vst [vmem:[#allocation3 + $0x4e0] sm:$0xcc] %v3808
      %3850 = vst [vmem:[#allocation3 + $0x4e8] sm:$0xcc] %v3810
      %3851 = vst [vmem:[#allocation3 + $0x4f0] sm:$0xcc] %v3812
      %3852 = vst [vmem:[#allocation3 + $0x4f8] sm:$0xcc] %v3814
      %3853 = vst [vmem:[#allocation3 + $0x500] sm:$0xcc] %v3816
      %3854 = vst [vmem:[#allocation3 + $0x508] sm:$0xcc] %v3818
      %v3855 = vld [vmem:[#allocation2 + $0xa] sm:$0xff]
      %v3856 = vld [vmem:[#allocation2 + $0x12] sm:$0xff]
      %v3857 = vld [vmem:[#allocation2 + $0x1a] sm:$0xff]
      %v3858 = vld [vmem:[#allocation2 + $0x22] sm:$0xff]
      %v3859 = vld [vmem:[#allocation2 + $0x2a] sm:$0xff]
      %v3860 = vld [vmem:[#allocation2 + $0x32] sm:$0xff]
      %v3861 = vld [vmem:[#allocation2 + $0x3a] sm:$0xff]
      %v3862 = vld [vmem:[#allocation2 + $0x42] sm:$0xff]
      %v3863 = vld [vmem:[#allocation2 + $0x4a] sm:$0xff]
      %v3864 = vld [vmem:[#allocation2 + $0x52] sm:$0x3]
      %3866 = vst [vmem:[#allocation1] ss:$2 sm:$0xff] %v3855
      %s3868 = scalar_lea.vmem [#allocation1], 16
      %3869 = vst [vmem:[%s3868] ss:$2 sm:$0xff] %v3856
      %s3871 = scalar_lea.vmem [#allocation1], 32
      %3872 = vst [vmem:[%s3871] ss:$2 sm:$0xff] %v3857
      %s3874 = scalar_lea.vmem [#allocation1], 48
      %3875 = vst [vmem:[%s3874] ss:$2 sm:$0xff] %v3858
      %v3876 = vld.sshfl [vmem:[#allocation1] sm:$0xff pattern:$0x75643120]
      %v3878 = vld.sshfl [vmem:[#allocation1 + $0x8] sm:$0xff pattern:$0x75643120]
      %v3880 = vld.sshfl [vmem:[#allocation1 + $0x10] sm:$0xff pattern:$0x75643120]
      %v3882 = vld.sshfl [vmem:[#allocation1 + $0x18] sm:$0xff pattern:$0x75643120]
      %v3884 = vld.sshfl [vmem:[#allocation1 + $0x20] sm:$0xff pattern:$0x75643120]
      %v3886 = vld.sshfl [vmem:[#allocation1 + $0x28] sm:$0xff pattern:$0x75643120]
      %v3888 = vld.sshfl [vmem:[#allocation1 + $0x30] sm:$0xff pattern:$0x75643120]
      %v3890 = vld.sshfl [vmem:[#allocation1 + $0x38] sm:$0xff pattern:$0x75643120]
      %3893 = vst [vmem:[#allocation1] ss:$2 sm:$0xff] %v3859
      %3895 = vst [vmem:[%s3868] ss:$2 sm:$0xff] %v3860
      %3897 = vst [vmem:[%s3871] ss:$2 sm:$0xff] %v3861
      %3899 = vst [vmem:[%s3874] ss:$2 sm:$0xff] %v3862
      %v3900 = vld.sshfl [vmem:[#allocation1] sm:$0xff pattern:$0x75643120]
      %v3902 = vld.sshfl [vmem:[#allocation1 + $0x8] sm:$0xff pattern:$0x75643120]
      %v3904 = vld.sshfl [vmem:[#allocation1 + $0x10] sm:$0xff pattern:$0x75643120]
      %v3906 = vld.sshfl [vmem:[#allocation1 + $0x18] sm:$0xff pattern:$0x75643120]
      %v3908 = vld.sshfl [vmem:[#allocation1 + $0x20] sm:$0xff pattern:$0x75643120]
      %v3910 = vld.sshfl [vmem:[#allocation1 + $0x28] sm:$0xff pattern:$0x75643120]
      %v3912 = vld.sshfl [vmem:[#allocation1 + $0x30] sm:$0xff pattern:$0x75643120]
      %v3914 = vld.sshfl [vmem:[#allocation1 + $0x38] sm:$0xff pattern:$0x75643120]
      %3917 = vst [vmem:[#allocation1] ss:$2 sm:$0xff] %v3863
      %3919 = vst [vmem:[%s3868] ss:$2 sm:$0xff] %v3864
      %v3920 = vld.sshfl [vmem:[#allocation1] sm:$0xff pattern:$0x75643120]
      %v3922 = vld.sshfl [vmem:[#allocation1 + $0x8] sm:$0xff pattern:$0x75643120]
      %v3924 = vld.sshfl [vmem:[#allocation1 + $0x10] sm:$0xff pattern:$0x75643120]
      %3926 = vrot.lane.b32.xlu0 %v3876, 120
      %v3927 = vpop.permute.xlu0 %3926
      %3928 = vrot.lane.b32.xlu0 %v3878, 120
      %v3929 = vpop.permute.xlu0 %3928
      %3930 = vrot.lane.b32.xlu0 %v3880, 120
      %v3931 = vpop.permute.xlu0 %3930
      %3932 = vrot.lane.b32.xlu0 %v3882, 120
      %v3933 = vpop.permute.xlu0 %3932
      %3934 = vrot.lane.b32.xlu0 %v3884, 120
      %v3935 = vpop.permute.xlu0 %3934
      %3936 = vrot.lane.b32.xlu0 %v3886, 120
      %v3937 = vpop.permute.xlu0 %3936
      %3938 = vrot.lane.b32.xlu0 %v3888, 120
      %v3939 = vpop.permute.xlu0 %3938
      %3940 = vrot.lane.b32.xlu0 %v3890, 120
      %v3941 = vpop.permute.xlu0 %3940
      %3942 = vrot.lane.b32.xlu0 %v3900, 120
      %v3943 = vpop.permute.xlu0 %3942
      %3944 = vrot.lane.b32.xlu0 %v3902, 120
      %v3945 = vpop.permute.xlu0 %3944
      %3946 = vrot.lane.b32.xlu0 %v3904, 120
      %v3947 = vpop.permute.xlu0 %3946
      %3948 = vrot.lane.b32.xlu0 %v3906, 120
      %v3949 = vpop.permute.xlu0 %3948
      %3950 = vrot.lane.b32.xlu0 %v3908, 120
      %v3951 = vpop.permute.xlu0 %3950
      %3952 = vrot.lane.b32.xlu0 %v3910, 120
      %v3953 = vpop.permute.xlu0 %3952
      %3954 = vrot.lane.b32.xlu0 %v3912, 120
      %v3955 = vpop.permute.xlu0 %3954
      %3956 = vrot.lane.b32.xlu0 %v3914, 120
      %v3957 = vpop.permute.xlu0 %3956
      %3958 = vrot.lane.b32.xlu0 %v3920, 120
      %v3959 = vpop.permute.xlu0 %3958
      %3960 = vrot.lane.b32.xlu0 %v3922, 120
      %v3961 = vpop.permute.xlu0 %3960
      %3962 = vrot.lane.b32.xlu0 %v3924, 120
      %v3963 = vpop.permute.xlu0 %3962
      %v3964 = vrot.slane %v3927, 4
      %v3965 = vrot.slane %v3929, 4
      %v3966 = vrot.slane %v3931, 4
      %v3967 = vrot.slane %v3933, 4
      %v3968 = vrot.slane %v3935, 4
      %v3969 = vrot.slane %v3937, 4
      %v3970 = vrot.slane %v3939, 4
      %v3971 = vrot.slane %v3941, 4
      %v3972 = vrot.slane %v3943, 4
      %v3973 = vrot.slane %v3945, 4
      %v3974 = vrot.slane %v3947, 4
      %v3975 = vrot.slane %v3949, 4
      %v3976 = vrot.slane %v3951, 4
      %v3977 = vrot.slane %v3953, 4
      %v3978 = vrot.slane %v3955, 4
      %v3979 = vrot.slane %v3957, 4
      %v3980 = vrot.slane %v3959, 4
      %v3981 = vrot.slane %v3961, 4
      %v3982 = vrot.slane %v3963, 4
      %v3983 = vsel %vm557, %v3964, %v3965
      %vm3984 = vcmask 982016
      %v3985 = vsel %vm3984, %v3927, %v3983
      %v3986 = vsel %vm557, %v3965, %v3966
      %v3987 = vsel %vm3984, %v3929, %v3986
      %v3988 = vsel %vm557, %v3966, %v3967
      %v3989 = vsel %vm3984, %v3931, %v3988
      %v3990 = vsel %vm557, %v3967, %v3968
      %v3991 = vsel %vm3984, %v3933, %v3990
      %v3992 = vsel %vm557, %v3968, %v3969
      %v3993 = vsel %vm3984, %v3935, %v3992
      %v3994 = vsel %vm557, %v3969, %v3970
      %v3995 = vsel %vm3984, %v3937, %v3994
      %v3996 = vsel %vm557, %v3970, %v3971
      %v3997 = vsel %vm3984, %v3939, %v3996
      %v3998 = vsel %vm557, %v3971, %v3972
      %v3999 = vsel %vm3984, %v3941, %v3998
      %v4000 = vsel %vm557, %v3972, %v3973
      %v4001 = vsel %vm3984, %v3943, %v4000
      %v4002 = vsel %vm557, %v3973, %v3974
      %v4003 = vsel %vm3984, %v3945, %v4002
      %v4004 = vsel %vm557, %v3974, %v3975
      %v4005 = vsel %vm3984, %v3947, %v4004
      %v4006 = vsel %vm557, %v3975, %v3976
      %v4007 = vsel %vm3984, %v3949, %v4006
      %v4008 = vsel %vm557, %v3976, %v3977
      %v4009 = vsel %vm3984, %v3951, %v4008
      %v4010 = vsel %vm557, %v3977, %v3978
      %v4011 = vsel %vm3984, %v3953, %v4010
      %v4012 = vsel %vm557, %v3978, %v3979
      %v4013 = vsel %vm3984, %v3955, %v4012
      %v4014 = vsel %vm557, %v3979, %v3980
      %v4015 = vsel %vm3984, %v3957, %v4014
      %v4016 = vsel %vm557, %v3980, %v3981
      %v4017 = vsel %vm3984, %v3959, %v4016
      %v4018 = vsel %vm557, %v3981, %v3982
      %v4019 = vsel %vm3984, %v3961, %v4018
      %4038 = vst [vmem:[#allocation3 + $0x510] sm:$0x33] %v3985
      %4039 = vst [vmem:[#allocation3 + $0x518] sm:$0x33] %v3987
      %4040 = vst [vmem:[#allocation3 + $0x520] sm:$0x33] %v3989
      %4041 = vst [vmem:[#allocation3 + $0x528] sm:$0x33] %v3991
      %4042 = vst [vmem:[#allocation3 + $0x530] sm:$0x33] %v3993
      %4043 = vst [vmem:[#allocation3 + $0x538] sm:$0x33] %v3995
      %4044 = vst [vmem:[#allocation3 + $0x540] sm:$0x33] %v3997
      %4045 = vst [vmem:[#allocation3 + $0x548] sm:$0x33] %v3999
      %4046 = vst [vmem:[#allocation3 + $0x550] sm:$0x33] %v4001
      %4047 = vst [vmem:[#allocation3 + $0x558] sm:$0x33] %v4003
      %4048 = vst [vmem:[#allocation3 + $0x560] sm:$0x33] %v4005
      %4049 = vst [vmem:[#allocation3 + $0x568] sm:$0x33] %v4007
      %4050 = vst [vmem:[#allocation3 + $0x570] sm:$0x33] %v4009
      %4051 = vst [vmem:[#allocation3 + $0x578] sm:$0x33] %v4011
      %4052 = vst [vmem:[#allocation3 + $0x580] sm:$0x33] %v4013
      %4053 = vst [vmem:[#allocation3 + $0x588] sm:$0x33] %v4015
      %4054 = vst [vmem:[#allocation3 + $0x590] sm:$0x33] %v4017
      %4055 = vst [vmem:[#allocation3 + $0x598] sm:$0x33] %v4019
      %v4056 = vld [vmem:[#allocation2 + $0xa] sm:$0xff]
      %v4057 = vld [vmem:[#allocation2 + $0x12] sm:$0xff]
      %v4058 = vld [vmem:[#allocation2 + $0x1a] sm:$0xff]
      %v4059 = vld [vmem:[#allocation2 + $0x22] sm:$0xff]
      %v4060 = vld [vmem:[#allocation2 + $0x2a] sm:$0xff]
      %v4061 = vld [vmem:[#allocation2 + $0x32] sm:$0xff]
      %v4062 = vld [vmem:[#allocation2 + $0x3a] sm:$0xff]
      %v4063 = vld [vmem:[#allocation2 + $0x42] sm:$0xff]
      %v4064 = vld [vmem:[#allocation2 + $0x4a] sm:$0xff]
      %v4065 = vld [vmem:[#allocation2 + $0x52] sm:$0x3]
      %s4067 = scalar_lea.vmem [#allocation1], 1
      %4068 = vst [vmem:[%s4067] ss:$2 sm:$0xff] %v4056
      %s4070 = scalar_lea.vmem [#allocation1], 17
      %4071 = vst [vmem:[%s4070] ss:$2 sm:$0xff] %v4057
      %s4073 = scalar_lea.vmem [#allocation1], 33
      %4074 = vst [vmem:[%s4073] ss:$2 sm:$0xff] %v4058
      %s4076 = scalar_lea.vmem [#allocation1], 49
      %4077 = vst [vmem:[%s4076] ss:$2 sm:$0xff] %v4059
      %v4078 = vld.sshfl [vmem:[#allocation1] sm:$0xff pattern:$0x75643120]
      %v4080 = vld.sshfl [vmem:[#allocation1 + $0x8] sm:$0xff pattern:$0x75643120]
      %v4082 = vld.sshfl [vmem:[#allocation1 + $0x10] sm:$0xff pattern:$0x75643120]
      %v4084 = vld.sshfl [vmem:[#allocation1 + $0x18] sm:$0xff pattern:$0x75643120]
      %v4086 = vld.sshfl [vmem:[#allocation1 + $0x20] sm:$0xff pattern:$0x75643120]
      %v4088 = vld.sshfl [vmem:[#allocation1 + $0x28] sm:$0xff pattern:$0x75643120]
      %v4090 = vld.sshfl [vmem:[#allocation1 + $0x30] sm:$0xff pattern:$0x75643120]
      %v4092 = vld.sshfl [vmem:[#allocation1 + $0x38] sm:$0xff pattern:$0x75643120]
      %4095 = vst [vmem:[%s4067] ss:$2 sm:$0xff] %v4060
      %4097 = vst [vmem:[%s4070] ss:$2 sm:$0xff] %v4061
      %4099 = vst [vmem:[%s4073] ss:$2 sm:$0xff] %v4062
      %4101 = vst [vmem:[%s4076] ss:$2 sm:$0xff] %v4063
      %v4102 = vld.sshfl [vmem:[#allocation1] sm:$0xff pattern:$0x75643120]
      %v4104 = vld.sshfl [vmem:[#allocation1 + $0x8] sm:$0xff pattern:$0x75643120]
      %v4106 = vld.sshfl [vmem:[#allocation1 + $0x10] sm:$0xff pattern:$0x75643120]
      %v4108 = vld.sshfl [vmem:[#allocation1 + $0x18] sm:$0xff pattern:$0x75643120]
      %v4110 = vld.sshfl [vmem:[#allocation1 + $0x20] sm:$0xff pattern:$0x75643120]
      %v4112 = vld.sshfl [vmem:[#allocation1 + $0x28] sm:$0xff pattern:$0x75643120]
      %v4114 = vld.sshfl [vmem:[#allocation1 + $0x30] sm:$0xff pattern:$0x75643120]
      %v4116 = vld.sshfl [vmem:[#allocation1 + $0x38] sm:$0xff pattern:$0x75643120]
      %4119 = vst [vmem:[%s4067] ss:$2 sm:$0xff] %v4064
      %4121 = vst [vmem:[%s4070] ss:$2 sm:$0xff] %v4065
      %v4122 = vld.sshfl [vmem:[#allocation1] sm:$0xff pattern:$0x75643120]
      %v4124 = vld.sshfl [vmem:[#allocation1 + $0x8] sm:$0xff pattern:$0x75643120]
      %v4126 = vld.sshfl [vmem:[#allocation1 + $0x10] sm:$0xff pattern:$0x75643120]
      %4128 = vrot.lane.b32.xlu0 %v4078, 119
      %v4129 = vpop.permute.xlu0 %4128
      %4130 = vrot.lane.b32.xlu0 %v4080, 119
      %v4131 = vpop.permute.xlu0 %4130
      %4132 = vrot.lane.b32.xlu0 %v4082, 119
      %v4133 = vpop.permute.xlu0 %4132
      %4134 = vrot.lane.b32.xlu0 %v4084, 119
      %v4135 = vpop.permute.xlu0 %4134
      %4136 = vrot.lane.b32.xlu0 %v4086, 119
      %v4137 = vpop.permute.xlu0 %4136
      %4138 = vrot.lane.b32.xlu0 %v4088, 119
      %v4139 = vpop.permute.xlu0 %4138
      %4140 = vrot.lane.b32.xlu0 %v4090, 119
      %v4141 = vpop.permute.xlu0 %4140
      %4142 = vrot.lane.b32.xlu0 %v4092, 119
      %v4143 = vpop.permute.xlu0 %4142
      %4144 = vrot.lane.b32.xlu0 %v4102, 119
      %v4145 = vpop.permute.xlu0 %4144
      %4146 = vrot.lane.b32.xlu0 %v4104, 119
      %v4147 = vpop.permute.xlu0 %4146
      %4148 = vrot.lane.b32.xlu0 %v4106, 119
      %v4149 = vpop.permute.xlu0 %4148
      %4150 = vrot.lane.b32.xlu0 %v4108, 119
      %v4151 = vpop.permute.xlu0 %4150
      %4152 = vrot.lane.b32.xlu0 %v4110, 119
      %v4153 = vpop.permute.xlu0 %4152
      %4154 = vrot.lane.b32.xlu0 %v4112, 119
      %v4155 = vpop.permute.xlu0 %4154
      %4156 = vrot.lane.b32.xlu0 %v4114, 119
      %v4157 = vpop.permute.xlu0 %4156
      %4158 = vrot.lane.b32.xlu0 %v4116, 119
      %v4159 = vpop.permute.xlu0 %4158
      %4160 = vrot.lane.b32.xlu0 %v4122, 119
      %v4161 = vpop.permute.xlu0 %4160
      %4162 = vrot.lane.b32.xlu0 %v4124, 119
      %v4163 = vpop.permute.xlu0 %4162
      %4164 = vrot.lane.b32.xlu0 %v4126, 119
      %v4165 = vpop.permute.xlu0 %4164
      %v4166 = vrot.slane %v4129, 4
      %v4167 = vrot.slane %v4131, 4
      %v4168 = vrot.slane %v4133, 4
      %v4169 = vrot.slane %v4135, 4
      %v4170 = vrot.slane %v4137, 4
      %v4171 = vrot.slane %v4139, 4
      %v4172 = vrot.slane %v4141, 4
      %v4173 = vrot.slane %v4143, 4
      %v4174 = vrot.slane %v4145, 4
      %v4175 = vrot.slane %v4147, 4
      %v4176 = vrot.slane %v4149, 4
      %v4177 = vrot.slane %v4151, 4
      %v4178 = vrot.slane %v4153, 4
      %v4179 = vrot.slane %v4155, 4
      %v4180 = vrot.slane %v4157, 4
      %v4181 = vrot.slane %v4159, 4
      %v4182 = vrot.slane %v4161, 4
      %v4183 = vrot.slane %v4163, 4
      %v4184 = vrot.slane %v4165, 4
      %v4185 = vsel %vm557, %v4166, %v4167
      %vm4186 = vcmask 973824
      %v4187 = vsel %vm4186, %v4129, %v4185
      %v4188 = vsel %vm557, %v4167, %v4168
      %v4189 = vsel %vm4186, %v4131, %v4188
      %v4190 = vsel %vm557, %v4168, %v4169
      %v4191 = vsel %vm4186, %v4133, %v4190
      %v4192 = vsel %vm557, %v4169, %v4170
      %v4193 = vsel %vm4186, %v4135, %v4192
      %v4194 = vsel %vm557, %v4170, %v4171
      %v4195 = vsel %vm4186, %v4137, %v4194
      %v4196 = vsel %vm557, %v4171, %v4172
      %v4197 = vsel %vm4186, %v4139, %v4196
      %v4198 = vsel %vm557, %v4172, %v4173
      %v4199 = vsel %vm4186, %v4141, %v4198
      %v4200 = vsel %vm557, %v4173, %v4174
      %v4201 = vsel %vm4186, %v4143, %v4200
      %v4202 = vsel %vm557, %v4174, %v4175
      %v4203 = vsel %vm4186, %v4145, %v4202
      %v4204 = vsel %vm557, %v4175, %v4176
      %v4205 = vsel %vm4186, %v4147, %v4204
      %v4206 = vsel %vm557, %v4176, %v4177
      %v4207 = vsel %vm4186, %v4149, %v4206
      %v4208 = vsel %vm557, %v4177, %v4178
      %v4209 = vsel %vm4186, %v4151, %v4208
      %v4210 = vsel %vm557, %v4178, %v4179
      %v4211 = vsel %vm4186, %v4153, %v4210
      %v4212 = vsel %vm557, %v4179, %v4180
      %v4213 = vsel %vm4186, %v4155, %v4212
      %v4214 = vsel %vm557, %v4180, %v4181
      %v4215 = vsel %vm4186, %v4157, %v4214
      %v4216 = vsel %vm557, %v4181, %v4182
      %v4217 = vsel %vm4186, %v4159, %v4216
      %v4218 = vsel %vm557, %v4182, %v4183
      %v4219 = vsel %vm4186, %v4161, %v4218
      %v4220 = vsel %vm557, %v4183, %v4184
      %v4221 = vsel %vm4186, %v4163, %v4220
      %4240 = vst [vmem:[#allocation3 + $0x510] sm:$0xcc] %v4187
      %4241 = vst [vmem:[#allocation3 + $0x518] sm:$0xcc] %v4189
      %4242 = vst [vmem:[#allocation3 + $0x520] sm:$0xcc] %v4191
      %4243 = vst [vmem:[#allocation3 + $0x528] sm:$0xcc] %v4193
      %4244 = vst [vmem:[#allocation3 + $0x530] sm:$0xcc] %v4195
      %4245 = vst [vmem:[#allocation3 + $0x538] sm:$0xcc] %v4197
      %4246 = vst [vmem:[#allocation3 + $0x540] sm:$0xcc] %v4199
      %4247 = vst [vmem:[#allocation3 + $0x548] sm:$0xcc] %v4201
      %4248 = vst [vmem:[#allocation3 + $0x550] sm:$0xcc] %v4203
      %4249 = vst [vmem:[#allocation3 + $0x558] sm:$0xcc] %v4205
      %4250 = vst [vmem:[#allocation3 + $0x560] sm:$0xcc] %v4207
      %4251 = vst [vmem:[#allocation3 + $0x568] sm:$0xcc] %v4209
      %4252 = vst [vmem:[#allocation3 + $0x570] sm:$0xcc] %v4211
      %4253 = vst [vmem:[#allocation3 + $0x578] sm:$0xcc] %v4213
      %4254 = vst [vmem:[#allocation3 + $0x580] sm:$0xcc] %v4215
      %4255 = vst [vmem:[#allocation3 + $0x588] sm:$0xcc] %v4217
      %4256 = vst [vmem:[#allocation3 + $0x590] sm:$0xcc] %v4219
      %4257 = vst [vmem:[#allocation3 + $0x598] sm:$0xcc] %v4221
      %v4258 = vld [vmem:[#allocation2 + $0xa] sm:$0xff]
      %v4259 = vld [vmem:[#allocation2 + $0x12] sm:$0xff]
      %v4260 = vld [vmem:[#allocation2 + $0x1a] sm:$0xff]
      %v4261 = vld [vmem:[#allocation2 + $0x22] sm:$0xff]
      %v4262 = vld [vmem:[#allocation2 + $0x2a] sm:$0xff]
      %v4263 = vld [vmem:[#allocation2 + $0x32] sm:$0xff]
      %v4264 = vld [vmem:[#allocation2 + $0x3a] sm:$0xff]
      %v4265 = vld [vmem:[#allocation2 + $0x42] sm:$0xff]
      %v4266 = vld [vmem:[#allocation2 + $0x4a] sm:$0xff]
      %v4267 = vld [vmem:[#allocation2 + $0x52] sm:$0x3]
      %4269 = vst [vmem:[#allocation1] ss:$2 sm:$0xff] %v4258
      %s4271 = scalar_lea.vmem [#allocation1], 16
      %4272 = vst [vmem:[%s4271] ss:$2 sm:$0xff] %v4259
      %s4274 = scalar_lea.vmem [#allocation1], 32
      %4275 = vst [vmem:[%s4274] ss:$2 sm:$0xff] %v4260
      %s4277 = scalar_lea.vmem [#allocation1], 48
      %4278 = vst [vmem:[%s4277] ss:$2 sm:$0xff] %v4261
      %v4279 = vld.sshfl [vmem:[#allocation1] sm:$0xff pattern:$0x75643120]
      %v4281 = vld.sshfl [vmem:[#allocation1 + $0x8] sm:$0xff pattern:$0x75643120]
      %v4283 = vld.sshfl [vmem:[#allocation1 + $0x10] sm:$0xff pattern:$0x75643120]
      %v4285 = vld.sshfl [vmem:[#allocation1 + $0x18] sm:$0xff pattern:$0x75643120]
      %v4287 = vld.sshfl [vmem:[#allocation1 + $0x20] sm:$0xff pattern:$0x75643120]
      %v4289 = vld.sshfl [vmem:[#allocation1 + $0x28] sm:$0xff pattern:$0x75643120]
      %v4291 = vld.sshfl [vmem:[#allocation1 + $0x30] sm:$0xff pattern:$0x75643120]
      %v4293 = vld.sshfl [vmem:[#allocation1 + $0x38] sm:$0xff pattern:$0x75643120]
      %4296 = vst [vmem:[#allocation1] ss:$2 sm:$0xff] %v4262
      %4298 = vst [vmem:[%s4271] ss:$2 sm:$0xff] %v4263
      %4300 = vst [vmem:[%s4274] ss:$2 sm:$0xff] %v4264
      %4302 = vst [vmem:[%s4277] ss:$2 sm:$0xff] %v4265
      %v4303 = vld.sshfl [vmem:[#allocation1] sm:$0xff pattern:$0x75643120]
      %v4305 = vld.sshfl [vmem:[#allocation1 + $0x8] sm:$0xff pattern:$0x75643120]
      %v4307 = vld.sshfl [vmem:[#allocation1 + $0x10] sm:$0xff pattern:$0x75643120]
      %v4309 = vld.sshfl [vmem:[#allocation1 + $0x18] sm:$0xff pattern:$0x75643120]
      %v4311 = vld.sshfl [vmem:[#allocation1 + $0x20] sm:$0xff pattern:$0x75643120]
      %v4313 = vld.sshfl [vmem:[#allocation1 + $0x28] sm:$0xff pattern:$0x75643120]
      %v4315 = vld.sshfl [vmem:[#allocation1 + $0x30] sm:$0xff pattern:$0x75643120]
      %v4317 = vld.sshfl [vmem:[#allocation1 + $0x38] sm:$0xff pattern:$0x75643120]
      %4320 = vst [vmem:[#allocation1] ss:$2 sm:$0xff] %v4266
      %4322 = vst [vmem:[%s4271] ss:$2 sm:$0xff] %v4267
      %v4323 = vld.sshfl [vmem:[#allocation1] sm:$0xff pattern:$0x75643120]
      %v4325 = vld.sshfl [vmem:[#allocation1 + $0x8] sm:$0xff pattern:$0x75643120]
      %v4327 = vld.sshfl [vmem:[#allocation1 + $0x10] sm:$0xff pattern:$0x75643120]
      %4329 = vrot.lane.b32.xlu0 %v4279, 118
      %v4330 = vpop.permute.xlu0 %4329
      %4331 = vrot.lane.b32.xlu0 %v4281, 118
      %v4332 = vpop.permute.xlu0 %4331
      %4333 = vrot.lane.b32.xlu0 %v4283, 118
      %v4334 = vpop.permute.xlu0 %4333
      %4335 = vrot.lane.b32.xlu0 %v4285, 118
      %v4336 = vpop.permute.xlu0 %4335
      %4337 = vrot.lane.b32.xlu0 %v4287, 118
      %v4338 = vpop.permute.xlu0 %4337
      %4339 = vrot.lane.b32.xlu0 %v4289, 118
      %v4340 = vpop.permute.xlu0 %4339
      %4341 = vrot.lane.b32.xlu0 %v4291, 118
      %v4342 = vpop.permute.xlu0 %4341
      %4343 = vrot.lane.b32.xlu0 %v4293, 118
      %v4344 = vpop.permute.xlu0 %4343
      %4345 = vrot.lane.b32.xlu0 %v4303, 118
      %v4346 = vpop.permute.xlu0 %4345
      %4347 = vrot.lane.b32.xlu0 %v4305, 118
      %v4348 = vpop.permute.xlu0 %4347
      %4349 = vrot.lane.b32.xlu0 %v4307, 118
      %v4350 = vpop.permute.xlu0 %4349
      %4351 = vrot.lane.b32.xlu0 %v4309, 118
      %v4352 = vpop.permute.xlu0 %4351
      %4353 = vrot.lane.b32.xlu0 %v4311, 118
      %v4354 = vpop.permute.xlu0 %4353
      %4355 = vrot.lane.b32.xlu0 %v4313, 118
      %v4356 = vpop.permute.xlu0 %4355
      %4357 = vrot.lane.b32.xlu0 %v4315, 118
      %v4358 = vpop.permute.xlu0 %4357
      %4359 = vrot.lane.b32.xlu0 %v4317, 118
      %v4360 = vpop.permute.xlu0 %4359
      %4361 = vrot.lane.b32.xlu0 %v4323, 118
      %v4362 = vpop.permute.xlu0 %4361
      %4363 = vrot.lane.b32.xlu0 %v4325, 118
      %v4364 = vpop.permute.xlu0 %4363
      %4365 = vrot.lane.b32.xlu0 %v4327, 118
      %v4366 = vpop.permute.xlu0 %4365
      %v4367 = vrot.slane %v4330, 4
      %v4368 = vrot.slane %v4332, 4
      %v4369 = vrot.slane %v4334, 4
      %v4370 = vrot.slane %v4336, 4
      %v4371 = vrot.slane %v4338, 4
      %v4372 = vrot.slane %v4340, 4
      %v4373 = vrot.slane %v4342, 4
      %v4374 = vrot.slane %v4344, 4
      %v4375 = vrot.slane %v4346, 4
      %v4376 = vrot.slane %v4348, 4
      %v4377 = vrot.slane %v4350, 4
      %v4378 = vrot.slane %v4352, 4
      %v4379 = vrot.slane %v4354, 4
      %v4380 = vrot.slane %v4356, 4
      %v4381 = vrot.slane %v4358, 4
      %v4382 = vrot.slane %v4360, 4
      %v4383 = vrot.slane %v4362, 4
      %v4384 = vrot.slane %v4364, 4
      %v4385 = vrot.slane %v4366, 4
      %v4386 = vsel %vm557, %v4367, %v4368
      %vm4387 = vcmask 965632
      %v4388 = vsel %vm4387, %v4330, %v4386
      %v4389 = vsel %vm557, %v4368, %v4369
      %v4390 = vsel %vm4387, %v4332, %v4389
      %v4391 = vsel %vm557, %v4369, %v4370
      %v4392 = vsel %vm4387, %v4334, %v4391
      %v4393 = vsel %vm557, %v4370, %v4371
      %v4394 = vsel %vm4387, %v4336, %v4393
      %v4395 = vsel %vm557, %v4371, %v4372
      %v4396 = vsel %vm4387, %v4338, %v4395
      %v4397 = vsel %vm557, %v4372, %v4373
      %v4398 = vsel %vm4387, %v4340, %v4397
      %v4399 = vsel %vm557, %v4373, %v4374
      %v4400 = vsel %vm4387, %v4342, %v4399
      %v4401 = vsel %vm557, %v4374, %v4375
      %v4402 = vsel %vm4387, %v4344, %v4401
      %v4403 = vsel %vm557, %v4375, %v4376
      %v4404 = vsel %vm4387, %v4346, %v4403
      %v4405 = vsel %vm557, %v4376, %v4377
      %v4406 = vsel %vm4387, %v4348, %v4405
      %v4407 = vsel %vm557, %v4377, %v4378
      %v4408 = vsel %vm4387, %v4350, %v4407
      %v4409 = vsel %vm557, %v4378, %v4379
      %v4410 = vsel %vm4387, %v4352, %v4409
      %v4411 = vsel %vm557, %v4379, %v4380
      %v4412 = vsel %vm4387, %v4354, %v4411
      %v4413 = vsel %vm557, %v4380, %v4381
      %v4414 = vsel %vm4387, %v4356, %v4413
      %v4415 = vsel %vm557, %v4381, %v4382
      %v4416 = vsel %vm4387, %v4358, %v4415
      %v4417 = vsel %vm557, %v4382, %v4383
      %v4418 = vsel %vm4387, %v4360, %v4417
      %v4419 = vsel %vm557, %v4383, %v4384
      %v4420 = vsel %vm4387, %v4362, %v4419
      %v4421 = vsel %vm557, %v4384, %v4385
      %v4422 = vsel %vm4387, %v4364, %v4421
      %4441 = vst [vmem:[#allocation3 + $0x5a0] sm:$0x33] %v4388
      %4442 = vst [vmem:[#allocation3 + $0x5a8] sm:$0x33] %v4390
      %4443 = vst [vmem:[#allocation3 + $0x5b0] sm:$0x33] %v4392
      %4444 = vst [vmem:[#allocation3 + $0x5b8] sm:$0x33] %v4394
      %4445 = vst [vmem:[#allocation3 + $0x5c0] sm:$0x33] %v4396
      %4446 = vst [vmem:[#allocation3 + $0x5c8] sm:$0x33] %v4398
      %4447 = vst [vmem:[#allocation3 + $0x5d0] sm:$0x33] %v4400
      %4448 = vst [vmem:[#allocation3 + $0x5d8] sm:$0x33] %v4402
      %4449 = vst [vmem:[#allocation3 + $0x5e0] sm:$0x33] %v4404
      %4450 = vst [vmem:[#allocation3 + $0x5e8] sm:$0x33] %v4406
      %4451 = vst [vmem:[#allocation3 + $0x5f0] sm:$0x33] %v4408
      %4452 = vst [vmem:[#allocation3 + $0x5f8] sm:$0x33] %v4410
      %4453 = vst [vmem:[#allocation3 + $0x600] sm:$0x33] %v4412
      %4454 = vst [vmem:[#allocation3 + $0x608] sm:$0x33] %v4414
      %4455 = vst [vmem:[#allocation3 + $0x610] sm:$0x33] %v4416
      %4456 = vst [vmem:[#allocation3 + $0x618] sm:$0x33] %v4418
      %4457 = vst [vmem:[#allocation3 + $0x620] sm:$0x33] %v4420
      %4458 = vst [vmem:[#allocation3 + $0x628] sm:$0x33] %v4422
      %v4459 = vld [vmem:[#allocation2 + $0xa] sm:$0xff]
      %v4460 = vld [vmem:[#allocation2 + $0x12] sm:$0xff]
      %v4461 = vld [vmem:[#allocation2 + $0x1a] sm:$0xff]
      %v4462 = vld [vmem:[#allocation2 + $0x22] sm:$0xff]
      %v4463 = vld [vmem:[#allocation2 + $0x2a] sm:$0xff]
      %v4464 = vld [vmem:[#allocation2 + $0x32] sm:$0xff]
      %v4465 = vld [vmem:[#allocation2 + $0x3a] sm:$0xff]
      %v4466 = vld [vmem:[#allocation2 + $0x42] sm:$0xff]
      %v4467 = vld [vmem:[#allocation2 + $0x4a] sm:$0xff]
      %v4468 = vld [vmem:[#allocation2 + $0x52] sm:$0x3]
      %s4470 = scalar_lea.vmem [#allocation1], 1
      %4471 = vst [vmem:[%s4470] ss:$2 sm:$0xff] %v4459
      %s4473 = scalar_lea.vmem [#allocation1], 17
      %4474 = vst [vmem:[%s4473] ss:$2 sm:$0xff] %v4460
      %s4476 = scalar_lea.vmem [#allocation1], 33
      %4477 = vst [vmem:[%s4476] ss:$2 sm:$0xff] %v4461
      %s4479 = scalar_lea.vmem [#allocation1], 49
      %4480 = vst [vmem:[%s4479] ss:$2 sm:$0xff] %v4462
      %v4481 = vld.sshfl [vmem:[#allocation1] sm:$0xff pattern:$0x75643120]
      %v4483 = vld.sshfl [vmem:[#allocation1 + $0x8] sm:$0xff pattern:$0x75643120]
      %v4485 = vld.sshfl [vmem:[#allocation1 + $0x10] sm:$0xff pattern:$0x75643120]
      %v4487 = vld.sshfl [vmem:[#allocation1 + $0x18] sm:$0xff pattern:$0x75643120]
      %v4489 = vld.sshfl [vmem:[#allocation1 + $0x20] sm:$0xff pattern:$0x75643120]
      %v4491 = vld.sshfl [vmem:[#allocation1 + $0x28] sm:$0xff pattern:$0x75643120]
      %v4493 = vld.sshfl [vmem:[#allocation1 + $0x30] sm:$0xff pattern:$0x75643120]
      %v4495 = vld.sshfl [vmem:[#allocation1 + $0x38] sm:$0xff pattern:$0x75643120]
      %4498 = vst [vmem:[%s4470] ss:$2 sm:$0xff] %v4463
      %4500 = vst [vmem:[%s4473] ss:$2 sm:$0xff] %v4464
      %4502 = vst [vmem:[%s4476] ss:$2 sm:$0xff] %v4465
      %4504 = vst [vmem:[%s4479] ss:$2 sm:$0xff] %v4466
      %v4505 = vld.sshfl [vmem:[#allocation1] sm:$0xff pattern:$0x75643120]
      %v4507 = vld.sshfl [vmem:[#allocation1 + $0x8] sm:$0xff pattern:$0x75643120]
      %v4509 = vld.sshfl [vmem:[#allocation1 + $0x10] sm:$0xff pattern:$0x75643120]
      %v4511 = vld.sshfl [vmem:[#allocation1 + $0x18] sm:$0xff pattern:$0x75643120]
      %v4513 = vld.sshfl [vmem:[#allocation1 + $0x20] sm:$0xff pattern:$0x75643120]
      %v4515 = vld.sshfl [vmem:[#allocation1 + $0x28] sm:$0xff pattern:$0x75643120]
      %v4517 = vld.sshfl [vmem:[#allocation1 + $0x30] sm:$0xff pattern:$0x75643120]
      %v4519 = vld.sshfl [vmem:[#allocation1 + $0x38] sm:$0xff pattern:$0x75643120]
      %4522 = vst [vmem:[%s4470] ss:$2 sm:$0xff] %v4467
      %4524 = vst [vmem:[%s4473] ss:$2 sm:$0xff] %v4468
      %v4525 = vld.sshfl [vmem:[#allocation1] sm:$0xff pattern:$0x75643120]
      %v4527 = vld.sshfl [vmem:[#allocation1 + $0x8] sm:$0xff pattern:$0x75643120]
      %v4529 = vld.sshfl [vmem:[#allocation1 + $0x10] sm:$0xff pattern:$0x75643120]
      %4531 = vrot.lane.b32.xlu0 %v4481, 102
      %v4532 = vpop.permute.xlu0 %4531
      %4533 = vrot.lane.b32.xlu0 %v4483, 102
      %v4534 = vpop.permute.xlu0 %4533
      %4535 = vrot.lane.b32.xlu0 %v4485, 102
      %v4536 = vpop.permute.xlu0 %4535
      %4537 = vrot.lane.b32.xlu0 %v4487, 102
      %v4538 = vpop.permute.xlu0 %4537
      %4539 = vrot.lane.b32.xlu0 %v4489, 102
      %v4540 = vpop.permute.xlu0 %4539
      %4541 = vrot.lane.b32.xlu0 %v4491, 102
      %v4542 = vpop.permute.xlu0 %4541
      %4543 = vrot.lane.b32.xlu0 %v4493, 102
      %v4544 = vpop.permute.xlu0 %4543
      %4545 = vrot.lane.b32.xlu0 %v4495, 102
      %v4546 = vpop.permute.xlu0 %4545
      %4547 = vrot.lane.b32.xlu0 %v4505, 102
      %v4548 = vpop.permute.xlu0 %4547
      %4549 = vrot.lane.b32.xlu0 %v4507, 102
      %v4550 = vpop.permute.xlu0 %4549
      %4551 = vrot.lane.b32.xlu0 %v4509, 102
      %v4552 = vpop.permute.xlu0 %4551
      %4553 = vrot.lane.b32.xlu0 %v4511, 102
      %v4554 = vpop.permute.xlu0 %4553
      %4555 = vrot.lane.b32.xlu0 %v4513, 102
      %v4556 = vpop.permute.xlu0 %4555
      %4557 = vrot.lane.b32.xlu0 %v4515, 102
      %v4558 = vpop.permute.xlu0 %4557
      %4559 = vrot.lane.b32.xlu0 %v4517, 102
      %v4560 = vpop.permute.xlu0 %4559
      %4561 = vrot.lane.b32.xlu0 %v4519, 102
      %v4562 = vpop.permute.xlu0 %4561
      %4563 = vrot.lane.b32.xlu0 %v4525, 102
      %v4564 = vpop.permute.xlu0 %4563
      %4565 = vrot.lane.b32.xlu0 %v4527, 102
      %v4566 = vpop.permute.xlu0 %4565
      %4567 = vrot.lane.b32.xlu0 %v4529, 102
      %v4568 = vpop.permute.xlu0 %4567
      %v4569 = vrot.slane %v4532, 4
      %v4570 = vrot.slane %v4534, 4
      %v4571 = vrot.slane %v4536, 4
      %v4572 = vrot.slane %v4538, 4
      %v4573 = vrot.slane %v4540, 4
      %v4574 = vrot.slane %v4542, 4
      %v4575 = vrot.slane %v4544, 4
      %v4576 = vrot.slane %v4546, 4
      %v4577 = vrot.slane %v4548, 4
      %v4578 = vrot.slane %v4550, 4
      %v4579 = vrot.slane %v4552, 4
      %v4580 = vrot.slane %v4554, 4
      %v4581 = vrot.slane %v4556, 4
      %v4582 = vrot.slane %v4558, 4
      %v4583 = vrot.slane %v4560, 4
      %v4584 = vrot.slane %v4562, 4
      %v4585 = vrot.slane %v4564, 4
      %v4586 = vrot.slane %v4566, 4
      %v4587 = vrot.slane %v4568, 4
      %v4588 = vsel %vm557, %v4569, %v4570
      %vm4589 = vcmask 834560
      %v4590 = vsel %vm4589, %v4532, %v4588
      %v4591 = vsel %vm557, %v4570, %v4571
      %v4592 = vsel %vm4589, %v4534, %v4591
      %v4593 = vsel %vm557, %v4571, %v4572
      %v4594 = vsel %vm4589, %v4536, %v4593
      %v4595 = vsel %vm557, %v4572, %v4573
      %v4596 = vsel %vm4589, %v4538, %v4595
      %v4597 = vsel %vm557, %v4573, %v4574
      %v4598 = vsel %vm4589, %v4540, %v4597
      %v4599 = vsel %vm557, %v4574, %v4575
      %v4600 = vsel %vm4589, %v4542, %v4599
      %v4601 = vsel %vm557, %v4575, %v4576
      %v4602 = vsel %vm4589, %v4544, %v4601
      %v4603 = vsel %vm557, %v4576, %v4577
      %v4604 = vsel %vm4589, %v4546, %v4603
      %v4605 = vsel %vm557, %v4577, %v4578
      %v4606 = vsel %vm4589, %v4548, %v4605
      %v4607 = vsel %vm557, %v4578, %v4579
      %v4608 = vsel %vm4589, %v4550, %v4607
      %v4609 = vsel %vm557, %v4579, %v4580
      %v4610 = vsel %vm4589, %v4552, %v4609
      %v4611 = vsel %vm557, %v4580, %v4581
      %v4612 = vsel %vm4589, %v4554, %v4611
      %v4613 = vsel %vm557, %v4581, %v4582
      %v4614 = vsel %vm4589, %v4556, %v4613
      %v4615 = vsel %vm557, %v4582, %v4583
      %v4616 = vsel %vm4589, %v4558, %v4615
      %v4617 = vsel %vm557, %v4583, %v4584
      %v4618 = vsel %vm4589, %v4560, %v4617
      %v4619 = vsel %vm557, %v4584, %v4585
      %v4620 = vsel %vm4589, %v4562, %v4619
      %v4621 = vsel %vm557, %v4585, %v4586
      %v4622 = vsel %vm4589, %v4564, %v4621
      %v4623 = vsel %vm557, %v4586, %v4587
      %v4624 = vsel %vm4589, %v4566, %v4623
      %4643 = vst [vmem:[#allocation3 + $0x5a0] sm:$0xcc] %v4590
      %4644 = vst [vmem:[#allocation3 + $0x5a8] sm:$0xcc] %v4592
      %4645 = vst [vmem:[#allocation3 + $0x5b0] sm:$0xcc] %v4594
      %4646 = vst [vmem:[#allocation3 + $0x5b8] sm:$0xcc] %v4596
      %4647 = vst [vmem:[#allocation3 + $0x5c0] sm:$0xcc] %v4598
      %4648 = vst [vmem:[#allocation3 + $0x5c8] sm:$0xcc] %v4600
      %4649 = vst [vmem:[#allocation3 + $0x5d0] sm:$0xcc] %v4602
      %4650 = vst [vmem:[#allocation3 + $0x5d8] sm:$0xcc] %v4604
      %4651 = vst [vmem:[#allocation3 + $0x5e0] sm:$0xcc] %v4606
      %4652 = vst [vmem:[#allocation3 + $0x5e8] sm:$0xcc] %v4608
      %4653 = vst [vmem:[#allocation3 + $0x5f0] sm:$0xcc] %v4610
      %4654 = vst [vmem:[#allocation3 + $0x5f8] sm:$0xcc] %v4612
      %4655 = vst [vmem:[#allocation3 + $0x600] sm:$0xcc] %v4614
      %4656 = vst [vmem:[#allocation3 + $0x608] sm:$0xcc] %v4616
      %4657 = vst [vmem:[#allocation3 + $0x610] sm:$0xcc] %v4618
      %4658 = vst [vmem:[#allocation3 + $0x618] sm:$0xcc] %v4620
      %4659 = vst [vmem:[#allocation3 + $0x620] sm:$0xcc] %v4622
      %4660 = vst [vmem:[#allocation3 + $0x628] sm:$0xcc] %v4624
      %v4661 = vld [vmem:[#allocation2 + $0xa] sm:$0xff]
      %v4662 = vld [vmem:[#allocation2 + $0x12] sm:$0xff]
      %v4663 = vld [vmem:[#allocation2 + $0x1a] sm:$0xff]
      %v4664 = vld [vmem:[#allocation2 + $0x22] sm:$0xff]
      %v4665 = vld [vmem:[#allocation2 + $0x2a] sm:$0xff]
      %v4666 = vld [vmem:[#allocation2 + $0x32] sm:$0xff]
      %v4667 = vld [vmem:[#allocation2 + $0x3a] sm:$0xff]
      %v4668 = vld [vmem:[#allocation2 + $0x42] sm:$0xff]
      %v4669 = vld [vmem:[#allocation2 + $0x4a] sm:$0xff]
      %v4670 = vld [vmem:[#allocation2 + $0x52] sm:$0x3]
      %4672 = vst [vmem:[#allocation1] ss:$2 sm:$0xff] %v4661
      %s4674 = scalar_lea.vmem [#allocation1], 16
      %4675 = vst [vmem:[%s4674] ss:$2 sm:$0xff] %v4662
      %s4677 = scalar_lea.vmem [#allocation1], 32
      %4678 = vst [vmem:[%s4677] ss:$2 sm:$0xff] %v4663
      %s4680 = scalar_lea.vmem [#allocation1], 48
      %4681 = vst [vmem:[%s4680] ss:$2 sm:$0xff] %v4664
      %v4682 = vld.sshfl [vmem:[#allocation1] sm:$0xff pattern:$0x75643120]
      %v4684 = vld.sshfl [vmem:[#allocation1 + $0x8] sm:$0xff pattern:$0x75643120]
      %v4686 = vld.sshfl [vmem:[#allocation1 + $0x10] sm:$0xff pattern:$0x75643120]
      %v4688 = vld.sshfl [vmem:[#allocation1 + $0x18] sm:$0xff pattern:$0x75643120]
      %v4690 = vld.sshfl [vmem:[#allocation1 + $0x20] sm:$0xff pattern:$0x75643120]
      %v4692 = vld.sshfl [vmem:[#allocation1 + $0x28] sm:$0xff pattern:$0x75643120]
      %v4694 = vld.sshfl [vmem:[#allocation1 + $0x30] sm:$0xff pattern:$0x75643120]
      %v4696 = vld.sshfl [vmem:[#allocation1 + $0x38] sm:$0xff pattern:$0x75643120]
      %4699 = vst [vmem:[#allocation1] ss:$2 sm:$0xff] %v4665
      %4701 = vst [vmem:[%s4674] ss:$2 sm:$0xff] %v4666
      %4703 = vst [vmem:[%s4677] ss:$2 sm:$0xff] %v4667
      %4705 = vst [vmem:[%s4680] ss:$2 sm:$0xff] %v4668
      %v4706 = vld.sshfl [vmem:[#allocation1] sm:$0xff pattern:$0x75643120]
      %v4708 = vld.sshfl [vmem:[#allocation1 + $0x8] sm:$0xff pattern:$0x75643120]
      %v4710 = vld.sshfl [vmem:[#allocation1 + $0x10] sm:$0xff pattern:$0x75643120]
      %v4712 = vld.sshfl [vmem:[#allocation1 + $0x18] sm:$0xff pattern:$0x75643120]
      %v4714 = vld.sshfl [vmem:[#allocation1 + $0x20] sm:$0xff pattern:$0x75643120]
      %v4716 = vld.sshfl [vmem:[#allocation1 + $0x28] sm:$0xff pattern:$0x75643120]
      %v4718 = vld.sshfl [vmem:[#allocation1 + $0x30] sm:$0xff pattern:$0x75643120]
      %v4720 = vld.sshfl [vmem:[#allocation1 + $0x38] sm:$0xff pattern:$0x75643120]
      %4723 = vst [vmem:[#allocation1] ss:$2 sm:$0xff] %v4669
      %4725 = vst [vmem:[%s4674] ss:$2 sm:$0xff] %v4670
      %v4726 = vld.sshfl [vmem:[#allocation1] sm:$0xff pattern:$0x75643120]
      %v4728 = vld.sshfl [vmem:[#allocation1 + $0x8] sm:$0xff pattern:$0x75643120]
      %v4730 = vld.sshfl [vmem:[#allocation1 + $0x10] sm:$0xff pattern:$0x75643120]
      %4732 = vrot.lane.b32.xlu0 %v4682, 101
      %v4733 = vpop.permute.xlu0 %4732
      %4734 = vrot.lane.b32.xlu0 %v4684, 101
      %v4735 = vpop.permute.xlu0 %4734
      %4736 = vrot.lane.b32.xlu0 %v4686, 101
      %v4737 = vpop.permute.xlu0 %4736
      %4738 = vrot.lane.b32.xlu0 %v4688, 101
      %v4739 = vpop.permute.xlu0 %4738
      %4740 = vrot.lane.b32.xlu0 %v4690, 101
      %v4741 = vpop.permute.xlu0 %4740
      %4742 = vrot.lane.b32.xlu0 %v4692, 101
      %v4743 = vpop.permute.xlu0 %4742
      %4744 = vrot.lane.b32.xlu0 %v4694, 101
      %v4745 = vpop.permute.xlu0 %4744
      %4746 = vrot.lane.b32.xlu0 %v4696, 101
      %v4747 = vpop.permute.xlu0 %4746
      %4748 = vrot.lane.b32.xlu0 %v4706, 101
      %v4749 = vpop.permute.xlu0 %4748
      %4750 = vrot.lane.b32.xlu0 %v4708, 101
      %v4751 = vpop.permute.xlu0 %4750
      %4752 = vrot.lane.b32.xlu0 %v4710, 101
      %v4753 = vpop.permute.xlu0 %4752
      %4754 = vrot.lane.b32.xlu0 %v4712, 101
      %v4755 = vpop.permute.xlu0 %4754
      %4756 = vrot.lane.b32.xlu0 %v4714, 101
      %v4757 = vpop.permute.xlu0 %4756
      %4758 = vrot.lane.b32.xlu0 %v4716, 101
      %v4759 = vpop.permute.xlu0 %4758
      %4760 = vrot.lane.b32.xlu0 %v4718, 101
      %v4761 = vpop.permute.xlu0 %4760
      %4762 = vrot.lane.b32.xlu0 %v4720, 101
      %v4763 = vpop.permute.xlu0 %4762
      %4764 = vrot.lane.b32.xlu0 %v4726, 101
      %v4765 = vpop.permute.xlu0 %4764
      %4766 = vrot.lane.b32.xlu0 %v4728, 101
      %v4767 = vpop.permute.xlu0 %4766
      %4768 = vrot.lane.b32.xlu0 %v4730, 101
      %v4769 = vpop.permute.xlu0 %4768
      %v4770 = vrot.slane %v4733, 4
      %v4771 = vrot.slane %v4735, 4
      %v4772 = vrot.slane %v4737, 4
      %v4773 = vrot.slane %v4739, 4
      %v4774 = vrot.slane %v4741, 4
      %v4775 = vrot.slane %v4743, 4
      %v4776 = vrot.slane %v4745, 4
      %v4777 = vrot.slane %v4747, 4
      %v4778 = vrot.slane %v4749, 4
      %v4779 = vrot.slane %v4751, 4
      %v4780 = vrot.slane %v4753, 4
      %v4781 = vrot.slane %v4755, 4
      %v4782 = vrot.slane %v4757, 4
      %v4783 = vrot.slane %v4759, 4
      %v4784 = vrot.slane %v4761, 4
      %v4785 = vrot.slane %v4763, 4
      %v4786 = vrot.slane %v4765, 4
      %v4787 = vrot.slane %v4767, 4
      %v4788 = vrot.slane %v4769, 4
      %v4789 = vsel %vm557, %v4770, %v4771
      %vm4790 = vcmask 826368
      %v4791 = vsel %vm4790, %v4733, %v4789
      %v4792 = vsel %vm557, %v4771, %v4772
      %v4793 = vsel %vm4790, %v4735, %v4792
      %v4794 = vsel %vm557, %v4772, %v4773
      %v4795 = vsel %vm4790, %v4737, %v4794
      %v4796 = vsel %vm557, %v4773, %v4774
      %v4797 = vsel %vm4790, %v4739, %v4796
      %v4798 = vsel %vm557, %v4774, %v4775
      %v4799 = vsel %vm4790, %v4741, %v4798
      %v4800 = vsel %vm557, %v4775, %v4776
      %v4801 = vsel %vm4790, %v4743, %v4800
      %v4802 = vsel %vm557, %v4776, %v4777
      %v4803 = vsel %vm4790, %v4745, %v4802
      %v4804 = vsel %vm557, %v4777, %v4778
      %v4805 = vsel %vm4790, %v4747, %v4804
      %v4806 = vsel %vm557, %v4778, %v4779
      %v4807 = vsel %vm4790, %v4749, %v4806
      %v4808 = vsel %vm557, %v4779, %v4780
      %v4809 = vsel %vm4790, %v4751, %v4808
      %v4810 = vsel %vm557, %v4780, %v4781
      %v4811 = vsel %vm4790, %v4753, %v4810
      %v4812 = vsel %vm557, %v4781, %v4782
      %v4813 = vsel %vm4790, %v4755, %v4812
      %v4814 = vsel %vm557, %v4782, %v4783
      %v4815 = vsel %vm4790, %v4757, %v4814
      %v4816 = vsel %vm557, %v4783, %v4784
      %v4817 = vsel %vm4790, %v4759, %v4816
      %v4818 = vsel %vm557, %v4784, %v4785
      %v4819 = vsel %vm4790, %v4761, %v4818
      %v4820 = vsel %vm557, %v4785, %v4786
      %v4821 = vsel %vm4790, %v4763, %v4820
      %v4822 = vsel %vm557, %v4786, %v4787
      %v4823 = vsel %vm4790, %v4765, %v4822
      %v4824 = vsel %vm557, %v4787, %v4788
      %v4825 = vsel %vm4790, %v4767, %v4824
      %4844 = vst [vmem:[#allocation3 + $0x630] sm:$0x33] %v4791
      %4845 = vst [vmem:[#allocation3 + $0x638] sm:$0x33] %v4793
      %4846 = vst [vmem:[#allocation3 + $0x640] sm:$0x33] %v4795
      %4847 = vst [vmem:[#allocation3 + $0x648] sm:$0x33] %v4797
      %4848 = vst [vmem:[#allocation3 + $0x650] sm:$0x33] %v4799
      %4849 = vst [vmem:[#allocation3 + $0x658] sm:$0x33] %v4801
      %4850 = vst [vmem:[#allocation3 + $0x660] sm:$0x33] %v4803
      %4851 = vst [vmem:[#allocation3 + $0x668] sm:$0x33] %v4805
      %4852 = vst [vmem:[#allocation3 + $0x670] sm:$0x33] %v4807
      %4853 = vst [vmem:[#allocation3 + $0x678] sm:$0x33] %v4809
      %4854 = vst [vmem:[#allocation3 + $0x680] sm:$0x33] %v4811
      %4855 = vst [vmem:[#allocation3 + $0x688] sm:$0x33] %v4813
      %4856 = vst [vmem:[#allocation3 + $0x690] sm:$0x33] %v4815
      %4857 = vst [vmem:[#allocation3 + $0x698] sm:$0x33] %v4817
      %4858 = vst [vmem:[#allocation3 + $0x6a0] sm:$0x33] %v4819
      %4859 = vst [vmem:[#allocation3 + $0x6a8] sm:$0x33] %v4821
      %4860 = vst [vmem:[#allocation3 + $0x6b0] sm:$0x33] %v4823
      %4861 = vst [vmem:[#allocation3 + $0x6b8] sm:$0x33] %v4825
      %v4862 = vld [vmem:[#allocation2 + $0xa] sm:$0xff]
      %v4863 = vld [vmem:[#allocation2 + $0x12] sm:$0xff]
      %v4864 = vld [vmem:[#allocation2 + $0x1a] sm:$0xff]
      %v4865 = vld [vmem:[#allocation2 + $0x22] sm:$0xff]
      %v4866 = vld [vmem:[#allocation2 + $0x2a] sm:$0xff]
      %v4867 = vld [vmem:[#allocation2 + $0x32] sm:$0xff]
      %v4868 = vld [vmem:[#allocation2 + $0x3a] sm:$0xff]
      %v4869 = vld [vmem:[#allocation2 + $0x42] sm:$0xff]
      %v4870 = vld [vmem:[#allocation2 + $0x4a] sm:$0xff]
      %v4871 = vld [vmem:[#allocation2 + $0x52] sm:$0x3]
      %s4873 = scalar_lea.vmem [#allocation1], 1
      %4874 = vst [vmem:[%s4873] ss:$2 sm:$0xff] %v4862
      %s4876 = scalar_lea.vmem [#allocation1], 17
      %4877 = vst [vmem:[%s4876] ss:$2 sm:$0xff] %v4863
      %s4879 = scalar_lea.vmem [#allocation1], 33
      %4880 = vst [vmem:[%s4879] ss:$2 sm:$0xff] %v4864
      %s4882 = scalar_lea.vmem [#allocation1], 49
      %4883 = vst [vmem:[%s4882] ss:$2 sm:$0xff] %v4865
      %v4884 = vld.sshfl [vmem:[#allocation1] sm:$0xff pattern:$0x75643120]
      %v4886 = vld.sshfl [vmem:[#allocation1 + $0x8] sm:$0xff pattern:$0x75643120]
      %v4888 = vld.sshfl [vmem:[#allocation1 + $0x10] sm:$0xff pattern:$0x75643120]
      %v4890 = vld.sshfl [vmem:[#allocation1 + $0x18] sm:$0xff pattern:$0x75643120]
      %v4892 = vld.sshfl [vmem:[#allocation1 + $0x20] sm:$0xff pattern:$0x75643120]
      %v4894 = vld.sshfl [vmem:[#allocation1 + $0x28] sm:$0xff pattern:$0x75643120]
      %v4896 = vld.sshfl [vmem:[#allocation1 + $0x30] sm:$0xff pattern:$0x75643120]
      %v4898 = vld.sshfl [vmem:[#allocation1 + $0x38] sm:$0xff pattern:$0x75643120]
      %4901 = vst [vmem:[%s4873] ss:$2 sm:$0xff] %v4866
      %4903 = vst [vmem:[%s4876] ss:$2 sm:$0xff] %v4867
      %4905 = vst [vmem:[%s4879] ss:$2 sm:$0xff] %v4868
      %4907 = vst [vmem:[%s4882] ss:$2 sm:$0xff] %v4869
      %v4908 = vld.sshfl [vmem:[#allocation1] sm:$0xff pattern:$0x75643120]
      %v4910 = vld.sshfl [vmem:[#allocation1 + $0x8] sm:$0xff pattern:$0x75643120]
      %v4912 = vld.sshfl [vmem:[#allocation1 + $0x10] sm:$0xff pattern:$0x75643120]
      %v4914 = vld.sshfl [vmem:[#allocation1 + $0x18] sm:$0xff pattern:$0x75643120]
      %v4916 = vld.sshfl [vmem:[#allocation1 + $0x20] sm:$0xff pattern:$0x75643120]
      %v4918 = vld.sshfl [vmem:[#allocation1 + $0x28] sm:$0xff pattern:$0x75643120]
      %v4920 = vld.sshfl [vmem:[#allocation1 + $0x30] sm:$0xff pattern:$0x75643120]
      %v4922 = vld.sshfl [vmem:[#allocation1 + $0x38] sm:$0xff pattern:$0x75643120]
      %4925 = vst [vmem:[%s4873] ss:$2 sm:$0xff] %v4870
      %4927 = vst [vmem:[%s4876] ss:$2 sm:$0xff] %v4871
      %v4928 = vld.sshfl [vmem:[#allocation1] sm:$0xff pattern:$0x75643120]
      %v4930 = vld.sshfl [vmem:[#allocation1 + $0x8] sm:$0xff pattern:$0x75643120]
      %v4932 = vld.sshfl [vmem:[#allocation1 + $0x10] sm:$0xff pattern:$0x75643120]
      %4934 = vrot.lane.b32.xlu0 %v4884, 100
      %v4935 = vpop.permute.xlu0 %4934
      %4936 = vrot.lane.b32.xlu0 %v4886, 100
      %v4937 = vpop.permute.xlu0 %4936
      %4938 = vrot.lane.b32.xlu0 %v4888, 100
      %v4939 = vpop.permute.xlu0 %4938
      %4940 = vrot.lane.b32.xlu0 %v4890, 100
      %v4941 = vpop.permute.xlu0 %4940
      %4942 = vrot.lane.b32.xlu0 %v4892, 100
      %v4943 = vpop.permute.xlu0 %4942
      %4944 = vrot.lane.b32.xlu0 %v4894, 100
      %v4945 = vpop.permute.xlu0 %4944
      %4946 = vrot.lane.b32.xlu0 %v4896, 100
      %v4947 = vpop.permute.xlu0 %4946
      %4948 = vrot.lane.b32.xlu0 %v4898, 100
      %v4949 = vpop.permute.xlu0 %4948
      %4950 = vrot.lane.b32.xlu0 %v4908, 100
      %v4951 = vpop.permute.xlu0 %4950
      %4952 = vrot.lane.b32.xlu0 %v4910, 100
      %v4953 = vpop.permute.xlu0 %4952
      %4954 = vrot.lane.b32.xlu0 %v4912, 100
      %v4955 = vpop.permute.xlu0 %4954
      %4956 = vrot.lane.b32.xlu0 %v4914, 100
      %v4957 = vpop.permute.xlu0 %4956
      %4958 = vrot.lane.b32.xlu0 %v4916, 100
      %v4959 = vpop.permute.xlu0 %4958
      %4960 = vrot.lane.b32.xlu0 %v4918, 100
      %v4961 = vpop.permute.xlu0 %4960
      %4962 = vrot.lane.b32.xlu0 %v4920, 100
      %v4963 = vpop.permute.xlu0 %4962
      %4964 = vrot.lane.b32.xlu0 %v4922, 100
      %v4965 = vpop.permute.xlu0 %4964
      %4966 = vrot.lane.b32.xlu0 %v4928, 100
      %v4967 = vpop.permute.xlu0 %4966
      %4968 = vrot.lane.b32.xlu0 %v4930, 100
      %v4969 = vpop.permute.xlu0 %4968
      %4970 = vrot.lane.b32.xlu0 %v4932, 100
      %v4971 = vpop.permute.xlu0 %4970
      %v4972 = vrot.slane %v4935, 4
      %v4973 = vrot.slane %v4937, 4
      %v4974 = vrot.slane %v4939, 4
      %v4975 = vrot.slane %v4941, 4
      %v4976 = vrot.slane %v4943, 4
      %v4977 = vrot.slane %v4945, 4
      %v4978 = vrot.slane %v4947, 4
      %v4979 = vrot.slane %v4949, 4
      %v4980 = vrot.slane %v4951, 4
      %v4981 = vrot.slane %v4953, 4
      %v4982 = vrot.slane %v4955, 4
      %v4983 = vrot.slane %v4957, 4
      %v4984 = vrot.slane %v4959, 4
      %v4985 = vrot.slane %v4961, 4
      %v4986 = vrot.slane %v4963, 4
      %v4987 = vrot.slane %v4965, 4
      %v4988 = vrot.slane %v4967, 4
      %v4989 = vrot.slane %v4969, 4
      %v4990 = vrot.slane %v4971, 4
      %v4991 = vsel %vm557, %v4972, %v4973
      %vm4992 = vcmask 818176
      %v4993 = vsel %vm4992, %v4935, %v4991
      %v4994 = vsel %vm557, %v4973, %v4974
      %v4995 = vsel %vm4992, %v4937, %v4994
      %v4996 = vsel %vm557, %v4974, %v4975
      %v4997 = vsel %vm4992, %v4939, %v4996
      %v4998 = vsel %vm557, %v4975, %v4976
      %v4999 = vsel %vm4992, %v4941, %v4998
      %v5000 = vsel %vm557, %v4976, %v4977
      %v5001 = vsel %vm4992, %v4943, %v5000
      %v5002 = vsel %vm557, %v4977, %v4978
      %v5003 = vsel %vm4992, %v4945, %v5002
      %v5004 = vsel %vm557, %v4978, %v4979
      %v5005 = vsel %vm4992, %v4947, %v5004
      %v5006 = vsel %vm557, %v4979, %v4980
      %v5007 = vsel %vm4992, %v4949, %v5006
      %v5008 = vsel %vm557, %v4980, %v4981
      %v5009 = vsel %vm4992, %v4951, %v5008
      %v5010 = vsel %vm557, %v4981, %v4982
      %v5011 = vsel %vm4992, %v4953, %v5010
      %v5012 = vsel %vm557, %v4982, %v4983
      %v5013 = vsel %vm4992, %v4955, %v5012
      %v5014 = vsel %vm557, %v4983, %v4984
      %v5015 = vsel %vm4992, %v4957, %v5014
      %v5016 = vsel %vm557, %v4984, %v4985
      %v5017 = vsel %vm4992, %v4959, %v5016
      %v5018 = vsel %vm557, %v4985, %v4986
      %v5019 = vsel %vm4992, %v4961, %v5018
      %v5020 = vsel %vm557, %v4986, %v4987
      %v5021 = vsel %vm4992, %v4963, %v5020
      %v5022 = vsel %vm557, %v4987, %v4988
      %v5023 = vsel %vm4992, %v4965, %v5022
      %v5024 = vsel %vm557, %v4988, %v4989
      %v5025 = vsel %vm4992, %v4967, %v5024
      %v5026 = vsel %vm557, %v4989, %v4990
      %v5027 = vsel %vm4992, %v4969, %v5026
      %5046 = vst [vmem:[#allocation3 + $0x630] sm:$0xcc] %v4993
      %5047 = vst [vmem:[#allocation3 + $0x638] sm:$0xcc] %v4995
      %5048 = vst [vmem:[#allocation3 + $0x640] sm:$0xcc] %v4997
      %5049 = vst [vmem:[#allocation3 + $0x648] sm:$0xcc] %v4999
      %5050 = vst [vmem:[#allocation3 + $0x650] sm:$0xcc] %v5001
      %5051 = vst [vmem:[#allocation3 + $0x658] sm:$0xcc] %v5003
      %5052 = vst [vmem:[#allocation3 + $0x660] sm:$0xcc] %v5005
      %5053 = vst [vmem:[#allocation3 + $0x668] sm:$0xcc] %v5007
      %5054 = vst [vmem:[#allocation3 + $0x670] sm:$0xcc] %v5009
      %5055 = vst [vmem:[#allocation3 + $0x678] sm:$0xcc] %v5011
      %5056 = vst [vmem:[#allocation3 + $0x680] sm:$0xcc] %v5013
      %5057 = vst [vmem:[#allocation3 + $0x688] sm:$0xcc] %v5015
      %5058 = vst [vmem:[#allocation3 + $0x690] sm:$0xcc] %v5017
      %5059 = vst [vmem:[#allocation3 + $0x698] sm:$0xcc] %v5019
      %5060 = vst [vmem:[#allocation3 + $0x6a0] sm:$0xcc] %v5021
      %5061 = vst [vmem:[#allocation3 + $0x6a8] sm:$0xcc] %v5023
      %5062 = vst [vmem:[#allocation3 + $0x6b0] sm:$0xcc] %v5025
      %5063 = vst [vmem:[#allocation3 + $0x6b8] sm:$0xcc] %v5027
      %v5064 = vld [vmem:[#allocation2 + $0xa] sm:$0xff]
      %v5065 = vld [vmem:[#allocation2 + $0x12] sm:$0xff]
      %v5066 = vld [vmem:[#allocation2 + $0x1a] sm:$0xff]
      %v5067 = vld [vmem:[#allocation2 + $0x22] sm:$0xff]
      %v5068 = vld [vmem:[#allocation2 + $0x2a] sm:$0xff]
      %v5069 = vld [vmem:[#allocation2 + $0x32] sm:$0xff]
      %v5070 = vld [vmem:[#allocation2 + $0x3a] sm:$0xff]
      %v5071 = vld [vmem:[#allocation2 + $0x42] sm:$0xff]
      %v5072 = vld [vmem:[#allocation2 + $0x4a] sm:$0xff]
      %v5073 = vld [vmem:[#allocation2 + $0x52] sm:$0x3]
      %5075 = vst [vmem:[#allocation1] ss:$2 sm:$0xff] %v5064
      %s5077 = scalar_lea.vmem [#allocation1], 16
      %5078 = vst [vmem:[%s5077] ss:$2 sm:$0xff] %v5065
      %s5080 = scalar_lea.vmem [#allocation1], 32
      %5081 = vst [vmem:[%s5080] ss:$2 sm:$0xff] %v5066
      %s5083 = scalar_lea.vmem [#allocation1], 48
      %5084 = vst [vmem:[%s5083] ss:$2 sm:$0xff] %v5067
      %v5085 = vld.sshfl [vmem:[#allocation1] sm:$0xff pattern:$0x75643120]
      %v5087 = vld.sshfl [vmem:[#allocation1 + $0x8] sm:$0xff pattern:$0x75643120]
      %v5089 = vld.sshfl [vmem:[#allocation1 + $0x10] sm:$0xff pattern:$0x75643120]
      %v5091 = vld.sshfl [vmem:[#allocation1 + $0x18] sm:$0xff pattern:$0x75643120]
      %v5093 = vld.sshfl [vmem:[#allocation1 + $0x20] sm:$0xff pattern:$0x75643120]
      %v5095 = vld.sshfl [vmem:[#allocation1 + $0x28] sm:$0xff pattern:$0x75643120]
      %v5097 = vld.sshfl [vmem:[#allocation1 + $0x30] sm:$0xff pattern:$0x75643120]
      %v5099 = vld.sshfl [vmem:[#allocation1 + $0x38] sm:$0xff pattern:$0x75643120]
      %5102 = vst [vmem:[#allocation1] ss:$2 sm:$0xff] %v5068
      %5104 = vst [vmem:[%s5077] ss:$2 sm:$0xff] %v5069
      %5106 = vst [vmem:[%s5080] ss:$2 sm:$0xff] %v5070
      %5108 = vst [vmem:[%s5083] ss:$2 sm:$0xff] %v5071
      %v5109 = vld.sshfl [vmem:[#allocation1] sm:$0xff pattern:$0x75643120]
      %v5111 = vld.sshfl [vmem:[#allocation1 + $0x8] sm:$0xff pattern:$0x75643120]
      %v5113 = vld.sshfl [vmem:[#allocation1 + $0x10] sm:$0xff pattern:$0x75643120]
      %v5115 = vld.sshfl [vmem:[#allocation1 + $0x18] sm:$0xff pattern:$0x75643120]
      %v5117 = vld.sshfl [vmem:[#allocation1 + $0x20] sm:$0xff pattern:$0x75643120]
      %v5119 = vld.sshfl [vmem:[#allocation1 + $0x28] sm:$0xff pattern:$0x75643120]
      %v5121 = vld.sshfl [vmem:[#allocation1 + $0x30] sm:$0xff pattern:$0x75643120]
      %v5123 = vld.sshfl [vmem:[#allocation1 + $0x38] sm:$0xff pattern:$0x75643120]
      %5126 = vst [vmem:[#allocation1] ss:$2 sm:$0xff] %v5072
      %5128 = vst [vmem:[%s5077] ss:$2 sm:$0xff] %v5073
      %v5129 = vld.sshfl [vmem:[#allocation1] sm:$0xff pattern:$0x75643120]
      %v5131 = vld.sshfl [vmem:[#allocation1 + $0x8] sm:$0xff pattern:$0x75643120]
      %v5133 = vld.sshfl [vmem:[#allocation1 + $0x10] sm:$0xff pattern:$0x75643120]
      %5135 = vrot.lane.b32.xlu0 %v5085, 84
      %v5136 = vpop.permute.xlu0 %5135
      %5137 = vrot.lane.b32.xlu0 %v5087, 84
      %v5138 = vpop.permute.xlu0 %5137
      %5139 = vrot.lane.b32.xlu0 %v5089, 84
      %v5140 = vpop.permute.xlu0 %5139
      %5141 = vrot.lane.b32.xlu0 %v5091, 84
      %v5142 = vpop.permute.xlu0 %5141
      %5143 = vrot.lane.b32.xlu0 %v5093, 84
      %v5144 = vpop.permute.xlu0 %5143
      %5145 = vrot.lane.b32.xlu0 %v5095, 84
      %v5146 = vpop.permute.xlu0 %5145
      %5147 = vrot.lane.b32.xlu0 %v5097, 84
      %v5148 = vpop.permute.xlu0 %5147
      %5149 = vrot.lane.b32.xlu0 %v5099, 84
      %v5150 = vpop.permute.xlu0 %5149
      %5151 = vrot.lane.b32.xlu0 %v5109, 84
      %v5152 = vpop.permute.xlu0 %5151
      %5153 = vrot.lane.b32.xlu0 %v5111, 84
      %v5154 = vpop.permute.xlu0 %5153
      %5155 = vrot.lane.b32.xlu0 %v5113, 84
      %v5156 = vpop.permute.xlu0 %5155
      %5157 = vrot.lane.b32.xlu0 %v5115, 84
      %v5158 = vpop.permute.xlu0 %5157
      %5159 = vrot.lane.b32.xlu0 %v5117, 84
      %v5160 = vpop.permute.xlu0 %5159
      %5161 = vrot.lane.b32.xlu0 %v5119, 84
      %v5162 = vpop.permute.xlu0 %5161
      %5163 = vrot.lane.b32.xlu0 %v5121, 84
      %v5164 = vpop.permute.xlu0 %5163
      %5165 = vrot.lane.b32.xlu0 %v5123, 84
      %v5166 = vpop.permute.xlu0 %5165
      %5167 = vrot.lane.b32.xlu0 %v5129, 84
      %v5168 = vpop.permute.xlu0 %5167
      %5169 = vrot.lane.b32.xlu0 %v5131, 84
      %v5170 = vpop.permute.xlu0 %5169
      %5171 = vrot.lane.b32.xlu0 %v5133, 84
      %v5172 = vpop.permute.xlu0 %5171
      %v5173 = vrot.slane %v5136, 4
      %v5174 = vrot.slane %v5138, 4
      %v5175 = vrot.slane %v5140, 4
      %v5176 = vrot.slane %v5142, 4
      %v5177 = vrot.slane %v5144, 4
      %v5178 = vrot.slane %v5146, 4
      %v5179 = vrot.slane %v5148, 4
      %v5180 = vrot.slane %v5150, 4
      %v5181 = vrot.slane %v5152, 4
      %v5182 = vrot.slane %v5154, 4
      %v5183 = vrot.slane %v5156, 4
      %v5184 = vrot.slane %v5158, 4
      %v5185 = vrot.slane %v5160, 4
      %v5186 = vrot.slane %v5162, 4
      %v5187 = vrot.slane %v5164, 4
      %v5188 = vrot.slane %v5166, 4
      %v5189 = vrot.slane %v5168, 4
      %v5190 = vrot.slane %v5170, 4
      %v5191 = vrot.slane %v5172, 4
      %v5192 = vsel %vm557, %v5173, %v5174
      %vm5193 = vcmask 687104
      %v5194 = vsel %vm5193, %v5136, %v5192
      %v5195 = vsel %vm557, %v5174, %v5175
      %v5196 = vsel %vm5193, %v5138, %v5195
      %v5197 = vsel %vm557, %v5175, %v5176
      %v5198 = vsel %vm5193, %v5140, %v5197
      %v5199 = vsel %vm557, %v5176, %v5177
      %v5200 = vsel %vm5193, %v5142, %v5199
      %v5201 = vsel %vm557, %v5177, %v5178
      %v5202 = vsel %vm5193, %v5144, %v5201
      %v5203 = vsel %vm557, %v5178, %v5179
      %v5204 = vsel %vm5193, %v5146, %v5203
      %v5205 = vsel %vm557, %v5179, %v5180
      %v5206 = vsel %vm5193, %v5148, %v5205
      %v5207 = vsel %vm557, %v5180, %v5181
      %v5208 = vsel %vm5193, %v5150, %v5207
      %v5209 = vsel %vm557, %v5181, %v5182
      %v5210 = vsel %vm5193, %v5152, %v5209
      %v5211 = vsel %vm557, %v5182, %v5183
      %v5212 = vsel %vm5193, %v5154, %v5211
      %v5213 = vsel %vm557, %v5183, %v5184
      %v5214 = vsel %vm5193, %v5156, %v5213
      %v5215 = vsel %vm557, %v5184, %v5185
      %v5216 = vsel %vm5193, %v5158, %v5215
      %v5217 = vsel %vm557, %v5185, %v5186
      %v5218 = vsel %vm5193, %v5160, %v5217
      %v5219 = vsel %vm557, %v5186, %v5187
      %v5220 = vsel %vm5193, %v5162, %v5219
      %v5221 = vsel %vm557, %v5187, %v5188
      %v5222 = vsel %vm5193, %v5164, %v5221
      %v5223 = vsel %vm557, %v5188, %v5189
      %v5224 = vsel %vm5193, %v5166, %v5223
      %v5225 = vsel %vm557, %v5189, %v5190
      %v5226 = vsel %vm5193, %v5168, %v5225
      %v5227 = vsel %vm557, %v5190, %v5191
      %v5228 = vsel %vm5193, %v5170, %v5227
      %5247 = vst [vmem:[#allocation3 + $0x6c0] sm:$0x33] %v5194
      %5248 = vst [vmem:[#allocation3 + $0x6c8] sm:$0x33] %v5196
      %5249 = vst [vmem:[#allocation3 + $0x6d0] sm:$0x33] %v5198
      %5250 = vst [vmem:[#allocation3 + $0x6d8] sm:$0x33] %v5200
      %5251 = vst [vmem:[#allocation3 + $0x6e0] sm:$0x33] %v5202
      %5252 = vst [vmem:[#allocation3 + $0x6e8] sm:$0x33] %v5204
      %5253 = vst [vmem:[#allocation3 + $0x6f0] sm:$0x33] %v5206
      %5254 = vst [vmem:[#allocation3 + $0x6f8] sm:$0x33] %v5208
      %5255 = vst [vmem:[#allocation3 + $0x700] sm:$0x33] %v5210
      %5256 = vst [vmem:[#allocation3 + $0x708] sm:$0x33] %v5212
      %5257 = vst [vmem:[#allocation3 + $0x710] sm:$0x33] %v5214
      %5258 = vst [vmem:[#allocation3 + $0x718] sm:$0x33] %v5216
      %5259 = vst [vmem:[#allocation3 + $0x720] sm:$0x33] %v5218
      %5260 = vst [vmem:[#allocation3 + $0x728] sm:$0x33] %v5220
      %5261 = vst [vmem:[#allocation3 + $0x730] sm:$0x33] %v5222
      %5262 = vst [vmem:[#allocation3 + $0x738] sm:$0x33] %v5224
      %5263 = vst [vmem:[#allocation3 + $0x740] sm:$0x33] %v5226
      %5264 = vst [vmem:[#allocation3 + $0x748] sm:$0x33] %v5228
      %v5265 = vld [vmem:[#allocation2 + $0xa] sm:$0xff]
      %v5266 = vld [vmem:[#allocation2 + $0x12] sm:$0xff]
      %v5267 = vld [vmem:[#allocation2 + $0x1a] sm:$0xff]
      %v5268 = vld [vmem:[#allocation2 + $0x22] sm:$0xff]
      %v5269 = vld [vmem:[#allocation2 + $0x2a] sm:$0xff]
      %v5270 = vld [vmem:[#allocation2 + $0x32] sm:$0xff]
      %v5271 = vld [vmem:[#allocation2 + $0x3a] sm:$0xff]
      %v5272 = vld [vmem:[#allocation2 + $0x42] sm:$0xff]
      %v5273 = vld [vmem:[#allocation2 + $0x4a] sm:$0xff]
      %v5274 = vld [vmem:[#allocation2 + $0x52] sm:$0x3]
      %s5276 = scalar_lea.vmem [#allocation1], 1
      %5277 = vst [vmem:[%s5276] ss:$2 sm:$0xff] %v5265
      %s5279 = scalar_lea.vmem [#allocation1], 17
      %5280 = vst [vmem:[%s5279] ss:$2 sm:$0xff] %v5266
      %s5282 = scalar_lea.vmem [#allocation1], 33
      %5283 = vst [vmem:[%s5282] ss:$2 sm:$0xff] %v5267
      %s5285 = scalar_lea.vmem [#allocation1], 49
      %5286 = vst [vmem:[%s5285] ss:$2 sm:$0xff] %v5268
      %v5287 = vld.sshfl [vmem:[#allocation1] sm:$0xff pattern:$0x75643120]
      %v5289 = vld.sshfl [vmem:[#allocation1 + $0x8] sm:$0xff pattern:$0x75643120]
      %v5291 = vld.sshfl [vmem:[#allocation1 + $0x10] sm:$0xff pattern:$0x75643120]
      %v5293 = vld.sshfl [vmem:[#allocation1 + $0x18] sm:$0xff pattern:$0x75643120]
      %v5295 = vld.sshfl [vmem:[#allocation1 + $0x20] sm:$0xff pattern:$0x75643120]
      %v5297 = vld.sshfl [vmem:[#allocation1 + $0x28] sm:$0xff pattern:$0x75643120]
      %v5299 = vld.sshfl [vmem:[#allocation1 + $0x30] sm:$0xff pattern:$0x75643120]
      %v5301 = vld.sshfl [vmem:[#allocation1 + $0x38] sm:$0xff pattern:$0x75643120]
      %5304 = vst [vmem:[%s5276] ss:$2 sm:$0xff] %v5269
      %5306 = vst [vmem:[%s5279] ss:$2 sm:$0xff] %v5270
      %5308 = vst [vmem:[%s5282] ss:$2 sm:$0xff] %v5271
      %5310 = vst [vmem:[%s5285] ss:$2 sm:$0xff] %v5272
      %v5311 = vld.sshfl [vmem:[#allocation1] sm:$0xff pattern:$0x75643120]
      %v5313 = vld.sshfl [vmem:[#allocation1 + $0x8] sm:$0xff pattern:$0x75643120]
      %v5315 = vld.sshfl [vmem:[#allocation1 + $0x10] sm:$0xff pattern:$0x75643120]
      %v5317 = vld.sshfl [vmem:[#allocation1 + $0x18] sm:$0xff pattern:$0x75643120]
      %v5319 = vld.sshfl [vmem:[#allocation1 + $0x20] sm:$0xff pattern:$0x75643120]
      %v5321 = vld.sshfl [vmem:[#allocation1 + $0x28] sm:$0xff pattern:$0x75643120]
      %v5323 = vld.sshfl [vmem:[#allocation1 + $0x30] sm:$0xff pattern:$0x75643120]
      %v5325 = vld.sshfl [vmem:[#allocation1 + $0x38] sm:$0xff pattern:$0x75643120]
      %5328 = vst [vmem:[%s5276] ss:$2 sm:$0xff] %v5273
      %5330 = vst [vmem:[%s5279] ss:$2 sm:$0xff] %v5274
      %v5331 = vld.sshfl [vmem:[#allocation1] sm:$0xff pattern:$0x75643120]
      %v5333 = vld.sshfl [vmem:[#allocation1 + $0x8] sm:$0xff pattern:$0x75643120]
      %v5335 = vld.sshfl [vmem:[#allocation1 + $0x10] sm:$0xff pattern:$0x75643120]
      %5337 = vrot.lane.b32.xlu0 %v5287, 83
      %v5338 = vpop.permute.xlu0 %5337
      %5339 = vrot.lane.b32.xlu0 %v5289, 83
      %v5340 = vpop.permute.xlu0 %5339
      %5341 = vrot.lane.b32.xlu0 %v5291, 83
      %v5342 = vpop.permute.xlu0 %5341
      %5343 = vrot.lane.b32.xlu0 %v5293, 83
      %v5344 = vpop.permute.xlu0 %5343
      %5345 = vrot.lane.b32.xlu0 %v5295, 83
      %v5346 = vpop.permute.xlu0 %5345
      %5347 = vrot.lane.b32.xlu0 %v5297, 83
      %v5348 = vpop.permute.xlu0 %5347
      %5349 = vrot.lane.b32.xlu0 %v5299, 83
      %v5350 = vpop.permute.xlu0 %5349
      %5351 = vrot.lane.b32.xlu0 %v5301, 83
      %v5352 = vpop.permute.xlu0 %5351
      %5353 = vrot.lane.b32.xlu0 %v5311, 83
      %v5354 = vpop.permute.xlu0 %5353
      %5355 = vrot.lane.b32.xlu0 %v5313, 83
      %v5356 = vpop.permute.xlu0 %5355
      %5357 = vrot.lane.b32.xlu0 %v5315, 83
      %v5358 = vpop.permute.xlu0 %5357
      %5359 = vrot.lane.b32.xlu0 %v5317, 83
      %v5360 = vpop.permute.xlu0 %5359
      %5361 = vrot.lane.b32.xlu0 %v5319, 83
      %v5362 = vpop.permute.xlu0 %5361
      %5363 = vrot.lane.b32.xlu0 %v5321, 83
      %v5364 = vpop.permute.xlu0 %5363
      %5365 = vrot.lane.b32.xlu0 %v5323, 83
      %v5366 = vpop.permute.xlu0 %5365
      %5367 = vrot.lane.b32.xlu0 %v5325, 83
      %v5368 = vpop.permute.xlu0 %5367
      %5369 = vrot.lane.b32.xlu0 %v5331, 83
      %v5370 = vpop.permute.xlu0 %5369
      %5371 = vrot.lane.b32.xlu0 %v5333, 83
      %v5372 = vpop.permute.xlu0 %5371
      %5373 = vrot.lane.b32.xlu0 %v5335, 83
      %v5374 = vpop.permute.xlu0 %5373
      %v5375 = vrot.slane %v5338, 4
      %v5376 = vrot.slane %v5340, 4
      %v5377 = vrot.slane %v5342, 4
      %v5378 = vrot.slane %v5344, 4
      %v5379 = vrot.slane %v5346, 4
      %v5380 = vrot.slane %v5348, 4
      %v5381 = vrot.slane %v5350, 4
      %v5382 = vrot.slane %v5352, 4
      %v5383 = vrot.slane %v5354, 4
      %v5384 = vrot.slane %v5356, 4
      %v5385 = vrot.slane %v5358, 4
      %v5386 = vrot.slane %v5360, 4
      %v5387 = vrot.slane %v5362, 4
      %v5388 = vrot.slane %v5364, 4
      %v5389 = vrot.slane %v5366, 4
      %v5390 = vrot.slane %v5368, 4
      %v5391 = vrot.slane %v5370, 4
      %v5392 = vrot.slane %v5372, 4
      %v5393 = vrot.slane %v5374, 4
      %v5394 = vsel %vm557, %v5375, %v5376
      %vm5395 = vcmask 678912
      %v5396 = vsel %vm5395, %v5338, %v5394
      %v5397 = vsel %vm557, %v5376, %v5377
      %v5398 = vsel %vm5395, %v5340, %v5397
      %v5399 = vsel %vm557, %v5377, %v5378
      %v5400 = vsel %vm5395, %v5342, %v5399
      %v5401 = vsel %vm557, %v5378, %v5379
      %v5402 = vsel %vm5395, %v5344, %v5401
      %v5403 = vsel %vm557, %v5379, %v5380
      %v5404 = vsel %vm5395, %v5346, %v5403
      %v5405 = vsel %vm557, %v5380, %v5381
      %v5406 = vsel %vm5395, %v5348, %v5405
      %v5407 = vsel %vm557, %v5381, %v5382
      %v5408 = vsel %vm5395, %v5350, %v5407
      %v5409 = vsel %vm557, %v5382, %v5383
      %v5410 = vsel %vm5395, %v5352, %v5409
      %v5411 = vsel %vm557, %v5383, %v5384
      %v5412 = vsel %vm5395, %v5354, %v5411
      %v5413 = vsel %vm557, %v5384, %v5385
      %v5414 = vsel %vm5395, %v5356, %v5413
      %v5415 = vsel %vm557, %v5385, %v5386
      %v5416 = vsel %vm5395, %v5358, %v5415
      %v5417 = vsel %vm557, %v5386, %v5387
      %v5418 = vsel %vm5395, %v5360, %v5417
      %v5419 = vsel %vm557, %v5387, %v5388
      %v5420 = vsel %vm5395, %v5362, %v5419
      %v5421 = vsel %vm557, %v5388, %v5389
      %v5422 = vsel %vm5395, %v5364, %v5421
      %v5423 = vsel %vm557, %v5389, %v5390
      %v5424 = vsel %vm5395, %v5366, %v5423
      %v5425 = vsel %vm557, %v5390, %v5391
      %v5426 = vsel %vm5395, %v5368, %v5425
      %v5427 = vsel %vm557, %v5391, %v5392
      %v5428 = vsel %vm5395, %v5370, %v5427
      %v5429 = vsel %vm557, %v5392, %v5393
      %v5430 = vsel %vm5395, %v5372, %v5429
      %5449 = vst [vmem:[#allocation3 + $0x6c0] sm:$0xcc] %v5396
      %5450 = vst [vmem:[#allocation3 + $0x6c8] sm:$0xcc] %v5398
      %5451 = vst [vmem:[#allocation3 + $0x6d0] sm:$0xcc] %v5400
      %5452 = vst [vmem:[#allocation3 + $0x6d8] sm:$0xcc] %v5402
      %5453 = vst [vmem:[#allocation3 + $0x6e0] sm:$0xcc] %v5404
      %5454 = vst [vmem:[#allocation3 + $0x6e8] sm:$0xcc] %v5406
      %5455 = vst [vmem:[#allocation3 + $0x6f0] sm:$0xcc] %v5408
      %5456 = vst [vmem:[#allocation3 + $0x6f8] sm:$0xcc] %v5410
      %5457 = vst [vmem:[#allocation3 + $0x700] sm:$0xcc] %v5412
      %5458 = vst [vmem:[#allocation3 + $0x708] sm:$0xcc] %v5414
      %5459 = vst [vmem:[#allocation3 + $0x710] sm:$0xcc] %v5416
      %5460 = vst [vmem:[#allocation3 + $0x718] sm:$0xcc] %v5418
      %5461 = vst [vmem:[#allocation3 + $0x720] sm:$0xcc] %v5420
      %5462 = vst [vmem:[#allocation3 + $0x728] sm:$0xcc] %v5422
      %5463 = vst [vmem:[#allocation3 + $0x730] sm:$0xcc] %v5424
      %5464 = vst [vmem:[#allocation3 + $0x738] sm:$0xcc] %v5426
      %5465 = vst [vmem:[#allocation3 + $0x740] sm:$0xcc] %v5428
      %5466 = vst [vmem:[#allocation3 + $0x748] sm:$0xcc] %v5430
      %v5467 = vld [vmem:[#allocation2 + $0xa] sm:$0xff]
      %v5468 = vld [vmem:[#allocation2 + $0x12] sm:$0xff]
      %v5469 = vld [vmem:[#allocation2 + $0x1a] sm:$0xff]
      %v5470 = vld [vmem:[#allocation2 + $0x22] sm:$0xff]
      %v5471 = vld [vmem:[#allocation2 + $0x2a] sm:$0xff]
      %v5472 = vld [vmem:[#allocation2 + $0x32] sm:$0xff]
      %v5473 = vld [vmem:[#allocation2 + $0x3a] sm:$0xff]
      %v5474 = vld [vmem:[#allocation2 + $0x42] sm:$0xff]
      %v5475 = vld [vmem:[#allocation2 + $0x4a] sm:$0xff]
      %v5476 = vld [vmem:[#allocation2 + $0x52] sm:$0x3]
      %5478 = vst [vmem:[#allocation1] ss:$2 sm:$0xff] %v5467
      %s5480 = scalar_lea.vmem [#allocation1], 16
      %5481 = vst [vmem:[%s5480] ss:$2 sm:$0xff] %v5468
      %s5483 = scalar_lea.vmem [#allocation1], 32
      %5484 = vst [vmem:[%s5483] ss:$2 sm:$0xff] %v5469
      %s5486 = scalar_lea.vmem [#allocation1], 48
      %5487 = vst [vmem:[%s5486] ss:$2 sm:$0xff] %v5470
      %v5488 = vld.sshfl [vmem:[#allocation1] sm:$0xff pattern:$0x75643120]
      %v5490 = vld.sshfl [vmem:[#allocation1 + $0x8] sm:$0xff pattern:$0x75643120]
      %v5492 = vld.sshfl [vmem:[#allocation1 + $0x10] sm:$0xff pattern:$0x75643120]
      %v5494 = vld.sshfl [vmem:[#allocation1 + $0x18] sm:$0xff pattern:$0x75643120]
      %v5496 = vld.sshfl [vmem:[#allocation1 + $0x20] sm:$0xff pattern:$0x75643120]
      %v5498 = vld.sshfl [vmem:[#allocation1 + $0x28] sm:$0xff pattern:$0x75643120]
      %v5500 = vld.sshfl [vmem:[#allocation1 + $0x30] sm:$0xff pattern:$0x75643120]
      %v5502 = vld.sshfl [vmem:[#allocation1 + $0x38] sm:$0xff pattern:$0x75643120]
      %5505 = vst [vmem:[#allocation1] ss:$2 sm:$0xff] %v5471
      %5507 = vst [vmem:[%s5480] ss:$2 sm:$0xff] %v5472
      %5509 = vst [vmem:[%s5483] ss:$2 sm:$0xff] %v5473
      %5511 = vst [vmem:[%s5486] ss:$2 sm:$0xff] %v5474
      %v5512 = vld.sshfl [vmem:[#allocation1] sm:$0xff pattern:$0x75643120]
      %v5514 = vld.sshfl [vmem:[#allocation1 + $0x8] sm:$0xff pattern:$0x75643120]
      %v5516 = vld.sshfl [vmem:[#allocation1 + $0x10] sm:$0xff pattern:$0x75643120]
      %v5518 = vld.sshfl [vmem:[#allocation1 + $0x18] sm:$0xff pattern:$0x75643120]
      %v5520 = vld.sshfl [vmem:[#allocation1 + $0x20] sm:$0xff pattern:$0x75643120]
      %v5522 = vld.sshfl [vmem:[#allocation1 + $0x28] sm:$0xff pattern:$0x75643120]
      %v5524 = vld.sshfl [vmem:[#allocation1 + $0x30] sm:$0xff pattern:$0x75643120]
      %v5526 = vld.sshfl [vmem:[#allocation1 + $0x38] sm:$0xff pattern:$0x75643120]
      %5529 = vst [vmem:[#allocation1] ss:$2 sm:$0xff] %v5475
      %5531 = vst [vmem:[%s5480] ss:$2 sm:$0xff] %v5476
      %v5532 = vld.sshfl [vmem:[#allocation1] sm:$0xff pattern:$0x75643120]
      %v5534 = vld.sshfl [vmem:[#allocation1 + $0x8] sm:$0xff pattern:$0x75643120]
      %v5536 = vld.sshfl [vmem:[#allocation1 + $0x10] sm:$0xff pattern:$0x75643120]
      %5538 = vrot.lane.b32.xlu0 %v5488, 82
      %v5539 = vpop.permute.xlu0 %5538
      %5540 = vrot.lane.b32.xlu0 %v5490, 82
      %v5541 = vpop.permute.xlu0 %5540
      %5542 = vrot.lane.b32.xlu0 %v5492, 82
      %v5543 = vpop.permute.xlu0 %5542
      %5544 = vrot.lane.b32.xlu0 %v5494, 82
      %v5545 = vpop.permute.xlu0 %5544
      %5546 = vrot.lane.b32.xlu0 %v5496, 82
      %v5547 = vpop.permute.xlu0 %5546
      %5548 = vrot.lane.b32.xlu0 %v5498, 82
      %v5549 = vpop.permute.xlu0 %5548
      %5550 = vrot.lane.b32.xlu0 %v5500, 82
      %v5551 = vpop.permute.xlu0 %5550
      %5552 = vrot.lane.b32.xlu0 %v5502, 82
      %v5553 = vpop.permute.xlu0 %5552
      %5554 = vrot.lane.b32.xlu0 %v5512, 82
      %v5555 = vpop.permute.xlu0 %5554
      %5556 = vrot.lane.b32.xlu0 %v5514, 82
      %v5557 = vpop.permute.xlu0 %5556
      %5558 = vrot.lane.b32.xlu0 %v5516, 82
      %v5559 = vpop.permute.xlu0 %5558
      %5560 = vrot.lane.b32.xlu0 %v5518, 82
      %v5561 = vpop.permute.xlu0 %5560
      %5562 = vrot.lane.b32.xlu0 %v5520, 82
      %v5563 = vpop.permute.xlu0 %5562
      %5564 = vrot.lane.b32.xlu0 %v5522, 82
      %v5565 = vpop.permute.xlu0 %5564
      %5566 = vrot.lane.b32.xlu0 %v5524, 82
      %v5567 = vpop.permute.xlu0 %5566
      %5568 = vrot.lane.b32.xlu0 %v5526, 82
      %v5569 = vpop.permute.xlu0 %5568
      %5570 = vrot.lane.b32.xlu0 %v5532, 82
      %v5571 = vpop.permute.xlu0 %5570
      %5572 = vrot.lane.b32.xlu0 %v5534, 82
      %v5573 = vpop.permute.xlu0 %5572
      %5574 = vrot.lane.b32.xlu0 %v5536, 82
      %v5575 = vpop.permute.xlu0 %5574
      %v5576 = vrot.slane %v5539, 4
      %v5577 = vrot.slane %v5541, 4
      %v5578 = vrot.slane %v5543, 4
      %v5579 = vrot.slane %v5545, 4
      %v5580 = vrot.slane %v5547, 4
      %v5581 = vrot.slane %v5549, 4
      %v5582 = vrot.slane %v5551, 4
      %v5583 = vrot.slane %v5553, 4
      %v5584 = vrot.slane %v5555, 4
      %v5585 = vrot.slane %v5557, 4
      %v5586 = vrot.slane %v5559, 4
      %v5587 = vrot.slane %v5561, 4
      %v5588 = vrot.slane %v5563, 4
      %v5589 = vrot.slane %v5565, 4
      %v5590 = vrot.slane %v5567, 4
      %v5591 = vrot.slane %v5569, 4
      %v5592 = vrot.slane %v5571, 4
      %v5593 = vrot.slane %v5573, 4
      %v5594 = vrot.slane %v5575, 4
      %v5595 = vsel %vm557, %v5576, %v5577
      %vm5596 = vcmask 670720
      %v5597 = vsel %vm5596, %v5539, %v5595
      %v5598 = vsel %vm557, %v5577, %v5578
      %v5599 = vsel %vm5596, %v5541, %v5598
      %v5600 = vsel %vm557, %v5578, %v5579
      %v5601 = vsel %vm5596, %v5543, %v5600
      %v5602 = vsel %vm557, %v5579, %v5580
      %v5603 = vsel %vm5596, %v5545, %v5602
      %v5604 = vsel %vm557, %v5580, %v5581
      %v5605 = vsel %vm5596, %v5547, %v5604
      %v5606 = vsel %vm557, %v5581, %v5582
      %v5607 = vsel %vm5596, %v5549, %v5606
      %v5608 = vsel %vm557, %v5582, %v5583
      %v5609 = vsel %vm5596, %v5551, %v5608
      %v5610 = vsel %vm557, %v5583, %v5584
      %v5611 = vsel %vm5596, %v5553, %v5610
      %v5612 = vsel %vm557, %v5584, %v5585
      %v5613 = vsel %vm5596, %v5555, %v5612
      %v5614 = vsel %vm557, %v5585, %v5586
      %v5615 = vsel %vm5596, %v5557, %v5614
      %v5616 = vsel %vm557, %v5586, %v5587
      %v5617 = vsel %vm5596, %v5559, %v5616
      %v5618 = vsel %vm557, %v5587, %v5588
      %v5619 = vsel %vm5596, %v5561, %v5618
      %v5620 = vsel %vm557, %v5588, %v5589
      %v5621 = vsel %vm5596, %v5563, %v5620
      %v5622 = vsel %vm557, %v5589, %v5590
      %v5623 = vsel %vm5596, %v5565, %v5622
      %v5624 = vsel %vm557, %v5590, %v5591
      %v5625 = vsel %vm5596, %v5567, %v5624
      %v5626 = vsel %vm557, %v5591, %v5592
      %v5627 = vsel %vm5596, %v5569, %v5626
      %v5628 = vsel %vm557, %v5592, %v5593
      %v5629 = vsel %vm5596, %v5571, %v5628
      %v5630 = vsel %vm557, %v5593, %v5594
      %v5631 = vsel %vm5596, %v5573, %v5630
      %5650 = vst [vmem:[#allocation3 + $0x750] sm:$0x33] %v5597
      %5651 = vst [vmem:[#allocation3 + $0x758] sm:$0x33] %v5599
      %5652 = vst [vmem:[#allocation3 + $0x760] sm:$0x33] %v5601
      %5653 = vst [vmem:[#allocation3 + $0x768] sm:$0x33] %v5603
      %5654 = vst [vmem:[#allocation3 + $0x770] sm:$0x33] %v5605
      %5655 = vst [vmem:[#allocation3 + $0x778] sm:$0x33] %v5607
      %5656 = vst [vmem:[#allocation3 + $0x780] sm:$0x33] %v5609
      %5657 = vst [vmem:[#allocation3 + $0x788] sm:$0x33] %v5611
      %5658 = vst [vmem:[#allocation3 + $0x790] sm:$0x33] %v5613
      %5659 = vst [vmem:[#allocation3 + $0x798] sm:$0x33] %v5615
      %5660 = vst [vmem:[#allocation3 + $0x7a0] sm:$0x33] %v5617
      %5661 = vst [vmem:[#allocation3 + $0x7a8] sm:$0x33] %v5619
      %5662 = vst [vmem:[#allocation3 + $0x7b0] sm:$0x33] %v5621
      %5663 = vst [vmem:[#allocation3 + $0x7b8] sm:$0x33] %v5623
      %5664 = vst [vmem:[#allocation3 + $0x7c0] sm:$0x33] %v5625
      %5665 = vst [vmem:[#allocation3 + $0x7c8] sm:$0x33] %v5627
      %5666 = vst [vmem:[#allocation3 + $0x7d0] sm:$0x33] %v5629
      %5667 = vst [vmem:[#allocation3 + $0x7d8] sm:$0x33] %v5631
      %v5668 = vld [vmem:[%s2] sm:$0xf]
      %v5669 = vld [vmem:[#allocation3] sm:$0xff]
      %v5670 = vld [vmem:[#allocation3 + $0x8] sm:$0xff]
      %v5671 = vld [vmem:[#allocation3 + $0x10] sm:$0xff]
      %v5672 = vld [vmem:[#allocation3 + $0x18] sm:$0xff]
      %v5673 = vld [vmem:[#allocation3 + $0x20] sm:$0xff]
      %v5674 = vld [vmem:[#allocation3 + $0x28] sm:$0xff]
      %v5675 = vld [vmem:[#allocation3 + $0x30] sm:$0xff]
      %v5676 = vld [vmem:[#allocation3 + $0x38] sm:$0xff]
      %v5677 = vld [vmem:[#allocation3 + $0x40] sm:$0xff]
      %v5678 = vld [vmem:[#allocation3 + $0x48] sm:$0xff]
      %v5679 = vld [vmem:[#allocation3 + $0x50] sm:$0xff]
      %v5680 = vld [vmem:[#allocation3 + $0x58] sm:$0xff]
      %v5681 = vld [vmem:[#allocation3 + $0x60] sm:$0xff]
      %v5682 = vld [vmem:[#allocation3 + $0x68] sm:$0xff]
      %v5683 = vld [vmem:[#allocation3 + $0x70] sm:$0xff]
      %v5684 = vld [vmem:[#allocation3 + $0x78] sm:$0xff]
      %v5685 = vld [vmem:[#allocation3 + $0x80] sm:$0xff]
      %v5686 = vld [vmem:[#allocation3 + $0x88] sm:$0xff]
      %v5687 = vld [vmem:[#allocation3 + $0x90] sm:$0xff]
      %v5688 = vld [vmem:[#allocation3 + $0x98] sm:$0xff]
      %v5689 = vld [vmem:[#allocation3 + $0xa0] sm:$0xff]
      %v5690 = vld [vmem:[#allocation3 + $0xa8] sm:$0xff]
      %v5691 = vld [vmem:[#allocation3 + $0xb0] sm:$0xff]
      %v5692 = vld [vmem:[#allocation3 + $0xb8] sm:$0xff]
      %v5693 = vld [vmem:[#allocation3 + $0xc0] sm:$0xff]
      %v5694 = vld [vmem:[#allocation3 + $0xc8] sm:$0xff]
      %v5695 = vld [vmem:[#allocation3 + $0xd0] sm:$0xff]
      %v5696 = vld [vmem:[#allocation3 + $0xd8] sm:$0xff]
      %v5697 = vld [vmem:[#allocation3 + $0xe0] sm:$0xff]
      %v5698 = vld [vmem:[#allocation3 + $0xe8] sm:$0xff]
      %v5699 = vld [vmem:[#allocation3 + $0xf0] sm:$0xff]
      %v5700 = vld [vmem:[#allocation3 + $0xf8] sm:$0xff]
      %v5701 = vld [vmem:[#allocation3 + $0x100] sm:$0xff]
      %v5702 = vld [vmem:[#allocation3 + $0x108] sm:$0xff]
      %v5703 = vld [vmem:[#allocation3 + $0x110] sm:$0xff]
      %v5704 = vld [vmem:[#allocation3 + $0x118] sm:$0xff]
      %v5705 = vld [vmem:[#allocation3 + $0x120] sm:$0xff]
      %v5706 = vld [vmem:[#allocation3 + $0x128] sm:$0xff]
      %v5707 = vld [vmem:[#allocation3 + $0x130] sm:$0xff]
      %v5708 = vld [vmem:[#allocation3 + $0x138] sm:$0xff]
      %v5709 = vld [vmem:[#allocation3 + $0x140] sm:$0xff]
      %v5710 = vld [vmem:[#allocation3 + $0x148] sm:$0xff]
      %v5711 = vld [vmem:[#allocation3 + $0x150] sm:$0xff]
      %v5712 = vld [vmem:[#allocation3 + $0x158] sm:$0xff]
      %v5713 = vld [vmem:[#allocation3 + $0x160] sm:$0xff]
      %v5714 = vld [vmem:[#allocation3 + $0x168] sm:$0xff]
      %v5715 = vld [vmem:[#allocation3 + $0x170] sm:$0xff]
      %v5716 = vld [vmem:[#allocation3 + $0x178] sm:$0xff]
      %v5717 = vld [vmem:[#allocation3 + $0x180] sm:$0xff]
      %v5718 = vld [vmem:[#allocation3 + $0x188] sm:$0xff]
      %v5719 = vld [vmem:[#allocation3 + $0x190] sm:$0xff]
      %v5720 = vld [vmem:[#allocation3 + $0x198] sm:$0xff]
      %v5721 = vld [vmem:[#allocation3 + $0x1a0] sm:$0xff]
      %v5722 = vld [vmem:[#allocation3 + $0x1a8] sm:$0xff]
      %v5723 = vld [vmem:[#allocation3 + $0x1b0] sm:$0xff]
      %v5724 = vld [vmem:[#allocation3 + $0x1b8] sm:$0xff]
      %v5725 = vld [vmem:[#allocation3 + $0x1c0] sm:$0xff]
      %v5726 = vld [vmem:[#allocation3 + $0x1c8] sm:$0xff]
      %v5727 = vld [vmem:[#allocation3 + $0x1d0] sm:$0xff]
      %v5728 = vld [vmem:[#allocation3 + $0x1d8] sm:$0xff]
      %v5729 = vld [vmem:[#allocation3 + $0x1e0] sm:$0xff]
      %v5730 = vld [vmem:[#allocation3 + $0x1e8] sm:$0xff]
      %v5731 = vld [vmem:[#allocation3 + $0x1f0] sm:$0xff]
      %v5732 = vld [vmem:[#allocation3 + $0x1f8] sm:$0xff]
      %v5733 = vld [vmem:[#allocation3 + $0x200] sm:$0xff]
      %v5734 = vld [vmem:[#allocation3 + $0x208] sm:$0xff]
      %v5735 = vld [vmem:[#allocation3 + $0x210] sm:$0xff]
      %v5736 = vld [vmem:[#allocation3 + $0x218] sm:$0xff]
      %v5737 = vld [vmem:[#allocation3 + $0x220] sm:$0xff]
      %v5738 = vld [vmem:[#allocation3 + $0x228] sm:$0xff]
      %v5739 = vld [vmem:[#allocation3 + $0x230] sm:$0xff]
      %v5740 = vld [vmem:[#allocation3 + $0x238] sm:$0xff]
      %v5741 = vld [vmem:[#allocation3 + $0x240] sm:$0xff]
      %v5742 = vld [vmem:[#allocation3 + $0x248] sm:$0xff]
      %v5743 = vld [vmem:[#allocation3 + $0x250] sm:$0xff]
      %v5744 = vld [vmem:[#allocation3 + $0x258] sm:$0xff]
      %v5745 = vld [vmem:[#allocation3 + $0x260] sm:$0xff]
      %v5746 = vld [vmem:[#allocation3 + $0x268] sm:$0xff]
      %v5747 = vld [vmem:[#allocation3 + $0x270] sm:$0xff]
      %v5748 = vld [vmem:[#allocation3 + $0x278] sm:$0xff]
      %v5749 = vld [vmem:[#allocation3 + $0x280] sm:$0xff]
      %v5750 = vld [vmem:[#allocation3 + $0x288] sm:$0xff]
      %v5751 = vld [vmem:[#allocation3 + $0x290] sm:$0xff]
      %v5752 = vld [vmem:[#allocation3 + $0x298] sm:$0xff]
      %v5753 = vld [vmem:[#allocation3 + $0x2a0] sm:$0xff]
      %v5754 = vld [vmem:[#allocation3 + $0x2a8] sm:$0xff]
      %v5755 = vld [vmem:[#allocation3 + $0x2b0] sm:$0xff]
      %v5756 = vld [vmem:[#allocation3 + $0x2b8] sm:$0xff]
      %v5757 = vld [vmem:[#allocation3 + $0x2c0] sm:$0xff]
      %v5758 = vld [vmem:[#allocation3 + $0x2c8] sm:$0xff]
      %v5759 = vld [vmem:[#allocation3 + $0x2d0] sm:$0xff]
      %v5760 = vld [vmem:[#allocation3 + $0x2d8] sm:$0xff]
      %v5761 = vld [vmem:[#allocation3 + $0x2e0] sm:$0xff]
      %v5762 = vld [vmem:[#allocation3 + $0x2e8] sm:$0xff]
      %v5763 = vld [vmem:[#allocation3 + $0x2f0] sm:$0xff]
      %v5764 = vld [vmem:[#allocation3 + $0x2f8] sm:$0xff]
      %v5765 = vld [vmem:[#allocation3 + $0x300] sm:$0xff]
      %v5766 = vld [vmem:[#allocation3 + $0x308] sm:$0xff]
      %v5767 = vld [vmem:[#allocation3 + $0x310] sm:$0xff]
      %v5768 = vld [vmem:[#allocation3 + $0x318] sm:$0xff]
      %v5769 = vld [vmem:[#allocation3 + $0x320] sm:$0xff]
      %v5770 = vld [vmem:[#allocation3 + $0x328] sm:$0xff]
      %v5771 = vld [vmem:[#allocation3 + $0x330] sm:$0xff]
      %v5772 = vld [vmem:[#allocation3 + $0x338] sm:$0xff]
      %v5773 = vld [vmem:[#allocation3 + $0x340] sm:$0xff]
      %v5774 = vld [vmem:[#allocation3 + $0x348] sm:$0xff]
      %v5775 = vld [vmem:[#allocation3 + $0x350] sm:$0xff]
      %v5776 = vld [vmem:[#allocation3 + $0x358] sm:$0xff]
      %v5777 = vld [vmem:[#allocation3 + $0x360] sm:$0xff]
      %v5778 = vld [vmem:[#allocation3 + $0x368] sm:$0xff]
      %v5779 = vld [vmem:[#allocation3 + $0x370] sm:$0xff]
      %v5780 = vld [vmem:[#allocation3 + $0x378] sm:$0xff]
      %v5781 = vld [vmem:[#allocation3 + $0x380] sm:$0xff]
      %v5782 = vld [vmem:[#allocation3 + $0x388] sm:$0xff]
      %v5783 = vld [vmem:[#allocation3 + $0x390] sm:$0xff]
      %v5784 = vld [vmem:[#allocation3 + $0x398] sm:$0xff]
      %v5785 = vld [vmem:[#allocation3 + $0x3a0] sm:$0xff]
      %v5786 = vld [vmem:[#allocation3 + $0x3a8] sm:$0xff]
      %v5787 = vld [vmem:[#allocation3 + $0x3b0] sm:$0xff]
      %v5788 = vld [vmem:[#allocation3 + $0x3b8] sm:$0xff]
      %v5789 = vld [vmem:[#allocation3 + $0x3c0] sm:$0xff]
      %v5790 = vld [vmem:[#allocation3 + $0x3c8] sm:$0xff]
      %v5791 = vld [vmem:[#allocation3 + $0x3d0] sm:$0xff]
      %v5792 = vld [vmem:[#allocation3 + $0x3d8] sm:$0xff]
      %v5793 = vld [vmem:[#allocation3 + $0x3e0] sm:$0xff]
      %v5794 = vld [vmem:[#allocation3 + $0x3e8] sm:$0xff]
      %v5795 = vld [vmem:[#allocation3 + $0x3f0] sm:$0xff]
      %v5796 = vld [vmem:[#allocation3 + $0x3f8] sm:$0xff]
      %v5797 = vld [vmem:[#allocation3 + $0x400] sm:$0xff]
      %v5798 = vld [vmem:[#allocation3 + $0x408] sm:$0xff]
      %v5799 = vld [vmem:[#allocation3 + $0x410] sm:$0xff]
      %v5800 = vld [vmem:[#allocation3 + $0x418] sm:$0xff]
      %v5801 = vld [vmem:[#allocation3 + $0x420] sm:$0xff]
      %v5802 = vld [vmem:[#allocation3 + $0x428] sm:$0xff]
      %v5803 = vld [vmem:[#allocation3 + $0x430] sm:$0xff]
      %v5804 = vld [vmem:[#allocation3 + $0x438] sm:$0xff]
      %v5805 = vld [vmem:[#allocation3 + $0x440] sm:$0xff]
      %v5806 = vld [vmem:[#allocation3 + $0x448] sm:$0xff]
      %v5807 = vld [vmem:[#allocation3 + $0x450] sm:$0xff]
      %v5808 = vld [vmem:[#allocation3 + $0x458] sm:$0xff]
      %v5809 = vld [vmem:[#allocation3 + $0x460] sm:$0xff]
      %v5810 = vld [vmem:[#allocation3 + $0x468] sm:$0xff]
      %v5811 = vld [vmem:[#allocation3 + $0x470] sm:$0xff]
      %v5812 = vld [vmem:[#allocation3 + $0x478] sm:$0xff]
      %v5813 = vld [vmem:[#allocation3 + $0x480] sm:$0xff]
      %v5814 = vld [vmem:[#allocation3 + $0x488] sm:$0xff]
      %v5815 = vld [vmem:[#allocation3 + $0x490] sm:$0xff]
      %v5816 = vld [vmem:[#allocation3 + $0x498] sm:$0xff]
      %v5817 = vld [vmem:[#allocation3 + $0x4a0] sm:$0xff]
      %v5818 = vld [vmem:[#allocation3 + $0x4a8] sm:$0xff]
      %v5819 = vld [vmem:[#allocation3 + $0x4b0] sm:$0xff]
      %v5820 = vld [vmem:[#allocation3 + $0x4b8] sm:$0xff]
      %v5821 = vld [vmem:[#allocation3 + $0x4c0] sm:$0xff]
      %v5822 = vld [vmem:[#allocation3 + $0x4c8] sm:$0xff]
      %v5823 = vld [vmem:[#allocation3 + $0x4d0] sm:$0xff]
      %v5824 = vld [vmem:[#allocation3 + $0x4d8] sm:$0xff]
      %v5825 = vld [vmem:[#allocation3 + $0x4e0] sm:$0xff]
      %v5826 = vld [vmem:[#allocation3 + $0x4e8] sm:$0xff]
      %v5827 = vld [vmem:[#allocation3 + $0x4f0] sm:$0xff]
      %v5828 = vld [vmem:[#allocation3 + $0x4f8] sm:$0xff]
      %v5829 = vld [vmem:[#allocation3 + $0x500] sm:$0xff]
      %v5830 = vld [vmem:[#allocation3 + $0x508] sm:$0xff]
      %v5831 = vld [vmem:[#allocation3 + $0x510] sm:$0xff]
      %v5832 = vld [vmem:[#allocation3 + $0x518] sm:$0xff]
      %v5833 = vld [vmem:[#allocation3 + $0x520] sm:$0xff]
      %v5834 = vld [vmem:[#allocation3 + $0x528] sm:$0xff]
      %v5835 = vld [vmem:[#allocation3 + $0x530] sm:$0xff]
      %v5836 = vld [vmem:[#allocation3 + $0x538] sm:$0xff]
      %v5837 = vld [vmem:[#allocation3 + $0x540] sm:$0xff]
      %v5838 = vld [vmem:[#allocation3 + $0x548] sm:$0xff]
      %v5839 = vld [vmem:[#allocation3 + $0x550] sm:$0xff]
      %v5840 = vld [vmem:[#allocation3 + $0x558] sm:$0xff]
      %v5841 = vld [vmem:[#allocation3 + $0x560] sm:$0xff]
      %v5842 = vld [vmem:[#allocation3 + $0x568] sm:$0xff]
      %v5843 = vld [vmem:[#allocation3 + $0x570] sm:$0xff]
      %v5844 = vld [vmem:[#allocation3 + $0x578] sm:$0xff]
      %v5845 = vld [vmem:[#allocation3 + $0x580] sm:$0xff]
      %v5846 = vld [vmem:[#allocation3 + $0x588] sm:$0xff]
      %v5847 = vld [vmem:[#allocation3 + $0x590] sm:$0xff]
      %v5848 = vld [vmem:[#allocation3 + $0x598] sm:$0xff]
      %v5849 = vld [vmem:[#allocation3 + $0x5a0] sm:$0xff]
      %v5850 = vld [vmem:[#allocation3 + $0x5a8] sm:$0xff]
      %v5851 = vld [vmem:[#allocation3 + $0x5b0] sm:$0xff]
      %v5852 = vld [vmem:[#allocation3 + $0x5b8] sm:$0xff]
      %v5853 = vld [vmem:[#allocation3 + $0x5c0] sm:$0xff]
      %v5854 = vld [vmem:[#allocation3 + $0x5c8] sm:$0xff]
      %v5855 = vld [vmem:[#allocation3 + $0x5d0] sm:$0xff]
      %v5856 = vld [vmem:[#allocation3 + $0x5d8] sm:$0xff]
      %v5857 = vld [vmem:[#allocation3 + $0x5e0] sm:$0xff]
      %v5858 = vld [vmem:[#allocation3 + $0x5e8] sm:$0xff]
      %v5859 = vld [vmem:[#allocation3 + $0x5f0] sm:$0xff]
      %v5860 = vld [vmem:[#allocation3 + $0x5f8] sm:$0xff]
      %v5861 = vld [vmem:[#allocation3 + $0x600] sm:$0xff]
      %v5862 = vld [vmem:[#allocation3 + $0x608] sm:$0xff]
      %v5863 = vld [vmem:[#allocation3 + $0x610] sm:$0xff]
      %v5864 = vld [vmem:[#allocation3 + $0x618] sm:$0xff]
      %v5865 = vld [vmem:[#allocation3 + $0x620] sm:$0xff]
      %v5866 = vld [vmem:[#allocation3 + $0x628] sm:$0xff]
      %v5867 = vld [vmem:[#allocation3 + $0x630] sm:$0xff]
      %v5868 = vld [vmem:[#allocation3 + $0x638] sm:$0xff]
      %v5869 = vld [vmem:[#allocation3 + $0x640] sm:$0xff]
      %v5870 = vld [vmem:[#allocation3 + $0x648] sm:$0xff]
      %v5871 = vld [vmem:[#allocation3 + $0x650] sm:$0xff]
      %v5872 = vld [vmem:[#allocation3 + $0x658] sm:$0xff]
      %v5873 = vld [vmem:[#allocation3 + $0x660] sm:$0xff]
      %v5874 = vld [vmem:[#allocation3 + $0x668] sm:$0xff]
      %v5875 = vld [vmem:[#allocation3 + $0x670] sm:$0xff]
      %v5876 = vld [vmem:[#allocation3 + $0x678] sm:$0xff]
      %v5877 = vld [vmem:[#allocation3 + $0x680] sm:$0xff]
      %v5878 = vld [vmem:[#allocation3 + $0x688] sm:$0xff]
      %v5879 = vld [vmem:[#allocation3 + $0x690] sm:$0xff]
      %v5880 = vld [vmem:[#allocation3 + $0x698] sm:$0xff]
      %v5881 = vld [vmem:[#allocation3 + $0x6a0] sm:$0xff]
      %v5882 = vld [vmem:[#allocation3 + $0x6a8] sm:$0xff]
      %v5883 = vld [vmem:[#allocation3 + $0x6b0] sm:$0xff]
      %v5884 = vld [vmem:[#allocation3 + $0x6b8] sm:$0xff]
      %v5885 = vld [vmem:[#allocation3 + $0x6c0] sm:$0xff]
      %v5886 = vld [vmem:[#allocation3 + $0x6c8] sm:$0xff]
      %v5887 = vld [vmem:[#allocation3 + $0x6d0] sm:$0xff]
      %v5888 = vld [vmem:[#allocation3 + $0x6d8] sm:$0xff]
      %v5889 = vld [vmem:[#allocation3 + $0x6e0] sm:$0xff]
      %v5890 = vld [vmem:[#allocation3 + $0x6e8] sm:$0xff]
      %v5891 = vld [vmem:[#allocation3 + $0x6f0] sm:$0xff]
      %v5892 = vld [vmem:[#allocation3 + $0x6f8] sm:$0xff]
      %v5893 = vld [vmem:[#allocation3 + $0x700] sm:$0xff]
      %v5894 = vld [vmem:[#allocation3 + $0x708] sm:$0xff]
      %v5895 = vld [vmem:[#allocation3 + $0x710] sm:$0xff]
      %v5896 = vld [vmem:[#allocation3 + $0x718] sm:$0xff]
      %v5897 = vld [vmem:[#allocation3 + $0x720] sm:$0xff]
      %v5898 = vld [vmem:[#allocation3 + $0x728] sm:$0xff]
      %v5899 = vld [vmem:[#allocation3 + $0x730] sm:$0xff]
      %v5900 = vld [vmem:[#allocation3 + $0x738] sm:$0xff]
      %v5901 = vld [vmem:[#allocation3 + $0x740] sm:$0xff]
      %v5902 = vld [vmem:[#allocation3 + $0x748] sm:$0xff]
      %v5903 = vld [vmem:[#allocation3 + $0x750] sm:$0x33]
      %v5904 = vld [vmem:[#allocation3 + $0x758] sm:$0x33]
      %v5905 = vld [vmem:[#allocation3 + $0x760] sm:$0x33]
      %v5906 = vld [vmem:[#allocation3 + $0x768] sm:$0x33]
      %v5907 = vld [vmem:[#allocation3 + $0x770] sm:$0x33]
      %v5908 = vld [vmem:[#allocation3 + $0x778] sm:$0x33]
      %v5909 = vld [vmem:[#allocation3 + $0x780] sm:$0x33]
      %v5910 = vld [vmem:[#allocation3 + $0x788] sm:$0x33]
      %v5911 = vld [vmem:[#allocation3 + $0x790] sm:$0x33]
      %v5912 = vld [vmem:[#allocation3 + $0x798] sm:$0x33]
      %v5913 = vld [vmem:[#allocation3 + $0x7a0] sm:$0x33]
      %v5914 = vld [vmem:[#allocation3 + $0x7a8] sm:$0x33]
      %v5915 = vld [vmem:[#allocation3 + $0x7b0] sm:$0x33]
      %v5916 = vld [vmem:[#allocation3 + $0x7b8] sm:$0x33]
      %v5917 = vld [vmem:[#allocation3 + $0x7c0] sm:$0x33]
      %v5918 = vld [vmem:[#allocation3 + $0x7c8] sm:$0x33]
      %v5919 = vld [vmem:[#allocation3 + $0x7d0] sm:$0x33]
      %v5920 = vld [vmem:[#allocation3 + $0x7d8] sm:$0x33]
      %v6173 = vunpack.c.l.b16 %v5669
      %v6174 = vunpack.c.h.b16 %v5669
      %v6175 = vunpack.c.l.b16 %v5670
      %v6176 = vunpack.c.h.b16 %v5670
      %v6177 = vunpack.c.l.b16 %v5671
      %v6178 = vunpack.c.h.b16 %v5671
      %v6179 = vunpack.c.l.b16 %v5672
      %v6180 = vunpack.c.h.b16 %v5672
      %v6181 = vunpack.c.l.b16 %v5673
      %v6182 = vunpack.c.h.b16 %v5673
      %v6183 = vunpack.c.l.b16 %v5674
      %v6184 = vunpack.c.h.b16 %v5674
      %v6185 = vunpack.c.l.b16 %v5675
      %v6186 = vunpack.c.h.b16 %v5675
      %v6187 = vunpack.c.l.b16 %v5676
      %v6188 = vunpack.c.h.b16 %v5676
      %v6189 = vunpack.c.l.b16 %v5677
      %v6190 = vunpack.c.h.b16 %v5677
      %v6191 = vunpack.c.l.b16 %v5678
      %v6192 = vunpack.c.h.b16 %v5678
      %v6193 = vunpack.c.l.b16 %v5679
      %v6194 = vunpack.c.h.b16 %v5679
      %v6195 = vunpack.c.l.b16 %v5680
      %v6196 = vunpack.c.h.b16 %v5680
      %v6197 = vunpack.c.l.b16 %v5681
      %v6198 = vunpack.c.h.b16 %v5681
      %v6199 = vunpack.c.l.b16 %v5682
      %v6200 = vunpack.c.h.b16 %v5682
      %v6201 = vunpack.c.l.b16 %v5683
      %v6202 = vunpack.c.h.b16 %v5683
      %v6203 = vunpack.c.l.b16 %v5684
      %v6204 = vunpack.c.h.b16 %v5684
      %v6205 = vunpack.c.l.b16 %v5685
      %v6206 = vunpack.c.h.b16 %v5685
      %v6207 = vunpack.c.l.b16 %v5686
      %v6208 = vunpack.c.h.b16 %v5686
      %v6209 = vunpack.c.l.b16 %v5687
      %v6210 = vunpack.c.h.b16 %v5687
      %v6211 = vunpack.c.l.b16 %v5688
      %v6212 = vunpack.c.h.b16 %v5688
      %v6213 = vunpack.c.l.b16 %v5689
      %v6214 = vunpack.c.h.b16 %v5689
      %v6215 = vunpack.c.l.b16 %v5690
      %v6216 = vunpack.c.h.b16 %v5690
      %v6217 = vunpack.c.l.b16 %v5691
      %v6218 = vunpack.c.h.b16 %v5691
      %v6219 = vunpack.c.l.b16 %v5692
      %v6220 = vunpack.c.h.b16 %v5692
      %v6221 = vunpack.c.l.b16 %v5693
      %v6222 = vunpack.c.h.b16 %v5693
      %v6223 = vunpack.c.l.b16 %v5694
      %v6224 = vunpack.c.h.b16 %v5694
      %v6225 = vunpack.c.l.b16 %v5695
      %v6226 = vunpack.c.h.b16 %v5695
      %v6227 = vunpack.c.l.b16 %v5696
      %v6228 = vunpack.c.h.b16 %v5696
      %v6229 = vunpack.c.l.b16 %v5697
      %v6230 = vunpack.c.h.b16 %v5697
      %v6231 = vunpack.c.l.b16 %v5698
      %v6232 = vunpack.c.h.b16 %v5698
      %v6233 = vunpack.c.l.b16 %v5699
      %v6234 = vunpack.c.h.b16 %v5699
      %v6235 = vunpack.c.l.b16 %v5700
      %v6236 = vunpack.c.h.b16 %v5700
      %v6237 = vunpack.c.l.b16 %v5701
      %v6238 = vunpack.c.h.b16 %v5701
      %v6239 = vunpack.c.l.b16 %v5702
      %v6240 = vunpack.c.h.b16 %v5702
      %v6241 = vunpack.c.l.b16 %v5703
      %v6242 = vunpack.c.h.b16 %v5703
      %v6243 = vunpack.c.l.b16 %v5704
      %v6244 = vunpack.c.h.b16 %v5704
      %v6245 = vunpack.c.l.b16 %v5705
      %v6246 = vunpack.c.h.b16 %v5705
      %v6247 = vunpack.c.l.b16 %v5706
      %v6248 = vunpack.c.h.b16 %v5706
      %v6249 = vunpack.c.l.b16 %v5707
      %v6250 = vunpack.c.h.b16 %v5707
      %v6251 = vunpack.c.l.b16 %v5708
      %v6252 = vunpack.c.h.b16 %v5708
      %v6253 = vunpack.c.l.b16 %v5709
      %v6254 = vunpack.c.h.b16 %v5709
      %v6255 = vunpack.c.l.b16 %v5710
      %v6256 = vunpack.c.h.b16 %v5710
      %v6257 = vunpack.c.l.b16 %v5711
      %v6258 = vunpack.c.h.b16 %v5711
      %v6259 = vunpack.c.l.b16 %v5712
      %v6260 = vunpack.c.h.b16 %v5712
      %v6261 = vunpack.c.l.b16 %v5713
      %v6262 = vunpack.c.h.b16 %v5713
      %v6263 = vunpack.c.l.b16 %v5714
      %v6264 = vunpack.c.h.b16 %v5714
      %v6265 = vunpack.c.l.b16 %v5715
      %v6266 = vunpack.c.h.b16 %v5715
      %v6267 = vunpack.c.l.b16 %v5716
      %v6268 = vunpack.c.h.b16 %v5716
      %v6269 = vunpack.c.l.b16 %v5717
      %v6270 = vunpack.c.h.b16 %v5717
      %v6271 = vunpack.c.l.b16 %v5718
      %v6272 = vunpack.c.h.b16 %v5718
      %v6273 = vunpack.c.l.b16 %v5719
      %v6274 = vunpack.c.h.b16 %v5719
      %v6275 = vunpack.c.l.b16 %v5720
      %v6276 = vunpack.c.h.b16 %v5720
      %v6277 = vunpack.c.l.b16 %v5721
      %v6278 = vunpack.c.h.b16 %v5721
      %v6279 = vunpack.c.l.b16 %v5722
      %v6280 = vunpack.c.h.b16 %v5722
      %v6281 = vunpack.c.l.b16 %v5723
      %v6282 = vunpack.c.h.b16 %v5723
      %v6283 = vunpack.c.l.b16 %v5724
      %v6284 = vunpack.c.h.b16 %v5724
      %v6285 = vunpack.c.l.b16 %v5725
      %v6286 = vunpack.c.h.b16 %v5725
      %v6287 = vunpack.c.l.b16 %v5726
      %v6288 = vunpack.c.h.b16 %v5726
      %v6289 = vunpack.c.l.b16 %v5727
      %v6290 = vunpack.c.h.b16 %v5727
      %v6291 = vunpack.c.l.b16 %v5728
      %v6292 = vunpack.c.h.b16 %v5728
      %v6293 = vunpack.c.l.b16 %v5729
      %v6294 = vunpack.c.h.b16 %v5729
      %v6295 = vunpack.c.l.b16 %v5730
      %v6296 = vunpack.c.h.b16 %v5730
      %v6297 = vunpack.c.l.b16 %v5731
      %v6298 = vunpack.c.h.b16 %v5731
      %v6299 = vunpack.c.l.b16 %v5732
      %v6300 = vunpack.c.h.b16 %v5732
      %v6301 = vunpack.c.l.b16 %v5733
      %v6302 = vunpack.c.h.b16 %v5733
      %v6303 = vunpack.c.l.b16 %v5734
      %v6304 = vunpack.c.h.b16 %v5734
      %v6305 = vunpack.c.l.b16 %v5735
      %v6306 = vunpack.c.h.b16 %v5735
      %v6307 = vunpack.c.l.b16 %v5736
      %v6308 = vunpack.c.h.b16 %v5736
      %v6309 = vunpack.c.l.b16 %v5737
      %v6310 = vunpack.c.h.b16 %v5737
      %v6311 = vunpack.c.l.b16 %v5738
      %v6312 = vunpack.c.h.b16 %v5738
      %v6313 = vunpack.c.l.b16 %v5739
      %v6314 = vunpack.c.h.b16 %v5739
      %v6315 = vunpack.c.l.b16 %v5740
      %v6316 = vunpack.c.h.b16 %v5740
      %v6317 = vunpack.c.l.b16 %v5741
      %v6318 = vunpack.c.h.b16 %v5741
      %v6319 = vunpack.c.l.b16 %v5742
      %v6320 = vunpack.c.h.b16 %v5742
      %v6321 = vunpack.c.l.b16 %v5743
      %v6322 = vunpack.c.h.b16 %v5743
      %v6323 = vunpack.c.l.b16 %v5744
      %v6324 = vunpack.c.h.b16 %v5744
      %v6325 = vunpack.c.l.b16 %v5745
      %v6326 = vunpack.c.h.b16 %v5745
      %v6327 = vunpack.c.l.b16 %v5746
      %v6328 = vunpack.c.h.b16 %v5746
      %v6329 = vunpack.c.l.b16 %v5747
      %v6330 = vunpack.c.h.b16 %v5747
      %v6331 = vunpack.c.l.b16 %v5748
      %v6332 = vunpack.c.h.b16 %v5748
      %v6333 = vunpack.c.l.b16 %v5749
      %v6334 = vunpack.c.h.b16 %v5749
      %v6335 = vunpack.c.l.b16 %v5750
      %v6336 = vunpack.c.h.b16 %v5750
      %v6337 = vunpack.c.l.b16 %v5751
      %v6338 = vunpack.c.h.b16 %v5751
      %v6339 = vunpack.c.l.b16 %v5752
      %v6340 = vunpack.c.h.b16 %v5752
      %v6341 = vunpack.c.l.b16 %v5753
      %v6342 = vunpack.c.h.b16 %v5753
      %v6343 = vunpack.c.l.b16 %v5754
      %v6344 = vunpack.c.h.b16 %v5754
      %v6345 = vunpack.c.l.b16 %v5755
      %v6346 = vunpack.c.h.b16 %v5755
      %v6347 = vunpack.c.l.b16 %v5756
      %v6348 = vunpack.c.h.b16 %v5756
      %v6349 = vunpack.c.l.b16 %v5757
      %v6350 = vunpack.c.h.b16 %v5757
      %v6351 = vunpack.c.l.b16 %v5758
      %v6352 = vunpack.c.h.b16 %v5758
      %v6353 = vunpack.c.l.b16 %v5759
      %v6354 = vunpack.c.h.b16 %v5759
      %v6355 = vunpack.c.l.b16 %v5760
      %v6356 = vunpack.c.h.b16 %v5760
      %v6357 = vunpack.c.l.b16 %v5761
      %v6358 = vunpack.c.h.b16 %v5761
      %v6359 = vunpack.c.l.b16 %v5762
      %v6360 = vunpack.c.h.b16 %v5762
      %v6361 = vunpack.c.l.b16 %v5763
      %v6362 = vunpack.c.h.b16 %v5763
      %v6363 = vunpack.c.l.b16 %v5764
      %v6364 = vunpack.c.h.b16 %v5764
      %v6365 = vunpack.c.l.b16 %v5765
      %v6366 = vunpack.c.h.b16 %v5765
      %v6367 = vunpack.c.l.b16 %v5766
      %v6368 = vunpack.c.h.b16 %v5766
      %v6369 = vunpack.c.l.b16 %v5767
      %v6370 = vunpack.c.h.b16 %v5767
      %v6371 = vunpack.c.l.b16 %v5768
      %v6372 = vunpack.c.h.b16 %v5768
      %v6373 = vunpack.c.l.b16 %v5769
      %v6374 = vunpack.c.h.b16 %v5769
      %v6375 = vunpack.c.l.b16 %v5770
      %v6376 = vunpack.c.h.b16 %v5770
      %v6377 = vunpack.c.l.b16 %v5771
      %v6378 = vunpack.c.h.b16 %v5771
      %v6379 = vunpack.c.l.b16 %v5772
      %v6380 = vunpack.c.h.b16 %v5772
      %v6381 = vunpack.c.l.b16 %v5773
      %v6382 = vunpack.c.h.b16 %v5773
      %v6383 = vunpack.c.l.b16 %v5774
      %v6384 = vunpack.c.h.b16 %v5774
      %v6385 = vunpack.c.l.b16 %v5775
      %v6386 = vunpack.c.h.b16 %v5775
      %v6387 = vunpack.c.l.b16 %v5776
      %v6388 = vunpack.c.h.b16 %v5776
      %v6389 = vunpack.c.l.b16 %v5777
      %v6390 = vunpack.c.h.b16 %v5777
      %v6391 = vunpack.c.l.b16 %v5778
      %v6392 = vunpack.c.h.b16 %v5778
      %v6393 = vunpack.c.l.b16 %v5779
      %v6394 = vunpack.c.h.b16 %v5779
      %v6395 = vunpack.c.l.b16 %v5780
      %v6396 = vunpack.c.h.b16 %v5780
      %v6397 = vunpack.c.l.b16 %v5781
      %v6398 = vunpack.c.h.b16 %v5781
      %v6399 = vunpack.c.l.b16 %v5782
      %v6400 = vunpack.c.h.b16 %v5782
      %v6401 = vunpack.c.l.b16 %v5783
      %v6402 = vunpack.c.h.b16 %v5783
      %v6403 = vunpack.c.l.b16 %v5784
      %v6404 = vunpack.c.h.b16 %v5784
      %v6405 = vunpack.c.l.b16 %v5785
      %v6406 = vunpack.c.h.b16 %v5785
      %v6407 = vunpack.c.l.b16 %v5786
      %v6408 = vunpack.c.h.b16 %v5786
      %v6409 = vunpack.c.l.b16 %v5787
      %v6410 = vunpack.c.h.b16 %v5787
      %v6411 = vunpack.c.l.b16 %v5788
      %v6412 = vunpack.c.h.b16 %v5788
      %v6413 = vunpack.c.l.b16 %v5789
      %v6414 = vunpack.c.h.b16 %v5789
      %v6415 = vunpack.c.l.b16 %v5790
      %v6416 = vunpack.c.h.b16 %v5790
      %v6417 = vunpack.c.l.b16 %v5791
      %v6418 = vunpack.c.h.b16 %v5791
      %v6419 = vunpack.c.l.b16 %v5792
      %v6420 = vunpack.c.h.b16 %v5792
      %v6421 = vunpack.c.l.b16 %v5793
      %v6422 = vunpack.c.h.b16 %v5793
      %v6423 = vunpack.c.l.b16 %v5794
      %v6424 = vunpack.c.h.b16 %v5794
      %v6425 = vunpack.c.l.b16 %v5795
      %v6426 = vunpack.c.h.b16 %v5795
      %v6427 = vunpack.c.l.b16 %v5796
      %v6428 = vunpack.c.h.b16 %v5796
      %v6429 = vunpack.c.l.b16 %v5797
      %v6430 = vunpack.c.h.b16 %v5797
      %v6431 = vunpack.c.l.b16 %v5798
      %v6432 = vunpack.c.h.b16 %v5798
      %v6433 = vunpack.c.l.b16 %v5799
      %v6434 = vunpack.c.h.b16 %v5799
      %v6435 = vunpack.c.l.b16 %v5800
      %v6436 = vunpack.c.h.b16 %v5800
      %v6437 = vunpack.c.l.b16 %v5801
      %v6438 = vunpack.c.h.b16 %v5801
      %v6439 = vunpack.c.l.b16 %v5802
      %v6440 = vunpack.c.h.b16 %v5802
      %v6441 = vunpack.c.l.b16 %v5803
      %v6442 = vunpack.c.h.b16 %v5803
      %v6443 = vunpack.c.l.b16 %v5804
      %v6444 = vunpack.c.h.b16 %v5804
      %v6445 = vunpack.c.l.b16 %v5805
      %v6446 = vunpack.c.h.b16 %v5805
      %v6447 = vunpack.c.l.b16 %v5806
      %v6448 = vunpack.c.h.b16 %v5806
      %v6449 = vunpack.c.l.b16 %v5807
      %v6450 = vunpack.c.h.b16 %v5807
      %v6451 = vunpack.c.l.b16 %v5808
      %v6452 = vunpack.c.h.b16 %v5808
      %v6453 = vunpack.c.l.b16 %v5809
      %v6454 = vunpack.c.h.b16 %v5809
      %v6455 = vunpack.c.l.b16 %v5810
      %v6456 = vunpack.c.h.b16 %v5810
      %v6457 = vunpack.c.l.b16 %v5811
      %v6458 = vunpack.c.h.b16 %v5811
      %v6459 = vunpack.c.l.b16 %v5812
      %v6460 = vunpack.c.h.b16 %v5812
      %v6461 = vunpack.c.l.b16 %v5813
      %v6462 = vunpack.c.h.b16 %v5813
      %v6463 = vunpack.c.l.b16 %v5814
      %v6464 = vunpack.c.h.b16 %v5814
      %v6465 = vunpack.c.l.b16 %v5815
      %v6466 = vunpack.c.h.b16 %v5815
      %v6467 = vunpack.c.l.b16 %v5816
      %v6468 = vunpack.c.h.b16 %v5816
      %v6469 = vunpack.c.l.b16 %v5817
      %v6470 = vunpack.c.h.b16 %v5817
      %v6471 = vunpack.c.l.b16 %v5818
      %v6472 = vunpack.c.h.b16 %v5818
      %v6473 = vunpack.c.l.b16 %v5819
      %v6474 = vunpack.c.h.b16 %v5819
      %v6475 = vunpack.c.l.b16 %v5820
      %v6476 = vunpack.c.h.b16 %v5820
      %v6477 = vunpack.c.l.b16 %v5821
      %v6478 = vunpack.c.h.b16 %v5821
      %v6479 = vunpack.c.l.b16 %v5822
      %v6480 = vunpack.c.h.b16 %v5822
      %v6481 = vunpack.c.l.b16 %v5823
      %v6482 = vunpack.c.h.b16 %v5823
      %v6483 = vunpack.c.l.b16 %v5824
      %v6484 = vunpack.c.h.b16 %v5824
      %v6485 = vunpack.c.l.b16 %v5825
      %v6486 = vunpack.c.h.b16 %v5825
      %v6487 = vunpack.c.l.b16 %v5826
      %v6488 = vunpack.c.h.b16 %v5826
      %v6489 = vunpack.c.l.b16 %v5827
      %v6490 = vunpack.c.h.b16 %v5827
      %v6491 = vunpack.c.l.b16 %v5828
      %v6492 = vunpack.c.h.b16 %v5828
      %v6493 = vunpack.c.l.b16 %v5829
      %v6494 = vunpack.c.h.b16 %v5829
      %v6495 = vunpack.c.l.b16 %v5830
      %v6496 = vunpack.c.h.b16 %v5830
      %v6497 = vunpack.c.l.b16 %v5831
      %v6498 = vunpack.c.h.b16 %v5831
      %v6499 = vunpack.c.l.b16 %v5832
      %v6500 = vunpack.c.h.b16 %v5832
      %v6501 = vunpack.c.l.b16 %v5833
      %v6502 = vunpack.c.h.b16 %v5833
      %v6503 = vunpack.c.l.b16 %v5834
      %v6504 = vunpack.c.h.b16 %v5834
      %v6505 = vunpack.c.l.b16 %v5835
      %v6506 = vunpack.c.h.b16 %v5835
      %v6507 = vunpack.c.l.b16 %v5836
      %v6508 = vunpack.c.h.b16 %v5836
      %v6509 = vunpack.c.l.b16 %v5837
      %v6510 = vunpack.c.h.b16 %v5837
      %v6511 = vunpack.c.l.b16 %v5838
      %v6512 = vunpack.c.h.b16 %v5838
      %v6513 = vunpack.c.l.b16 %v5839
      %v6514 = vunpack.c.h.b16 %v5839
      %v6515 = vunpack.c.l.b16 %v5840
      %v6516 = vunpack.c.h.b16 %v5840
      %v6517 = vunpack.c.l.b16 %v5841
      %v6518 = vunpack.c.h.b16 %v5841
      %v6519 = vunpack.c.l.b16 %v5842
      %v6520 = vunpack.c.h.b16 %v5842
      %v6521 = vunpack.c.l.b16 %v5843
      %v6522 = vunpack.c.h.b16 %v5843
      %v6523 = vunpack.c.l.b16 %v5844
      %v6524 = vunpack.c.h.b16 %v5844
      %v6525 = vunpack.c.l.b16 %v5845
      %v6526 = vunpack.c.h.b16 %v5845
      %v6527 = vunpack.c.l.b16 %v5846
      %v6528 = vunpack.c.h.b16 %v5846
      %v6529 = vunpack.c.l.b16 %v5847
      %v6530 = vunpack.c.h.b16 %v5847
      %v6531 = vunpack.c.l.b16 %v5848
      %v6532 = vunpack.c.h.b16 %v5848
      %v6533 = vunpack.c.l.b16 %v5849
      %v6534 = vunpack.c.h.b16 %v5849
      %v6535 = vunpack.c.l.b16 %v5850
      %v6536 = vunpack.c.h.b16 %v5850
      %v6537 = vunpack.c.l.b16 %v5851
      %v6538 = vunpack.c.h.b16 %v5851
      %v6539 = vunpack.c.l.b16 %v5852
      %v6540 = vunpack.c.h.b16 %v5852
      %v6541 = vunpack.c.l.b16 %v5853
      %v6542 = vunpack.c.h.b16 %v5853
      %v6543 = vunpack.c.l.b16 %v5854
      %v6544 = vunpack.c.h.b16 %v5854
      %v6545 = vunpack.c.l.b16 %v5855
      %v6546 = vunpack.c.h.b16 %v5855
      %v6547 = vunpack.c.l.b16 %v5856
      %v6548 = vunpack.c.h.b16 %v5856
      %v6549 = vunpack.c.l.b16 %v5857
      %v6550 = vunpack.c.h.b16 %v5857
      %v6551 = vunpack.c.l.b16 %v5858
      %v6552 = vunpack.c.h.b16 %v5858
      %v6553 = vunpack.c.l.b16 %v5859
      %v6554 = vunpack.c.h.b16 %v5859
      %v6555 = vunpack.c.l.b16 %v5860
      %v6556 = vunpack.c.h.b16 %v5860
      %v6557 = vunpack.c.l.b16 %v5861
      %v6558 = vunpack.c.h.b16 %v5861
      %v6559 = vunpack.c.l.b16 %v5862
      %v6560 = vunpack.c.h.b16 %v5862
      %v6561 = vunpack.c.l.b16 %v5863
      %v6562 = vunpack.c.h.b16 %v5863
      %v6563 = vunpack.c.l.b16 %v5864
      %v6564 = vunpack.c.h.b16 %v5864
      %v6565 = vunpack.c.l.b16 %v5865
      %v6566 = vunpack.c.h.b16 %v5865
      %v6567 = vunpack.c.l.b16 %v5866
      %v6568 = vunpack.c.h.b16 %v5866
      %v6569 = vunpack.c.l.b16 %v5867
      %v6570 = vunpack.c.h.b16 %v5867
      %v6571 = vunpack.c.l.b16 %v5868
      %v6572 = vunpack.c.h.b16 %v5868
      %v6573 = vunpack.c.l.b16 %v5869
      %v6574 = vunpack.c.h.b16 %v5869
      %v6575 = vunpack.c.l.b16 %v5870
      %v6576 = vunpack.c.h.b16 %v5870
      %v6577 = vunpack.c.l.b16 %v5871
      %v6578 = vunpack.c.h.b16 %v5871
      %v6579 = vunpack.c.l.b16 %v5872
      %v6580 = vunpack.c.h.b16 %v5872
      %v6581 = vunpack.c.l.b16 %v5873
      %v6582 = vunpack.c.h.b16 %v5873
      %v6583 = vunpack.c.l.b16 %v5874
      %v6584 = vunpack.c.h.b16 %v5874
      %v6585 = vunpack.c.l.b16 %v5875
      %v6586 = vunpack.c.h.b16 %v5875
      %v6587 = vunpack.c.l.b16 %v5876
      %v6588 = vunpack.c.h.b16 %v5876
      %v6589 = vunpack.c.l.b16 %v5877
      %v6590 = vunpack.c.h.b16 %v5877
      %v6591 = vunpack.c.l.b16 %v5878
      %v6592 = vunpack.c.h.b16 %v5878
      %v6593 = vunpack.c.l.b16 %v5879
      %v6594 = vunpack.c.h.b16 %v5879
      %v6595 = vunpack.c.l.b16 %v5880
      %v6596 = vunpack.c.h.b16 %v5880
      %v6597 = vunpack.c.l.b16 %v5881
      %v6598 = vunpack.c.h.b16 %v5881
      %v6599 = vunpack.c.l.b16 %v5882
      %v6600 = vunpack.c.h.b16 %v5882
      %v6601 = vunpack.c.l.b16 %v5883
      %v6602 = vunpack.c.h.b16 %v5883
      %v6603 = vunpack.c.l.b16 %v5884
      %v6604 = vunpack.c.h.b16 %v5884
      %v6605 = vunpack.c.l.b16 %v5885
      %v6606 = vunpack.c.h.b16 %v5885
      %v6607 = vunpack.c.l.b16 %v5886
      %v6608 = vunpack.c.h.b16 %v5886
      %v6609 = vunpack.c.l.b16 %v5887
      %v6610 = vunpack.c.h.b16 %v5887
      %v6611 = vunpack.c.l.b16 %v5888
      %v6612 = vunpack.c.h.b16 %v5888
      %v6613 = vunpack.c.l.b16 %v5889
      %v6614 = vunpack.c.h.b16 %v5889
      %v6615 = vunpack.c.l.b16 %v5890
      %v6616 = vunpack.c.h.b16 %v5890
      %v6617 = vunpack.c.l.b16 %v5891
      %v6618 = vunpack.c.h.b16 %v5891
      %v6619 = vunpack.c.l.b16 %v5892
      %v6620 = vunpack.c.h.b16 %v5892
      %v6621 = vunpack.c.l.b16 %v5893
      %v6622 = vunpack.c.h.b16 %v5893
      %v6623 = vunpack.c.l.b16 %v5894
      %v6624 = vunpack.c.h.b16 %v5894
      %v6625 = vunpack.c.l.b16 %v5895
      %v6626 = vunpack.c.h.b16 %v5895
      %v6627 = vunpack.c.l.b16 %v5896
      %v6628 = vunpack.c.h.b16 %v5896
      %v6629 = vunpack.c.l.b16 %v5897
      %v6630 = vunpack.c.h.b16 %v5897
      %v6631 = vunpack.c.l.b16 %v5898
      %v6632 = vunpack.c.h.b16 %v5898
      %v6633 = vunpack.c.l.b16 %v5899
      %v6634 = vunpack.c.h.b16 %v5899
      %v6635 = vunpack.c.l.b16 %v5900
      %v6636 = vunpack.c.h.b16 %v5900
      %v6637 = vunpack.c.l.b16 %v5901
      %v6638 = vunpack.c.h.b16 %v5901
      %v6639 = vunpack.c.l.b16 %v5902
      %v6640 = vunpack.c.h.b16 %v5902
      %v6641 = vunpack.c.l.b16 %v5903
      %v6642 = vunpack.c.h.b16 %v5903
      %v6643 = vunpack.c.l.b16 %v5904
      %v6644 = vunpack.c.h.b16 %v5904
      %v6645 = vunpack.c.l.b16 %v5905
      %v6646 = vunpack.c.h.b16 %v5905
      %v6647 = vunpack.c.l.b16 %v5906
      %v6648 = vunpack.c.h.b16 %v5906
      %v6649 = vunpack.c.l.b16 %v5907
      %v6650 = vunpack.c.h.b16 %v5907
      %v6651 = vunpack.c.l.b16 %v5908
      %v6652 = vunpack.c.h.b16 %v5908
      %v6653 = vunpack.c.l.b16 %v5909
      %v6654 = vunpack.c.h.b16 %v5909
      %v6655 = vunpack.c.l.b16 %v5910
      %v6656 = vunpack.c.h.b16 %v5910
      %v6657 = vunpack.c.l.b16 %v5911
      %v6658 = vunpack.c.h.b16 %v5911
      %v6659 = vunpack.c.l.b16 %v5912
      %v6660 = vunpack.c.h.b16 %v5912
      %v6661 = vunpack.c.l.b16 %v5913
      %v6662 = vunpack.c.h.b16 %v5913
      %v6663 = vunpack.c.l.b16 %v5914
      %v6664 = vunpack.c.h.b16 %v5914
      %v6665 = vunpack.c.l.b16 %v5915
      %v6666 = vunpack.c.h.b16 %v5915
      %v6667 = vunpack.c.l.b16 %v5916
      %v6668 = vunpack.c.h.b16 %v5916
      %v6669 = vunpack.c.l.b16 %v5917
      %v6670 = vunpack.c.h.b16 %v5917
      %v6671 = vunpack.c.l.b16 %v5918
      %v6672 = vunpack.c.h.b16 %v5918
      %v6673 = vunpack.c.l.b16 %v5919
      %v6674 = vunpack.c.h.b16 %v5919
      %v6675 = vunpack.c.l.b16 %v5920
      %v6676 = vunpack.c.h.b16 %v5920
      %v6677 = vpack.c.b16 %v6209, %v6173
      %v6678 = vpack.c.b16 %v6210, %v6174
      %v6679 = vpack.c.b16 %v6211, %v6175
      %v6680 = vpack.c.b16 %v6212, %v6176
      %v6681 = vpack.c.b16 %v6213, %v6177
      %v6682 = vpack.c.b16 %v6214, %v6178
      %v6683 = vpack.c.b16 %v6215, %v6179
      %v6684 = vpack.c.b16 %v6216, %v6180
      %v6685 = vpack.c.b16 %v6217, %v6181
      %v6686 = vpack.c.b16 %v6218, %v6182
      %v6687 = vpack.c.b16 %v6219, %v6183
      %v6688 = vpack.c.b16 %v6220, %v6184
      %v6689 = vpack.c.b16 %v6221, %v6185
      %v6690 = vpack.c.b16 %v6222, %v6186
      %v6691 = vpack.c.b16 %v6223, %v6187
      %v6692 = vpack.c.b16 %v6224, %v6188
      %v6693 = vpack.c.b16 %v6225, %v6189
      %v6694 = vpack.c.b16 %v6226, %v6190
      %v6695 = vpack.c.b16 %v6227, %v6191
      %v6696 = vpack.c.b16 %v6228, %v6192
      %v6697 = vpack.c.b16 %v6229, %v6193
      %v6698 = vpack.c.b16 %v6230, %v6194
      %v6699 = vpack.c.b16 %v6231, %v6195
      %v6700 = vpack.c.b16 %v6232, %v6196
      %v6701 = vpack.c.b16 %v6233, %v6197
      %v6702 = vpack.c.b16 %v6234, %v6198
      %v6703 = vpack.c.b16 %v6235, %v6199
      %v6704 = vpack.c.b16 %v6236, %v6200
      %v6705 = vpack.c.b16 %v6237, %v6201
      %v6706 = vpack.c.b16 %v6238, %v6202
      %v6707 = vpack.c.b16 %v6239, %v6203
      %v6708 = vpack.c.b16 %v6240, %v6204
      %v6709 = vpack.c.b16 %v6241, %v6205
      %v6710 = vpack.c.b16 %v6242, %v6206
      %v6711 = vpack.c.b16 %v6243, %v6207
      %v6712 = vpack.c.b16 %v6244, %v6208
      %v6713 = vpack.c.b16 %v6281, %v6245
      %v6714 = vpack.c.b16 %v6282, %v6246
      %v6715 = vpack.c.b16 %v6283, %v6247
      %v6716 = vpack.c.b16 %v6284, %v6248
      %v6717 = vpack.c.b16 %v6285, %v6249
      %v6718 = vpack.c.b16 %v6286, %v6250
      %v6719 = vpack.c.b16 %v6287, %v6251
      %v6720 = vpack.c.b16 %v6288, %v6252
      %v6721 = vpack.c.b16 %v6289, %v6253
      %v6722 = vpack.c.b16 %v6290, %v6254
      %v6723 = vpack.c.b16 %v6291, %v6255
      %v6724 = vpack.c.b16 %v6292, %v6256
      %v6725 = vpack.c.b16 %v6293, %v6257
      %v6726 = vpack.c.b16 %v6294, %v6258
      %v6727 = vpack.c.b16 %v6295, %v6259
      %v6728 = vpack.c.b16 %v6296, %v6260
      %v6729 = vpack.c.b16 %v6297, %v6261
      %v6730 = vpack.c.b16 %v6298, %v6262
      %v6731 = vpack.c.b16 %v6299, %v6263
      %v6732 = vpack.c.b16 %v6300, %v6264
      %v6733 = vpack.c.b16 %v6301, %v6265
      %v6734 = vpack.c.b16 %v6302, %v6266
      %v6735 = vpack.c.b16 %v6303, %v6267
      %v6736 = vpack.c.b16 %v6304, %v6268
      %v6737 = vpack.c.b16 %v6305, %v6269
      %v6738 = vpack.c.b16 %v6306, %v6270
      %v6739 = vpack.c.b16 %v6307, %v6271
      %v6740 = vpack.c.b16 %v6308, %v6272
      %v6741 = vpack.c.b16 %v6309, %v6273
      %v6742 = vpack.c.b16 %v6310, %v6274
      %v6743 = vpack.c.b16 %v6311, %v6275
      %v6744 = vpack.c.b16 %v6312, %v6276
      %v6745 = vpack.c.b16 %v6313, %v6277
      %v6746 = vpack.c.b16 %v6314, %v6278
      %v6747 = vpack.c.b16 %v6315, %v6279
      %v6748 = vpack.c.b16 %v6316, %v6280
      %v6749 = vpack.c.b16 %v6353, %v6317
      %v6750 = vpack.c.b16 %v6354, %v6318
      %v6751 = vpack.c.b16 %v6355, %v6319
      %v6752 = vpack.c.b16 %v6356, %v6320
      %v6753 = vpack.c.b16 %v6357, %v6321
      %v6754 = vpack.c.b16 %v6358, %v6322
      %v6755 = vpack.c.b16 %v6359, %v6323
      %v6756 = vpack.c.b16 %v6360, %v6324
      %v6757 = vpack.c.b16 %v6361, %v6325
      %v6758 = vpack.c.b16 %v6362, %v6326
      %v6759 = vpack.c.b16 %v6363, %v6327
      %v6760 = vpack.c.b16 %v6364, %v6328
      %v6761 = vpack.c.b16 %v6365, %v6329
      %v6762 = vpack.c.b16 %v6366, %v6330
      %v6763 = vpack.c.b16 %v6367, %v6331
      %v6764 = vpack.c.b16 %v6368, %v6332
      %v6765 = vpack.c.b16 %v6369, %v6333
      %v6766 = vpack.c.b16 %v6370, %v6334
      %v6767 = vpack.c.b16 %v6371, %v6335
      %v6768 = vpack.c.b16 %v6372, %v6336
      %v6769 = vpack.c.b16 %v6373, %v6337
      %v6770 = vpack.c.b16 %v6374, %v6338
      %v6771 = vpack.c.b16 %v6375, %v6339
      %v6772 = vpack.c.b16 %v6376, %v6340
      %v6773 = vpack.c.b16 %v6377, %v6341
      %v6774 = vpack.c.b16 %v6378, %v6342
      %v6775 = vpack.c.b16 %v6379, %v6343
      %v6776 = vpack.c.b16 %v6380, %v6344
      %v6777 = vpack.c.b16 %v6381, %v6345
      %v6778 = vpack.c.b16 %v6382, %v6346
      %v6779 = vpack.c.b16 %v6383, %v6347
      %v6780 = vpack.c.b16 %v6384, %v6348
      %v6781 = vpack.c.b16 %v6385, %v6349
      %v6782 = vpack.c.b16 %v6386, %v6350
      %v6783 = vpack.c.b16 %v6387, %v6351
      %v6784 = vpack.c.b16 %v6388, %v6352
      %v6785 = vpack.c.b16 %v6425, %v6389
      %v6786 = vpack.c.b16 %v6426, %v6390
      %v6787 = vpack.c.b16 %v6427, %v6391
      %v6788 = vpack.c.b16 %v6428, %v6392
      %v6789 = vpack.c.b16 %v6429, %v6393
      %v6790 = vpack.c.b16 %v6430, %v6394
      %v6791 = vpack.c.b16 %v6431, %v6395
      %v6792 = vpack.c.b16 %v6432, %v6396
      %v6793 = vpack.c.b16 %v6433, %v6397
      %v6794 = vpack.c.b16 %v6434, %v6398
      %v6795 = vpack.c.b16 %v6435, %v6399
      %v6796 = vpack.c.b16 %v6436, %v6400
      %v6797 = vpack.c.b16 %v6437, %v6401
      %v6798 = vpack.c.b16 %v6438, %v6402
      %v6799 = vpack.c.b16 %v6439, %v6403
      %v6800 = vpack.c.b16 %v6440, %v6404
      %v6801 = vpack.c.b16 %v6441, %v6405
      %v6802 = vpack.c.b16 %v6442, %v6406
      %v6803 = vpack.c.b16 %v6443, %v6407
      %v6804 = vpack.c.b16 %v6444, %v6408
      %v6805 = vpack.c.b16 %v6445, %v6409
      %v6806 = vpack.c.b16 %v6446, %v6410
      %v6807 = vpack.c.b16 %v6447, %v6411
      %v6808 = vpack.c.b16 %v6448, %v6412
      %v6809 = vpack.c.b16 %v6449, %v6413
      %v6810 = vpack.c.b16 %v6450, %v6414
      %v6811 = vpack.c.b16 %v6451, %v6415
      %v6812 = vpack.c.b16 %v6452, %v6416
      %v6813 = vpack.c.b16 %v6453, %v6417
      %v6814 = vpack.c.b16 %v6454, %v6418
      %v6815 = vpack.c.b16 %v6455, %v6419
      %v6816 = vpack.c.b16 %v6456, %v6420
      %v6817 = vpack.c.b16 %v6457, %v6421
      %v6818 = vpack.c.b16 %v6458, %v6422
      %v6819 = vpack.c.b16 %v6459, %v6423
      %v6820 = vpack.c.b16 %v6460, %v6424
      %v6821 = vpack.c.b16 %v6497, %v6461
      %v6822 = vpack.c.b16 %v6498, %v6462
      %v6823 = vpack.c.b16 %v6499, %v6463
      %v6824 = vpack.c.b16 %v6500, %v6464
      %v6825 = vpack.c.b16 %v6501, %v6465
      %v6826 = vpack.c.b16 %v6502, %v6466
      %v6827 = vpack.c.b16 %v6503, %v6467
      %v6828 = vpack.c.b16 %v6504, %v6468
      %v6829 = vpack.c.b16 %v6505, %v6469
      %v6830 = vpack.c.b16 %v6506, %v6470
      %v6831 = vpack.c.b16 %v6507, %v6471
      %v6832 = vpack.c.b16 %v6508, %v6472
      %v6833 = vpack.c.b16 %v6509, %v6473
      %v6834 = vpack.c.b16 %v6510, %v6474
      %v6835 = vpack.c.b16 %v6511, %v6475
      %v6836 = vpack.c.b16 %v6512, %v6476
      %v6837 = vpack.c.b16 %v6513, %v6477
      %v6838 = vpack.c.b16 %v6514, %v6478
      %v6839 = vpack.c.b16 %v6515, %v6479
      %v6840 = vpack.c.b16 %v6516, %v6480
      %v6841 = vpack.c.b16 %v6517, %v6481
      %v6842 = vpack.c.b16 %v6518, %v6482
      %v6843 = vpack.c.b16 %v6519, %v6483
      %v6844 = vpack.c.b16 %v6520, %v6484
      %v6845 = vpack.c.b16 %v6521, %v6485
      %v6846 = vpack.c.b16 %v6522, %v6486
      %v6847 = vpack.c.b16 %v6523, %v6487
      %v6848 = vpack.c.b16 %v6524, %v6488
      %v6849 = vpack.c.b16 %v6525, %v6489
      %v6850 = vpack.c.b16 %v6526, %v6490
      %v6851 = vpack.c.b16 %v6527, %v6491
      %v6852 = vpack.c.b16 %v6528, %v6492
      %v6853 = vpack.c.b16 %v6529, %v6493
      %v6854 = vpack.c.b16 %v6530, %v6494
      %v6855 = vpack.c.b16 %v6531, %v6495
      %v6856 = vpack.c.b16 %v6532, %v6496
      %v6857 = vpack.c.b16 %v6569, %v6533
      %v6858 = vpack.c.b16 %v6570, %v6534
      %v6859 = vpack.c.b16 %v6571, %v6535
      %v6860 = vpack.c.b16 %v6572, %v6536
      %v6861 = vpack.c.b16 %v6573, %v6537
      %v6862 = vpack.c.b16 %v6574, %v6538
      %v6863 = vpack.c.b16 %v6575, %v6539
      %v6864 = vpack.c.b16 %v6576, %v6540
      %v6865 = vpack.c.b16 %v6577, %v6541
      %v6866 = vpack.c.b16 %v6578, %v6542
      %v6867 = vpack.c.b16 %v6579, %v6543
      %v6868 = vpack.c.b16 %v6580, %v6544
      %v6869 = vpack.c.b16 %v6581, %v6545
      %v6870 = vpack.c.b16 %v6582, %v6546
      %v6871 = vpack.c.b16 %v6583, %v6547
      %v6872 = vpack.c.b16 %v6584, %v6548
      %v6873 = vpack.c.b16 %v6585, %v6549
      %v6874 = vpack.c.b16 %v6586, %v6550
      %v6875 = vpack.c.b16 %v6587, %v6551
      %v6876 = vpack.c.b16 %v6588, %v6552
      %v6877 = vpack.c.b16 %v6589, %v6553
      %v6878 = vpack.c.b16 %v6590, %v6554
      %v6879 = vpack.c.b16 %v6591, %v6555
      %v6880 = vpack.c.b16 %v6592, %v6556
      %v6881 = vpack.c.b16 %v6593, %v6557
      %v6882 = vpack.c.b16 %v6594, %v6558
      %v6883 = vpack.c.b16 %v6595, %v6559
      %v6884 = vpack.c.b16 %v6596, %v6560
      %v6885 = vpack.c.b16 %v6597, %v6561
      %v6886 = vpack.c.b16 %v6598, %v6562
      %v6887 = vpack.c.b16 %v6599, %v6563
      %v6888 = vpack.c.b16 %v6600, %v6564
      %v6889 = vpack.c.b16 %v6601, %v6565
      %v6890 = vpack.c.b16 %v6602, %v6566
      %v6891 = vpack.c.b16 %v6603, %v6567
      %v6892 = vpack.c.b16 %v6604, %v6568
      %v6893 = vpack.c.b16 %v6641, %v6605
      %v6894 = vpack.c.b16 %v6642, %v6606
      %v6895 = vpack.c.b16 %v6643, %v6607
      %v6896 = vpack.c.b16 %v6644, %v6608
      %v6897 = vpack.c.b16 %v6645, %v6609
      %v6898 = vpack.c.b16 %v6646, %v6610
      %v6899 = vpack.c.b16 %v6647, %v6611
      %v6900 = vpack.c.b16 %v6648, %v6612
      %v6901 = vpack.c.b16 %v6649, %v6613
      %v6902 = vpack.c.b16 %v6650, %v6614
      %v6903 = vpack.c.b16 %v6651, %v6615
      %v6904 = vpack.c.b16 %v6652, %v6616
      %v6905 = vpack.c.b16 %v6653, %v6617
      %v6906 = vpack.c.b16 %v6654, %v6618
      %v6907 = vpack.c.b16 %v6655, %v6619
      %v6908 = vpack.c.b16 %v6656, %v6620
      %v6909 = vpack.c.b16 %v6657, %v6621
      %v6910 = vpack.c.b16 %v6658, %v6622
      %v6911 = vpack.c.b16 %v6659, %v6623
      %v6912 = vpack.c.b16 %v6660, %v6624
      %v6913 = vpack.c.b16 %v6661, %v6625
      %v6914 = vpack.c.b16 %v6662, %v6626
      %v6915 = vpack.c.b16 %v6663, %v6627
      %v6916 = vpack.c.b16 %v6664, %v6628
      %v6917 = vpack.c.b16 %v6665, %v6629
      %v6918 = vpack.c.b16 %v6666, %v6630
      %v6919 = vpack.c.b16 %v6667, %v6631
      %v6920 = vpack.c.b16 %v6668, %v6632
      %v6921 = vpack.c.b16 %v6669, %v6633
      %v6922 = vpack.c.b16 %v6670, %v6634
      %v6923 = vpack.c.b16 %v6671, %v6635
      %v6924 = vpack.c.b16 %v6672, %v6636
      %v6925 = vpack.c.b16 %v6673, %v6637
      %v6926 = vpack.c.b16 %v6674, %v6638
      %v6927 = vpack.c.b16 %v6675, %v6639
      %v6928 = vpack.c.b16 %v6676, %v6640
      %vm7145 = vcmask 883712
      %v7147 = vsel %vm7145, %v5668, 0
      %vm7149 = vcmask 1045504
      %v7151 = vsel %vm7149, %v6893, 0
      %v7154 = vsel %vm7149, %v6894, 0
      %v7157 = vsel %vm7149, %v6895, 0
      %v7160 = vsel %vm7149, %v6896, 0
      %v7163 = vsel %vm7149, %v6897, 0
      %v7166 = vsel %vm7149, %v6898, 0
      %v7169 = vsel %vm7149, %v6899, 0
      %v7172 = vsel %vm7149, %v6900, 0
      %v7175 = vsel %vm7149, %v6901, 0
      %v7178 = vsel %vm7149, %v6902, 0
      %v7181 = vsel %vm7149, %v6903, 0
      %v7184 = vsel %vm7149, %v6904, 0
      %v7187 = vsel %vm7149, %v6905, 0
      %v7190 = vsel %vm7149, %v6906, 0
      %v7193 = vsel %vm7149, %v6907, 0
      %v7196 = vsel %vm7149, %v6908, 0
      %v7199 = vsel %vm7149, %v6909, 0
      %v7202 = vsel %vm7149, %v6910, 0
      %v7205 = vsel %vm7149, %v6911, 0
      %v7208 = vsel %vm7149, %v6912, 0
      %v7211 = vsel %vm7149, %v6913, 0
      %v7214 = vsel %vm7149, %v6914, 0
      %v7217 = vsel %vm7149, %v6915, 0
      %v7220 = vsel %vm7149, %v6916, 0
      %v7223 = vsel %vm7149, %v6917, 0
      %v7226 = vsel %vm7149, %v6918, 0
      %v7229 = vsel %vm7149, %v6919, 0
      %v7232 = vsel %vm7149, %v6920, 0
      %v7235 = vsel %vm7149, %v6921, 0
      %v7238 = vsel %vm7149, %v6922, 0
      %v7241 = vsel %vm7149, %v6923, 0
      %v7244 = vsel %vm7149, %v6924, 0
      %v7247 = vsel %vm7149, %v6925, 0
      %v7250 = vsel %vm7149, %v6926, 0
      %v7253 = vsel %vm7149, %v6927, 0
      %v7256 = vsel %vm7149, %v6928, 0
      %7258 = vmatpush.bf16.msra.mxu0 0
      %7259 = vmatpush.bf16.msra.mxu0 %v7151
      %7260 = vmatpush.bf16.msra.mxu0 %v6857
      %7261 = vmatpush.bf16.msra.mxu0 %v6821
      %7262 = vmatpush.bf16.msra.mxu0 %v6785
      %7263 = vmatpush.bf16.msra.mxu0 %v6749
      %7264 = vmatpush.bf16.msra.mxu0 %v6713
      %7265 = vmatpush.bf16.msra.mxu0 %v6677
      %7266 = vmatmul.bf16.gmra.mxu0 %v7147
      %v7267 = vpop.f32.mrf.mxu0
      %v7268 = vadd.f32 0.0, %v7267
      %v7269 = vpop.f32.mrf.mxu0
      %7270 = vdwg.mxu0
      %7271 = vmatpush.bf16.msra.mxu0 0
      %7272 = vmatpush.bf16.msra.mxu0 %v7154
      %7273 = vmatpush.bf16.msra.mxu0 %v6858
      %7274 = vmatpush.bf16.msra.mxu0 %v6822
      %7275 = vmatpush.bf16.msra.mxu0 %v6786
      %7276 = vmatpush.bf16.msra.mxu0 %v6750
      %7277 = vmatpush.bf16.msra.mxu0 %v6714
      %7278 = vmatpush.bf16.msra.mxu0 %v6678
      %7279 = vmatmul.bf16.gmra.mxu0 %v7147
      %v7280 = vpop.f32.mrf.mxu0
      %v7281 = vadd.f32 0.0, %v7280
      %v7282 = vpop.f32.mrf.mxu0
      %7283 = vdwg.mxu0
      %7284 = vmatpush.bf16.msra.mxu0 0
      %7285 = vmatpush.bf16.msra.mxu0 %v7157
      %7286 = vmatpush.bf16.msra.mxu0 %v6859
      %7287 = vmatpush.bf16.msra.mxu0 %v6823
      %7288 = vmatpush.bf16.msra.mxu0 %v6787
      %7289 = vmatpush.bf16.msra.mxu0 %v6751
      %7290 = vmatpush.bf16.msra.mxu0 %v6715
      %7291 = vmatpush.bf16.msra.mxu0 %v6679
      %7292 = vmatmul.bf16.gmra.mxu0 %v7147
      %v7293 = vpop.f32.mrf.mxu0
      %v7294 = vadd.f32 0.0, %v7293
      %v7295 = vpop.f32.mrf.mxu0
      %7296 = vdwg.mxu0
      %7297 = vmatpush.bf16.msra.mxu0 0
      %7298 = vmatpush.bf16.msra.mxu0 %v7160
      %7299 = vmatpush.bf16.msra.mxu0 %v6860
      %7300 = vmatpush.bf16.msra.mxu0 %v6824
      %7301 = vmatpush.bf16.msra.mxu0 %v6788
      %7302 = vmatpush.bf16.msra.mxu0 %v6752
      %7303 = vmatpush.bf16.msra.mxu0 %v6716
      %7304 = vmatpush.bf16.msra.mxu0 %v6680
      %7305 = vmatmul.bf16.gmra.mxu0 %v7147
      %v7306 = vpop.f32.mrf.mxu0
      %v7307 = vadd.f32 0.0, %v7306
      %v7308 = vpop.f32.mrf.mxu0
      %7309 = vdwg.mxu0
      %7310 = vmatpush.bf16.msra.mxu0 0
      %7311 = vmatpush.bf16.msra.mxu0 %v7163
      %7312 = vmatpush.bf16.msra.mxu0 %v6861
      %7313 = vmatpush.bf16.msra.mxu0 %v6825
      %7314 = vmatpush.bf16.msra.mxu0 %v6789
      %7315 = vmatpush.bf16.msra.mxu0 %v6753
      %7316 = vmatpush.bf16.msra.mxu0 %v6717
      %7317 = vmatpush.bf16.msra.mxu0 %v6681
      %7318 = vmatmul.bf16.gmra.mxu0 %v7147
      %v7319 = vpop.f32.mrf.mxu0
      %v7320 = vadd.f32 0.0, %v7319
      %v7321 = vpop.f32.mrf.mxu0
      %7322 = vdwg.mxu0
      %7323 = vmatpush.bf16.msra.mxu0 0
      %7324 = vmatpush.bf16.msra.mxu0 %v7166
      %7325 = vmatpush.bf16.msra.mxu0 %v6862
      %7326 = vmatpush.bf16.msra.mxu0 %v6826
      %7327 = vmatpush.bf16.msra.mxu0 %v6790
      %7328 = vmatpush.bf16.msra.mxu0 %v6754
      %7329 = vmatpush.bf16.msra.mxu0 %v6718
      %7330 = vmatpush.bf16.msra.mxu0 %v6682
      %7331 = vmatmul.bf16.gmra.mxu0 %v7147
      %v7332 = vpop.f32.mrf.mxu0
      %v7333 = vadd.f32 0.0, %v7332
      %v7334 = vpop.f32.mrf.mxu0
      %7335 = vdwg.mxu0
      %7336 = vmatpush.bf16.msra.mxu0 0
      %7337 = vmatpush.bf16.msra.mxu0 %v7169
      %7338 = vmatpush.bf16.msra.mxu0 %v6863
      %7339 = vmatpush.bf16.msra.mxu0 %v6827
      %7340 = vmatpush.bf16.msra.mxu0 %v6791
      %7341 = vmatpush.bf16.msra.mxu0 %v6755
      %7342 = vmatpush.bf16.msra.mxu0 %v6719
      %7343 = vmatpush.bf16.msra.mxu0 %v6683
      %7344 = vmatmul.bf16.gmra.mxu0 %v7147
      %v7345 = vpop.f32.mrf.mxu0
      %v7346 = vadd.f32 0.0, %v7345
      %v7347 = vpop.f32.mrf.mxu0
      %7348 = vdwg.mxu0
      %7349 = vmatpush.bf16.msra.mxu0 0
      %7350 = vmatpush.bf16.msra.mxu0 %v7172
      %7351 = vmatpush.bf16.msra.mxu0 %v6864
      %7352 = vmatpush.bf16.msra.mxu0 %v6828
      %7353 = vmatpush.bf16.msra.mxu0 %v6792
      %7354 = vmatpush.bf16.msra.mxu0 %v6756
      %7355 = vmatpush.bf16.msra.mxu0 %v6720
      %7356 = vmatpush.bf16.msra.mxu0 %v6684
      %7357 = vmatmul.bf16.gmra.mxu0 %v7147
      %v7358 = vpop.f32.mrf.mxu0
      %v7359 = vadd.f32 0.0, %v7358
      %v7360 = vpop.f32.mrf.mxu0
      %7361 = vdwg.mxu0
      %7362 = vmatpush.bf16.msra.mxu0 0
      %7363 = vmatpush.bf16.msra.mxu0 %v7175
      %7364 = vmatpush.bf16.msra.mxu0 %v6865
      %7365 = vmatpush.bf16.msra.mxu0 %v6829
      %7366 = vmatpush.bf16.msra.mxu0 %v6793
      %7367 = vmatpush.bf16.msra.mxu0 %v6757
      %7368 = vmatpush.bf16.msra.mxu0 %v6721
      %7369 = vmatpush.bf16.msra.mxu0 %v6685
      %7370 = vmatmul.bf16.gmra.mxu0 %v7147
      %v7371 = vpop.f32.mrf.mxu0
      %v7372 = vadd.f32 0.0, %v7371
      %v7373 = vpop.f32.mrf.mxu0
      %7374 = vdwg.mxu0
      %7375 = vmatpush.bf16.msra.mxu0 0
      %7376 = vmatpush.bf16.msra.mxu0 %v7178
      %7377 = vmatpush.bf16.msra.mxu0 %v6866
      %7378 = vmatpush.bf16.msra.mxu0 %v6830
      %7379 = vmatpush.bf16.msra.mxu0 %v6794
      %7380 = vmatpush.bf16.msra.mxu0 %v6758
      %7381 = vmatpush.bf16.msra.mxu0 %v6722
      %7382 = vmatpush.bf16.msra.mxu0 %v6686
      %7383 = vmatmul.bf16.gmra.mxu0 %v7147
      %v7384 = vpop.f32.mrf.mxu0
      %v7385 = vadd.f32 0.0, %v7384
      %v7386 = vpop.f32.mrf.mxu0
      %7387 = vdwg.mxu0
      %7388 = vmatpush.bf16.msra.mxu0 0
      %7389 = vmatpush.bf16.msra.mxu0 %v7181
      %7390 = vmatpush.bf16.msra.mxu0 %v6867
      %7391 = vmatpush.bf16.msra.mxu0 %v6831
      %7392 = vmatpush.bf16.msra.mxu0 %v6795
      %7393 = vmatpush.bf16.msra.mxu0 %v6759
      %7394 = vmatpush.bf16.msra.mxu0 %v6723
      %7395 = vmatpush.bf16.msra.mxu0 %v6687
      %7396 = vmatmul.bf16.gmra.mxu0 %v7147
      %v7397 = vpop.f32.mrf.mxu0
      %v7398 = vadd.f32 0.0, %v7397
      %v7399 = vpop.f32.mrf.mxu0
      %7400 = vdwg.mxu0
      %7401 = vmatpush.bf16.msra.mxu0 0
      %7402 = vmatpush.bf16.msra.mxu0 %v7184
      %7403 = vmatpush.bf16.msra.mxu0 %v6868
      %7404 = vmatpush.bf16.msra.mxu0 %v6832
      %7405 = vmatpush.bf16.msra.mxu0 %v6796
      %7406 = vmatpush.bf16.msra.mxu0 %v6760
      %7407 = vmatpush.bf16.msra.mxu0 %v6724
      %7408 = vmatpush.bf16.msra.mxu0 %v6688
      %7409 = vmatmul.bf16.gmra.mxu0 %v7147
      %v7410 = vpop.f32.mrf.mxu0
      %v7411 = vadd.f32 0.0, %v7410
      %v7412 = vpop.f32.mrf.mxu0
      %7413 = vdwg.mxu0
      %7414 = vmatpush.bf16.msra.mxu0 0
      %7415 = vmatpush.bf16.msra.mxu0 %v7187
      %7416 = vmatpush.bf16.msra.mxu0 %v6869
      %7417 = vmatpush.bf16.msra.mxu0 %v6833
      %7418 = vmatpush.bf16.msra.mxu0 %v6797
      %7419 = vmatpush.bf16.msra.mxu0 %v6761
      %7420 = vmatpush.bf16.msra.mxu0 %v6725
      %7421 = vmatpush.bf16.msra.mxu0 %v6689
      %7422 = vmatmul.bf16.gmra.mxu0 %v7147
      %v7423 = vpop.f32.mrf.mxu0
      %v7424 = vadd.f32 0.0, %v7423
      %v7425 = vpop.f32.mrf.mxu0
      %7426 = vdwg.mxu0
      %7427 = vmatpush.bf16.msra.mxu0 0
      %7428 = vmatpush.bf16.msra.mxu0 %v7190
      %7429 = vmatpush.bf16.msra.mxu0 %v6870
      %7430 = vmatpush.bf16.msra.mxu0 %v6834
      %7431 = vmatpush.bf16.msra.mxu0 %v6798
      %7432 = vmatpush.bf16.msra.mxu0 %v6762
      %7433 = vmatpush.bf16.msra.mxu0 %v6726
      %7434 = vmatpush.bf16.msra.mxu0 %v6690
      %7435 = vmatmul.bf16.gmra.mxu0 %v7147
      %v7436 = vpop.f32.mrf.mxu0
      %v7437 = vadd.f32 0.0, %v7436
      %v7438 = vpop.f32.mrf.mxu0
      %7439 = vdwg.mxu0
      %7440 = vmatpush.bf16.msra.mxu0 0
      %7441 = vmatpush.bf16.msra.mxu0 %v7193
      %7442 = vmatpush.bf16.msra.mxu0 %v6871
      %7443 = vmatpush.bf16.msra.mxu0 %v6835
      %7444 = vmatpush.bf16.msra.mxu0 %v6799
      %7445 = vmatpush.bf16.msra.mxu0 %v6763
      %7446 = vmatpush.bf16.msra.mxu0 %v6727
      %7447 = vmatpush.bf16.msra.mxu0 %v6691
      %7448 = vmatmul.bf16.gmra.mxu0 %v7147
      %v7449 = vpop.f32.mrf.mxu0
      %v7450 = vadd.f32 0.0, %v7449
      %v7451 = vpop.f32.mrf.mxu0
      %7452 = vdwg.mxu0
      %7453 = vmatpush.bf16.msra.mxu0 0
      %7454 = vmatpush.bf16.msra.mxu0 %v7196
      %7455 = vmatpush.bf16.msra.mxu0 %v6872
      %7456 = vmatpush.bf16.msra.mxu0 %v6836
      %7457 = vmatpush.bf16.msra.mxu0 %v6800
      %7458 = vmatpush.bf16.msra.mxu0 %v6764
      %7459 = vmatpush.bf16.msra.mxu0 %v6728
      %7460 = vmatpush.bf16.msra.mxu0 %v6692
      %7461 = vmatmul.bf16.gmra.mxu0 %v7147
      %v7462 = vpop.f32.mrf.mxu0
      %v7463 = vadd.f32 0.0, %v7462
      %v7464 = vpop.f32.mrf.mxu0
      %7465 = vdwg.mxu0
      %7466 = vmatpush.bf16.msra.mxu0 0
      %7467 = vmatpush.bf16.msra.mxu0 %v7199
      %7468 = vmatpush.bf16.msra.mxu0 %v6873
      %7469 = vmatpush.bf16.msra.mxu0 %v6837
      %7470 = vmatpush.bf16.msra.mxu0 %v6801
      %7471 = vmatpush.bf16.msra.mxu0 %v6765
      %7472 = vmatpush.bf16.msra.mxu0 %v6729
      %7473 = vmatpush.bf16.msra.mxu0 %v6693
      %7474 = vmatmul.bf16.gmra.mxu0 %v7147
      %v7475 = vpop.f32.mrf.mxu0
      %v7476 = vadd.f32 0.0, %v7475
      %v7477 = vpop.f32.mrf.mxu0
      %7478 = vdwg.mxu0
      %7479 = vmatpush.bf16.msra.mxu0 0
      %7480 = vmatpush.bf16.msra.mxu0 %v7202
      %7481 = vmatpush.bf16.msra.mxu0 %v6874
      %7482 = vmatpush.bf16.msra.mxu0 %v6838
      %7483 = vmatpush.bf16.msra.mxu0 %v6802
      %7484 = vmatpush.bf16.msra.mxu0 %v6766
      %7485 = vmatpush.bf16.msra.mxu0 %v6730
      %7486 = vmatpush.bf16.msra.mxu0 %v6694
      %7487 = vmatmul.bf16.gmra.mxu0 %v7147
      %v7488 = vpop.f32.mrf.mxu0
      %v7489 = vadd.f32 0.0, %v7488
      %v7490 = vpop.f32.mrf.mxu0
      %7491 = vdwg.mxu0
      %7492 = vmatpush.bf16.msra.mxu0 0
      %7493 = vmatpush.bf16.msra.mxu0 %v7205
      %7494 = vmatpush.bf16.msra.mxu0 %v6875
      %7495 = vmatpush.bf16.msra.mxu0 %v6839
      %7496 = vmatpush.bf16.msra.mxu0 %v6803
      %7497 = vmatpush.bf16.msra.mxu0 %v6767
      %7498 = vmatpush.bf16.msra.mxu0 %v6731
      %7499 = vmatpush.bf16.msra.mxu0 %v6695
      %7500 = vmatmul.bf16.gmra.mxu0 %v7147
      %v7501 = vpop.f32.mrf.mxu0
      %v7502 = vadd.f32 0.0, %v7501
      %v7503 = vpop.f32.mrf.mxu0
      %7504 = vdwg.mxu0
      %7505 = vmatpush.bf16.msra.mxu0 0
      %7506 = vmatpush.bf16.msra.mxu0 %v7208
      %7507 = vmatpush.bf16.msra.mxu0 %v6876
      %7508 = vmatpush.bf16.msra.mxu0 %v6840
      %7509 = vmatpush.bf16.msra.mxu0 %v6804
      %7510 = vmatpush.bf16.msra.mxu0 %v6768
      %7511 = vmatpush.bf16.msra.mxu0 %v6732
      %7512 = vmatpush.bf16.msra.mxu0 %v6696
      %7513 = vmatmul.bf16.gmra.mxu0 %v7147
      %v7514 = vpop.f32.mrf.mxu0
      %v7515 = vadd.f32 0.0, %v7514
      %v7516 = vpop.f32.mrf.mxu0
      %7517 = vdwg.mxu0
      %7518 = vmatpush.bf16.msra.mxu0 0
      %7519 = vmatpush.bf16.msra.mxu0 %v7211
      %7520 = vmatpush.bf16.msra.mxu0 %v6877
      %7521 = vmatpush.bf16.msra.mxu0 %v6841
      %7522 = vmatpush.bf16.msra.mxu0 %v6805
      %7523 = vmatpush.bf16.msra.mxu0 %v6769
      %7524 = vmatpush.bf16.msra.mxu0 %v6733
      %7525 = vmatpush.bf16.msra.mxu0 %v6697
      %7526 = vmatmul.bf16.gmra.mxu0 %v7147
      %v7527 = vpop.f32.mrf.mxu0
      %v7528 = vadd.f32 0.0, %v7527
      %v7529 = vpop.f32.mrf.mxu0
      %7530 = vdwg.mxu0
      %7531 = vmatpush.bf16.msra.mxu0 0
      %7532 = vmatpush.bf16.msra.mxu0 %v7214
      %7533 = vmatpush.bf16.msra.mxu0 %v6878
      %7534 = vmatpush.bf16.msra.mxu0 %v6842
      %7535 = vmatpush.bf16.msra.mxu0 %v6806
      %7536 = vmatpush.bf16.msra.mxu0 %v6770
      %7537 = vmatpush.bf16.msra.mxu0 %v6734
      %7538 = vmatpush.bf16.msra.mxu0 %v6698
      %7539 = vmatmul.bf16.gmra.mxu0 %v7147
      %v7540 = vpop.f32.mrf.mxu0
      %v7541 = vadd.f32 0.0, %v7540
      %v7542 = vpop.f32.mrf.mxu0
      %7543 = vdwg.mxu0
      %7544 = vmatpush.bf16.msra.mxu0 0
      %7545 = vmatpush.bf16.msra.mxu0 %v7217
      %7546 = vmatpush.bf16.msra.mxu0 %v6879
      %7547 = vmatpush.bf16.msra.mxu0 %v6843
      %7548 = vmatpush.bf16.msra.mxu0 %v6807
      %7549 = vmatpush.bf16.msra.mxu0 %v6771
      %7550 = vmatpush.bf16.msra.mxu0 %v6735
      %7551 = vmatpush.bf16.msra.mxu0 %v6699
      %7552 = vmatmul.bf16.gmra.mxu0 %v7147
      %v7553 = vpop.f32.mrf.mxu0
      %v7554 = vadd.f32 0.0, %v7553
      %v7555 = vpop.f32.mrf.mxu0
      %7556 = vdwg.mxu0
      %7557 = vmatpush.bf16.msra.mxu0 0
      %7558 = vmatpush.bf16.msra.mxu0 %v7220
      %7559 = vmatpush.bf16.msra.mxu0 %v6880
      %7560 = vmatpush.bf16.msra.mxu0 %v6844
      %7561 = vmatpush.bf16.msra.mxu0 %v6808
      %7562 = vmatpush.bf16.msra.mxu0 %v6772
      %7563 = vmatpush.bf16.msra.mxu0 %v6736
      %7564 = vmatpush.bf16.msra.mxu0 %v6700
      %7565 = vmatmul.bf16.gmra.mxu0 %v7147
      %v7566 = vpop.f32.mrf.mxu0
      %v7567 = vadd.f32 0.0, %v7566
      %v7568 = vpop.f32.mrf.mxu0
      %7569 = vdwg.mxu0
      %7570 = vmatpush.bf16.msra.mxu0 0
      %7571 = vmatpush.bf16.msra.mxu0 %v7223
      %7572 = vmatpush.bf16.msra.mxu0 %v6881
      %7573 = vmatpush.bf16.msra.mxu0 %v6845
      %7574 = vmatpush.bf16.msra.mxu0 %v6809
      %7575 = vmatpush.bf16.msra.mxu0 %v6773
      %7576 = vmatpush.bf16.msra.mxu0 %v6737
      %7577 = vmatpush.bf16.msra.mxu0 %v6701
      %7578 = vmatmul.bf16.gmra.mxu0 %v7147
      %v7579 = vpop.f32.mrf.mxu0
      %v7580 = vadd.f32 0.0, %v7579
      %v7581 = vpop.f32.mrf.mxu0
      %7582 = vdwg.mxu0
      %7583 = vmatpush.bf16.msra.mxu0 0
      %7584 = vmatpush.bf16.msra.mxu0 %v7226
      %7585 = vmatpush.bf16.msra.mxu0 %v6882
      %7586 = vmatpush.bf16.msra.mxu0 %v6846
      %7587 = vmatpush.bf16.msra.mxu0 %v6810
      %7588 = vmatpush.bf16.msra.mxu0 %v6774
      %7589 = vmatpush.bf16.msra.mxu0 %v6738
      %7590 = vmatpush.bf16.msra.mxu0 %v6702
      %7591 = vmatmul.bf16.gmra.mxu0 %v7147
      %v7592 = vpop.f32.mrf.mxu0
      %v7593 = vadd.f32 0.0, %v7592
      %v7594 = vpop.f32.mrf.mxu0
      %7595 = vdwg.mxu0
      %7596 = vmatpush.bf16.msra.mxu0 0
      %7597 = vmatpush.bf16.msra.mxu0 %v7229
      %7598 = vmatpush.bf16.msra.mxu0 %v6883
      %7599 = vmatpush.bf16.msra.mxu0 %v6847
      %7600 = vmatpush.bf16.msra.mxu0 %v6811
      %7601 = vmatpush.bf16.msra.mxu0 %v6775
      %7602 = vmatpush.bf16.msra.mxu0 %v6739
      %7603 = vmatpush.bf16.msra.mxu0 %v6703
      %7604 = vmatmul.bf16.gmra.mxu0 %v7147
      %v7605 = vpop.f32.mrf.mxu0
      %v7606 = vadd.f32 0.0, %v7605
      %v7607 = vpop.f32.mrf.mxu0
      %7608 = vdwg.mxu0
      %7609 = vmatpush.bf16.msra.mxu0 0
      %7610 = vmatpush.bf16.msra.mxu0 %v7232
      %7611 = vmatpush.bf16.msra.mxu0 %v6884
      %7612 = vmatpush.bf16.msra.mxu0 %v6848
      %7613 = vmatpush.bf16.msra.mxu0 %v6812
      %7614 = vmatpush.bf16.msra.mxu0 %v6776
      %7615 = vmatpush.bf16.msra.mxu0 %v6740
      %7616 = vmatpush.bf16.msra.mxu0 %v6704
      %7617 = vmatmul.bf16.gmra.mxu0 %v7147
      %v7618 = vpop.f32.mrf.mxu0
      %v7619 = vadd.f32 0.0, %v7618
      %v7620 = vpop.f32.mrf.mxu0
      %7621 = vdwg.mxu0
      %7622 = vmatpush.bf16.msra.mxu0 0
      %7623 = vmatpush.bf16.msra.mxu0 %v7235
      %7624 = vmatpush.bf16.msra.mxu0 %v6885
      %7625 = vmatpush.bf16.msra.mxu0 %v6849
      %7626 = vmatpush.bf16.msra.mxu0 %v6813
      %7627 = vmatpush.bf16.msra.mxu0 %v6777
      %7628 = vmatpush.bf16.msra.mxu0 %v6741
      %7629 = vmatpush.bf16.msra.mxu0 %v6705
      %7630 = vmatmul.bf16.gmra.mxu0 %v7147
      %v7631 = vpop.f32.mrf.mxu0
      %v7632 = vadd.f32 0.0, %v7631
      %v7633 = vpop.f32.mrf.mxu0
      %7634 = vdwg.mxu0
      %7635 = vmatpush.bf16.msra.mxu0 0
      %7636 = vmatpush.bf16.msra.mxu0 %v7238
      %7637 = vmatpush.bf16.msra.mxu0 %v6886
      %7638 = vmatpush.bf16.msra.mxu0 %v6850
      %7639 = vmatpush.bf16.msra.mxu0 %v6814
      %7640 = vmatpush.bf16.msra.mxu0 %v6778
      %7641 = vmatpush.bf16.msra.mxu0 %v6742
      %7642 = vmatpush.bf16.msra.mxu0 %v6706
      %7643 = vmatmul.bf16.gmra.mxu0 %v7147
      %v7644 = vpop.f32.mrf.mxu0
      %v7645 = vadd.f32 0.0, %v7644
      %v7646 = vpop.f32.mrf.mxu0
      %7647 = vdwg.mxu0
      %7648 = vmatpush.bf16.msra.mxu0 0
      %7649 = vmatpush.bf16.msra.mxu0 %v7241
      %7650 = vmatpush.bf16.msra.mxu0 %v6887
      %7651 = vmatpush.bf16.msra.mxu0 %v6851
      %7652 = vmatpush.bf16.msra.mxu0 %v6815
      %7653 = vmatpush.bf16.msra.mxu0 %v6779
      %7654 = vmatpush.bf16.msra.mxu0 %v6743
      %7655 = vmatpush.bf16.msra.mxu0 %v6707
      %7656 = vmatmul.bf16.gmra.mxu0 %v7147
      %v7657 = vpop.f32.mrf.mxu0
      %v7658 = vadd.f32 0.0, %v7657
      %v7659 = vpop.f32.mrf.mxu0
      %7660 = vdwg.mxu0
      %7661 = vmatpush.bf16.msra.mxu0 0
      %7662 = vmatpush.bf16.msra.mxu0 %v7244
      %7663 = vmatpush.bf16.msra.mxu0 %v6888
      %7664 = vmatpush.bf16.msra.mxu0 %v6852
      %7665 = vmatpush.bf16.msra.mxu0 %v6816
      %7666 = vmatpush.bf16.msra.mxu0 %v6780
      %7667 = vmatpush.bf16.msra.mxu0 %v6744
      %7668 = vmatpush.bf16.msra.mxu0 %v6708
      %7669 = vmatmul.bf16.gmra.mxu0 %v7147
      %v7670 = vpop.f32.mrf.mxu0
      %v7671 = vadd.f32 0.0, %v7670
      %v7672 = vpop.f32.mrf.mxu0
      %7673 = vdwg.mxu0
      %7674 = vmatpush.bf16.msra.mxu0 0
      %7675 = vmatpush.bf16.msra.mxu0 %v7247
      %7676 = vmatpush.bf16.msra.mxu0 %v6889
      %7677 = vmatpush.bf16.msra.mxu0 %v6853
      %7678 = vmatpush.bf16.msra.mxu0 %v6817
      %7679 = vmatpush.bf16.msra.mxu0 %v6781
      %7680 = vmatpush.bf16.msra.mxu0 %v6745
      %7681 = vmatpush.bf16.msra.mxu0 %v6709
      %7682 = vmatmul.bf16.gmra.mxu0 %v7147
      %v7683 = vpop.f32.mrf.mxu0
      %v7684 = vadd.f32 0.0, %v7683
      %v7685 = vpop.f32.mrf.mxu0
      %7686 = vdwg.mxu0
      %7687 = vmatpush.bf16.msra.mxu0 0
      %7688 = vmatpush.bf16.msra.mxu0 %v7250
      %7689 = vmatpush.bf16.msra.mxu0 %v6890
      %7690 = vmatpush.bf16.msra.mxu0 %v6854
      %7691 = vmatpush.bf16.msra.mxu0 %v6818
      %7692 = vmatpush.bf16.msra.mxu0 %v6782
      %7693 = vmatpush.bf16.msra.mxu0 %v6746
      %7694 = vmatpush.bf16.msra.mxu0 %v6710
      %7695 = vmatmul.bf16.gmra.mxu0 %v7147
      %v7696 = vpop.f32.mrf.mxu0
      %v7697 = vadd.f32 0.0, %v7696
      %v7698 = vpop.f32.mrf.mxu0
      %7699 = vdwg.mxu0
      %7700 = vmatpush.bf16.msra.mxu0 0
      %7701 = vmatpush.bf16.msra.mxu0 %v7253
      %7702 = vmatpush.bf16.msra.mxu0 %v6891
      %7703 = vmatpush.bf16.msra.mxu0 %v6855
      %7704 = vmatpush.bf16.msra.mxu0 %v6819
      %7705 = vmatpush.bf16.msra.mxu0 %v6783
      %7706 = vmatpush.bf16.msra.mxu0 %v6747
      %7707 = vmatpush.bf16.msra.mxu0 %v6711
      %7708 = vmatmul.bf16.gmra.mxu0 %v7147
      %v7709 = vpop.f32.mrf.mxu0
      %v7710 = vadd.f32 0.0, %v7709
      %v7711 = vpop.f32.mrf.mxu0
      %7712 = vdwg.mxu0
      %7713 = vmatpush.bf16.msra.mxu0 0
      %7714 = vmatpush.bf16.msra.mxu0 %v7256
      %7715 = vmatpush.bf16.msra.mxu0 %v6892
      %7716 = vmatpush.bf16.msra.mxu0 %v6856
      %7717 = vmatpush.bf16.msra.mxu0 %v6820
      %7718 = vmatpush.bf16.msra.mxu0 %v6784
      %7719 = vmatpush.bf16.msra.mxu0 %v6748
      %7720 = vmatpush.bf16.msra.mxu0 %v6712
      %7721 = vmatmul.bf16.gmra.mxu0 %v7147
      %v7722 = vpop.f32.mrf.mxu0
      %v7723 = vadd.f32 0.0, %v7722
      %v7724 = vpop.f32.mrf.mxu0
      %7725 = vdwg.mxu0
      %v7726 = vld [vmem:[%s312] sm:$0xff]
      %v7727 = vld [vmem:[%s312 + $0x8] sm:$0xff]
      %v7728 = vld [vmem:[%s312 + $0x10] sm:$0xff]
      %v7729 = vld [vmem:[%s312 + $0x18] sm:$0xff]
      %v7730 = vld [vmem:[%s312 + $0x20] sm:$0xf]
      %v7731 = vunpack.c.l.bf16 %v7726
      %v7732 = vunpack.c.h.bf16 %v7726
      %v7733 = vunpack.c.l.bf16 %v7727
      %v7734 = vunpack.c.h.bf16 %v7727
      %v7735 = vunpack.c.l.bf16 %v7728
      %v7736 = vunpack.c.h.bf16 %v7728
      %v7737 = vunpack.c.l.bf16 %v7729
      %v7738 = vunpack.c.h.bf16 %v7729
      %v7739 = vunpack.c.l.bf16 %v7730
      %v7749 = vperm.slane %v7731, 0
      %v7750 = vperm.slane %v7731, 2
      %v7751 = vperm.slane %v7731, 4
      %v7752 = vperm.slane %v7731, 6
      %v7753 = vperm.slane %v7732, 0
      %v7754 = vperm.slane %v7732, 2
      %v7755 = vperm.slane %v7732, 4
      %v7756 = vperm.slane %v7732, 6
      %v7757 = vperm.slane %v7733, 0
      %v7758 = vperm.slane %v7733, 2
      %v7759 = vperm.slane %v7733, 4
      %v7760 = vperm.slane %v7733, 6
      %v7761 = vperm.slane %v7734, 0
      %v7762 = vperm.slane %v7734, 2
      %v7763 = vperm.slane %v7734, 4
      %v7764 = vperm.slane %v7734, 6
      %v7765 = vperm.slane %v7735, 0
      %v7766 = vperm.slane %v7735, 2
      %v7767 = vperm.slane %v7735, 4
      %v7768 = vperm.slane %v7735, 6
      %v7769 = vperm.slane %v7736, 0
      %v7770 = vperm.slane %v7736, 2
      %v7771 = vperm.slane %v7736, 4
      %v7772 = vperm.slane %v7736, 6
      %v7773 = vperm.slane %v7737, 0
      %v7774 = vperm.slane %v7737, 2
      %v7775 = vperm.slane %v7737, 4
      %v7776 = vperm.slane %v7737, 6
      %v7777 = vperm.slane %v7738, 0
      %v7778 = vperm.slane %v7738, 2
      %v7779 = vperm.slane %v7738, 4
      %v7780 = vperm.slane %v7738, 6
      %v7781 = vperm.slane %v7739, 0
      %v7782 = vperm.slane %v7739, 2
      %v7783 = vperm.slane %v7739, 4
      %v7784 = vperm.slane %v7739, 6
      %v7821 = vperm.slane %v7749, 0
      %v7822 = vperm.slane %v7750, 0
      %v7823 = vperm.slane %v7751, 0
      %v7824 = vperm.slane %v7752, 0
      %v7825 = vperm.slane %v7753, 0
      %v7826 = vperm.slane %v7754, 0
      %v7827 = vperm.slane %v7755, 0
      %v7828 = vperm.slane %v7756, 0
      %v7829 = vperm.slane %v7757, 0
      %v7830 = vperm.slane %v7758, 0
      %v7831 = vperm.slane %v7759, 0
      %v7832 = vperm.slane %v7760, 0
      %v7833 = vperm.slane %v7761, 0
      %v7834 = vperm.slane %v7762, 0
      %v7835 = vperm.slane %v7763, 0
      %v7836 = vperm.slane %v7764, 0
      %v7837 = vperm.slane %v7765, 0
      %v7838 = vperm.slane %v7766, 0
      %v7839 = vperm.slane %v7767, 0
      %v7840 = vperm.slane %v7768, 0
      %v7841 = vperm.slane %v7769, 0
      %v7842 = vperm.slane %v7770, 0
      %v7843 = vperm.slane %v7771, 0
      %v7844 = vperm.slane %v7772, 0
      %v7845 = vperm.slane %v7773, 0
      %v7846 = vperm.slane %v7774, 0
      %v7847 = vperm.slane %v7775, 0
      %v7848 = vperm.slane %v7776, 0
      %v7849 = vperm.slane %v7777, 0
      %v7850 = vperm.slane %v7778, 0
      %v7851 = vperm.slane %v7779, 0
      %v7852 = vperm.slane %v7780, 0
      %v7853 = vperm.slane %v7781, 0
      %v7854 = vperm.slane %v7782, 0
      %v7855 = vperm.slane %v7783, 0
      %v7856 = vperm.slane %v7784, 0
      %v7857 = vmul.f32 %v7268, %v7821
      %v7858 = vmul.f32 %v7281, %v7822
      %v7859 = vmul.f32 %v7294, %v7823
      %v7860 = vmul.f32 %v7307, %v7824
      %v7861 = vmul.f32 %v7320, %v7825
      %v7862 = vmul.f32 %v7333, %v7826
      %v7863 = vmul.f32 %v7346, %v7827
      %v7864 = vmul.f32 %v7359, %v7828
      %v7865 = vmul.f32 %v7372, %v7829
      %v7866 = vmul.f32 %v7385, %v7830
      %v7867 = vmul.f32 %v7398, %v7831
      %v7868 = vmul.f32 %v7411, %v7832
      %v7869 = vmul.f32 %v7424, %v7833
      %v7870 = vmul.f32 %v7437, %v7834
      %v7871 = vmul.f32 %v7450, %v7835
      %v7872 = vmul.f32 %v7463, %v7836
      %v7873 = vmul.f32 %v7476, %v7837
      %v7874 = vmul.f32 %v7489, %v7838
      %v7875 = vmul.f32 %v7502, %v7839
      %v7876 = vmul.f32 %v7515, %v7840
      %v7877 = vmul.f32 %v7528, %v7841
      %v7878 = vmul.f32 %v7541, %v7842
      %v7879 = vmul.f32 %v7554, %v7843
      %v7880 = vmul.f32 %v7567, %v7844
      %v7881 = vmul.f32 %v7580, %v7845
      %v7882 = vmul.f32 %v7593, %v7846
      %v7883 = vmul.f32 %v7606, %v7847
      %v7884 = vmul.f32 %v7619, %v7848
      %v7885 = vmul.f32 %v7632, %v7849
      %v7886 = vmul.f32 %v7645, %v7850
      %v7887 = vmul.f32 %v7658, %v7851
      %v7888 = vmul.f32 %v7671, %v7852
      %v7889 = vmul.f32 %v7684, %v7853
      %v7890 = vmul.f32 %v7697, %v7854
      %v7891 = vmul.f32 %v7710, %v7855
      %v7892 = vmul.f32 %v7723, %v7856
      %v7893 = vld [vmem:[#allocation4] sm:$0xff]
      %v7894 = vadd.f32 %v7857, %v7858
      %v7895 = vadd.f32 %v7894, %v7859
      %v7896 = vadd.f32 %v7895, %v7860
      %v7897 = vadd.f32 %v7896, %v7861
      %v7898 = vadd.f32 %v7897, %v7862
      %v7899 = vadd.f32 %v7898, %v7863
      %v7900 = vadd.f32 %v7899, %v7864
      %v7901 = vadd.f32 %v7900, %v7865
      %v7902 = vadd.f32 %v7901, %v7866
      %v7903 = vadd.f32 %v7902, %v7867
      %v7904 = vadd.f32 %v7903, %v7868
      %v7905 = vadd.f32 %v7904, %v7869
      %v7906 = vadd.f32 %v7905, %v7870
      %v7907 = vadd.f32 %v7906, %v7871
      %v7908 = vadd.f32 %v7907, %v7872
      %v7909 = vadd.f32 %v7908, %v7873
      %v7910 = vadd.f32 %v7909, %v7874
      %v7911 = vadd.f32 %v7910, %v7875
      %v7912 = vadd.f32 %v7911, %v7876
      %v7913 = vadd.f32 %v7912, %v7877
      %v7914 = vadd.f32 %v7913, %v7878
      %v7915 = vadd.f32 %v7914, %v7879
      %v7916 = vadd.f32 %v7915, %v7880
      %v7917 = vadd.f32 %v7916, %v7881
      %v7918 = vadd.f32 %v7917, %v7882
      %v7919 = vadd.f32 %v7918, %v7883
      %v7920 = vadd.f32 %v7919, %v7884
      %v7921 = vadd.f32 %v7920, %v7885
      %v7922 = vadd.f32 %v7921, %v7886
      %v7923 = vadd.f32 %v7922, %v7887
      %v7924 = vadd.f32 %v7923, %v7888
      %v7925 = vadd.f32 %v7924, %v7889
      %v7926 = vadd.f32 %v7925, %v7890
      %v7927 = vadd.f32 %v7926, %v7891
      %v7928 = vadd.f32 %v7927, %v7892
      %7929 = vadd.xlane.f32.xlu0 %v7928
      %v7930 = vpop.xlane.xlu0 %7929
      %v7931 = vadd.f32 %v7893, %v7930
      %vm7932 = vcmask 7168
      %7933 = vst.msk [vmem:[#allocation4] sm:$0xff] %vm7932, %v7931
      %v7934 = vld [vmem:[#allocation5] sm:$0xff]
      %v7935 = vmul.f32 %v7857, %v7268
      %v7936 = vmul.f32 %v7858, %v7281
      %v7937 = vmul.f32 %v7859, %v7294
      %v7938 = vmul.f32 %v7860, %v7307
      %v7939 = vmul.f32 %v7861, %v7320
      %v7940 = vmul.f32 %v7862, %v7333
      %v7941 = vmul.f32 %v7863, %v7346
      %v7942 = vmul.f32 %v7864, %v7359
      %v7943 = vmul.f32 %v7865, %v7372
      %v7944 = vmul.f32 %v7866, %v7385
      %v7945 = vmul.f32 %v7867, %v7398
      %v7946 = vmul.f32 %v7868, %v7411
      %v7947 = vmul.f32 %v7869, %v7424
      %v7948 = vmul.f32 %v7870, %v7437
      %v7949 = vmul.f32 %v7871, %v7450
      %v7950 = vmul.f32 %v7872, %v7463
      %v7951 = vmul.f32 %v7873, %v7476
      %v7952 = vmul.f32 %v7874, %v7489
      %v7953 = vmul.f32 %v7875, %v7502
      %v7954 = vmul.f32 %v7876, %v7515
      %v7955 = vmul.f32 %v7877, %v7528
      %v7956 = vmul.f32 %v7878, %v7541
      %v7957 = vmul.f32 %v7879, %v7554
      %v7958 = vmul.f32 %v7880, %v7567
      %v7959 = vmul.f32 %v7881, %v7580
      %v7960 = vmul.f32 %v7882, %v7593
      %v7961 = vmul.f32 %v7883, %v7606
      %v7962 = vmul.f32 %v7884, %v7619
      %v7963 = vmul.f32 %v7885, %v7632
      %v7964 = vmul.f32 %v7886, %v7645
      %v7965 = vmul.f32 %v7887, %v7658
      %v7966 = vmul.f32 %v7888, %v7671
      %v7967 = vmul.f32 %v7889, %v7684
      %v7968 = vmul.f32 %v7890, %v7697
      %v7969 = vmul.f32 %v7891, %v7710
      %v7970 = vmul.f32 %v7892, %v7723
      %v7971 = vadd.f32 %v7935, %v7936
      %v7972 = vadd.f32 %v7971, %v7937
      %v7973 = vadd.f32 %v7972, %v7938
      %v7974 = vadd.f32 %v7973, %v7939
      %v7975 = vadd.f32 %v7974, %v7940
      %v7976 = vadd.f32 %v7975, %v7941
      %v7977 = vadd.f32 %v7976, %v7942
      %v7978 = vadd.f32 %v7977, %v7943
      %v7979 = vadd.f32 %v7978, %v7944
      %v7980 = vadd.f32 %v7979, %v7945
      %v7981 = vadd.f32 %v7980, %v7946
      %v7982 = vadd.f32 %v7981, %v7947
      %v7983 = vadd.f32 %v7982, %v7948
      %v7984 = vadd.f32 %v7983, %v7949
      %v7985 = vadd.f32 %v7984, %v7950
      %v7986 = vadd.f32 %v7985, %v7951
      %v7987 = vadd.f32 %v7986, %v7952
      %v7988 = vadd.f32 %v7987, %v7953
      %v7989 = vadd.f32 %v7988, %v7954
      %v7990 = vadd.f32 %v7989, %v7955
      %v7991 = vadd.f32 %v7990, %v7956
      %v7992 = vadd.f32 %v7991, %v7957
      %v7993 = vadd.f32 %v7992, %v7958
      %v7994 = vadd.f32 %v7993, %v7959
      %v7995 = vadd.f32 %v7994, %v7960
      %v7996 = vadd.f32 %v7995, %v7961
      %v7997 = vadd.f32 %v7996, %v7962
      %v7998 = vadd.f32 %v7997, %v7963
      %v7999 = vadd.f32 %v7998, %v7964
      %v8000 = vadd.f32 %v7999, %v7965
      %v8001 = vadd.f32 %v8000, %v7966
      %v8002 = vadd.f32 %v8001, %v7967
      %v8003 = vadd.f32 %v8002, %v7968
      %v8004 = vadd.f32 %v8003, %v7969
      %v8005 = vadd.f32 %v8004, %v7970
      %8006 = vadd.xlane.f32.xlu0 %v8005
      %v8007 = vpop.xlane.xlu0 %8006
      %v8008 = vadd.f32 %v7934, %v8007
      %8009 = vst.msk [vmem:[#allocation5] sm:$0xff] %vm7932, %v8008
      %s8010 = smul.u32 %s17, 4608
      %s8011 = sshra.s32 %s8010, 7
      %s8012 = sand.u32 %s8010, 127
      %s8013 = smul.addr %s8011, 8
      %s8014 = scalar_lea.vmem %s6, %s8013
      %8015 = vst [vmem:[%s8014] sm:$0xff] %v7268
      %8016 = vst [vmem:[%s8014 + $0x8] sm:$0xff] %v7281
      %8017 = vst [vmem:[%s8014 + $0x10] sm:$0xff] %v7294
      %8018 = vst [vmem:[%s8014 + $0x18] sm:$0xff] %v7307
      %8019 = vst [vmem:[%s8014 + $0x20] sm:$0xff] %v7320
      %8020 = vst [vmem:[%s8014 + $0x28] sm:$0xff] %v7333
      %8021 = vst [vmem:[%s8014 + $0x30] sm:$0xff] %v7346
      %8022 = vst [vmem:[%s8014 + $0x38] sm:$0xff] %v7359
      %8023 = vst [vmem:[%s8014 + $0x40] sm:$0xff] %v7372
      %8024 = vst [vmem:[%s8014 + $0x48] sm:$0xff] %v7385
      %8025 = vst [vmem:[%s8014 + $0x50] sm:$0xff] %v7398
      %8026 = vst [vmem:[%s8014 + $0x58] sm:$0xff] %v7411
      %8027 = vst [vmem:[%s8014 + $0x60] sm:$0xff] %v7424
      %8028 = vst [vmem:[%s8014 + $0x68] sm:$0xff] %v7437
      %8029 = vst [vmem:[%s8014 + $0x70] sm:$0xff] %v7450
      %8030 = vst [vmem:[%s8014 + $0x78] sm:$0xff] %v7463
      %8031 = vst [vmem:[%s8014 + $0x80] sm:$0xff] %v7476
      %8032 = vst [vmem:[%s8014 + $0x88] sm:$0xff] %v7489
      %8033 = vst [vmem:[%s8014 + $0x90] sm:$0xff] %v7502
      %8034 = vst [vmem:[%s8014 + $0x98] sm:$0xff] %v7515
      %8035 = vst [vmem:[%s8014 + $0xa0] sm:$0xff] %v7528
      %8036 = vst [vmem:[%s8014 + $0xa8] sm:$0xff] %v7541
      %8037 = vst [vmem:[%s8014 + $0xb0] sm:$0xff] %v7554
      %8038 = vst [vmem:[%s8014 + $0xb8] sm:$0xff] %v7567
      %8039 = vst [vmem:[%s8014 + $0xc0] sm:$0xff] %v7580
      %8040 = vst [vmem:[%s8014 + $0xc8] sm:$0xff] %v7593
      %8041 = vst [vmem:[%s8014 + $0xd0] sm:$0xff] %v7606
      %8042 = vst [vmem:[%s8014 + $0xd8] sm:$0xff] %v7619
      %8043 = vst [vmem:[%s8014 + $0xe0] sm:$0xff] %v7632
      %8044 = vst [vmem:[%s8014 + $0xe8] sm:$0xff] %v7645
      %8045 = vst [vmem:[%s8014 + $0xf0] sm:$0xff] %v7658
      %8046 = vst [vmem:[%s8014 + $0xf8] sm:$0xff] %v7671
      %8047 = vst [vmem:[%s8014 + $0x100] sm:$0xff] %v7684
      %8048 = vst [vmem:[%s8014 + $0x108] sm:$0xff] %v7697
      %8049 = vst [vmem:[%s8014 + $0x110] sm:$0xff] %v7710
      %8050 = vst [vmem:[%s8014 + $0x118] sm:$0xff] %v7723
      %p8051 = scmp.eq.s32.totalorder %s17, 1
      // Predicated region
      $region49: #{metric_block.1} parent=43 // pred_check
        %p8052 = pneg %p8051
      $region50: #{metric_block.1} parent=43 // pred_check_branch
        %8054 = sbr.rel (%p8052) target = $region52
      $region51: #{metric_block.1} parent=43 // pred_region
        %v8055 = vld [vmem:[#allocation4] sm:$0xff]
        %v8056 = vmul.f32 %v8055, 0.00024414063
        %v8057 = vld [vmem:[#allocation5] sm:$0xff]
        %v8058 = vmul.f32 %v8057, 0.00024414063
        %v8059 = vmul.f32 %v8056, %v8056
        %v8060 = vsub.f32 %v8058, %v8059
        %v8061 = vmax.f32 %v8060, 0.0
        %v8062 = vld [vmem:[%s4] sm:$0xff]
        %v8063 = vadd.f32 %v8061, 1e-05
        %v8064 = vrsqrt.pop %v8063
        %v8065 = vmul.f32 %v8064, %v8063
        %v8066 = vmul.f32 %v8065, %v8064
        %v8067 = vmul.f32 0.5, %v8066
        %v8068 = vsub.f32 1.5, %v8067
        %v8069 = vmul.f32 %v8064, %v8068
        %vm8070 = vweird.f32 %v8063
        %vm8071 = vweird.f32 %v8064
        %vm8072 = vmor %vm8070, %vm8071
        %v8073 = vsel %vm8072, %v8064, %v8069
        %v8074 = vmul.f32 %v8062, %v8073
        %v8075 = vld [vmem:[%s5] sm:$0xff]
        %v8076 = vmul.f32 %v8056, %v8074
        %v8077 = vsub.f32 %v8075, %v8076
        %v8078 = vld [vmem:[%s6] sm:$0xff]
        %v8079 = vld [vmem:[%s6 + $0x8] sm:$0xff]
        %v8080 = vld [vmem:[%s6 + $0x10] sm:$0xff]
        %v8081 = vld [vmem:[%s6 + $0x18] sm:$0xff]
        %v8082 = vld [vmem:[%s6 + $0x20] sm:$0xff]
        %v8083 = vld [vmem:[%s6 + $0x28] sm:$0xff]
        %v8084 = vld [vmem:[%s6 + $0x30] sm:$0xff]
        %v8085 = vld [vmem:[%s6 + $0x38] sm:$0xff]
        %v8086 = vld [vmem:[%s6 + $0x40] sm:$0xff]
        %v8087 = vld [vmem:[%s6 + $0x48] sm:$0xff]
        %v8088 = vld [vmem:[%s6 + $0x50] sm:$0xff]
        %v8089 = vld [vmem:[%s6 + $0x58] sm:$0xff]
        %v8090 = vld [vmem:[%s6 + $0x60] sm:$0xff]
        %v8091 = vld [vmem:[%s6 + $0x68] sm:$0xff]
        %v8092 = vld [vmem:[%s6 + $0x70] sm:$0xff]
        %v8093 = vld [vmem:[%s6 + $0x78] sm:$0xff]
        %v8094 = vld [vmem:[%s6 + $0x80] sm:$0xff]
        %v8095 = vld [vmem:[%s6 + $0x88] sm:$0xff]
        %v8096 = vld [vmem:[%s6 + $0x90] sm:$0xff]
        %v8097 = vld [vmem:[%s6 + $0x98] sm:$0xff]
        %v8098 = vld [vmem:[%s6 + $0xa0] sm:$0xff]
        %v8099 = vld [vmem:[%s6 + $0xa8] sm:$0xff]
        %v8100 = vld [vmem:[%s6 + $0xb0] sm:$0xff]
        %v8101 = vld [vmem:[%s6 + $0xb8] sm:$0xff]
        %v8102 = vld [vmem:[%s6 + $0xc0] sm:$0xff]
        %v8103 = vld [vmem:[%s6 + $0xc8] sm:$0xff]
        %v8104 = vld [vmem:[%s6 + $0xd0] sm:$0xff]
        %v8105 = vld [vmem:[%s6 + $0xd8] sm:$0xff]
        %v8106 = vld [vmem:[%s6 + $0xe0] sm:$0xff]
        %v8107 = vld [vmem:[%s6 + $0xe8] sm:$0xff]
        %v8108 = vld [vmem:[%s6 + $0xf0] sm:$0xff]
        %v8109 = vld [vmem:[%s6 + $0xf8] sm:$0xff]
        %v8110 = vld [vmem:[%s6 + $0x100] sm:$0xff]
        %v8111 = vld [vmem:[%s6 + $0x108] sm:$0xff]
        %v8112 = vld [vmem:[%s6 + $0x110] sm:$0xff]
        %v8113 = vld [vmem:[%s6 + $0x118] sm:$0xff]
        %8115 = vset.pattern.permute.xlu0 0
        %8116 = vperm.xlu0 %8115, %v8074
        %v8117 = vpop.permute.xlu0 %8116
        %v8119 = vmul.f32 %v8078, %v8117
        %v8120 = vmul.f32 %v8079, %v8117
        %v8121 = vmul.f32 %v8080, %v8117
        %v8122 = vmul.f32 %v8081, %v8117
        %v8123 = vmul.f32 %v8082, %v8117
        %v8124 = vmul.f32 %v8083, %v8117
        %v8125 = vmul.f32 %v8084, %v8117
        %v8126 = vmul.f32 %v8085, %v8117
        %v8127 = vmul.f32 %v8086, %v8117
        %v8128 = vmul.f32 %v8087, %v8117
        %v8129 = vmul.f32 %v8088, %v8117
        %v8130 = vmul.f32 %v8089, %v8117
        %v8131 = vmul.f32 %v8090, %v8117
        %v8132 = vmul.f32 %v8091, %v8117
        %v8133 = vmul.f32 %v8092, %v8117
        %v8134 = vmul.f32 %v8093, %v8117
        %v8135 = vmul.f32 %v8094, %v8117
        %v8136 = vmul.f32 %v8095, %v8117
        %v8137 = vmul.f32 %v8096, %v8117
        %v8138 = vmul.f32 %v8097, %v8117
        %v8139 = vmul.f32 %v8098, %v8117
        %v8140 = vmul.f32 %v8099, %v8117
        %v8141 = vmul.f32 %v8100, %v8117
        %v8142 = vmul.f32 %v8101, %v8117
        %v8143 = vmul.f32 %v8102, %v8117
        %v8144 = vmul.f32 %v8103, %v8117
        %v8145 = vmul.f32 %v8104, %v8117
        %v8146 = vmul.f32 %v8105, %v8117
        %v8147 = vmul.f32 %v8106, %v8117
        %v8148 = vmul.f32 %v8107, %v8117
        %v8149 = vmul.f32 %v8108, %v8117
        %v8150 = vmul.f32 %v8109, %v8117
        %v8151 = vmul.f32 %v8110, %v8117
        %v8152 = vmul.f32 %v8111, %v8117
        %v8153 = vmul.f32 %v8112, %v8117
        %v8154 = vmul.f32 %v8113, %v8117
        %8156 = vset.pattern.permute.xlu0 0
        %8157 = vperm.xlu0 %8156, %v8077
        %v8158 = vpop.permute.xlu0 %8157
        %v8160 = vadd.f32 %v8119, %v8158
        %v8161 = vadd.f32 %v8120, %v8158
        %v8162 = vadd.f32 %v8121, %v8158
        %v8163 = vadd.f32 %v8122, %v8158
        %v8164 = vadd.f32 %v8123, %v8158
        %v8165 = vadd.f32 %v8124, %v8158
        %v8166 = vadd.f32 %v8125, %v8158
        %v8167 = vadd.f32 %v8126, %v8158
        %v8168 = vadd.f32 %v8127, %v8158
        %v8169 = vadd.f32 %v8128, %v8158
        %v8170 = vadd.f32 %v8129, %v8158
        %v8171 = vadd.f32 %v8130, %v8158
        %v8172 = vadd.f32 %v8131, %v8158
        %v8173 = vadd.f32 %v8132, %v8158
        %v8174 = vadd.f32 %v8133, %v8158
        %v8175 = vadd.f32 %v8134, %v8158
        %v8176 = vadd.f32 %v8135, %v8158
        %v8177 = vadd.f32 %v8136, %v8158
        %v8178 = vadd.f32 %v8137, %v8158
        %v8179 = vadd.f32 %v8138, %v8158
        %v8180 = vadd.f32 %v8139, %v8158
        %v8181 = vadd.f32 %v8140, %v8158
        %v8182 = vadd.f32 %v8141, %v8158
        %v8183 = vadd.f32 %v8142, %v8158
        %v8184 = vadd.f32 %v8143, %v8158
        %v8185 = vadd.f32 %v8144, %v8158
        %v8186 = vadd.f32 %v8145, %v8158
        %v8187 = vadd.f32 %v8146, %v8158
        %v8188 = vadd.f32 %v8147, %v8158
        %v8189 = vadd.f32 %v8148, %v8158
        %v8190 = vadd.f32 %v8149, %v8158
        %v8191 = vadd.f32 %v8150, %v8158
        %v8192 = vadd.f32 %v8151, %v8158
        %v8193 = vadd.f32 %v8152, %v8158
        %v8194 = vadd.f32 %v8153, %v8158
        %v8195 = vadd.f32 %v8154, %v8158
        %vm8196 = vcmp.ge.f32.partialorder %v8160, 0.0
        %vm8197 = vcmp.ge.f32.partialorder %v8161, 0.0
        %vm8198 = vcmp.ge.f32.partialorder %v8162, 0.0
        %vm8199 = vcmp.ge.f32.partialorder %v8163, 0.0
        %vm8200 = vcmp.ge.f32.partialorder %v8164, 0.0
        %vm8201 = vcmp.ge.f32.partialorder %v8165, 0.0
        %vm8202 = vcmp.ge.f32.partialorder %v8166, 0.0
        %vm8203 = vcmp.ge.f32.partialorder %v8167, 0.0
        %vm8204 = vcmp.ge.f32.partialorder %v8168, 0.0
        %vm8205 = vcmp.ge.f32.partialorder %v8169, 0.0
        %vm8206 = vcmp.ge.f32.partialorder %v8170, 0.0
        %vm8207 = vcmp.ge.f32.partialorder %v8171, 0.0
        %vm8208 = vcmp.ge.f32.partialorder %v8172, 0.0
        %vm8209 = vcmp.ge.f32.partialorder %v8173, 0.0
        %vm8210 = vcmp.ge.f32.partialorder %v8174, 0.0
        %vm8211 = vcmp.ge.f32.partialorder %v8175, 0.0
        %vm8212 = vcmp.ge.f32.partialorder %v8176, 0.0
        %vm8213 = vcmp.ge.f32.partialorder %v8177, 0.0
        %vm8214 = vcmp.ge.f32.partialorder %v8178, 0.0
        %vm8215 = vcmp.ge.f32.partialorder %v8179, 0.0
        %vm8216 = vcmp.ge.f32.partialorder %v8180, 0.0
        %vm8217 = vcmp.ge.f32.partialorder %v8181, 0.0
        %vm8218 = vcmp.ge.f32.partialorder %v8182, 0.0
        %vm8219 = vcmp.ge.f32.partialorder %v8183, 0.0
        %vm8220 = vcmp.ge.f32.partialorder %v8184, 0.0
        %vm8221 = vcmp.ge.f32.partialorder %v8185, 0.0
        %vm8222 = vcmp.ge.f32.partialorder %v8186, 0.0
        %vm8223 = vcmp.ge.f32.partialorder %v8187, 0.0
        %vm8224 = vcmp.ge.f32.partialorder %v8188, 0.0
        %vm8225 = vcmp.ge.f32.partialorder %v8189, 0.0
        %vm8226 = vcmp.ge.f32.partialorder %v8190, 0.0
        %vm8227 = vcmp.ge.f32.partialorder %v8191, 0.0
        %vm8228 = vcmp.ge.f32.partialorder %v8192, 0.0
        %vm8229 = vcmp.ge.f32.partialorder %v8193, 0.0
        %vm8230 = vcmp.ge.f32.partialorder %v8194, 0.0
        %vm8231 = vcmp.ge.f32.partialorder %v8195, 0.0
        %v8232 = vmul.f32 %v8160, 0.01
        %v8233 = vmul.f32 %v8161, 0.01
        %v8234 = vmul.f32 %v8162, 0.01
        %v8235 = vmul.f32 %v8163, 0.01
        %v8236 = vmul.f32 %v8164, 0.01
        %v8237 = vmul.f32 %v8165, 0.01
        %v8238 = vmul.f32 %v8166, 0.01
        %v8239 = vmul.f32 %v8167, 0.01
        %v8240 = vmul.f32 %v8168, 0.01
        %v8241 = vmul.f32 %v8169, 0.01
        %v8242 = vmul.f32 %v8170, 0.01
        %v8243 = vmul.f32 %v8171, 0.01
        %v8244 = vmul.f32 %v8172, 0.01
        %v8245 = vmul.f32 %v8173, 0.01
        %v8246 = vmul.f32 %v8174, 0.01
        %v8247 = vmul.f32 %v8175, 0.01
        %v8248 = vmul.f32 %v8176, 0.01
        %v8249 = vmul.f32 %v8177, 0.01
        %v8250 = vmul.f32 %v8178, 0.01
        %v8251 = vmul.f32 %v8179, 0.01
        %v8252 = vmul.f32 %v8180, 0.01
        %v8253 = vmul.f32 %v8181, 0.01
        %v8254 = vmul.f32 %v8182, 0.01
        %v8255 = vmul.f32 %v8183, 0.01
        %v8256 = vmul.f32 %v8184, 0.01
        %v8257 = vmul.f32 %v8185, 0.01
        %v8258 = vmul.f32 %v8186, 0.01
        %v8259 = vmul.f32 %v8187, 0.01
        %v8260 = vmul.f32 %v8188, 0.01
        %v8261 = vmul.f32 %v8189, 0.01
        %v8262 = vmul.f32 %v8190, 0.01
        %v8263 = vmul.f32 %v8191, 0.01
        %v8264 = vmul.f32 %v8192, 0.01
        %v8265 = vmul.f32 %v8193, 0.01
        %v8266 = vmul.f32 %v8194, 0.01
        %v8267 = vmul.f32 %v8195, 0.01
        %v8268 = vsel %vm8196, %v8160, %v8232
        %v8269 = vsel %vm8197, %v8161, %v8233
        %v8270 = vsel %vm8198, %v8162, %v8234
        %v8271 = vsel %vm8199, %v8163, %v8235
        %v8272 = vsel %vm8200, %v8164, %v8236
        %v8273 = vsel %vm8201, %v8165, %v8237
        %v8274 = vsel %vm8202, %v8166, %v8238
        %v8275 = vsel %vm8203, %v8167, %v8239
        %v8276 = vsel %vm8204, %v8168, %v8240
        %v8277 = vsel %vm8205, %v8169, %v8241
        %v8278 = vsel %vm8206, %v8170, %v8242
        %v8279 = vsel %vm8207, %v8171, %v8243
        %v8280 = vsel %vm8208, %v8172, %v8244
        %v8281 = vsel %vm8209, %v8173, %v8245
        %v8282 = vsel %vm8210, %v8174, %v8246
        %v8283 = vsel %vm8211, %v8175, %v8247
        %v8284 = vsel %vm8212, %v8176, %v8248
        %v8285 = vsel %vm8213, %v8177, %v8249
        %v8286 = vsel %vm8214, %v8178, %v8250
        %v8287 = vsel %vm8215, %v8179, %v8251
        %v8288 = vsel %vm8216, %v8180, %v8252
        %v8289 = vsel %vm8217, %v8181, %v8253
        %v8290 = vsel %vm8218, %v8182, %v8254
        %v8291 = vsel %vm8219, %v8183, %v8255
        %v8292 = vsel %vm8220, %v8184, %v8256
        %v8293 = vsel %vm8221, %v8185, %v8257
        %v8294 = vsel %vm8222, %v8186, %v8258
        %v8295 = vsel %vm8223, %v8187, %v8259
        %v8296 = vsel %vm8224, %v8188, %v8260
        %v8297 = vsel %vm8225, %v8189, %v8261
        %v8298 = vsel %vm8226, %v8190, %v8262
        %v8299 = vsel %vm8227, %v8191, %v8263
        %v8300 = vsel %vm8228, %v8192, %v8264
        %v8301 = vsel %vm8229, %v8193, %v8265
        %v8302 = vsel %vm8230, %v8194, %v8266
        %v8303 = vsel %vm8231, %v8195, %v8267
        %8304 = vst [vmem:[%s6] sm:$0xff] %v8268
        %8305 = vst [vmem:[%s6 + $0x8] sm:$0xff] %v8269
        %8306 = vst [vmem:[%s6 + $0x10] sm:$0xff] %v8270
        %8307 = vst [vmem:[%s6 + $0x18] sm:$0xff] %v8271
        %8308 = vst [vmem:[%s6 + $0x20] sm:$0xff] %v8272
        %8309 = vst [vmem:[%s6 + $0x28] sm:$0xff] %v8273
        %8310 = vst [vmem:[%s6 + $0x30] sm:$0xff] %v8274
        %8311 = vst [vmem:[%s6 + $0x38] sm:$0xff] %v8275
        %8312 = vst [vmem:[%s6 + $0x40] sm:$0xff] %v8276
        %8313 = vst [vmem:[%s6 + $0x48] sm:$0xff] %v8277
        %8314 = vst [vmem:[%s6 + $0x50] sm:$0xff] %v8278
        %8315 = vst [vmem:[%s6 + $0x58] sm:$0xff] %v8279
        %8316 = vst [vmem:[%s6 + $0x60] sm:$0xff] %v8280
        %8317 = vst [vmem:[%s6 + $0x68] sm:$0xff] %v8281
        %8318 = vst [vmem:[%s6 + $0x70] sm:$0xff] %v8282
        %8319 = vst [vmem:[%s6 + $0x78] sm:$0xff] %v8283
        %8320 = vst [vmem:[%s6 + $0x80] sm:$0xff] %v8284
        %8321 = vst [vmem:[%s6 + $0x88] sm:$0xff] %v8285
        %8322 = vst [vmem:[%s6 + $0x90] sm:$0xff] %v8286
        %8323 = vst [vmem:[%s6 + $0x98] sm:$0xff] %v8287
        %8324 = vst [vmem:[%s6 + $0xa0] sm:$0xff] %v8288
        %8325 = vst [vmem:[%s6 + $0xa8] sm:$0xff] %v8289
        %8326 = vst [vmem:[%s6 + $0xb0] sm:$0xff] %v8290
        %8327 = vst [vmem:[%s6 + $0xb8] sm:$0xff] %v8291
        %8328 = vst [vmem:[%s6 + $0xc0] sm:$0xff] %v8292
        %8329 = vst [vmem:[%s6 + $0xc8] sm:$0xff] %v8293
        %8330 = vst [vmem:[%s6 + $0xd0] sm:$0xff] %v8294
        %8331 = vst [vmem:[%s6 + $0xd8] sm:$0xff] %v8295
        %8332 = vst [vmem:[%s6 + $0xe0] sm:$0xff] %v8296
        %8333 = vst [vmem:[%s6 + $0xe8] sm:$0xff] %v8297
        %8334 = vst [vmem:[%s6 + $0xf0] sm:$0xff] %v8298
        %8335 = vst [vmem:[%s6 + $0xf8] sm:$0xff] %v8299
        %8336 = vst [vmem:[%s6 + $0x100] sm:$0xff] %v8300
        %8337 = vst [vmem:[%s6 + $0x108] sm:$0xff] %v8301
        %8338 = vst [vmem:[%s6 + $0x110] sm:$0xff] %v8302
        %8339 = vst [vmem:[%s6 + $0x118] sm:$0xff] %v8303
        %v8340 = vld [vmem:[%s6 + $0x120] sm:$0xff]
        %v8341 = vld [vmem:[%s6 + $0x128] sm:$0xff]
        %v8342 = vld [vmem:[%s6 + $0x130] sm:$0xff]
        %v8343 = vld [vmem:[%s6 + $0x138] sm:$0xff]
        %v8344 = vld [vmem:[%s6 + $0x140] sm:$0xff]
        %v8345 = vld [vmem:[%s6 + $0x148] sm:$0xff]
        %v8346 = vld [vmem:[%s6 + $0x150] sm:$0xff]
        %v8347 = vld [vmem:[%s6 + $0x158] sm:$0xff]
        %v8348 = vld [vmem:[%s6 + $0x160] sm:$0xff]
        %v8349 = vld [vmem:[%s6 + $0x168] sm:$0xff]
        %v8350 = vld [vmem:[%s6 + $0x170] sm:$0xff]
        %v8351 = vld [vmem:[%s6 + $0x178] sm:$0xff]
        %v8352 = vld [vmem:[%s6 + $0x180] sm:$0xff]
        %v8353 = vld [vmem:[%s6 + $0x188] sm:$0xff]
        %v8354 = vld [vmem:[%s6 + $0x190] sm:$0xff]
        %v8355 = vld [vmem:[%s6 + $0x198] sm:$0xff]
        %v8356 = vld [vmem:[%s6 + $0x1a0] sm:$0xff]
        %v8357 = vld [vmem:[%s6 + $0x1a8] sm:$0xff]
        %v8358 = vld [vmem:[%s6 + $0x1b0] sm:$0xff]
        %v8359 = vld [vmem:[%s6 + $0x1b8] sm:$0xff]
        %v8360 = vld [vmem:[%s6 + $0x1c0] sm:$0xff]
        %v8361 = vld [vmem:[%s6 + $0x1c8] sm:$0xff]
        %v8362 = vld [vmem:[%s6 + $0x1d0] sm:$0xff]
        %v8363 = vld [vmem:[%s6 + $0x1d8] sm:$0xff]
        %v8364 = vld [vmem:[%s6 + $0x1e0] sm:$0xff]
        %v8365 = vld [vmem:[%s6 + $0x1e8] sm:$0xff]
        %v8366 = vld [vmem:[%s6 + $0x1f0] sm:$0xff]
        %v8367 = vld [vmem:[%s6 + $0x1f8] sm:$0xff]
        %v8368 = vld [vmem:[%s6 + $0x200] sm:$0xff]
        %v8369 = vld [vmem:[%s6 + $0x208] sm:$0xff]
        %v8370 = vld [vmem:[%s6 + $0x210] sm:$0xff]
        %v8371 = vld [vmem:[%s6 + $0x218] sm:$0xff]
        %v8372 = vld [vmem:[%s6 + $0x220] sm:$0xff]
        %v8373 = vld [vmem:[%s6 + $0x228] sm:$0xff]
        %v8374 = vld [vmem:[%s6 + $0x230] sm:$0xff]
        %v8375 = vld [vmem:[%s6 + $0x238] sm:$0xff]
        %v8376 = vmul.f32 %v8340, %v8117
        %v8377 = vmul.f32 %v8341, %v8117
        %v8378 = vmul.f32 %v8342, %v8117
        %v8379 = vmul.f32 %v8343, %v8117
        %v8380 = vmul.f32 %v8344, %v8117
        %v8381 = vmul.f32 %v8345, %v8117
        %v8382 = vmul.f32 %v8346, %v8117
        %v8383 = vmul.f32 %v8347, %v8117
        %v8384 = vmul.f32 %v8348, %v8117
        %v8385 = vmul.f32 %v8349, %v8117
        %v8386 = vmul.f32 %v8350, %v8117
        %v8387 = vmul.f32 %v8351, %v8117
        %v8388 = vmul.f32 %v8352, %v8117
        %v8389 = vmul.f32 %v8353, %v8117
        %v8390 = vmul.f32 %v8354, %v8117
        %v8391 = vmul.f32 %v8355, %v8117
        %v8392 = vmul.f32 %v8356, %v8117
        %v8393 = vmul.f32 %v8357, %v8117
        %v8394 = vmul.f32 %v8358, %v8117
        %v8395 = vmul.f32 %v8359, %v8117
        %v8396 = vmul.f32 %v8360, %v8117
        %v8397 = vmul.f32 %v8361, %v8117
        %v8398 = vmul.f32 %v8362, %v8117
        %v8399 = vmul.f32 %v8363, %v8117
        %v8400 = vmul.f32 %v8364, %v8117
        %v8401 = vmul.f32 %v8365, %v8117
        %v8402 = vmul.f32 %v8366, %v8117
        %v8403 = vmul.f32 %v8367, %v8117
        %v8404 = vmul.f32 %v8368, %v8117
        %v8405 = vmul.f32 %v8369, %v8117
        %v8406 = vmul.f32 %v8370, %v8117
        %v8407 = vmul.f32 %v8371, %v8117
        %v8408 = vmul.f32 %v8372, %v8117
        %v8409 = vmul.f32 %v8373, %v8117
        %v8410 = vmul.f32 %v8374, %v8117
        %v8411 = vmul.f32 %v8375, %v8117
        %v8412 = vadd.f32 %v8376, %v8158
        %v8413 = vadd.f32 %v8377, %v8158
        %v8414 = vadd.f32 %v8378, %v8158
        %v8415 = vadd.f32 %v8379, %v8158
        %v8416 = vadd.f32 %v8380, %v8158
        %v8417 = vadd.f32 %v8381, %v8158
        %v8418 = vadd.f32 %v8382, %v8158
        %v8419 = vadd.f32 %v8383, %v8158
        %v8420 = vadd.f32 %v8384, %v8158
        %v8421 = vadd.f32 %v8385, %v8158
        %v8422 = vadd.f32 %v8386, %v8158
        %v8423 = vadd.f32 %v8387, %v8158
        %v8424 = vadd.f32 %v8388, %v8158
        %v8425 = vadd.f32 %v8389, %v8158
        %v8426 = vadd.f32 %v8390, %v8158
        %v8427 = vadd.f32 %v8391, %v8158
        %v8428 = vadd.f32 %v8392, %v8158
        %v8429 = vadd.f32 %v8393, %v8158
        %v8430 = vadd.f32 %v8394, %v8158
        %v8431 = vadd.f32 %v8395, %v8158
        %v8432 = vadd.f32 %v8396, %v8158
        %v8433 = vadd.f32 %v8397, %v8158
        %v8434 = vadd.f32 %v8398, %v8158
        %v8435 = vadd.f32 %v8399, %v8158
        %v8436 = vadd.f32 %v8400, %v8158
        %v8437 = vadd.f32 %v8401, %v8158
        %v8438 = vadd.f32 %v8402, %v8158
        %v8439 = vadd.f32 %v8403, %v8158
        %v8440 = vadd.f32 %v8404, %v8158
        %v8441 = vadd.f32 %v8405, %v8158
        %v8442 = vadd.f32 %v8406, %v8158
        %v8443 = vadd.f32 %v8407, %v8158
        %v8444 = vadd.f32 %v8408, %v8158
        %v8445 = vadd.f32 %v8409, %v8158
        %v8446 = vadd.f32 %v8410, %v8158
        %v8447 = vadd.f32 %v8411, %v8158
        %vm8448 = vcmp.ge.f32.partialorder %v8412, 0.0
        %vm8449 = vcmp.ge.f32.partialorder %v8413, 0.0
        %vm8450 = vcmp.ge.f32.partialorder %v8414, 0.0
        %vm8451 = vcmp.ge.f32.partialorder %v8415, 0.0
        %vm8452 = vcmp.ge.f32.partialorder %v8416, 0.0
        %vm8453 = vcmp.ge.f32.partialorder %v8417, 0.0
        %vm8454 = vcmp.ge.f32.partialorder %v8418, 0.0
        %vm8455 = vcmp.ge.f32.partialorder %v8419, 0.0
        %vm8456 = vcmp.ge.f32.partialorder %v8420, 0.0
        %vm8457 = vcmp.ge.f32.partialorder %v8421, 0.0
        %vm8458 = vcmp.ge.f32.partialorder %v8422, 0.0
        %vm8459 = vcmp.ge.f32.partialorder %v8423, 0.0
        %vm8460 = vcmp.ge.f32.partialorder %v8424, 0.0
        %vm8461 = vcmp.ge.f32.partialorder %v8425, 0.0
        %vm8462 = vcmp.ge.f32.partialorder %v8426, 0.0
        %vm8463 = vcmp.ge.f32.partialorder %v8427, 0.0
        %vm8464 = vcmp.ge.f32.partialorder %v8428, 0.0
        %vm8465 = vcmp.ge.f32.partialorder %v8429, 0.0
        %vm8466 = vcmp.ge.f32.partialorder %v8430, 0.0
        %vm8467 = vcmp.ge.f32.partialorder %v8431, 0.0
        %vm8468 = vcmp.ge.f32.partialorder %v8432, 0.0
        %vm8469 = vcmp.ge.f32.partialorder %v8433, 0.0
        %vm8470 = vcmp.ge.f32.partialorder %v8434, 0.0
        %vm8471 = vcmp.ge.f32.partialorder %v8435, 0.0
        %vm8472 = vcmp.ge.f32.partialorder %v8436, 0.0
        %vm8473 = vcmp.ge.f32.partialorder %v8437, 0.0
        %vm8474 = vcmp.ge.f32.partialorder %v8438, 0.0
        %vm8475 = vcmp.ge.f32.partialorder %v8439, 0.0
        %vm8476 = vcmp.ge.f32.partialorder %v8440, 0.0
        %vm8477 = vcmp.ge.f32.partialorder %v8441, 0.0
        %vm8478 = vcmp.ge.f32.partialorder %v8442, 0.0
        %vm8479 = vcmp.ge.f32.partialorder %v8443, 0.0
        %vm8480 = vcmp.ge.f32.partialorder %v8444, 0.0
        %vm8481 = vcmp.ge.f32.partialorder %v8445, 0.0
        %vm8482 = vcmp.ge.f32.partialorder %v8446, 0.0
        %vm8483 = vcmp.ge.f32.partialorder %v8447, 0.0
        %v8484 = vmul.f32 %v8412, 0.01
        %v8485 = vmul.f32 %v8413, 0.01
        %v8486 = vmul.f32 %v8414, 0.01
        %v8487 = vmul.f32 %v8415, 0.01
        %v8488 = vmul.f32 %v8416, 0.01
        %v8489 = vmul.f32 %v8417, 0.01
        %v8490 = vmul.f32 %v8418, 0.01
        %v8491 = vmul.f32 %v8419, 0.01
        %v8492 = vmul.f32 %v8420, 0.01
        %v8493 = vmul.f32 %v8421, 0.01
        %v8494 = vmul.f32 %v8422, 0.01
        %v8495 = vmul.f32 %v8423, 0.01
        %v8496 = vmul.f32 %v8424, 0.01
        %v8497 = vmul.f32 %v8425, 0.01
        %v8498 = vmul.f32 %v8426, 0.01
        %v8499 = vmul.f32 %v8427, 0.01
        %v8500 = vmul.f32 %v8428, 0.01
        %v8501 = vmul.f32 %v8429, 0.01
        %v8502 = vmul.f32 %v8430, 0.01
        %v8503 = vmul.f32 %v8431, 0.01
        %v8504 = vmul.f32 %v8432, 0.01
        %v8505 = vmul.f32 %v8433, 0.01
        %v8506 = vmul.f32 %v8434, 0.01
        %v8507 = vmul.f32 %v8435, 0.01
        %v8508 = vmul.f32 %v8436, 0.01
        %v8509 = vmul.f32 %v8437, 0.01
        %v8510 = vmul.f32 %v8438, 0.01
        %v8511 = vmul.f32 %v8439, 0.01
        %v8512 = vmul.f32 %v8440, 0.01
        %v8513 = vmul.f32 %v8441, 0.01
        %v8514 = vmul.f32 %v8442, 0.01
        %v8515 = vmul.f32 %v8443, 0.01
        %v8516 = vmul.f32 %v8444, 0.01
        %v8517 = vmul.f32 %v8445, 0.01
        %v8518 = vmul.f32 %v8446, 0.01
        %v8519 = vmul.f32 %v8447, 0.01
        %v8520 = vsel %vm8448, %v8412, %v8484
        %v8521 = vsel %vm8449, %v8413, %v8485
        %v8522 = vsel %vm8450, %v8414, %v8486
        %v8523 = vsel %vm8451, %v8415, %v8487
        %v8524 = vsel %vm8452, %v8416, %v8488
        %v8525 = vsel %vm8453, %v8417, %v8489
        %v8526 = vsel %vm8454, %v8418, %v8490
        %v8527 = vsel %vm8455, %v8419, %v8491
        %v8528 = vsel %vm8456, %v8420, %v8492
        %v8529 = vsel %vm8457, %v8421, %v8493
        %v8530 = vsel %vm8458, %v8422, %v8494
        %v8531 = vsel %vm8459, %v8423, %v8495
        %v8532 = vsel %vm8460, %v8424, %v8496
        %v8533 = vsel %vm8461, %v8425, %v8497
        %v8534 = vsel %vm8462, %v8426, %v8498
        %v8535 = vsel %vm8463, %v8427, %v8499
        %v8536 = vsel %vm8464, %v8428, %v8500
        %v8537 = vsel %vm8465, %v8429, %v8501
        %v8538 = vsel %vm8466, %v8430, %v8502
        %v8539 = vsel %vm8467, %v8431, %v8503
        %v8540 = vsel %vm8468, %v8432, %v8504
        %v8541 = vsel %vm8469, %v8433, %v8505
        %v8542 = vsel %vm8470, %v8434, %v8506
        %v8543 = vsel %vm8471, %v8435, %v8507
        %v8544 = vsel %vm8472, %v8436, %v8508
        %v8545 = vsel %vm8473, %v8437, %v8509
        %v8546 = vsel %vm8474, %v8438, %v8510
        %v8547 = vsel %vm8475, %v8439, %v8511
        %v8548 = vsel %vm8476, %v8440, %v8512
        %v8549 = vsel %vm8477, %v8441, %v8513
        %v8550 = vsel %vm8478, %v8442, %v8514
        %v8551 = vsel %vm8479, %v8443, %v8515
        %v8552 = vsel %vm8480, %v8444, %v8516
        %v8553 = vsel %vm8481, %v8445, %v8517
        %v8554 = vsel %vm8482, %v8446, %v8518
        %v8555 = vsel %vm8483, %v8447, %v8519
        %8556 = vst [vmem:[%s6 + $0x120] sm:$0xff] %v8520
        %8557 = vst [vmem:[%s6 + $0x128] sm:$0xff] %v8521
        %8558 = vst [vmem:[%s6 + $0x130] sm:$0xff] %v8522
        %8559 = vst [vmem:[%s6 + $0x138] sm:$0xff] %v8523
        %8560 = vst [vmem:[%s6 + $0x140] sm:$0xff] %v8524
        %8561 = vst [vmem:[%s6 + $0x148] sm:$0xff] %v8525
        %8562 = vst [vmem:[%s6 + $0x150] sm:$0xff] %v8526
        %8563 = vst [vmem:[%s6 + $0x158] sm:$0xff] %v8527
        %8564 = vst [vmem:[%s6 + $0x160] sm:$0xff] %v8528
        %8565 = vst [vmem:[%s6 + $0x168] sm:$0xff] %v8529
        %8566 = vst [vmem:[%s6 + $0x170] sm:$0xff] %v8530
        %8567 = vst [vmem:[%s6 + $0x178] sm:$0xff] %v8531
        %8568 = vst [vmem:[%s6 + $0x180] sm:$0xff] %v8532
        %8569 = vst [vmem:[%s6 + $0x188] sm:$0xff] %v8533
        %8570 = vst [vmem:[%s6 + $0x190] sm:$0xff] %v8534
        %8571 = vst [vmem:[%s6 + $0x198] sm:$0xff] %v8535
        %8572 = vst [vmem:[%s6 + $0x1a0] sm:$0xff] %v8536
        %8573 = vst [vmem:[%s6 + $0x1a8] sm:$0xff] %v8537
        %8574 = vst [vmem:[%s6 + $0x1b0] sm:$0xff] %v8538
        %8575 = vst [vmem:[%s6 + $0x1b8] sm:$0xff] %v8539
        %8576 = vst [vmem:[%s6 + $0x1c0] sm:$0xff] %v8540
        %8577 = vst [vmem:[%s6 + $0x1c8] sm:$0xff] %v8541
        %8578 = vst [vmem:[%s6 + $0x1d0] sm:$0xff] %v8542
        %8579 = vst [vmem:[%s6 + $0x1d8] sm:$0xff] %v8543
        %8580 = vst [vmem:[%s6 + $0x1e0] sm:$0xff] %v8544
        %8581 = vst [vmem:[%s6 + $0x1e8] sm:$0xff] %v8545
        %8582 = vst [vmem:[%s6 + $0x1f0] sm:$0xff] %v8546
        %8583 = vst [vmem:[%s6 + $0x1f8] sm:$0xff] %v8547
        %8584 = vst [vmem:[%s6 + $0x200] sm:$0xff] %v8548
        %8585 = vst [vmem:[%s6 + $0x208] sm:$0xff] %v8549
        %8586 = vst [vmem:[%s6 + $0x210] sm:$0xff] %v8550
        %8587 = vst [vmem:[%s6 + $0x218] sm:$0xff] %v8551
        %8588 = vst [vmem:[%s6 + $0x220] sm:$0xff] %v8552
        %8589 = vst [vmem:[%s6 + $0x228] sm:$0xff] %v8553
        %8590 = vst [vmem:[%s6 + $0x230] sm:$0xff] %v8554
        %8591 = vst [vmem:[%s6 + $0x238] sm:$0xff] %v8555
      $region52: #{metric_block.1} parent=43 // pred_fallthru
        _
      // Predicated region
      $region53: #{metric_block.1} parent=43 // pred_check
        %p8592 = pneg %p175
      $region54: #{metric_block.1} parent=43 // pred_check_branch
        %8594 = sbr.rel (%p8592) target = $region56
      $region55: #{metric_block.1} parent=43 // pred_region
        _
      $region56: #{metric_block.1} parent=43 // pred_fallthru
        _
      // Predicated region
      $region57: #{metric_block.1} parent=43 // pred_check
        %p8595 = pneg %p175
      $region58: #{metric_block.1} parent=43 // pred_check_branch
        %8597 = sbr.rel (%p8595) target = $region60
      $region59: #{metric_block.1} parent=43 // pred_region
        _
      $region60: #{metric_block.1} parent=43 // pred_fallthru
        _
    $region44: #{metric_block.1} parent=5 // pred_fallthru
      _
    %p8598 = scmp.le.s32.totalorder 2, %s12
    // Predicated region
    $region61: #{metric_block.1} parent=5 // pred_check
      %p8599 = pneg %p8598
    $region62: #{metric_block.1} parent=5 // pred_check_branch
      %8601 = sbr.rel (%p8599) target = $region64
    $region63: #{metric_block.1} parent=5 // pred_region
      %s8602 = ssub.s32 %s12, 2
    $region64: #{metric_block.1} parent=5 // pred_fallthru
      _
  $region6: #{metric_block.1} parent=0 // loop_footer
    %s16 = sadd.s32 1, %s12
  $region7: #{metric_block.1} parent=0 // loop_footer_branch
    %11 = sbr.rel target = $region3
  $region8: #{metric_block.1} parent=0 // loop_exit
    _

</llo_original>
